<compile_context>
chip_gen: v6e
topology: v6e:2x2x1
jax: 0.10.0
libtpu: 0.0.40
codegen_flags: <defaults>
</compile_context>

<pallas_src>
import functools

import jax
import jax.numpy as jnp
from jax.experimental import pallas as pl
from jax.experimental.pallas import tpu as pltpu

MAXPAD = 18                 # largest dilation/padding of the 4 branches
DILATIONS = (1, 6, 12, 18)
EPS = 1e-5                  # nn.GroupNorm default


def _round_up(v, m):
    return ((v + m - 1) // m) * m


def _conv_stats_kernel(g_ref, wc_ref, mask_ref, y_ref, stats_ref, *,
                       tap_plan, trows, cp):
    """4 dilated 3x3 strided convs for one (sample, row-tile) + GN partial stats.

    g_ref:     (1, 1, RG, CP)    bf16  residue-decomposed padded-x window (+halo)
    wc_ref:    (4, 9, CP, CP)    bf16  per-branch, per-tap conv weights
    mask_ref:  (1, TROWS, CP)    f32   1.0 on valid output positions, else 0.0
    y_ref:     (4, 1, TROWS, CP) bf16  conv outputs (extended row layout)
    stats_ref: (1, 1, 8, CP)     f32   rows 0-3: masked sum(y), 4-7: sum(y*y)
    """
    maskf = mask_ref[0]                                          # (TROWS, CP)
    for br in range(4):
        acc = jnp.zeros((trows, cp), jnp.float32)
        for k in range(9):
            # dilated/strided conv tap == contiguous slice in residue layout
            tap = g_ref[0, 0, pl.ds(tap_plan[br][k], trows), :]  # (TROWS, CP)
            acc = acc + jnp.dot(tap, wc_ref[br, k],
                                preferred_element_type=jnp.float32)
        y_ref[br, 0, :, :] = acc.astype(y_ref.dtype)
        # single-pass GroupNorm statistics (masked sum / sum of squares)
        m = acc * maskf
        stats_ref[0, 0, br:br + 1, :] = jnp.sum(m, axis=0, keepdims=True)
        stats_ref[0, 0, 4 + br:5 + br, :] = jnp.sum(m * acc, axis=0,
                                                    keepdims=True)


def _norm_final_kernel(y_ref, pooled_ref, a_ref, b_ref, wfin_ref, bias_ref,
                       o_ref):
    """GroupNorm affine + ReLU + pooled branch + final 1x1 conv (per row tile).

    y_ref:       (4, 1, TR, CP) bf16   branch conv outputs
    pooled_ref:  (1, TR, CP)    bf16   avg-pool branch
    a_ref/b_ref: (1, 4, CP)     f32    folded GN scale / shift per branch
    wfin_ref:    (5, CP, CP)    bf16   final 1x1 conv split per concat block
    bias_ref:    (1, CP)        f32
    o_ref:       (1, TR, CP)    f32
    """
    acc = jnp.zeros(o_ref.shape[1:], jnp.float32)
    for br in range(4):                       # per-branch accumulation, no concat
        yb = y_ref[br, 0].astype(jnp.float32)
        yb = yb * a_ref[0, br:br + 1, :] + b_ref[0, br:br + 1, :]
        yb = jnp.maximum(yb, 0.0)             # ReLU
        acc = acc + jnp.dot(yb.astype(jnp.bfloat16), wfin_ref[br],
                            preferred_element_type=jnp.float32)
    acc = acc + jnp.dot(pooled_ref[0], wfin_ref[4],
                        preferred_element_type=jnp.float32)
    acc = acc + bias_ref[...]
    o_ref[0, :, :] = acc.astype(o_ref.dtype)


def atrou_mmu_forward(x_nchw, params, scale_factor, *, row_block=None,
                      out_row_tile=None):
    """Pallas implementation of AtrouMMU.forward. Input/output are NCHW."""
    N, C, H, W = x_nchw.shape
    s = int(scale_factor)
    assert H % s == 0 and W % s == 0, "spatial dims must divide scale_factor"
    OH, OW = H // s, W // s
    CP = _round_up(max(C, 128), 128)          # lane-aligned channel count

    # geometry of the residue-decomposed, max-padded input
    qmax = (2 * MAXPAD) // s                  # largest whole-block tap offset
    QH = qmax + 1                             # halo in block-rows
    WB = _round_up(OW + qmax + 1, 8)          # extended output width (lane-safe)
    Wp = WB * s
    if row_block is None:
        row_block = max(1, min(OH, max(1, 512 // WB)))
    TOH = int(row_block)                      # output rows per conv tile
    nt = -(-OH // TOH)                        # number of conv row tiles
    HB = nt * TOH + QH
    Hp = HB * s
    TROWS = TOH * WB                          # extended flat rows per conv tile
    R_ext = nt * TROWS                        # total extended flat rows
    WIN = (TOH + QH) * WB                     # rows per residue window (w/ halo)
    RG = s * s * WIN

    x = jnp.transpose(x_nchw, (0, 2, 3, 1)).astype(jnp.float32)   # NHWC

    # ---- avg-pool branch (cheap XLA reduce), laid out in extended space ----
    pooled = x.reshape(N, OH, s, OW, s, C).mean(axis=(2, 4))      # (N,OH,OW,C)
    pooled_ext = jnp.pad(pooled, ((0, 0), (0, nt * TOH - OH),
                                  (0, WB - OW), (0, CP - C)))
    pooled_ext = pooled_ext.reshape(N, R_ext, CP).astype(jnp.bfloat16)

    # ---- residue-decomposed max-padded input + per-tile halo windows -------
    xb = x.astype(jnp.bfloat16)
    x_pad = jnp.pad(xb, ((0, 0), (MAXPAD, Hp - H - MAXPAD),
                         (MAXPAD, Wp - W - MAXPAD), (0, CP - C)))
    # F[n, ry*s+rx, i*WB+j, :] == x_pad[n, i*s+ry, j*s+rx, :]
    F = x_pad.reshape(N, HB, s, WB, s, CP).transpose(0, 2, 4, 1, 3, 5)
    F = F.reshape(N, s * s, HB * WB, CP)
    # overlapping halo windows: ~(TOH+QH)/TOH duplication of x, not 36x im2col
    G = jnp.stack([F[:, :, t * TROWS:t * TROWS + WIN, :] for t in range(nt)],
                  axis=1).reshape(N, nt, RG, CP)

    # ---- static tap plan: (branch, tap) -> start row inside a G window -----
    tap_plan = []
    for d in DILATIONS:
        starts = []
        for ky in range(3):
            for kx in range(3):
                qy, ry = divmod((MAXPAD - d) + ky * d, s)
                qx, rx = divmod((MAXPAD - d) + kx * d, s)
                starts.append((ry * s + rx) * WIN + qy * WB + qx)
        tap_plan.append(tuple(starts))
    tap_plan = tuple(tap_plan)

    # ---- packed weights (bf16, channel-padded; zero pad keeps math exact) --
    wc = jnp.stack([jnp.transpose(w, (2, 3, 1, 0)).reshape(9, C, C)
                    for w in params["conv_w"]], axis=0)           # (4,9,Cin,Cout)
    wc = jnp.pad(wc, ((0, 0), (0, 0), (0, CP - C), (0, CP - C)))
    wc = wc.astype(jnp.bfloat16)

    # ---- validity mask for GroupNorm statistics ----------------------------
    valid = (jnp.arange(nt * TOH)[:, None] < OH) & (jnp.arange(WB)[None, :] < OW)
    mask = jnp.broadcast_to(valid[:, :, None], (nt * TOH, WB, CP))
    mask = mask.reshape(nt, TROWS, CP).astype(jnp.float32)

    # ---- pass 1: dilated convs + fused partial GroupNorm stats -------------
    kernel1 = functools.partial(_conv_stats_kernel, tap_plan=tap_plan,
                                trows=TROWS, cp=CP)
    y_ext, stats = pl.pallas_call(
        kernel1,
        out_shape=(jax.ShapeDtypeStruct((4, N, R_ext, CP), jnp.bfloat16),
                   jax.ShapeDtypeStruct((N, nt, 8, CP), jnp.float32)),
        grid_spec=pltpu.PrefetchScalarGridSpec(
            num_scalar_prefetch=0,
            grid=(N, nt),
            in_specs=[
                pl.BlockSpec((1, 1, RG, CP), lambda n, t: (n, t, 0, 0)),
                pl.BlockSpec((4, 9, CP, CP), lambda n, t: (0, 0, 0, 0)),
                pl.BlockSpec((1, TROWS, CP), lambda n, t: (t, 0, 0)),
            ],
            out_specs=[
                pl.BlockSpec((4, 1, TROWS, CP), lambda n, t: (0, n, t, 0)),
                pl.BlockSpec((1, 1, 8, CP), lambda n, t: (n, t, 0, 0)),
            ],
        ),
        compiler_params=pltpu.CompilerParams(
            dimension_semantics=("parallel", "parallel"),
            vmem_limit_bytes=64 * 1024 * 1024),
    )(G, wc, mask)

    # ---- GroupNorm(1,C): fold full-sample stats into per-branch scale/shift
    # TODO(synk): this tiny cross-tile reduction (and the avg-pool above) stay
    # as XLA glue by design; all O(N*OHW*C) work runs inside the two kernels.
    gam = jnp.pad(jnp.stack(params["gn_gamma"], 0), ((0, 0), (0, CP - C)))
    bet = jnp.pad(jnp.stack(params["gn_beta"], 0), ((0, 0), (0, CP - C)))
    cnt = float(OH * OW * C)
    mu = stats[:, :, 0:4, :].sum(axis=(1, 3)) / cnt                # (N, 4)
    var = jnp.maximum(stats[:, :, 4:8, :].sum(axis=(1, 3)) / cnt - mu * mu, 0.0)
    inv = jax.lax.rsqrt(var + EPS)
    a_aff = gam[None] * inv[:, :, None]                            # (N, 4, CP)
    b_aff = bet[None] - mu[:, :, None] * a_aff                     # (N, 4, CP)

    # ---- final 1x1 conv weights, split per concat block --------------------
    wf = jnp.transpose(params["fin_w"][:, :, 0, 0], (1, 0)).reshape(5, C, C)
    wf = jnp.pad(wf, ((0, 0), (0, CP - C), (0, CP - C))).astype(jnp.bfloat16)
    bf = jnp.pad(params["fin_b"], (0, CP - C)).reshape(1, CP).astype(jnp.float32)

    # ---- pass 2: GN affine + ReLU + pooled branch + final 1x1 conv ---------
    if out_row_tile is None:
        out_row_tile = R_ext
    TR = int(out_row_tile)
    assert R_ext % TR == 0 and TR % 8 == 0
    nr = R_ext // TR

    out_ext = pl.pallas_call(
        _norm_final_kernel,
        out_shape=jax.ShapeDtypeStruct((N, R_ext, CP), jnp.float32),
        grid_spec=pltpu.PrefetchScalarGridSpec(
            num_scalar_prefetch=0,
            grid=(N, nr),
            in_specs=[
                pl.BlockSpec((4, 1, TR, CP), lambda n, r: (0, n, r, 0)),
                pl.BlockSpec((1, TR, CP), lambda n, r: (n, r, 0)),
                pl.BlockSpec((1, 4, CP), lambda n, r: (n, 0, 0)),
                pl.BlockSpec((1, 4, CP), lambda n, r: (n, 0, 0)),
                pl.BlockSpec((5, CP, CP), lambda n, r: (0, 0, 0)),
                pl.BlockSpec((1, CP), lambda n, r: (0, 0)),
            ],
            out_specs=pl.BlockSpec((1, TR, CP), lambda n, r: (n, r, 0)),
        ),
        compiler_params=pltpu.CompilerParams(
            dimension_semantics=("parallel", "parallel"),
            vmem_limit_bytes=64 * 1024 * 1024),
    )(y_ext, pooled_ext, a_aff, b_aff, wf, bf)

    # drop extended-layout garbage + channel padding, back to NCHW
    out = out_ext.reshape(N, nt * TOH, WB, CP)[:, :OH, :OW, :C]
    return jnp.transpose(out, (0, 3, 1, 2))


def _reference_forward(x_nchw, params, s):
    """Pure-JAX f32 reference mirroring the PyTorch module (validation only)."""
    N, C, H, W = x_nchw.shape
    OH, OW = H // s, W // s
    x = jnp.transpose(x_nchw, (0, 2, 3, 1)).astype(jnp.float32)
    feats = []
    for d, w, g, b in zip(DILATIONS, params["conv_w"],
                          params["gn_gamma"], params["gn_beta"]):
        xp = jnp.pad(x, ((0, 0), (d, d), (d, d), (0, 0)))
        taps = [xp[:, ky * d: ky * d + (OH - 1) * s + 1: s,
                   kx * d: kx * d + (OW - 1) * s + 1: s, :]
                for ky in range(3) for kx in range(3)]
        pat = jnp.stack(taps, axis=3).reshape(N, OH * OW, 9 * C)
        wm = jnp.transpose(w, (2, 3, 1, 0)).reshape(9 * C, C)
        y = jnp.einsum("npk,kc->npc", pat, wm, precision="highest")
        mu = jnp.mean(y, axis=(1, 2), keepdims=True)
        var = jnp.mean((y - mu) ** 2, axis=(1, 2), keepdims=True)
        y = (y - mu) * jax.lax.rsqrt(var + EPS)
        y = y * g[None, None, :] + b[None, None, :]
        feats.append(jnp.maximum(y, 0.0))
    pooled = x.reshape(N, OH, s, OW, s, C).mean(axis=(2, 4)).reshape(N, OH * OW, C)
    cat = jnp.concatenate(feats + [pooled], axis=-1)
    wfm = jnp.transpose(params["fin_w"][:, :, 0, 0], (1, 0))
    out = jnp.einsum("npk,kc->npc", cat, wfm, precision="highest")
    out = out + params["fin_b"][None, None, :]
    return jnp.transpose(out.reshape(N, OH, OW, C), (0, 3, 1, 2))


def init_params(key, inf):
    """Deterministic synthetic parameters matching AtrouMMU.__init__ shapes."""
    keys = jax.random.split(key, 6)
    conv_w = [0.1 * jax.random.normal(keys[i], (inf, inf, 3, 3), jnp.float32)
              for i in range(4)]
    gn_gamma = [jnp.ones((inf,), jnp.float32) for _ in range(4)]
    gn_beta = [jnp.zeros((inf,), jnp.float32) for _ in range(4)]
    fin_w = 0.1 * jax.random.normal(keys[4], (inf, 5 * inf, 1, 1), jnp.float32)
    fin_b = 0.05 * jax.random.normal(keys[5], (inf,), jnp.float32)
    return dict(conv_w=conv_w, gn_gamma=gn_gamma, gn_beta=gn_beta,
                fin_w=fin_w, fin_b=fin_b)


if __name__ == "__main__":
    key = jax.random.PRNGKey(0)
    kx, kp = jax.random.split(key)

    inf = 4            # channels
    scale_factor = 4   # conv stride / pool size (small for the example)
    N, H, W = 2, 16, 16

    x = jax.random.normal(kx, (N, inf, H, W), jnp.float32)   # NCHW input
    params = init_params(kp, inf)

    fwd = jax.jit(functools.partial(atrou_mmu_forward,
                                    scale_factor=scale_factor,
                                    row_block=2,        # exercise conv tiling
                                    out_row_tile=32))   # exercise output tiling
    out = jax.block_until_ready(fwd(x, params))
    assert out.shape == (N, inf, H // scale_factor, W // scale_factor), out.shape
    assert bool(jnp.all(jnp.isfinite(out)))

    ref = _reference_forward(x, params, scale_factor)
    err = float(jnp.max(jnp.abs(out - ref)))
    assert err < 0.1, f"mismatch vs reference: max abs err = {err}"
    print("KERNEL_OK")
</pallas_src>

<mosaic_0001>
module attributes {stable_mosaic.version = 11 : i64} {
  func.func @_conv_stats_kernel(%arg0: i32, %arg1: i32, %arg2: memref<1x1x3072x128xbf16, #tpu.memory_space<vmem>>, %arg3: memref<4x9x128x128xbf16, #tpu.memory_space<vmem>>, %arg4: memref<1x32x128xf32, #tpu.memory_space<vmem>>, %arg5: memref<4x1x32x128xbf16, #tpu.memory_space<vmem>>, %arg6: memref<1x1x8x128xf32, #tpu.memory_space<vmem>>) attributes {dimension_semantics = [#tpu.dimension_semantics<parallel>, #tpu.dimension_semantics<parallel>], iteration_bounds = array<i64: 2, 2>, scalar_prefetch = 0 : i64, scratch_operands = 0 : i64, tpu.core_type = #tpu.core_type<tc>, window_params = [{transform_indices = @transform_0, window_bounds = array<i64: 1, 1, 3072, 128>}, {pipeline_mode = #tpu.pipeline_mode<synchronous>, transform_indices = @transform_1, window_bounds = array<i64: 4, 9, 128, 128>}, {transform_indices = @transform_2, window_bounds = array<i64: 1, 32, 128>}, {transform_indices = @transform_3, window_bounds = array<i64: 4, 1, 32, 128>}, {transform_indices = @transform_4, window_bounds = array<i64: 1, 1, 8, 128>}]} {
    %c0 = arith.constant 0 : index
    %c0_0 = arith.constant 0 : index
    %c0_1 = arith.constant 0 : index
    %0 = vector.load %arg4[%c0, %c0_0, %c0_1] : memref<1x32x128xf32, #tpu.memory_space<vmem>>, vector<1x32x128xf32>
    %1 = vector.shape_cast %0 : vector<1x32x128xf32> to vector<32x128xf32>
    %cst = arith.constant 0.000000e+00 : f32
    %2 = vector.broadcast %cst : f32 to vector<32x128xf32>
    %c0_2 = arith.constant 0 : index
    %c0_3 = arith.constant 0 : index
    %c1028 = arith.constant 1028 : index
    %c0_4 = arith.constant 0 : index
    %3 = vector.load %arg2[%c0_2, %c0_3, %c1028, %c0_4] : memref<1x1x3072x128xbf16, #tpu.memory_space<vmem>>, vector<1x1x32x128xbf16>
    %4 = vector.shape_cast %3 : vector<1x1x32x128xbf16> to vector<32x128xbf16>
    %c0_5 = arith.constant 0 : index
    %c0_6 = arith.constant 0 : index
    %c0_7 = arith.constant 0 : index
    %c0_8 = arith.constant 0 : index
    %5 = vector.load %arg3[%c0_5, %c0_6, %c0_7, %c0_8] : memref<4x9x128x128xbf16, #tpu.memory_space<vmem>>, vector<1x1x128x128xbf16>
    %6 = vector.shape_cast %5 : vector<1x1x128x128xbf16> to vector<128x128xbf16>
    %cst_9 = arith.constant dense<0.000000e+00> : vector<32x128xf32>
    %7 = tpu.matmul %4, %6, %cst_9 {dimension_numbers = #tpu.dot_dimension_numbers<[1], [0], [0], [1], [0, 0, 1, 1], [], []>} : vector<32x128xbf16>, vector<128x128xbf16>, vector<32x128xf32> -> vector<32x128xf32>
    %8 = arith.addf %2, %7 : vector<32x128xf32>
    %c0_10 = arith.constant 0 : index
    %c0_11 = arith.constant 0 : index
    %c1220 = arith.constant 1220 : index
    %c0_12 = arith.constant 0 : index
    %9 = vector.load %arg2[%c0_10, %c0_11, %c1220, %c0_12] : memref<1x1x3072x128xbf16, #tpu.memory_space<vmem>>, vector<1x1x32x128xbf16>
    %10 = vector.shape_cast %9 : vector<1x1x32x128xbf16> to vector<32x128xbf16>
    %c0_13 = arith.constant 0 : index
    %c1 = arith.constant 1 : index
    %c0_14 = arith.constant 0 : index
    %c0_15 = arith.constant 0 : index
    %11 = vector.load %arg3[%c0_13, %c1, %c0_14, %c0_15] : memref<4x9x128x128xbf16, #tpu.memory_space<vmem>>, vector<1x1x128x128xbf16>
    %12 = vector.shape_cast %11 : vector<1x1x128x128xbf16> to vector<128x128xbf16>
    %cst_16 = arith.constant dense<0.000000e+00> : vector<32x128xf32>
    %13 = tpu.matmul %10, %12, %cst_16 {dimension_numbers = #tpu.dot_dimension_numbers<[1], [0], [0], [1], [0, 0, 1, 1], [], []>} : vector<32x128xbf16>, vector<128x128xbf16>, vector<32x128xf32> -> vector<32x128xf32>
    %14 = arith.addf %8, %13 : vector<32x128xf32>
    %c0_17 = arith.constant 0 : index
    %c0_18 = arith.constant 0 : index
    %c1412 = arith.constant 1412 : index
    %c0_19 = arith.constant 0 : index
    %15 = vector.load %arg2[%c0_17, %c0_18, %c1412, %c0_19] : memref<1x1x3072x128xbf16, #tpu.memory_space<vmem>>, vector<1x1x32x128xbf16>
    %16 = vector.shape_cast %15 : vector<1x1x32x128xbf16> to vector<32x128xbf16>
    %c0_20 = arith.constant 0 : index
    %c2 = arith.constant 2 : index
    %c0_21 = arith.constant 0 : index
    %c0_22 = arith.constant 0 : index
    %17 = vector.load %arg3[%c0_20, %c2, %c0_21, %c0_22] : memref<4x9x128x128xbf16, #tpu.memory_space<vmem>>, vector<1x1x128x128xbf16>
    %18 = vector.shape_cast %17 : vector<1x1x128x128xbf16> to vector<128x128xbf16>
    %cst_23 = arith.constant dense<0.000000e+00> : vector<32x128xf32>
    %19 = tpu.matmul %16, %18, %cst_23 {dimension_numbers = #tpu.dot_dimension_numbers<[1], [0], [0], [1], [0, 0, 1, 1], [], []>} : vector<32x128xbf16>, vector<128x128xbf16>, vector<32x128xf32> -> vector<32x128xf32>
    %20 = arith.addf %14, %19 : vector<32x128xf32>
    %c0_24 = arith.constant 0 : index
    %c0_25 = arith.constant 0 : index
    %c1796 = arith.constant 1796 : index
    %c0_26 = arith.constant 0 : index
    %21 = vector.load %arg2[%c0_24, %c0_25, %c1796, %c0_26] : memref<1x1x3072x128xbf16, #tpu.memory_space<vmem>>, vector<1x1x32x128xbf16>
    %22 = vector.shape_cast %21 : vector<1x1x32x128xbf16> to vector<32x128xbf16>
    %c0_27 = arith.constant 0 : index
    %c3 = arith.constant 3 : index
    %c0_28 = arith.constant 0 : index
    %c0_29 = arith.constant 0 : index
    %23 = vector.load %arg3[%c0_27, %c3, %c0_28, %c0_29] : memref<4x9x128x128xbf16, #tpu.memory_space<vmem>>, vector<1x1x128x128xbf16>
    %24 = vector.shape_cast %23 : vector<1x1x128x128xbf16> to vector<128x128xbf16>
    %cst_30 = arith.constant dense<0.000000e+00> : vector<32x128xf32>
    %25 = tpu.matmul %22, %24, %cst_30 {dimension_numbers = #tpu.dot_dimension_numbers<[1], [0], [0], [1], [0, 0, 1, 1], [], []>} : vector<32x128xbf16>, vector<128x128xbf16>, vector<32x128xf32> -> vector<32x128xf32>
    %26 = arith.addf %20, %25 : vector<32x128xf32>
    %c0_31 = arith.constant 0 : index
    %c0_32 = arith.constant 0 : index
    %c1988 = arith.constant 1988 : index
    %c0_33 = arith.constant 0 : index
    %27 = vector.load %arg2[%c0_31, %c0_32, %c1988, %c0_33] : memref<1x1x3072x128xbf16, #tpu.memory_space<vmem>>, vector<1x1x32x128xbf16>
    %28 = vector.shape_cast %27 : vector<1x1x32x128xbf16> to vector<32x128xbf16>
    %c0_34 = arith.constant 0 : index
    %c4 = arith.constant 4 : index
    %c0_35 = arith.constant 0 : index
    %c0_36 = arith.constant 0 : index
    %29 = vector.load %arg3[%c0_34, %c4, %c0_35, %c0_36] : memref<4x9x128x128xbf16, #tpu.memory_space<vmem>>, vector<1x1x128x128xbf16>
    %30 = vector.shape_cast %29 : vector<1x1x128x128xbf16> to vector<128x128xbf16>
    %cst_37 = arith.constant dense<0.000000e+00> : vector<32x128xf32>
    %31 = tpu.matmul %28, %30, %cst_37 {dimension_numbers = #tpu.dot_dimension_numbers<[1], [0], [0], [1], [0, 0, 1, 1], [], []>} : vector<32x128xbf16>, vector<128x128xbf16>, vector<32x128xf32> -> vector<32x128xf32>
    %32 = arith.addf %26, %31 : vector<32x128xf32>
    %c0_38 = arith.constant 0 : index
    %c0_39 = arith.constant 0 : index
    %c2180 = arith.constant 2180 : index
    %c0_40 = arith.constant 0 : index
    %33 = vector.load %arg2[%c0_38, %c0_39, %c2180, %c0_40] : memref<1x1x3072x128xbf16, #tpu.memory_space<vmem>>, vector<1x1x32x128xbf16>
    %34 = vector.shape_cast %33 : vector<1x1x32x128xbf16> to vector<32x128xbf16>
    %c0_41 = arith.constant 0 : index
    %c5 = arith.constant 5 : index
    %c0_42 = arith.constant 0 : index
    %c0_43 = arith.constant 0 : index
    %35 = vector.load %arg3[%c0_41, %c5, %c0_42, %c0_43] : memref<4x9x128x128xbf16, #tpu.memory_space<vmem>>, vector<1x1x128x128xbf16>
    %36 = vector.shape_cast %35 : vector<1x1x128x128xbf16> to vector<128x128xbf16>
    %cst_44 = arith.constant dense<0.000000e+00> : vector<32x128xf32>
    %37 = tpu.matmul %34, %36, %cst_44 {dimension_numbers = #tpu.dot_dimension_numbers<[1], [0], [0], [1], [0, 0, 1, 1], [], []>} : vector<32x128xbf16>, vector<128x128xbf16>, vector<32x128xf32> -> vector<32x128xf32>
    %38 = arith.addf %32, %37 : vector<32x128xf32>
    %c0_45 = arith.constant 0 : index
    %c0_46 = arith.constant 0 : index
    %c2564 = arith.constant 2564 : index
    %c0_47 = arith.constant 0 : index
    %39 = vector.load %arg2[%c0_45, %c0_46, %c2564, %c0_47] : memref<1x1x3072x128xbf16, #tpu.memory_space<vmem>>, vector<1x1x32x128xbf16>
    %40 = vector.shape_cast %39 : vector<1x1x32x128xbf16> to vector<32x128xbf16>
    %c0_48 = arith.constant 0 : index
    %c6 = arith.constant 6 : index
    %c0_49 = arith.constant 0 : index
    %c0_50 = arith.constant 0 : index
    %41 = vector.load %arg3[%c0_48, %c6, %c0_49, %c0_50] : memref<4x9x128x128xbf16, #tpu.memory_space<vmem>>, vector<1x1x128x128xbf16>
    %42 = vector.shape_cast %41 : vector<1x1x128x128xbf16> to vector<128x128xbf16>
    %cst_51 = arith.constant dense<0.000000e+00> : vector<32x128xf32>
    %43 = tpu.matmul %40, %42, %cst_51 {dimension_numbers = #tpu.dot_dimension_numbers<[1], [0], [0], [1], [0, 0, 1, 1], [], []>} : vector<32x128xbf16>, vector<128x128xbf16>, vector<32x128xf32> -> vector<32x128xf32>
    %44 = arith.addf %38, %43 : vector<32x128xf32>
    %c0_52 = arith.constant 0 : index
    %c0_53 = arith.constant 0 : index
    %c2756 = arith.constant 2756 : index
    %c0_54 = arith.constant 0 : index
    %45 = vector.load %arg2[%c0_52, %c0_53, %c2756, %c0_54] : memref<1x1x3072x128xbf16, #tpu.memory_space<vmem>>, vector<1x1x32x128xbf16>
    %46 = vector.shape_cast %45 : vector<1x1x32x128xbf16> to vector<32x128xbf16>
    %c0_55 = arith.constant 0 : index
    %c7 = arith.constant 7 : index
    %c0_56 = arith.constant 0 : index
    %c0_57 = arith.constant 0 : index
    %47 = vector.load %arg3[%c0_55, %c7, %c0_56, %c0_57] : memref<4x9x128x128xbf16, #tpu.memory_space<vmem>>, vector<1x1x128x128xbf16>
    %48 = vector.shape_cast %47 : vector<1x1x128x128xbf16> to vector<128x128xbf16>
    %cst_58 = arith.constant dense<0.000000e+00> : vector<32x128xf32>
    %49 = tpu.matmul %46, %48, %cst_58 {dimension_numbers = #tpu.dot_dimension_numbers<[1], [0], [0], [1], [0, 0, 1, 1], [], []>} : vector<32x128xbf16>, vector<128x128xbf16>, vector<32x128xf32> -> vector<32x128xf32>
    %50 = arith.addf %44, %49 : vector<32x128xf32>
    %c0_59 = arith.constant 0 : index
    %c0_60 = arith.constant 0 : index
    %c2948 = arith.constant 2948 : index
    %c0_61 = arith.constant 0 : index
    %51 = vector.load %arg2[%c0_59, %c0_60, %c2948, %c0_61] : memref<1x1x3072x128xbf16, #tpu.memory_space<vmem>>, vector<1x1x32x128xbf16>
    %52 = vector.shape_cast %51 : vector<1x1x32x128xbf16> to vector<32x128xbf16>
    %c0_62 = arith.constant 0 : index
    %c8 = arith.constant 8 : index
    %c0_63 = arith.constant 0 : index
    %c0_64 = arith.constant 0 : index
    %53 = vector.load %arg3[%c0_62, %c8, %c0_63, %c0_64] : memref<4x9x128x128xbf16, #tpu.memory_space<vmem>>, vector<1x1x128x128xbf16>
    %54 = vector.shape_cast %53 : vector<1x1x128x128xbf16> to vector<128x128xbf16>
    %cst_65 = arith.constant dense<0.000000e+00> : vector<32x128xf32>
    %55 = tpu.matmul %52, %54, %cst_65 {dimension_numbers = #tpu.dot_dimension_numbers<[1], [0], [0], [1], [0, 0, 1, 1], [], []>} : vector<32x128xbf16>, vector<128x128xbf16>, vector<32x128xf32> -> vector<32x128xf32>
    %56 = arith.addf %50, %55 : vector<32x128xf32>
    %57 = arith.truncf %56 : vector<32x128xf32> to vector<32x128xbf16>
    %c0_66 = arith.constant 0 : index
    %c0_67 = arith.constant 0 : index
    %c0_68 = arith.constant 0 : index
    %c0_69 = arith.constant 0 : index
    %58 = vector.load %arg5[%c0_66, %c0_67, %c0_68, %c0_69] : memref<4x1x32x128xbf16, #tpu.memory_space<vmem>>, vector<1x1x32x128xbf16>
    %59 = vector.shape_cast %58 : vector<1x1x32x128xbf16> to vector<32x128xbf16>
    %60 = vector.shape_cast %57 : vector<32x128xbf16> to vector<1x1x32x128xbf16>
    tpu.vector_store %arg5[%c0_66, %c0_67, %c0_68, %c0_69], %60 {strides = array<i32>} : memref<4x1x32x128xbf16, #tpu.memory_space<vmem>>, vector<1x1x32x128xbf16>,
    %61 = arith.mulf %56, %1 : vector<32x128xf32>
    %cst_70 = arith.constant dense<0.000000e+00> : vector<128xf32>
    %62 = vector.multi_reduction <add>, %61, %cst_70 [0] : vector<32x128xf32> to vector<128xf32>
    %63 = vector.shape_cast %62 : vector<128xf32> to vector<1x128xf32>
    %c0_71 = arith.constant 0 : index
    %c0_72 = arith.constant 0 : index
    %c0_73 = arith.constant 0 : index
    %c0_74 = arith.constant 0 : index
    %64 = vector.load %arg6[%c0_71, %c0_72, %c0_73, %c0_74] : memref<1x1x8x128xf32, #tpu.memory_space<vmem>>, vector<1x1x1x128xf32>
    %65 = vector.shape_cast %64 : vector<1x1x1x128xf32> to vector<1x128xf32>
    %66 = vector.shape_cast %63 : vector<1x128xf32> to vector<1x1x1x128xf32>
    tpu.vector_store %arg6[%c0_71, %c0_72, %c0_73, %c0_74], %66 {strides = array<i32>} : memref<1x1x8x128xf32, #tpu.memory_space<vmem>>, vector<1x1x1x128xf32>,
    %67 = arith.mulf %61, %56 : vector<32x128xf32>
    %cst_75 = arith.constant dense<0.000000e+00> : vector<128xf32>
    %68 = vector.multi_reduction <add>, %67, %cst_75 [0] : vector<32x128xf32> to vector<128xf32>
    %69 = vector.shape_cast %68 : vector<128xf32> to vector<1x128xf32>
    %c0_76 = arith.constant 0 : index
    %c0_77 = arith.constant 0 : index
    %c4_78 = arith.constant 4 : index
    %c0_79 = arith.constant 0 : index
    %70 = vector.load %arg6[%c0_76, %c0_77, %c4_78, %c0_79] : memref<1x1x8x128xf32, #tpu.memory_space<vmem>>, vector<1x1x1x128xf32>
    %71 = vector.shape_cast %70 : vector<1x1x1x128xf32> to vector<1x128xf32>
    %72 = vector.shape_cast %69 : vector<1x128xf32> to vector<1x1x1x128xf32>
    tpu.vector_store %arg6[%c0_76, %c0_77, %c4_78, %c0_79], %72 {strides = array<i32>} : memref<1x1x8x128xf32, #tpu.memory_space<vmem>>, vector<1x1x1x128xf32>,
    %cst_80 = arith.constant 0.000000e+00 : f32
    %73 = vector.broadcast %cst_80 : f32 to vector<32x128xf32>
    %c0_81 = arith.constant 0 : index
    %c0_82 = arith.constant 0 : index
    %c51 = arith.constant 51 : index
    %c0_83 = arith.constant 0 : index
    %74 = vector.load %arg2[%c0_81, %c0_82, %c51, %c0_83] : memref<1x1x3072x128xbf16, #tpu.memory_space<vmem>>, vector<1x1x32x128xbf16>
    %75 = vector.shape_cast %74 : vector<1x1x32x128xbf16> to vector<32x128xbf16>
    %c1_84 = arith.constant 1 : index
    %c0_85 = arith.constant 0 : index
    %c0_86 = arith.constant 0 : index
    %c0_87 = arith.constant 0 : index
    %76 = vector.load %arg3[%c1_84, %c0_85, %c0_86, %c0_87] : memref<4x9x128x128xbf16, #tpu.memory_space<vmem>>, vector<1x1x128x128xbf16>
    %77 = vector.shape_cast %76 : vector<1x1x128x128xbf16> to vector<128x128xbf16>
    %cst_88 = arith.constant dense<0.000000e+00> : vector<32x128xf32>
    %78 = tpu.matmul %75, %77, %cst_88 {dimension_numbers = #tpu.dot_dimension_numbers<[1], [0], [0], [1], [0, 0, 1, 1], [], []>} : vector<32x128xbf16>, vector<128x128xbf16>, vector<32x128xf32> -> vector<32x128xf32>
    %79 = arith.addf %73, %78 : vector<32x128xf32>
    %c0_89 = arith.constant 0 : index
    %c0_90 = arith.constant 0 : index
    %c436 = arith.constant 436 : index
    %c0_91 = arith.constant 0 : index
    %80 = vector.load %arg2[%c0_89, %c0_90, %c436, %c0_91] : memref<1x1x3072x128xbf16, #tpu.memory_space<vmem>>, vector<1x1x32x128xbf16>
    %81 = vector.shape_cast %80 : vector<1x1x32x128xbf16> to vector<32x128xbf16>
    %c1_92 = arith.constant 1 : index
    %c1_93 = arith.constant 1 : index
    %c0_94 = arith.constant 0 : index
    %c0_95 = arith.constant 0 : index
    %82 = vector.load %arg3[%c1_92, %c1_93, %c0_94, %c0_95] : memref<4x9x128x128xbf16, #tpu.memory_space<vmem>>, vector<1x1x128x128xbf16>
    %83 = vector.shape_cast %82 : vector<1x1x128x128xbf16> to vector<128x128xbf16>
    %cst_96 = arith.constant dense<0.000000e+00> : vector<32x128xf32>
    %84 = tpu.matmul %81, %83, %cst_96 {dimension_numbers = #tpu.dot_dimension_numbers<[1], [0], [0], [1], [0, 0, 1, 1], [], []>} : vector<32x128xbf16>, vector<128x128xbf16>, vector<32x128xf32> -> vector<32x128xf32>
    %85 = arith.addf %79, %84 : vector<32x128xf32>
    %c0_97 = arith.constant 0 : index
    %c0_98 = arith.constant 0 : index
    %c54 = arith.constant 54 : index
    %c0_99 = arith.constant 0 : index
    %86 = vector.load %arg2[%c0_97, %c0_98, %c54, %c0_99] : memref<1x1x3072x128xbf16, #tpu.memory_space<vmem>>, vector<1x1x32x128xbf16>
    %87 = vector.shape_cast %86 : vector<1x1x32x128xbf16> to vector<32x128xbf16>
    %c1_100 = arith.constant 1 : index
    %c2_101 = arith.constant 2 : index
    %c0_102 = arith.constant 0 : index
    %c0_103 = arith.constant 0 : index
    %88 = vector.load %arg3[%c1_100, %c2_101, %c0_102, %c0_103] : memref<4x9x128x128xbf16, #tpu.memory_space<vmem>>, vector<1x1x128x128xbf16>
    %89 = vector.shape_cast %88 : vector<1x1x128x128xbf16> to vector<128x128xbf16>
    %cst_104 = arith.constant dense<0.000000e+00> : vector<32x128xf32>
    %90 = tpu.matmul %87, %89, %cst_104 {dimension_numbers = #tpu.dot_dimension_numbers<[1], [0], [0], [1], [0, 0, 1, 1], [], []>} : vector<32x128xbf16>, vector<128x128xbf16>, vector<32x128xf32> -> vector<32x128xf32>
    %91 = arith.addf %85, %90 : vector<32x128xf32>
    %c0_105 = arith.constant 0 : index
    %c0_106 = arith.constant 0 : index
    %c1603 = arith.constant 1603 : index
    %c0_107 = arith.constant 0 : index
    %92 = vector.load %arg2[%c0_105, %c0_106, %c1603, %c0_107] : memref<1x1x3072x128xbf16, #tpu.memory_space<vmem>>, vector<1x1x32x128xbf16>
    %93 = vector.shape_cast %92 : vector<1x1x32x128xbf16> to vector<32x128xbf16>
    %c1_108 = arith.constant 1 : index
    %c3_109 = arith.constant 3 : index
    %c0_110 = arith.constant 0 : index
    %c0_111 = arith.constant 0 : index
    %94 = vector.load %arg3[%c1_108, %c3_109, %c0_110, %c0_111] : memref<4x9x128x128xbf16, #tpu.memory_space<vmem>>, vector<1x1x128x128xbf16>
    %95 = vector.shape_cast %94 : vector<1x1x128x128xbf16> to vector<128x128xbf16>
    %cst_112 = arith.constant dense<0.000000e+00> : vector<32x128xf32>
    %96 = tpu.matmul %93, %95, %cst_112 {dimension_numbers = #tpu.dot_dimension_numbers<[1], [0], [0], [1], [0, 0, 1, 1], [], []>} : vector<32x128xbf16>, vector<128x128xbf16>, vector<32x128xf32> -> vector<32x128xf32>
    %97 = arith.addf %91, %96 : vector<32x128xf32>
    %c0_113 = arith.constant 0 : index
    %c0_114 = arith.constant 0 : index
    %c1988_115 = arith.constant 1988 : index
    %c0_116 = arith.constant 0 : index
    %98 = vector.load %arg2[%c0_113, %c0_114, %c1988_115, %c0_116] : memref<1x1x3072x128xbf16, #tpu.memory_space<vmem>>, vector<1x1x32x128xbf16>
    %99 = vector.shape_cast %98 : vector<1x1x32x128xbf16> to vector<32x128xbf16>
    %c1_117 = arith.constant 1 : index
    %c4_118 = arith.constant 4 : index
    %c0_119 = arith.constant 0 : index
    %c0_120 = arith.constant 0 : index
    %100 = vector.load %arg3[%c1_117, %c4_118, %c0_119, %c0_120] : memref<4x9x128x128xbf16, #tpu.memory_space<vmem>>, vector<1x1x128x128xbf16>
    %101 = vector.shape_cast %100 : vector<1x1x128x128xbf16> to vector<128x128xbf16>
    %cst_121 = arith.constant dense<0.000000e+00> : vector<32x128xf32>
    %102 = tpu.matmul %99, %101, %cst_121 {dimension_numbers = #tpu.dot_dimension_numbers<[1], [0], [0], [1], [0, 0, 1, 1], [], []>} : vector<32x128xbf16>, vector<128x128xbf16>, vector<32x128xf32> -> vector<32x128xf32>
    %103 = arith.addf %97, %102 : vector<32x128xf32>
    %c0_122 = arith.constant 0 : index
    %c0_123 = arith.constant 0 : index
    %c1606 = arith.constant 1606 : index
    %c0_124 = arith.constant 0 : index
    %104 = vector.load %arg2[%c0_122, %c0_123, %c1606, %c0_124] : memref<1x1x3072x128xbf16, #tpu.memory_space<vmem>>, vector<1x1x32x128xbf16>
    %105 = vector.shape_cast %104 : vector<1x1x32x128xbf16> to vector<32x128xbf16>
    %c1_125 = arith.constant 1 : index
    %c5_126 = arith.constant 5 : index
    %c0_127 = arith.constant 0 : index
    %c0_128 = arith.constant 0 : index
    %106 = vector.load %arg3[%c1_125, %c5_126, %c0_127, %c0_128] : memref<4x9x128x128xbf16, #tpu.memory_space<vmem>>, vector<1x1x128x128xbf16>
    %107 = vector.shape_cast %106 : vector<1x1x128x128xbf16> to vector<128x128xbf16>
    %cst_129 = arith.constant dense<0.000000e+00> : vector<32x128xf32>
    %108 = tpu.matmul %105, %107, %cst_129 {dimension_numbers = #tpu.dot_dimension_numbers<[1], [0], [0], [1], [0, 0, 1, 1], [], []>} : vector<32x128xbf16>, vector<128x128xbf16>, vector<32x128xf32> -> vector<32x128xf32>
    %109 = arith.addf %103, %108 : vector<32x128xf32>
    %c0_130 = arith.constant 0 : index
    %c0_131 = arith.constant 0 : index
    %c99 = arith.constant 99 : index
    %c0_132 = arith.constant 0 : index
    %110 = vector.load %arg2[%c0_130, %c0_131, %c99, %c0_132] : memref<1x1x3072x128xbf16, #tpu.memory_space<vmem>>, vector<1x1x32x128xbf16>
    %111 = vector.shape_cast %110 : vector<1x1x32x128xbf16> to vector<32x128xbf16>
    %c1_133 = arith.constant 1 : index
    %c6_134 = arith.constant 6 : index
    %c0_135 = arith.constant 0 : index
    %c0_136 = arith.constant 0 : index
    %112 = vector.load %arg3[%c1_133, %c6_134, %c0_135, %c0_136] : memref<4x9x128x128xbf16, #tpu.memory_space<vmem>>, vector<1x1x128x128xbf16>
    %113 = vector.shape_cast %112 : vector<1x1x128x128xbf16> to vector<128x128xbf16>
    %cst_137 = arith.constant dense<0.000000e+00> : vector<32x128xf32>
    %114 = tpu.matmul %111, %113, %cst_137 {dimension_numbers = #tpu.dot_dimension_numbers<[1], [0], [0], [1], [0, 0, 1, 1], [], []>} : vector<32x128xbf16>, vector<128x128xbf16>, vector<32x128xf32> -> vector<32x128xf32>
    %115 = arith.addf %109, %114 : vector<32x128xf32>
    %c0_138 = arith.constant 0 : index
    %c0_139 = arith.constant 0 : index
    %c484 = arith.constant 484 : index
    %c0_140 = arith.constant 0 : index
    %116 = vector.load %arg2[%c0_138, %c0_139, %c484, %c0_140] : memref<1x1x3072x128xbf16, #tpu.memory_space<vmem>>, vector<1x1x32x128xbf16>
    %117 = vector.shape_cast %116 : vector<1x1x32x128xbf16> to vector<32x128xbf16>
    %c1_141 = arith.constant 1 : index
    %c7_142 = arith.constant 7 : index
    %c0_143 = arith.constant 0 : index
    %c0_144 = arith.constant 0 : index
    %118 = vector.load %arg3[%c1_141, %c7_142, %c0_143, %c0_144] : memref<4x9x128x128xbf16, #tpu.memory_space<vmem>>, vector<1x1x128x128xbf16>
    %119 = vector.shape_cast %118 : vector<1x1x128x128xbf16> to vector<128x128xbf16>
    %cst_145 = arith.constant dense<0.000000e+00> : vector<32x128xf32>
    %120 = tpu.matmul %117, %119, %cst_145 {dimension_numbers = #tpu.dot_dimension_numbers<[1], [0], [0], [1], [0, 0, 1, 1], [], []>} : vector<32x128xbf16>, vector<128x128xbf16>, vector<32x128xf32> -> vector<32x128xf32>
    %121 = arith.addf %115, %120 : vector<32x128xf32>
    %c0_146 = arith.constant 0 : index
    %c0_147 = arith.constant 0 : index
    %c102 = arith.constant 102 : index
    %c0_148 = arith.constant 0 : index
    %122 = vector.load %arg2[%c0_146, %c0_147, %c102, %c0_148] : memref<1x1x3072x128xbf16, #tpu.memory_space<vmem>>, vector<1x1x32x128xbf16>
    %123 = vector.shape_cast %122 : vector<1x1x32x128xbf16> to vector<32x128xbf16>
    %c1_149 = arith.constant 1 : index
    %c8_150 = arith.constant 8 : index
    %c0_151 = arith.constant 0 : index
    %c0_152 = arith.constant 0 : index
    %124 = vector.load %arg3[%c1_149, %c8_150, %c0_151, %c0_152] : memref<4x9x128x128xbf16, #tpu.memory_space<vmem>>, vector<1x1x128x128xbf16>
    %125 = vector.shape_cast %124 : vector<1x1x128x128xbf16> to vector<128x128xbf16>
    %cst_153 = arith.constant dense<0.000000e+00> : vector<32x128xf32>
    %126 = tpu.matmul %123, %125, %cst_153 {dimension_numbers = #tpu.dot_dimension_numbers<[1], [0], [0], [1], [0, 0, 1, 1], [], []>} : vector<32x128xbf16>, vector<128x128xbf16>, vector<32x128xf32> -> vector<32x128xf32>
    %127 = arith.addf %121, %126 : vector<32x128xf32>
    %128 = arith.truncf %127 : vector<32x128xf32> to vector<32x128xbf16>
    %c1_154 = arith.constant 1 : index
    %c0_155 = arith.constant 0 : index
    %c0_156 = arith.constant 0 : index
    %c0_157 = arith.constant 0 : index
    %129 = vector.load %arg5[%c1_154, %c0_155, %c0_156, %c0_157] : memref<4x1x32x128xbf16, #tpu.memory_space<vmem>>, vector<1x1x32x128xbf16>
    %130 = vector.shape_cast %129 : vector<1x1x32x128xbf16> to vector<32x128xbf16>
    %131 = vector.shape_cast %128 : vector<32x128xbf16> to vector<1x1x32x128xbf16>
    tpu.vector_store %arg5[%c1_154, %c0_155, %c0_156, %c0_157], %131 {strides = array<i32>} : memref<4x1x32x128xbf16, #tpu.memory_space<vmem>>, vector<1x1x32x128xbf16>,
    %132 = arith.mulf %127, %1 : vector<32x128xf32>
    %cst_158 = arith.constant dense<0.000000e+00> : vector<128xf32>
    %133 = vector.multi_reduction <add>, %132, %cst_158 [0] : vector<32x128xf32> to vector<128xf32>
    %134 = vector.shape_cast %133 : vector<128xf32> to vector<1x128xf32>
    %c0_159 = arith.constant 0 : index
    %c0_160 = arith.constant 0 : index
    %c1_161 = arith.constant 1 : index
    %c0_162 = arith.constant 0 : index
    %135 = vector.load %arg6[%c0_159, %c0_160, %c1_161, %c0_162] : memref<1x1x8x128xf32, #tpu.memory_space<vmem>>, vector<1x1x1x128xf32>
    %136 = vector.shape_cast %135 : vector<1x1x1x128xf32> to vector<1x128xf32>
    %137 = vector.shape_cast %134 : vector<1x128xf32> to vector<1x1x1x128xf32>
    tpu.vector_store %arg6[%c0_159, %c0_160, %c1_161, %c0_162], %137 {strides = array<i32>} : memref<1x1x8x128xf32, #tpu.memory_space<vmem>>, vector<1x1x1x128xf32>,
    %138 = arith.mulf %132, %127 : vector<32x128xf32>
    %cst_163 = arith.constant dense<0.000000e+00> : vector<128xf32>
    %139 = vector.multi_reduction <add>, %138, %cst_163 [0] : vector<32x128xf32> to vector<128xf32>
    %140 = vector.shape_cast %139 : vector<128xf32> to vector<1x128xf32>
    %c0_164 = arith.constant 0 : index
    %c0_165 = arith.constant 0 : index
    %c5_166 = arith.constant 5 : index
    %c0_167 = arith.constant 0 : index
    %141 = vector.load %arg6[%c0_164, %c0_165, %c5_166, %c0_167] : memref<1x1x8x128xf32, #tpu.memory_space<vmem>>, vector<1x1x1x128xf32>
    %142 = vector.shape_cast %141 : vector<1x1x1x128xf32> to vector<1x128xf32>
    %143 = vector.shape_cast %140 : vector<1x128xf32> to vector<1x1x1x128xf32>
    tpu.vector_store %arg6[%c0_164, %c0_165, %c5_166, %c0_167], %143 {strides = array<i32>} : memref<1x1x8x128xf32, #tpu.memory_space<vmem>>, vector<1x1x1x128xf32>,
    %cst_168 = arith.constant 0.000000e+00 : f32
    %144 = vector.broadcast %cst_168 : f32 to vector<32x128xf32>
    %c0_169 = arith.constant 0 : index
    %c0_170 = arith.constant 0 : index
    %c1937 = arith.constant 1937 : index
    %c0_171 = arith.constant 0 : index
    %145 = vector.load %arg2[%c0_169, %c0_170, %c1937, %c0_171] : memref<1x1x3072x128xbf16, #tpu.memory_space<vmem>>, vector<1x1x32x128xbf16>
    %146 = vector.shape_cast %145 : vector<1x1x32x128xbf16> to vector<32x128xbf16>
    %c2_172 = arith.constant 2 : index
    %c0_173 = arith.constant 0 : index
    %c0_174 = arith.constant 0 : index
    %c0_175 = arith.constant 0 : index
    %147 = vector.load %arg3[%c2_172, %c0_173, %c0_174, %c0_175] : memref<4x9x128x128xbf16, #tpu.memory_space<vmem>>, vector<1x1x128x128xbf16>
    %148 = vector.shape_cast %147 : vector<1x1x128x128xbf16> to vector<128x128xbf16>
    %cst_176 = arith.constant dense<0.000000e+00> : vector<32x128xf32>
    %149 = tpu.matmul %146, %148, %cst_176 {dimension_numbers = #tpu.dot_dimension_numbers<[1], [0], [0], [1], [0, 0, 1, 1], [], []>} : vector<32x128xbf16>, vector<128x128xbf16>, vector<32x128xf32> -> vector<32x128xf32>
    %150 = arith.addf %144, %149 : vector<32x128xf32>
    %c0_177 = arith.constant 0 : index
    %c0_178 = arith.constant 0 : index
    %c1940 = arith.constant 1940 : index
    %c0_179 = arith.constant 0 : index
    %151 = vector.load %arg2[%c0_177, %c0_178, %c1940, %c0_179] : memref<1x1x3072x128xbf16, #tpu.memory_space<vmem>>, vector<1x1x32x128xbf16>
    %152 = vector.shape_cast %151 : vector<1x1x32x128xbf16> to vector<32x128xbf16>
    %c2_180 = arith.constant 2 : index
    %c1_181 = arith.constant 1 : index
    %c0_182 = arith.constant 0 : index
    %c0_183 = arith.constant 0 : index
    %153 = vector.load %arg3[%c2_180, %c1_181, %c0_182, %c0_183] : memref<4x9x128x128xbf16, #tpu.memory_space<vmem>>, vector<1x1x128x128xbf16>
    %154 = vector.shape_cast %153 : vector<1x1x128x128xbf16> to vector<128x128xbf16>
    %cst_184 = arith.constant dense<0.000000e+00> : vector<32x128xf32>
    %155 = tpu.matmul %152, %154, %cst_184 {dimension_numbers = #tpu.dot_dimension_numbers<[1], [0], [0], [1], [0, 0, 1, 1], [], []>} : vector<32x128xbf16>, vector<128x128xbf16>, vector<32x128xf32> -> vector<32x128xf32>
    %156 = arith.addf %150, %155 : vector<32x128xf32>
    %c0_185 = arith.constant 0 : index
    %c0_186 = arith.constant 0 : index
    %c1943 = arith.constant 1943 : index
    %c0_187 = arith.constant 0 : index
    %157 = vector.load %arg2[%c0_185, %c0_186, %c1943, %c0_187] : memref<1x1x3072x128xbf16, #tpu.memory_space<vmem>>, vector<1x1x32x128xbf16>
    %158 = vector.shape_cast %157 : vector<1x1x32x128xbf16> to vector<32x128xbf16>
    %c2_188 = arith.constant 2 : index
    %c2_189 = arith.constant 2 : index
    %c0_190 = arith.constant 0 : index
    %c0_191 = arith.constant 0 : index
    %159 = vector.load %arg3[%c2_188, %c2_189, %c0_190, %c0_191] : memref<4x9x128x128xbf16, #tpu.memory_space<vmem>>, vector<1x1x128x128xbf16>
    %160 = vector.shape_cast %159 : vector<1x1x128x128xbf16> to vector<128x128xbf16>
    %cst_192 = arith.constant dense<0.000000e+00> : vector<32x128xf32>
    %161 = tpu.matmul %158, %160, %cst_192 {dimension_numbers = #tpu.dot_dimension_numbers<[1], [0], [0], [1], [0, 0, 1, 1], [], []>} : vector<32x128xbf16>, vector<128x128xbf16>, vector<32x128xf32> -> vector<32x128xf32>
    %162 = arith.addf %156, %161 : vector<32x128xf32>
    %c0_193 = arith.constant 0 : index
    %c0_194 = arith.constant 0 : index
    %c1985 = arith.constant 1985 : index
    %c0_195 = arith.constant 0 : index
    %163 = vector.load %arg2[%c0_193, %c0_194, %c1985, %c0_195] : memref<1x1x3072x128xbf16, #tpu.memory_space<vmem>>, vector<1x1x32x128xbf16>
    %164 = vector.shape_cast %163 : vector<1x1x32x128xbf16> to vector<32x128xbf16>
    %c2_196 = arith.constant 2 : index
    %c3_197 = arith.constant 3 : index
    %c0_198 = arith.constant 0 : index
    %c0_199 = arith.constant 0 : index
    %165 = vector.load %arg3[%c2_196, %c3_197, %c0_198, %c0_199] : memref<4x9x128x128xbf16, #tpu.memory_space<vmem>>, vector<1x1x128x128xbf16>
    %166 = vector.shape_cast %165 : vector<1x1x128x128xbf16> to vector<128x128xbf16>
    %cst_200 = arith.constant dense<0.000000e+00> : vector<32x128xf32>
    %167 = tpu.matmul %164, %166, %cst_200 {dimension_numbers = #tpu.dot_dimension_numbers<[1], [0], [0], [1], [0, 0, 1, 1], [], []>} : vector<32x128xbf16>, vector<128x128xbf16>, vector<32x128xf32> -> vector<32x128xf32>
    %168 = arith.addf %162, %167 : vector<32x128xf32>
    %c0_201 = arith.constant 0 : index
    %c0_202 = arith.constant 0 : index
    %c1988_203 = arith.constant 1988 : index
    %c0_204 = arith.constant 0 : index
    %169 = vector.load %arg2[%c0_201, %c0_202, %c1988_203, %c0_204] : memref<1x1x3072x128xbf16, #tpu.memory_space<vmem>>, vector<1x1x32x128xbf16>
    %170 = vector.shape_cast %169 : vector<1x1x32x128xbf16> to vector<32x128xbf16>
    %c2_205 = arith.constant 2 : index
    %c4_206 = arith.constant 4 : index
    %c0_207 = arith.constant 0 : index
    %c0_208 = arith.constant 0 : index
    %171 = vector.load %arg3[%c2_205, %c4_206, %c0_207, %c0_208] : memref<4x9x128x128xbf16, #tpu.memory_space<vmem>>, vector<1x1x128x128xbf16>
    %172 = vector.shape_cast %171 : vector<1x1x128x128xbf16> to vector<128x128xbf16>
    %cst_209 = arith.constant dense<0.000000e+00> : vector<32x128xf32>
    %173 = tpu.matmul %170, %172, %cst_209 {dimension_numbers = #tpu.dot_dimension_numbers<[1], [0], [0], [1], [0, 0, 1, 1], [], []>} : vector<32x128xbf16>, vector<128x128xbf16>, vector<32x128xf32> -> vector<32x128xf32>
    %174 = arith.addf %168, %173 : vector<32x128xf32>
    %c0_210 = arith.constant 0 : index
    %c0_211 = arith.constant 0 : index
    %c1991 = arith.constant 1991 : index
    %c0_212 = arith.constant 0 : index
    %175 = vector.load %arg2[%c0_210, %c0_211, %c1991, %c0_212] : memref<1x1x3072x128xbf16, #tpu.memory_space<vmem>>, vector<1x1x32x128xbf16>
    %176 = vector.shape_cast %175 : vector<1x1x32x128xbf16> to vector<32x128xbf16>
    %c2_213 = arith.constant 2 : index
    %c5_214 = arith.constant 5 : index
    %c0_215 = arith.constant 0 : index
    %c0_216 = arith.constant 0 : index
    %177 = vector.load %arg3[%c2_213, %c5_214, %c0_215, %c0_216] : memref<4x9x128x128xbf16, #tpu.memory_space<vmem>>, vector<1x1x128x128xbf16>
    %178 = vector.shape_cast %177 : vector<1x1x128x128xbf16> to vector<128x128xbf16>
    %cst_217 = arith.constant dense<0.000000e+00> : vector<32x128xf32>
    %179 = tpu.matmul %176, %178, %cst_217 {dimension_numbers = #tpu.dot_dimension_numbers<[1], [0], [0], [1], [0, 0, 1, 1], [], []>} : vector<32x128xbf16>, vector<128x128xbf16>, vector<32x128xf32> -> vector<32x128xf32>
    %180 = arith.addf %174, %179 : vector<32x128xf32>
    %c0_218 = arith.constant 0 : index
    %c0_219 = arith.constant 0 : index
    %c2033 = arith.constant 2033 : index
    %c0_220 = arith.constant 0 : index
    %181 = vector.load %arg2[%c0_218, %c0_219, %c2033, %c0_220] : memref<1x1x3072x128xbf16, #tpu.memory_space<vmem>>, vector<1x1x32x128xbf16>
    %182 = vector.shape_cast %181 : vector<1x1x32x128xbf16> to vector<32x128xbf16>
    %c2_221 = arith.constant 2 : index
    %c6_222 = arith.constant 6 : index
    %c0_223 = arith.constant 0 : index
    %c0_224 = arith.constant 0 : index
    %183 = vector.load %arg3[%c2_221, %c6_222, %c0_223, %c0_224] : memref<4x9x128x128xbf16, #tpu.memory_space<vmem>>, vector<1x1x128x128xbf16>
    %184 = vector.shape_cast %183 : vector<1x1x128x128xbf16> to vector<128x128xbf16>
    %cst_225 = arith.constant dense<0.000000e+00> : vector<32x128xf32>
    %185 = tpu.matmul %182, %184, %cst_225 {dimension_numbers = #tpu.dot_dimension_numbers<[1], [0], [0], [1], [0, 0, 1, 1], [], []>} : vector<32x128xbf16>, vector<128x128xbf16>, vector<32x128xf32> -> vector<32x128xf32>
    %186 = arith.addf %180, %185 : vector<32x128xf32>
    %c0_226 = arith.constant 0 : index
    %c0_227 = arith.constant 0 : index
    %c2036 = arith.constant 2036 : index
    %c0_228 = arith.constant 0 : index
    %187 = vector.load %arg2[%c0_226, %c0_227, %c2036, %c0_228] : memref<1x1x3072x128xbf16, #tpu.memory_space<vmem>>, vector<1x1x32x128xbf16>
    %188 = vector.shape_cast %187 : vector<1x1x32x128xbf16> to vector<32x128xbf16>
    %c2_229 = arith.constant 2 : index
    %c7_230 = arith.constant 7 : index
    %c0_231 = arith.constant 0 : index
    %c0_232 = arith.constant 0 : index
    %189 = vector.load %arg3[%c2_229, %c7_230, %c0_231, %c0_232] : memref<4x9x128x128xbf16, #tpu.memory_space<vmem>>, vector<1x1x128x128xbf16>
    %190 = vector.shape_cast %189 : vector<1x1x128x128xbf16> to vector<128x128xbf16>
    %cst_233 = arith.constant dense<0.000000e+00> : vector<32x128xf32>
    %191 = tpu.matmul %188, %190, %cst_233 {dimension_numbers = #tpu.dot_dimension_numbers<[1], [0], [0], [1], [0, 0, 1, 1], [], []>} : vector<32x128xbf16>, vector<128x128xbf16>, vector<32x128xf32> -> vector<32x128xf32>
    %192 = arith.addf %186, %191 : vector<32x128xf32>
    %c0_234 = arith.constant 0 : index
    %c0_235 = arith.constant 0 : index
    %c2039 = arith.constant 2039 : index
    %c0_236 = arith.constant 0 : index
    %193 = vector.load %arg2[%c0_234, %c0_235, %c2039, %c0_236] : memref<1x1x3072x128xbf16, #tpu.memory_space<vmem>>, vector<1x1x32x128xbf16>
    %194 = vector.shape_cast %193 : vector<1x1x32x128xbf16> to vector<32x128xbf16>
    %c2_237 = arith.constant 2 : index
    %c8_238 = arith.constant 8 : index
    %c0_239 = arith.constant 0 : index
    %c0_240 = arith.constant 0 : index
    %195 = vector.load %arg3[%c2_237, %c8_238, %c0_239, %c0_240] : memref<4x9x128x128xbf16, #tpu.memory_space<vmem>>, vector<1x1x128x128xbf16>
    %196 = vector.shape_cast %195 : vector<1x1x128x128xbf16> to vector<128x128xbf16>
    %cst_241 = arith.constant dense<0.000000e+00> : vector<32x128xf32>
    %197 = tpu.matmul %194, %196, %cst_241 {dimension_numbers = #tpu.dot_dimension_numbers<[1], [0], [0], [1], [0, 0, 1, 1], [], []>} : vector<32x128xbf16>, vector<128x128xbf16>, vector<32x128xf32> -> vector<32x128xf32>
    %198 = arith.addf %192, %197 : vector<32x128xf32>
    %199 = arith.truncf %198 : vector<32x128xf32> to vector<32x128xbf16>
    %c2_242 = arith.constant 2 : index
    %c0_243 = arith.constant 0 : index
    %c0_244 = arith.constant 0 : index
    %c0_245 = arith.constant 0 : index
    %200 = vector.load %arg5[%c2_242, %c0_243, %c0_244, %c0_245] : memref<4x1x32x128xbf16, #tpu.memory_space<vmem>>, vector<1x1x32x128xbf16>
    %201 = vector.shape_cast %200 : vector<1x1x32x128xbf16> to vector<32x128xbf16>
    %202 = vector.shape_cast %199 : vector<32x128xbf16> to vector<1x1x32x128xbf16>
    tpu.vector_store %arg5[%c2_242, %c0_243, %c0_244, %c0_245], %202 {strides = array<i32>} : memref<4x1x32x128xbf16, #tpu.memory_space<vmem>>, vector<1x1x32x128xbf16>,
    %203 = arith.mulf %198, %1 : vector<32x128xf32>
    %cst_246 = arith.constant dense<0.000000e+00> : vector<128xf32>
    %204 = vector.multi_reduction <add>, %203, %cst_246 [0] : vector<32x128xf32> to vector<128xf32>
    %205 = vector.shape_cast %204 : vector<128xf32> to vector<1x128xf32>
    %c0_247 = arith.constant 0 : index
    %c0_248 = arith.constant 0 : index
    %c2_249 = arith.constant 2 : index
    %c0_250 = arith.constant 0 : index
    %206 = vector.load %arg6[%c0_247, %c0_248, %c2_249, %c0_250] : memref<1x1x8x128xf32, #tpu.memory_space<vmem>>, vector<1x1x1x128xf32>
    %207 = vector.shape_cast %206 : vector<1x1x1x128xf32> to vector<1x128xf32>
    %208 = vector.shape_cast %205 : vector<1x128xf32> to vector<1x1x1x128xf32>
    tpu.vector_store %arg6[%c0_247, %c0_248, %c2_249, %c0_250], %208 {strides = array<i32>} : memref<1x1x8x128xf32, #tpu.memory_space<vmem>>, vector<1x1x1x128xf32>,
    %209 = arith.mulf %203, %198 : vector<32x128xf32>
    %cst_251 = arith.constant dense<0.000000e+00> : vector<128xf32>
    %210 = vector.multi_reduction <add>, %209, %cst_251 [0] : vector<32x128xf32> to vector<128xf32>
    %211 = vector.shape_cast %210 : vector<128xf32> to vector<1x128xf32>
    %c0_252 = arith.constant 0 : index
    %c0_253 = arith.constant 0 : index
    %c6_254 = arith.constant 6 : index
    %c0_255 = arith.constant 0 : index
    %212 = vector.load %arg6[%c0_252, %c0_253, %c6_254, %c0_255] : memref<1x1x8x128xf32, #tpu.memory_space<vmem>>, vector<1x1x1x128xf32>
    %213 = vector.shape_cast %212 : vector<1x1x1x128xf32> to vector<1x128xf32>
    %214 = vector.shape_cast %211 : vector<1x128xf32> to vector<1x1x1x128xf32>
    tpu.vector_store %arg6[%c0_252, %c0_253, %c6_254, %c0_255], %214 {strides = array<i32>} : memref<1x1x8x128xf32, #tpu.memory_space<vmem>>, vector<1x1x1x128xf32>,
    %cst_256 = arith.constant 0.000000e+00 : f32
    %215 = vector.broadcast %cst_256 : f32 to vector<32x128xf32>
    %c0_257 = arith.constant 0 : index
    %c0_258 = arith.constant 0 : index
    %c0_259 = arith.constant 0 : index
    %c0_260 = arith.constant 0 : index
    %216 = vector.load %arg2[%c0_257, %c0_258, %c0_259, %c0_260] : memref<1x1x3072x128xbf16, #tpu.memory_space<vmem>>, vector<1x1x32x128xbf16>
    %217 = vector.shape_cast %216 : vector<1x1x32x128xbf16> to vector<32x128xbf16>
    %c3_261 = arith.constant 3 : index
    %c0_262 = arith.constant 0 : index
    %c0_263 = arith.constant 0 : index
    %c0_264 = arith.constant 0 : index
    %218 = vector.load %arg3[%c3_261, %c0_262, %c0_263, %c0_264] : memref<4x9x128x128xbf16, #tpu.memory_space<vmem>>, vector<1x1x128x128xbf16>
    %219 = vector.shape_cast %218 : vector<1x1x128x128xbf16> to vector<128x128xbf16>
    %cst_265 = arith.constant dense<0.000000e+00> : vector<32x128xf32>
    %220 = tpu.matmul %217, %219, %cst_265 {dimension_numbers = #tpu.dot_dimension_numbers<[1], [0], [0], [1], [0, 0, 1, 1], [], []>} : vector<32x128xbf16>, vector<128x128xbf16>, vector<32x128xf32> -> vector<32x128xf32>
    %221 = arith.addf %215, %220 : vector<32x128xf32>
    %c0_266 = arith.constant 0 : index
    %c0_267 = arith.constant 0 : index
    %c388 = arith.constant 388 : index
    %c0_268 = arith.constant 0 : index
    %222 = vector.load %arg2[%c0_266, %c0_267, %c388, %c0_268] : memref<1x1x3072x128xbf16, #tpu.memory_space<vmem>>, vector<1x1x32x128xbf16>
    %223 = vector.shape_cast %222 : vector<1x1x32x128xbf16> to vector<32x128xbf16>
    %c3_269 = arith.constant 3 : index
    %c1_270 = arith.constant 1 : index
    %c0_271 = arith.constant 0 : index
    %c0_272 = arith.constant 0 : index
    %224 = vector.load %arg3[%c3_269, %c1_270, %c0_271, %c0_272] : memref<4x9x128x128xbf16, #tpu.memory_space<vmem>>, vector<1x1x128x128xbf16>
    %225 = vector.shape_cast %224 : vector<1x1x128x128xbf16> to vector<128x128xbf16>
    %cst_273 = arith.constant dense<0.000000e+00> : vector<32x128xf32>
    %226 = tpu.matmul %223, %225, %cst_273 {dimension_numbers = #tpu.dot_dimension_numbers<[1], [0], [0], [1], [0, 0, 1, 1], [], []>} : vector<32x128xbf16>, vector<128x128xbf16>, vector<32x128xf32> -> vector<32x128xf32>
    %227 = arith.addf %221, %226 : vector<32x128xf32>
    %c0_274 = arith.constant 0 : index
    %c0_275 = arith.constant 0 : index
    %c9 = arith.constant 9 : index
    %c0_276 = arith.constant 0 : index
    %228 = vector.load %arg2[%c0_274, %c0_275, %c9, %c0_276] : memref<1x1x3072x128xbf16, #tpu.memory_space<vmem>>, vector<1x1x32x128xbf16>
    %229 = vector.shape_cast %228 : vector<1x1x32x128xbf16> to vector<32x128xbf16>
    %c3_277 = arith.constant 3 : index
    %c2_278 = arith.constant 2 : index
    %c0_279 = arith.constant 0 : index
    %c0_280 = arith.constant 0 : index
    %230 = vector.load %arg3[%c3_277, %c2_278, %c0_279, %c0_280] : memref<4x9x128x128xbf16, #tpu.memory_space<vmem>>, vector<1x1x128x128xbf16>
    %231 = vector.shape_cast %230 : vector<1x1x128x128xbf16> to vector<128x128xbf16>
    %cst_281 = arith.constant dense<0.000000e+00> : vector<32x128xf32>
    %232 = tpu.matmul %229, %231, %cst_281 {dimension_numbers = #tpu.dot_dimension_numbers<[1], [0], [0], [1], [0, 0, 1, 1], [], []>} : vector<32x128xbf16>, vector<128x128xbf16>, vector<32x128xf32> -> vector<32x128xf32>
    %233 = arith.addf %227, %232 : vector<32x128xf32>
    %c0_282 = arith.constant 0 : index
    %c0_283 = arith.constant 0 : index
    %c1600 = arith.constant 1600 : index
    %c0_284 = arith.constant 0 : index
    %234 = vector.load %arg2[%c0_282, %c0_283, %c1600, %c0_284] : memref<1x1x3072x128xbf16, #tpu.memory_space<vmem>>, vector<1x1x32x128xbf16>
    %235 = vector.shape_cast %234 : vector<1x1x32x128xbf16> to vector<32x128xbf16>
    %c3_285 = arith.constant 3 : index
    %c3_286 = arith.constant 3 : index
    %c0_287 = arith.constant 0 : index
    %c0_288 = arith.constant 0 : index
    %236 = vector.load %arg3[%c3_285, %c3_286, %c0_287, %c0_288] : memref<4x9x128x128xbf16, #tpu.memory_space<vmem>>, vector<1x1x128x128xbf16>
    %237 = vector.shape_cast %236 : vector<1x1x128x128xbf16> to vector<128x128xbf16>
    %cst_289 = arith.constant dense<0.000000e+00> : vector<32x128xf32>
    %238 = tpu.matmul %235, %237, %cst_289 {dimension_numbers = #tpu.dot_dimension_numbers<[1], [0], [0], [1], [0, 0, 1, 1], [], []>} : vector<32x128xbf16>, vector<128x128xbf16>, vector<32x128xf32> -> vector<32x128xf32>
    %239 = arith.addf %233, %238 : vector<32x128xf32>
    %c0_290 = arith.constant 0 : index
    %c0_291 = arith.constant 0 : index
    %c1988_292 = arith.constant 1988 : index
    %c0_293 = arith.constant 0 : index
    %240 = vector.load %arg2[%c0_290, %c0_291, %c1988_292, %c0_293] : memref<1x1x3072x128xbf16, #tpu.memory_space<vmem>>, vector<1x1x32x128xbf16>
    %241 = vector.shape_cast %240 : vector<1x1x32x128xbf16> to vector<32x128xbf16>
    %c3_294 = arith.constant 3 : index
    %c4_295 = arith.constant 4 : index
    %c0_296 = arith.constant 0 : index
    %c0_297 = arith.constant 0 : index
    %242 = vector.load %arg3[%c3_294, %c4_295, %c0_296, %c0_297] : memref<4x9x128x128xbf16, #tpu.memory_space<vmem>>, vector<1x1x128x128xbf16>
    %243 = vector.shape_cast %242 : vector<1x1x128x128xbf16> to vector<128x128xbf16>
    %cst_298 = arith.constant dense<0.000000e+00> : vector<32x128xf32>
    %244 = tpu.matmul %241, %243, %cst_298 {dimension_numbers = #tpu.dot_dimension_numbers<[1], [0], [0], [1], [0, 0, 1, 1], [], []>} : vector<32x128xbf16>, vector<128x128xbf16>, vector<32x128xf32> -> vector<32x128xf32>
    %245 = arith.addf %239, %244 : vector<32x128xf32>
    %c0_299 = arith.constant 0 : index
    %c0_300 = arith.constant 0 : index
    %c1609 = arith.constant 1609 : index
    %c0_301 = arith.constant 0 : index
    %246 = vector.load %arg2[%c0_299, %c0_300, %c1609, %c0_301] : memref<1x1x3072x128xbf16, #tpu.memory_space<vmem>>, vector<1x1x32x128xbf16>
    %247 = vector.shape_cast %246 : vector<1x1x32x128xbf16> to vector<32x128xbf16>
    %c3_302 = arith.constant 3 : index
    %c5_303 = arith.constant 5 : index
    %c0_304 = arith.constant 0 : index
    %c0_305 = arith.constant 0 : index
    %248 = vector.load %arg3[%c3_302, %c5_303, %c0_304, %c0_305] : memref<4x9x128x128xbf16, #tpu.memory_space<vmem>>, vector<1x1x128x128xbf16>
    %249 = vector.shape_cast %248 : vector<1x1x128x128xbf16> to vector<128x128xbf16>
    %cst_306 = arith.constant dense<0.000000e+00> : vector<32x128xf32>
    %250 = tpu.matmul %247, %249, %cst_306 {dimension_numbers = #tpu.dot_dimension_numbers<[1], [0], [0], [1], [0, 0, 1, 1], [], []>} : vector<32x128xbf16>, vector<128x128xbf16>, vector<32x128xf32> -> vector<32x128xf32>
    %251 = arith.addf %245, %250 : vector<32x128xf32>
    %c0_307 = arith.constant 0 : index
    %c0_308 = arith.constant 0 : index
    %c144 = arith.constant 144 : index
    %c0_309 = arith.constant 0 : index
    %252 = vector.load %arg2[%c0_307, %c0_308, %c144, %c0_309] : memref<1x1x3072x128xbf16, #tpu.memory_space<vmem>>, vector<1x1x32x128xbf16>
    %253 = vector.shape_cast %252 : vector<1x1x32x128xbf16> to vector<32x128xbf16>
    %c3_310 = arith.constant 3 : index
    %c6_311 = arith.constant 6 : index
    %c0_312 = arith.constant 0 : index
    %c0_313 = arith.constant 0 : index
    %254 = vector.load %arg3[%c3_310, %c6_311, %c0_312, %c0_313] : memref<4x9x128x128xbf16, #tpu.memory_space<vmem>>, vector<1x1x128x128xbf16>
    %255 = vector.shape_cast %254 : vector<1x1x128x128xbf16> to vector<128x128xbf16>
    %cst_314 = arith.constant dense<0.000000e+00> : vector<32x128xf32>
    %256 = tpu.matmul %253, %255, %cst_314 {dimension_numbers = #tpu.dot_dimension_numbers<[1], [0], [0], [1], [0, 0, 1, 1], [], []>} : vector<32x128xbf16>, vector<128x128xbf16>, vector<32x128xf32> -> vector<32x128xf32>
    %257 = arith.addf %251, %256 : vector<32x128xf32>
    %c0_315 = arith.constant 0 : index
    %c0_316 = arith.constant 0 : index
    %c532 = arith.constant 532 : index
    %c0_317 = arith.constant 0 : index
    %258 = vector.load %arg2[%c0_315, %c0_316, %c532, %c0_317] : memref<1x1x3072x128xbf16, #tpu.memory_space<vmem>>, vector<1x1x32x128xbf16>
    %259 = vector.shape_cast %258 : vector<1x1x32x128xbf16> to vector<32x128xbf16>
    %c3_318 = arith.constant 3 : index
    %c7_319 = arith.constant 7 : index
    %c0_320 = arith.constant 0 : index
    %c0_321 = arith.constant 0 : index
    %260 = vector.load %arg3[%c3_318, %c7_319, %c0_320, %c0_321] : memref<4x9x128x128xbf16, #tpu.memory_space<vmem>>, vector<1x1x128x128xbf16>
    %261 = vector.shape_cast %260 : vector<1x1x128x128xbf16> to vector<128x128xbf16>
    %cst_322 = arith.constant dense<0.000000e+00> : vector<32x128xf32>
    %262 = tpu.matmul %259, %261, %cst_322 {dimension_numbers = #tpu.dot_dimension_numbers<[1], [0], [0], [1], [0, 0, 1, 1], [], []>} : vector<32x128xbf16>, vector<128x128xbf16>, vector<32x128xf32> -> vector<32x128xf32>
    %263 = arith.addf %257, %262 : vector<32x128xf32>
    %c0_323 = arith.constant 0 : index
    %c0_324 = arith.constant 0 : index
    %c153 = arith.constant 153 : index
    %c0_325 = arith.constant 0 : index
    %264 = vector.load %arg2[%c0_323, %c0_324, %c153, %c0_325] : memref<1x1x3072x128xbf16, #tpu.memory_space<vmem>>, vector<1x1x32x128xbf16>
    %265 = vector.shape_cast %264 : vector<1x1x32x128xbf16> to vector<32x128xbf16>
    %c3_326 = arith.constant 3 : index
    %c8_327 = arith.constant 8 : index
    %c0_328 = arith.constant 0 : index
    %c0_329 = arith.constant 0 : index
    %266 = vector.load %arg3[%c3_326, %c8_327, %c0_328, %c0_329] : memref<4x9x128x128xbf16, #tpu.memory_space<vmem>>, vector<1x1x128x128xbf16>
    %267 = vector.shape_cast %266 : vector<1x1x128x128xbf16> to vector<128x128xbf16>
    %cst_330 = arith.constant dense<0.000000e+00> : vector<32x128xf32>
    %268 = tpu.matmul %265, %267, %cst_330 {dimension_numbers = #tpu.dot_dimension_numbers<[1], [0], [0], [1], [0, 0, 1, 1], [], []>} : vector<32x128xbf16>, vector<128x128xbf16>, vector<32x128xf32> -> vector<32x128xf32>
    %269 = arith.addf %263, %268 : vector<32x128xf32>
    %270 = arith.truncf %269 : vector<32x128xf32> to vector<32x128xbf16>
    %c3_331 = arith.constant 3 : index
    %c0_332 = arith.constant 0 : index
    %c0_333 = arith.constant 0 : index
    %c0_334 = arith.constant 0 : index
    %271 = vector.load %arg5[%c3_331, %c0_332, %c0_333, %c0_334] : memref<4x1x32x128xbf16, #tpu.memory_space<vmem>>, vector<1x1x32x128xbf16>
    %272 = vector.shape_cast %271 : vector<1x1x32x128xbf16> to vector<32x128xbf16>
    %273 = vector.shape_cast %270 : vector<32x128xbf16> to vector<1x1x32x128xbf16>
    tpu.vector_store %arg5[%c3_331, %c0_332, %c0_333, %c0_334], %273 {strides = array<i32>} : memref<4x1x32x128xbf16, #tpu.memory_space<vmem>>, vector<1x1x32x128xbf16>,
    %274 = arith.mulf %269, %1 : vector<32x128xf32>
    %cst_335 = arith.constant dense<0.000000e+00> : vector<128xf32>
    %275 = vector.multi_reduction <add>, %274, %cst_335 [0] : vector<32x128xf32> to vector<128xf32>
    %276 = vector.shape_cast %275 : vector<128xf32> to vector<1x128xf32>
    %c0_336 = arith.constant 0 : index
    %c0_337 = arith.constant 0 : index
    %c3_338 = arith.constant 3 : index
    %c0_339 = arith.constant 0 : index
    %277 = vector.load %arg6[%c0_336, %c0_337, %c3_338, %c0_339] : memref<1x1x8x128xf32, #tpu.memory_space<vmem>>, vector<1x1x1x128xf32>
    %278 = vector.shape_cast %277 : vector<1x1x1x128xf32> to vector<1x128xf32>
    %279 = vector.shape_cast %276 : vector<1x128xf32> to vector<1x1x1x128xf32>
    tpu.vector_store %arg6[%c0_336, %c0_337, %c3_338, %c0_339], %279 {strides = array<i32>} : memref<1x1x8x128xf32, #tpu.memory_space<vmem>>, vector<1x1x1x128xf32>,
    %280 = arith.mulf %274, %269 : vector<32x128xf32>
    %cst_340 = arith.constant dense<0.000000e+00> : vector<128xf32>
    %281 = vector.multi_reduction <add>, %280, %cst_340 [0] : vector<32x128xf32> to vector<128xf32>
    %282 = vector.shape_cast %281 : vector<128xf32> to vector<1x128xf32>
    %c0_341 = arith.constant 0 : index
    %c0_342 = arith.constant 0 : index
    %c7_343 = arith.constant 7 : index
    %c0_344 = arith.constant 0 : index
    %283 = vector.load %arg6[%c0_341, %c0_342, %c7_343, %c0_344] : memref<1x1x8x128xf32, #tpu.memory_space<vmem>>, vector<1x1x1x128xf32>
    %284 = vector.shape_cast %283 : vector<1x1x1x128xf32> to vector<1x128xf32>
    %285 = vector.shape_cast %282 : vector<1x128xf32> to vector<1x1x1x128xf32>
    tpu.vector_store %arg6[%c0_341, %c0_342, %c7_343, %c0_344], %285 {strides = array<i32>} : memref<1x1x8x128xf32, #tpu.memory_space<vmem>>, vector<1x1x1x128xf32>,
    return
  }
  func.func @transform_0(%arg0: i32, %arg1: i32) -> (i32, i32, i32, i32) {
    %c0_i32 = arith.constant 0 : i32
    %c0_i32_0 = arith.constant 0 : i32
    %c0_i32_1 = arith.constant 0 : i32
    return %arg0, %arg1, %c0_i32, %c0_i32_0 : i32, i32, i32, i32
  }
  func.func @transform_1(%arg0: i32, %arg1: i32) -> (i32, i32, i32, i32) {
    %c0_i32 = arith.constant 0 : i32
    %c0_i32_0 = arith.constant 0 : i32
    %c0_i32_1 = arith.constant 0 : i32
    %c0_i32_2 = arith.constant 0 : i32
    %c0_i32_3 = arith.constant 0 : i32
    return %c0_i32, %c0_i32_0, %c0_i32_1, %c0_i32_2 : i32, i32, i32, i32
  }
  func.func @transform_2(%arg0: i32, %arg1: i32) -> (i32, i32, i32) {
    %c0_i32 = arith.constant 0 : i32
    %c0_i32_0 = arith.constant 0 : i32
    %c0_i32_1 = arith.constant 0 : i32
    return %arg1, %c0_i32, %c0_i32_0 : i32, i32, i32
  }
  func.func @transform_3(%arg0: i32, %arg1: i32) -> (i32, i32, i32, i32) {
    %c0_i32 = arith.constant 0 : i32
    %c0_i32_0 = arith.constant 0 : i32
    %c0_i32_1 = arith.constant 0 : i32
    return %c0_i32, %arg0, %arg1, %c0_i32_0 : i32, i32, i32, i32
  }
  func.func @transform_4(%arg0: i32, %arg1: i32) -> (i32, i32, i32, i32) {
    %c0_i32 = arith.constant 0 : i32
    %c0_i32_0 = arith.constant 0 : i32
    %c0_i32_1 = arith.constant 0 : i32
    return %arg0, %arg1, %c0_i32, %c0_i32_0 : i32, i32, i32, i32
  }
}

module attributes {stable_mosaic.version = 11 : i64} {
  func.func @_norm_final_kernel(%arg0: i32, %arg1: i32, %arg2: memref<4x1x32x128xbf16, #tpu.memory_space<vmem>>, %arg3: memref<1x32x128xbf16, #tpu.memory_space<vmem>>, %arg4: memref<1x4x128xf32, #tpu.memory_space<vmem>>, %arg5: memref<1x4x128xf32, #tpu.memory_space<vmem>>, %arg6: memref<5x128x128xbf16, #tpu.memory_space<vmem>>, %arg7: memref<1x128xf32, #tpu.memory_space<vmem>>, %arg8: memref<1x32x128xf32, #tpu.memory_space<vmem>>) attributes {dimension_semantics = [#tpu.dimension_semantics<parallel>, #tpu.dimension_semantics<parallel>], iteration_bounds = array<i64: 2, 2>, scalar_prefetch = 0 : i64, scratch_operands = 0 : i64, tpu.core_type = #tpu.core_type<tc>, window_params = [{transform_indices = @transform_0, window_bounds = array<i64: 4, 1, 32, 128>}, {transform_indices = @transform_1, window_bounds = array<i64: 1, 32, 128>}, {transform_indices = @transform_2, window_bounds = array<i64: 1, 4, 128>}, {transform_indices = @transform_3, window_bounds = array<i64: 1, 4, 128>}, {pipeline_mode = #tpu.pipeline_mode<synchronous>, transform_indices = @transform_4, window_bounds = array<i64: 5, 128, 128>}, {pipeline_mode = #tpu.pipeline_mode<synchronous>, transform_indices = @transform_5, window_bounds = array<i64: 1, 128>}, {transform_indices = @transform_6, window_bounds = array<i64: 1, 32, 128>}]} {
    %cst = arith.constant 0.000000e+00 : f32
    %0 = vector.broadcast %cst : f32 to vector<32x128xf32>
    %c0 = arith.constant 0 : index
    %c0_0 = arith.constant 0 : index
    %c0_1 = arith.constant 0 : index
    %c0_2 = arith.constant 0 : index
    %1 = vector.load %arg2[%c0, %c0_0, %c0_1, %c0_2] : memref<4x1x32x128xbf16, #tpu.memory_space<vmem>>, vector<1x1x32x128xbf16>
    %2 = vector.shape_cast %1 : vector<1x1x32x128xbf16> to vector<32x128xbf16>
    %3 = arith.extf %2 : vector<32x128xbf16> to vector<32x128xf32>
    %c0_3 = arith.constant 0 : index
    %c0_4 = arith.constant 0 : index
    %c0_5 = arith.constant 0 : index
    %4 = vector.load %arg4[%c0_3, %c0_4, %c0_5] : memref<1x4x128xf32, #tpu.memory_space<vmem>>, vector<1x1x128xf32>
    %5 = vector.shape_cast %4 : vector<1x1x128xf32> to vector<1x128xf32>
    %6 = vector.broadcast %5 : vector<1x128xf32> to vector<32x128xf32>
    %7 = arith.mulf %3, %6 : vector<32x128xf32>
    %c0_6 = arith.constant 0 : index
    %c0_7 = arith.constant 0 : index
    %c0_8 = arith.constant 0 : index
    %8 = vector.load %arg5[%c0_6, %c0_7, %c0_8] : memref<1x4x128xf32, #tpu.memory_space<vmem>>, vector<1x1x128xf32>
    %9 = vector.shape_cast %8 : vector<1x1x128xf32> to vector<1x128xf32>
    %10 = vector.broadcast %9 : vector<1x128xf32> to vector<32x128xf32>
    %11 = arith.addf %7, %10 : vector<32x128xf32>
    %cst_9 = arith.constant 0.000000e+00 : f32
    %12 = vector.broadcast %cst_9 : f32 to vector<32x128xf32>
    %13 = arith.maximumf %11, %12 : vector<32x128xf32>
    %14 = arith.truncf %13 : vector<32x128xf32> to vector<32x128xbf16>
    %c0_10 = arith.constant 0 : index
    %c0_11 = arith.constant 0 : index
    %c0_12 = arith.constant 0 : index
    %15 = vector.load %arg6[%c0_10, %c0_11, %c0_12] : memref<5x128x128xbf16, #tpu.memory_space<vmem>>, vector<1x128x128xbf16>
    %16 = vector.shape_cast %15 : vector<1x128x128xbf16> to vector<128x128xbf16>
    %cst_13 = arith.constant dense<0.000000e+00> : vector<32x128xf32>
    %17 = tpu.matmul %14, %16, %cst_13 {dimension_numbers = #tpu.dot_dimension_numbers<[1], [0], [0], [1], [0, 0, 1, 1], [], []>} : vector<32x128xbf16>, vector<128x128xbf16>, vector<32x128xf32> -> vector<32x128xf32>
    %18 = arith.addf %0, %17 : vector<32x128xf32>
    %c1 = arith.constant 1 : index
    %c0_14 = arith.constant 0 : index
    %c0_15 = arith.constant 0 : index
    %c0_16 = arith.constant 0 : index
    %19 = vector.load %arg2[%c1, %c0_14, %c0_15, %c0_16] : memref<4x1x32x128xbf16, #tpu.memory_space<vmem>>, vector<1x1x32x128xbf16>
    %20 = vector.shape_cast %19 : vector<1x1x32x128xbf16> to vector<32x128xbf16>
    %21 = arith.extf %20 : vector<32x128xbf16> to vector<32x128xf32>
    %c0_17 = arith.constant 0 : index
    %c1_18 = arith.constant 1 : index
    %c0_19 = arith.constant 0 : index
    %22 = vector.load %arg4[%c0_17, %c1_18, %c0_19] : memref<1x4x128xf32, #tpu.memory_space<vmem>>, vector<1x1x128xf32>
    %23 = vector.shape_cast %22 : vector<1x1x128xf32> to vector<1x128xf32>
    %24 = vector.broadcast %23 : vector<1x128xf32> to vector<32x128xf32>
    %25 = arith.mulf %21, %24 : vector<32x128xf32>
    %c0_20 = arith.constant 0 : index
    %c1_21 = arith.constant 1 : index
    %c0_22 = arith.constant 0 : index
    %26 = vector.load %arg5[%c0_20, %c1_21, %c0_22] : memref<1x4x128xf32, #tpu.memory_space<vmem>>, vector<1x1x128xf32>
    %27 = vector.shape_cast %26 : vector<1x1x128xf32> to vector<1x128xf32>
    %28 = vector.broadcast %27 : vector<1x128xf32> to vector<32x128xf32>
    %29 = arith.addf %25, %28 : vector<32x128xf32>
    %cst_23 = arith.constant 0.000000e+00 : f32
    %30 = vector.broadcast %cst_23 : f32 to vector<32x128xf32>
    %31 = arith.maximumf %29, %30 : vector<32x128xf32>
    %32 = arith.truncf %31 : vector<32x128xf32> to vector<32x128xbf16>
    %c1_24 = arith.constant 1 : index
    %c0_25 = arith.constant 0 : index
    %c0_26 = arith.constant 0 : index
    %33 = vector.load %arg6[%c1_24, %c0_25, %c0_26] : memref<5x128x128xbf16, #tpu.memory_space<vmem>>, vector<1x128x128xbf16>
    %34 = vector.shape_cast %33 : vector<1x128x128xbf16> to vector<128x128xbf16>
    %cst_27 = arith.constant dense<0.000000e+00> : vector<32x128xf32>
    %35 = tpu.matmul %32, %34, %cst_27 {dimension_numbers = #tpu.dot_dimension_numbers<[1], [0], [0], [1], [0, 0, 1, 1], [], []>} : vector<32x128xbf16>, vector<128x128xbf16>, vector<32x128xf32> -> vector<32x128xf32>
    %36 = arith.addf %18, %35 : vector<32x128xf32>
    %c2 = arith.constant 2 : index
    %c0_28 = arith.constant 0 : index
    %c0_29 = arith.constant 0 : index
    %c0_30 = arith.constant 0 : index
    %37 = vector.load %arg2[%c2, %c0_28, %c0_29, %c0_30] : memref<4x1x32x128xbf16, #tpu.memory_space<vmem>>, vector<1x1x32x128xbf16>
    %38 = vector.shape_cast %37 : vector<1x1x32x128xbf16> to vector<32x128xbf16>
    %39 = arith.extf %38 : vector<32x128xbf16> to vector<32x128xf32>
    %c0_31 = arith.constant 0 : index
    %c2_32 = arith.constant 2 : index
    %c0_33 = arith.constant 0 : index
    %40 = vector.load %arg4[%c0_31, %c2_32, %c0_33] : memref<1x4x128xf32, #tpu.memory_space<vmem>>, vector<1x1x128xf32>
    %41 = vector.shape_cast %40 : vector<1x1x128xf32> to vector<1x128xf32>
    %42 = vector.broadcast %41 : vector<1x128xf32> to vector<32x128xf32>
    %43 = arith.mulf %39, %42 : vector<32x128xf32>
    %c0_34 = arith.constant 0 : index
    %c2_35 = arith.constant 2 : index
    %c0_36 = arith.constant 0 : index
    %44 = vector.load %arg5[%c0_34, %c2_35, %c0_36] : memref<1x4x128xf32, #tpu.memory_space<vmem>>, vector<1x1x128xf32>
    %45 = vector.shape_cast %44 : vector<1x1x128xf32> to vector<1x128xf32>
    %46 = vector.broadcast %45 : vector<1x128xf32> to vector<32x128xf32>
    %47 = arith.addf %43, %46 : vector<32x128xf32>
    %cst_37 = arith.constant 0.000000e+00 : f32
    %48 = vector.broadcast %cst_37 : f32 to vector<32x128xf32>
    %49 = arith.maximumf %47, %48 : vector<32x128xf32>
    %50 = arith.truncf %49 : vector<32x128xf32> to vector<32x128xbf16>
    %c2_38 = arith.constant 2 : index
    %c0_39 = arith.constant 0 : index
    %c0_40 = arith.constant 0 : index
    %51 = vector.load %arg6[%c2_38, %c0_39, %c0_40] : memref<5x128x128xbf16, #tpu.memory_space<vmem>>, vector<1x128x128xbf16>
    %52 = vector.shape_cast %51 : vector<1x128x128xbf16> to vector<128x128xbf16>
    %cst_41 = arith.constant dense<0.000000e+00> : vector<32x128xf32>
    %53 = tpu.matmul %50, %52, %cst_41 {dimension_numbers = #tpu.dot_dimension_numbers<[1], [0], [0], [1], [0, 0, 1, 1], [], []>} : vector<32x128xbf16>, vector<128x128xbf16>, vector<32x128xf32> -> vector<32x128xf32>
    %54 = arith.addf %36, %53 : vector<32x128xf32>
    %c3 = arith.constant 3 : index
    %c0_42 = arith.constant 0 : index
    %c0_43 = arith.constant 0 : index
    %c0_44 = arith.constant 0 : index
    %55 = vector.load %arg2[%c3, %c0_42, %c0_43, %c0_44] : memref<4x1x32x128xbf16, #tpu.memory_space<vmem>>, vector<1x1x32x128xbf16>
    %56 = vector.shape_cast %55 : vector<1x1x32x128xbf16> to vector<32x128xbf16>
    %57 = arith.extf %56 : vector<32x128xbf16> to vector<32x128xf32>
    %c0_45 = arith.constant 0 : index
    %c3_46 = arith.constant 3 : index
    %c0_47 = arith.constant 0 : index
    %58 = vector.load %arg4[%c0_45, %c3_46, %c0_47] : memref<1x4x128xf32, #tpu.memory_space<vmem>>, vector<1x1x128xf32>
    %59 = vector.shape_cast %58 : vector<1x1x128xf32> to vector<1x128xf32>
    %60 = vector.broadcast %59 : vector<1x128xf32> to vector<32x128xf32>
    %61 = arith.mulf %57, %60 : vector<32x128xf32>
    %c0_48 = arith.constant 0 : index
    %c3_49 = arith.constant 3 : index
    %c0_50 = arith.constant 0 : index
    %62 = vector.load %arg5[%c0_48, %c3_49, %c0_50] : memref<1x4x128xf32, #tpu.memory_space<vmem>>, vector<1x1x128xf32>
    %63 = vector.shape_cast %62 : vector<1x1x128xf32> to vector<1x128xf32>
    %64 = vector.broadcast %63 : vector<1x128xf32> to vector<32x128xf32>
    %65 = arith.addf %61, %64 : vector<32x128xf32>
    %cst_51 = arith.constant 0.000000e+00 : f32
    %66 = vector.broadcast %cst_51 : f32 to vector<32x128xf32>
    %67 = arith.maximumf %65, %66 : vector<32x128xf32>
    %68 = arith.truncf %67 : vector<32x128xf32> to vector<32x128xbf16>
    %c3_52 = arith.constant 3 : index
    %c0_53 = arith.constant 0 : index
    %c0_54 = arith.constant 0 : index
    %69 = vector.load %arg6[%c3_52, %c0_53, %c0_54] : memref<5x128x128xbf16, #tpu.memory_space<vmem>>, vector<1x128x128xbf16>
    %70 = vector.shape_cast %69 : vector<1x128x128xbf16> to vector<128x128xbf16>
    %cst_55 = arith.constant dense<0.000000e+00> : vector<32x128xf32>
    %71 = tpu.matmul %68, %70, %cst_55 {dimension_numbers = #tpu.dot_dimension_numbers<[1], [0], [0], [1], [0, 0, 1, 1], [], []>} : vector<32x128xbf16>, vector<128x128xbf16>, vector<32x128xf32> -> vector<32x128xf32>
    %72 = arith.addf %54, %71 : vector<32x128xf32>
    %c0_56 = arith.constant 0 : index
    %c0_57 = arith.constant 0 : index
    %c0_58 = arith.constant 0 : index
    %73 = vector.load %arg3[%c0_56, %c0_57, %c0_58] : memref<1x32x128xbf16, #tpu.memory_space<vmem>>, vector<1x32x128xbf16>
    %74 = vector.shape_cast %73 : vector<1x32x128xbf16> to vector<32x128xbf16>
    %c4 = arith.constant 4 : index
    %c0_59 = arith.constant 0 : index
    %c0_60 = arith.constant 0 : index
    %75 = vector.load %arg6[%c4, %c0_59, %c0_60] : memref<5x128x128xbf16, #tpu.memory_space<vmem>>, vector<1x128x128xbf16>
    %76 = vector.shape_cast %75 : vector<1x128x128xbf16> to vector<128x128xbf16>
    %cst_61 = arith.constant dense<0.000000e+00> : vector<32x128xf32>
    %77 = tpu.matmul %74, %76, %cst_61 {dimension_numbers = #tpu.dot_dimension_numbers<[1], [0], [0], [1], [0, 0, 1, 1], [], []>} : vector<32x128xbf16>, vector<128x128xbf16>, vector<32x128xf32> -> vector<32x128xf32>
    %78 = arith.addf %72, %77 : vector<32x128xf32>
    %c0_62 = arith.constant 0 : index
    %c0_63 = arith.constant 0 : index
    %79 = vector.load %arg7[%c0_62, %c0_63] : memref<1x128xf32, #tpu.memory_space<vmem>>, vector<1x128xf32>
    %80 = vector.broadcast %79 : vector<1x128xf32> to vector<32x128xf32>
    %81 = arith.addf %78, %80 : vector<32x128xf32>
    %c0_64 = arith.constant 0 : index
    %c0_65 = arith.constant 0 : index
    %c0_66 = arith.constant 0 : index
    %82 = vector.load %arg8[%c0_64, %c0_65, %c0_66] : memref<1x32x128xf32, #tpu.memory_space<vmem>>, vector<1x32x128xf32>
    %83 = vector.shape_cast %82 : vector<1x32x128xf32> to vector<32x128xf32>
    %84 = vector.shape_cast %81 : vector<32x128xf32> to vector<1x32x128xf32>
    tpu.vector_store %arg8[%c0_64, %c0_65, %c0_66], %84 {strides = array<i32>} : memref<1x32x128xf32, #tpu.memory_space<vmem>>, vector<1x32x128xf32>,
    return
  }
  func.func @transform_0(%arg0: i32, %arg1: i32) -> (i32, i32, i32, i32) {
    %c0_i32 = arith.constant 0 : i32
    %c0_i32_0 = arith.constant 0 : i32
    %c0_i32_1 = arith.constant 0 : i32
    return %c0_i32, %arg0, %arg1, %c0_i32_0 : i32, i32, i32, i32
  }
  func.func @transform_1(%arg0: i32, %arg1: i32) -> (i32, i32, i32) {
    %c0_i32 = arith.constant 0 : i32
    %c0_i32_0 = arith.constant 0 : i32
    return %arg0, %arg1, %c0_i32 : i32, i32, i32
  }
  func.func @transform_2(%arg0: i32, %arg1: i32) -> (i32, i32, i32) {
    %c0_i32 = arith.constant 0 : i32
    %c0_i32_0 = arith.constant 0 : i32
    %c0_i32_1 = arith.constant 0 : i32
    return %arg0, %c0_i32, %c0_i32_0 : i32, i32, i32
  }
  func.func @transform_3(%arg0: i32, %arg1: i32) -> (i32, i32, i32) {
    %c0_i32 = arith.constant 0 : i32
    %c0_i32_0 = arith.constant 0 : i32
    %c0_i32_1 = arith.constant 0 : i32
    return %arg0, %c0_i32, %c0_i32_0 : i32, i32, i32
  }
  func.func @transform_4(%arg0: i32, %arg1: i32) -> (i32, i32, i32) {
    %c0_i32 = arith.constant 0 : i32
    %c0_i32_0 = arith.constant 0 : i32
    %c0_i32_1 = arith.constant 0 : i32
    %c0_i32_2 = arith.constant 0 : i32
    return %c0_i32, %c0_i32_0, %c0_i32_1 : i32, i32, i32
  }
  func.func @transform_5(%arg0: i32, %arg1: i32) -> (i32, i32) {
    %c0_i32 = arith.constant 0 : i32
    %c0_i32_0 = arith.constant 0 : i32
    %c0_i32_1 = arith.constant 0 : i32
    return %c0_i32, %c0_i32_0 : i32, i32
  }
  func.func @transform_6(%arg0: i32, %arg1: i32) -> (i32, i32, i32) {
    %c0_i32 = arith.constant 0 : i32
    %c0_i32_0 = arith.constant 0 : i32
    return %arg0, %arg1, %c0_i32 : i32, i32, i32
  }
}

</mosaic_0001>

<llo_original>
// kernel: atrou_mmu_forward.3
$region0: #{atrou_mmu_forward.3}
  #allocation0 [shape = 'u32[]', space=smem, size = 0x4, offset = 0x4, fixed_abs, tag = 'smem constant byte address 0x4 - core index']
  #allocation1 [shape = 'u32[144,128]{1,0:T(1,128)}', space=vmem, size = 0x12000, scoped, tag = 'internal scratch']
  %s0 = inlined_call_operand.vmem [shape: bf16[4,2,64,128], index: 0, kind: input, shape index: {}]
  %s1 = inlined_call_operand.vmem [shape: bf16[2,64,128], index: 1, kind: input, shape index: {}]
  %s2 = inlined_call_operand.vmem [shape: f32[2,4,128], index: 2, kind: input, shape index: {}]
  %s3 = inlined_call_operand.vmem [shape: f32[2,4,128], index: 3, kind: input, shape index: {}]
  %s4 = inlined_call_operand.vmem [shape: bf16[5,128,128], index: 4, kind: input, shape index: {}]
  %s5 = inlined_call_operand.vmem [shape: f32[1,128], index: 5, kind: input, shape index: {}]
  %s6 = inlined_call_operand.vmem [shape: f32[2,64,128], index: 6, kind: output, shape index: {}]
  %s7 = sld [smem:[#allocation0]]
  $region98: #{atrou_mmu_forward.3} parent=0
    _
  %s9 = ssub.s32 1, %s7
  %s10 = scalar_select 0, %s9, %s7
  $region1: #{atrou_mmu_forward.3} parent=0
    #allocation2 [shape = 'u8[65536]{0}', space=vmem, size = 0x10000, scoped, tag = 'input window, operand 0']
    loop: start=0, step=1, limit=6
    $region2: #{atrou_mmu_forward.3} parent=1 // loop_pre_header
      _
    $region3: #{atrou_mmu_forward.3} parent=1 // loop_header
      %s12 = sphi 0, %s16
      %p13 = scmp.ge.s32.totalorder %s12, 6
      %s19 = sphi 0, %s31
      %s20 = sphi 0, %s27
      %s21 = sphi 0, %s19
      %s22 = sphi 0, %s20
      %s23 = sphi 0, %s21
      %s24 = sphi 0, %s22
      %s36 = sphi 0, %s38
      %s39 = sphi 0, %s36
      %s40 = sphi 0, %s39
      %s56 = sphi 0, %s40
      %s64 = sphi 0, %s66
      %s67 = sphi 0, %s64
      %s68 = sphi 0, %s67
      %s84 = sphi 0, %s68
      %s90 = sphi 0, %s92
      %s93 = sphi 0, %s90
      %s94 = sphi 0, %s93
      %s110 = sphi 0, %s94
      %s116 = sphi 0, %s118
      %s119 = sphi 0, %s116
      %s120 = sphi 0, %s119
      %s136 = sphi 0, %s120
      %s140 = sphi 0, %s140
      %s142 = sphi 0, %s140
      %s143 = sphi 0, %s142
      %s157 = sphi 0, %s143
      %s161 = sphi 0, %s161
      %s163 = sphi 0, %s161
      %s164 = sphi 0, %s163
      %s178 = sphi 0, %s164
      %s186 = sphi 0, %s188
      %s189 = sphi 0, %s186
      %s190 = sphi 0, %s189
      %s206 = sphi 0, %s190
    $region4: #{atrou_mmu_forward.3} parent=1 // loop_header_branch
      %15 = sbr.rel (%p13) target = $region8
    $region5: #{atrou_mmu_forward.3} parent=1 // loop_body
      %s17 = ssub.s32 %s12, 1
      %s18 = ssub.s32 %s12, 2
      %s25 = sadd.s32 1, %s20
      %p26 = scmp.ge.s32.totalorder %s25, 2
      %s27 = scalar_select %p26, 0, %s25
      %s28 = sadd.s32 1, %s19
      %s29 = scalar_select %p26, %s28, %s19
      %p30 = scmp.ge.s32.totalorder %s29, 2
      %s31 = scalar_select %p30, 0, %s29
      %s32 = ssub.s32 %s19, %s31
      %s33 = ssub.s32 %s20, %s27
      %s34 = sor.u32 %s32, %s33
      %p35 = scmp.eq.s32.totalorder %s34, 0
      %s37 = sadd.s32 %s36, 1
      %s38 = scalar_select %p35, %s36, %s37
      %p41 = pneg %p35
      %p42 = scmp.eq.s32.totalorder %s12, 3
      %p43 = por %p41, %p42
      %p44 = scmp.ne.s32.totalorder %s36, %s39
      %p45 = scmp.eq.s32.totalorder %s12, 0
      %p46 = por %p44, %p45
      %p47 = scmp.ne.s32.totalorder %s36, %s39
      %p48 = scmp.eq.s32.totalorder %s17, 3
      %p49 = por %p47, %p48
      %p50 = scmp.ne.s32.totalorder %s39, %s40
      %p51 = scmp.eq.s32.totalorder %s17, 0
      %p52 = por %p50, %p51
      %p53 = scmp.ne.s32.totalorder %s39, %s40
      %p54 = scmp.eq.s32.totalorder %s18, 3
      %p55 = por %p53, %p54
      %p57 = scmp.ne.s32.totalorder %s40, %s56
      %p58 = scmp.eq.s32.totalorder %s18, 0
      %p59 = por %p57, %p58
      %s60 = ssub.s32 %s19, %s31
      %s61 = ssub.s32 %s20, %s27
      %s62 = sor.u32 %s60, %s61
      %p63 = scmp.eq.s32.totalorder %s62, 0
      %s65 = sadd.s32 %s64, 1
      %s66 = scalar_select %p63, %s64, %s65
      %p69 = pneg %p63
      %p70 = scmp.eq.s32.totalorder %s12, 3
      %p71 = por %p69, %p70
      %p72 = scmp.ne.s32.totalorder %s64, %s67
      %p73 = scmp.eq.s32.totalorder %s12, 0
      %p74 = por %p72, %p73
      %p75 = scmp.ne.s32.totalorder %s64, %s67
      %p76 = scmp.eq.s32.totalorder %s17, 3
      %p77 = por %p75, %p76
      %p78 = scmp.ne.s32.totalorder %s67, %s68
      %p79 = scmp.eq.s32.totalorder %s17, 0
      %p80 = por %p78, %p79
      %p81 = scmp.ne.s32.totalorder %s67, %s68
      %p82 = scmp.eq.s32.totalorder %s18, 3
      %p83 = por %p81, %p82
      %p85 = scmp.ne.s32.totalorder %s68, %s84
      %p86 = scmp.eq.s32.totalorder %s18, 0
      %p87 = por %p85, %p86
      %s88 = ssub.s32 %s19, %s31
      %p89 = scmp.eq.s32.totalorder %s88, 0
      %s91 = sadd.s32 %s90, 1
      %s92 = scalar_select %p89, %s90, %s91
      %p95 = pneg %p89
      %p96 = scmp.eq.s32.totalorder %s12, 3
      %p97 = por %p95, %p96
      %p98 = scmp.ne.s32.totalorder %s90, %s93
      %p99 = scmp.eq.s32.totalorder %s12, 0
      %p100 = por %p98, %p99
      %p101 = scmp.ne.s32.totalorder %s90, %s93
      %p102 = scmp.eq.s32.totalorder %s17, 3
      %p103 = por %p101, %p102
      %p104 = scmp.ne.s32.totalorder %s93, %s94
      %p105 = scmp.eq.s32.totalorder %s17, 0
      %p106 = por %p104, %p105
      %p107 = scmp.ne.s32.totalorder %s93, %s94
      %p108 = scmp.eq.s32.totalorder %s18, 3
      %p109 = por %p107, %p108
      %p111 = scmp.ne.s32.totalorder %s94, %s110
      %p112 = scmp.eq.s32.totalorder %s18, 0
      %p113 = por %p111, %p112
      %s114 = ssub.s32 %s19, %s31
      %p115 = scmp.eq.s32.totalorder %s114, 0
      %s117 = sadd.s32 %s116, 1
      %s118 = scalar_select %p115, %s116, %s117
      %p121 = pneg %p115
      %p122 = scmp.eq.s32.totalorder %s12, 3
      %p123 = por %p121, %p122
      %p124 = scmp.ne.s32.totalorder %s116, %s119
      %p125 = scmp.eq.s32.totalorder %s12, 0
      %p126 = por %p124, %p125
      %p127 = scmp.ne.s32.totalorder %s116, %s119
      %p128 = scmp.eq.s32.totalorder %s17, 3
      %p129 = por %p127, %p128
      %p130 = scmp.ne.s32.totalorder %s119, %s120
      %p131 = scmp.eq.s32.totalorder %s17, 0
      %p132 = por %p130, %p131
      %p133 = scmp.ne.s32.totalorder %s119, %s120
      %p134 = scmp.eq.s32.totalorder %s18, 3
      %p135 = por %p133, %p134
      %p137 = scmp.ne.s32.totalorder %s120, %s136
      %p138 = scmp.eq.s32.totalorder %s18, 0
      %p139 = por %p137, %p138
      %s141 = sadd.s32 %s140, 1
      %p144 = scmp.eq.s32.totalorder %s12, 3
      %p145 = scmp.ne.s32.totalorder %s140, %s142
      %p146 = scmp.eq.s32.totalorder %s12, 0
      %p147 = por %p145, %p146
      %p148 = scmp.ne.s32.totalorder %s140, %s142
      %p149 = scmp.eq.s32.totalorder %s17, 3
      %p150 = por %p148, %p149
      %p151 = scmp.ne.s32.totalorder %s142, %s143
      %p152 = scmp.eq.s32.totalorder %s17, 0
      %p153 = por %p151, %p152
      %p154 = scmp.ne.s32.totalorder %s142, %s143
      %p155 = scmp.eq.s32.totalorder %s18, 3
      %p156 = por %p154, %p155
      %p158 = scmp.ne.s32.totalorder %s143, %s157
      %p159 = scmp.eq.s32.totalorder %s18, 0
      %p160 = por %p158, %p159
      %s162 = sadd.s32 %s161, 1
      %p165 = scmp.eq.s32.totalorder %s12, 3
      %p166 = scmp.ne.s32.totalorder %s161, %s163
      %p167 = scmp.eq.s32.totalorder %s12, 0
      %p168 = por %p166, %p167
      %p169 = scmp.ne.s32.totalorder %s161, %s163
      %p170 = scmp.eq.s32.totalorder %s17, 3
      %p171 = por %p169, %p170
      %p172 = scmp.ne.s32.totalorder %s163, %s164
      %p173 = scmp.eq.s32.totalorder %s17, 0
      %p174 = por %p172, %p173
      %p175 = scmp.ne.s32.totalorder %s163, %s164
      %p176 = scmp.eq.s32.totalorder %s18, 3
      %p177 = por %p175, %p176
      %p179 = scmp.ne.s32.totalorder %s164, %s178
      %p180 = scmp.eq.s32.totalorder %s18, 0
      %p181 = por %p179, %p180
      %s182 = ssub.s32 %s19, %s31
      %s183 = ssub.s32 %s20, %s27
      %s184 = sor.u32 %s182, %s183
      %p185 = scmp.eq.s32.totalorder %s184, 0
      %s187 = sadd.s32 %s186, 1
      %s188 = scalar_select %p185, %s186, %s187
      %p191 = pneg %p185
      %p192 = scmp.eq.s32.totalorder %s12, 3
      %p193 = por %p191, %p192
      %p194 = scmp.ne.s32.totalorder %s186, %s189
      %p195 = scmp.eq.s32.totalorder %s12, 0
      %p196 = por %p194, %p195
      %p197 = scmp.ne.s32.totalorder %s186, %s189
      %p198 = scmp.eq.s32.totalorder %s17, 3
      %p199 = por %p197, %p198
      %p200 = scmp.ne.s32.totalorder %s189, %s190
      %p201 = scmp.eq.s32.totalorder %s17, 0
      %p202 = por %p200, %p201
      %p203 = scmp.ne.s32.totalorder %s189, %s190
      %p204 = scmp.eq.s32.totalorder %s18, 3
      %p205 = por %p203, %p204
      %p207 = scmp.ne.s32.totalorder %s190, %s206
      %p208 = scmp.eq.s32.totalorder %s18, 0
      %p209 = por %p207, %p208
      %p210 = scmp.le.s32.totalorder 1, %s12
      %p211 = scmp.lt.s32.totalorder %s12, 5
      %p212 = pnand %p210, %p211
      %p213 = pneg %p212
      // Predicated region
      $region9: #{atrou_mmu_forward.3} parent=5 // pred_check
        _
      $region10: #{atrou_mmu_forward.3} parent=5 // pred_check_branch
        %215 = sbr.rel (%p212) target = $region12
      $region11: #{atrou_mmu_forward.3} parent=5 // pred_region
        %s216 = ssub.s32 %s12, 1
        // Predicated region
        $region13: #{atrou_mmu_forward.3} parent=11 // pred_check
          %p217 = pneg %p153
        $region14: #{atrou_mmu_forward.3} parent=11 // pred_check_branch
          %219 = sbr.rel (%p217) target = $region16
        $region15: #{atrou_mmu_forward.3} parent=11 // pred_region
          _
        $region16: #{atrou_mmu_forward.3} parent=11 // pred_fallthru
          _
        // Predicated region
        $region17: #{atrou_mmu_forward.3} parent=11 // pred_check
          %p220 = pneg %p174
        $region18: #{atrou_mmu_forward.3} parent=11 // pred_check_branch
          %222 = sbr.rel (%p220) target = $region20
        $region19: #{atrou_mmu_forward.3} parent=11 // pred_region
          _
        $region20: #{atrou_mmu_forward.3} parent=11 // pred_fallthru
          _
      $region12: #{atrou_mmu_forward.3} parent=5 // pred_fallthru
        _
      %p223 = scmp.lt.s32.totalorder %s12, 4
      // Predicated region
      $region21: #{atrou_mmu_forward.3} parent=5 // pred_check
        %p224 = pneg %p223
      $region22: #{atrou_mmu_forward.3} parent=5 // pred_check_branch
        %226 = sbr.rel (%p224) target = $region24
      $region23: #{atrou_mmu_forward.3} parent=5 // pred_region
        // Predicated region
        $region25: #{atrou_mmu_forward.3} parent=23 // pred_check
          %p227 = pneg %p46
        $region26: #{atrou_mmu_forward.3} parent=23 // pred_check_branch
          %229 = sbr.rel (%p227) target = $region28
        $region27: #{atrou_mmu_forward.3} parent=23 // pred_region
          %s230 = sand.u32 %s36, 1
          %s231 = sand.u32 %s36, 1
          %s232 = smul.addr %s231, 64
          %s233 = scalar_lea.vmem [#allocation2], %s232
          %s234 = smul.u32 4, %s20
          %s235 = smul.addr %s19, 8
          %s236 = sadd.s32 %s234, %s235
          %s237 = smul.addr %s236, 4
          %s238 = scalar_lea.vmem %s0, %s237
          // Predicated region
          $region29: #{atrou_mmu_forward.3} parent=27 // pred_check
            _
          $region30: #{atrou_mmu_forward.3} parent=27 // pred_check_branch
            %240 = sbr.rel (0) target = $region32
          $region31: #{atrou_mmu_forward.3} parent=27 // pred_region
            // Predicated region
            $region33: #{atrou_mmu_forward.3} parent=31 // pred_check
              _
            $region34: #{atrou_mmu_forward.3} parent=31 // pred_check_branch
              %242 = sbr.rel target = $region36
            $region35: #{atrou_mmu_forward.3} parent=31 // pred_region
              // Predicated region
              $region48: #{atrou_mmu_forward.3} parent=35 // pred_check
                _
              $region49: #{atrou_mmu_forward.3} parent=35 // pred_check_branch
                %288 = sbr.rel (0) target = $region51
              $region50: #{atrou_mmu_forward.3} parent=35 // pred_region
                loop: start=0, step=1, limit=1
                $region52: #{atrou_mmu_forward.3} parent=50 // loop_pre_header
                  _
                $region53: #{atrou_mmu_forward.3} parent=50 // loop_header
                  %s290 = sphi 0, %s294
                  %p291 = scmp.ge.s32.totalorder %s290, 1
                  %s295 = sphi %s238, %s238
                  %s296 = sphi %s233, %s233
                $region54: #{atrou_mmu_forward.3} parent=50 // loop_header_branch
                  %293 = sbr.rel (%p291) target = $region58
                $region55: #{atrou_mmu_forward.3} parent=50 // loop_body
                  _
                $region56: #{atrou_mmu_forward.3} parent=50 // loop_footer
                  %s294 = sadd.s32 1, %s290
                $region57: #{atrou_mmu_forward.3} parent=50 // loop_footer_branch
                  %289 = sbr.rel target = $region53
                $region58: #{atrou_mmu_forward.3} parent=50 // loop_exit
                  _
                %s298 = ssub.s32 16, 1
                loop: start=0, step=1, limit=1
                $region59: #{atrou_mmu_forward.3} parent=50 // loop_pre_header
                  _
                $region60: #{atrou_mmu_forward.3} parent=50 // loop_header
                  %s300 = sphi 0, %s304
                  %p301 = scmp.ge.s32.totalorder %s300, 1
                  %s305 = sphi %s238, %s238
                  %s306 = sphi %s233, %s233
                $region61: #{atrou_mmu_forward.3} parent=50 // loop_header_branch
                  %303 = sbr.rel (%p301) target = $region65
                $region62: #{atrou_mmu_forward.3} parent=50 // loop_body
                  %v307 = vld [vmem:[%s305] sm:%s298]
                  %308 = vst [vmem:[%s306] sm:%s298] %v307
                  %v309 = vld [vmem:[%s305 + $0x4] sm:%s298]
                  %310 = vst [vmem:[%s306 + $0x4] sm:%s298] %v309
                  %v311 = vld [vmem:[%s305 + $0x8] sm:%s298]
                  %312 = vst [vmem:[%s306 + $0x8] sm:%s298] %v311
                  %v313 = vld [vmem:[%s305 + $0xc] sm:%s298]
                  %314 = vst [vmem:[%s306 + $0xc] sm:%s298] %v313
                  %v315 = vld [vmem:[%s305 + $0x40] sm:%s298]
                  %316 = vst [vmem:[%s306 + $0x10] sm:%s298] %v315
                  %v317 = vld [vmem:[%s305 + $0x44] sm:%s298]
                  %318 = vst [vmem:[%s306 + $0x14] sm:%s298] %v317
                  %v319 = vld [vmem:[%s305 + $0x48] sm:%s298]
                  %320 = vst [vmem:[%s306 + $0x18] sm:%s298] %v319
                  %v321 = vld [vmem:[%s305 + $0x4c] sm:%s298]
                  %322 = vst [vmem:[%s306 + $0x1c] sm:%s298] %v321
                  %v323 = vld [vmem:[%s305 + $0x80] sm:%s298]
                  %324 = vst [vmem:[%s306 + $0x20] sm:%s298] %v323
                  %v325 = vld [vmem:[%s305 + $0x84] sm:%s298]
                  %326 = vst [vmem:[%s306 + $0x24] sm:%s298] %v325
                  %v327 = vld [vmem:[%s305 + $0x88] sm:%s298]
                  %328 = vst [vmem:[%s306 + $0x28] sm:%s298] %v327
                  %v329 = vld [vmem:[%s305 + $0x8c] sm:%s298]
                  %330 = vst [vmem:[%s306 + $0x2c] sm:%s298] %v329
                  %v331 = vld [vmem:[%s305 + $0xc0] sm:%s298]
                  %332 = vst [vmem:[%s306 + $0x30] sm:%s298] %v331
                  %v333 = vld [vmem:[%s305 + $0xc4] sm:%s298]
                  %334 = vst [vmem:[%s306 + $0x34] sm:%s298] %v333
                  %v335 = vld [vmem:[%s305 + $0xc8] sm:%s298]
                  %336 = vst [vmem:[%s306 + $0x38] sm:%s298] %v335
                  %v337 = vld [vmem:[%s305 + $0xcc] sm:%s298]
                  %338 = vst [vmem:[%s306 + $0x3c] sm:%s298] %v337
                $region63: #{atrou_mmu_forward.3} parent=50 // loop_footer
                  %s304 = sadd.s32 1, %s300
                $region64: #{atrou_mmu_forward.3} parent=50 // loop_footer_branch
                  %299 = sbr.rel target = $region60
                $region65: #{atrou_mmu_forward.3} parent=50 // loop_exit
                  _
              $region51: #{atrou_mmu_forward.3} parent=35 // pred_fallthru
                _
            $region36: #{atrou_mmu_forward.3} parent=31 // pred_fallthru
              _
            // Predicated region
            $region37: #{atrou_mmu_forward.3} parent=31 // pred_check
              _
            $region38: #{atrou_mmu_forward.3} parent=31 // pred_check_branch
              %244 = sbr.rel (0) target = $region40
            $region39: #{atrou_mmu_forward.3} parent=31 // pred_region
              %s246 = ssub.s32 16, 1
              loop: start=0, step=1, limit=1
              $region41: #{atrou_mmu_forward.3} parent=39 // loop_pre_header
                _
              $region42: #{atrou_mmu_forward.3} parent=39 // loop_header
                %s248 = sphi 0, %s252
                %p249 = scmp.ge.s32.totalorder %s248, 1
                %s253 = sphi %s238, %s238
                %s254 = sphi %s233, %s233
              $region43: #{atrou_mmu_forward.3} parent=39 // loop_header_branch
                %251 = sbr.rel (%p249) target = $region47
              $region44: #{atrou_mmu_forward.3} parent=39 // loop_body
                %v255 = vld [vmem:[%s253] sm:%s246]
                %256 = vst [vmem:[%s254] sm:%s246] %v255
                %v257 = vld [vmem:[%s253 + $0x4] sm:%s246]
                %258 = vst [vmem:[%s254 + $0x4] sm:%s246] %v257
                %v259 = vld [vmem:[%s253 + $0x8] sm:%s246]
                %260 = vst [vmem:[%s254 + $0x8] sm:%s246] %v259
                %v261 = vld [vmem:[%s253 + $0xc] sm:%s246]
                %262 = vst [vmem:[%s254 + $0xc] sm:%s246] %v261
                %v263 = vld [vmem:[%s253 + $0x40] sm:%s246]
                %264 = vst [vmem:[%s254 + $0x10] sm:%s246] %v263
                %v265 = vld [vmem:[%s253 + $0x44] sm:%s246]
                %266 = vst [vmem:[%s254 + $0x14] sm:%s246] %v265
                %v267 = vld [vmem:[%s253 + $0x48] sm:%s246]
                %268 = vst [vmem:[%s254 + $0x18] sm:%s246] %v267
                %v269 = vld [vmem:[%s253 + $0x4c] sm:%s246]
                %270 = vst [vmem:[%s254 + $0x1c] sm:%s246] %v269
                %v271 = vld [vmem:[%s253 + $0x80] sm:%s246]
                %272 = vst [vmem:[%s254 + $0x20] sm:%s246] %v271
                %v273 = vld [vmem:[%s253 + $0x84] sm:%s246]
                %274 = vst [vmem:[%s254 + $0x24] sm:%s246] %v273
                %v275 = vld [vmem:[%s253 + $0x88] sm:%s246]
                %276 = vst [vmem:[%s254 + $0x28] sm:%s246] %v275
                %v277 = vld [vmem:[%s253 + $0x8c] sm:%s246]
                %278 = vst [vmem:[%s254 + $0x2c] sm:%s246] %v277
                %v279 = vld [vmem:[%s253 + $0xc0] sm:%s246]
                %280 = vst [vmem:[%s254 + $0x30] sm:%s246] %v279
                %v281 = vld [vmem:[%s253 + $0xc4] sm:%s246]
                %282 = vst [vmem:[%s254 + $0x34] sm:%s246] %v281
                %v283 = vld [vmem:[%s253 + $0xc8] sm:%s246]
                %284 = vst [vmem:[%s254 + $0x38] sm:%s246] %v283
                %v285 = vld [vmem:[%s253 + $0xcc] sm:%s246]
                %286 = vst [vmem:[%s254 + $0x3c] sm:%s246] %v285
              $region45: #{atrou_mmu_forward.3} parent=39 // loop_footer
                %s252 = sadd.s32 1, %s248
              $region46: #{atrou_mmu_forward.3} parent=39 // loop_footer_branch
                %247 = sbr.rel target = $region42
              $region47: #{atrou_mmu_forward.3} parent=39 // loop_exit
                _
            $region40: #{atrou_mmu_forward.3} parent=31 // pred_fallthru
              _
          $region32: #{atrou_mmu_forward.3} parent=27 // pred_fallthru
            _
          %339 = vnop
        $region28: #{atrou_mmu_forward.3} parent=23 // pred_fallthru
          _
        // Predicated region
        $region66: #{atrou_mmu_forward.3} parent=23 // pred_check
          %p340 = pneg %p74
        $region67: #{atrou_mmu_forward.3} parent=23 // pred_check_branch
          %342 = sbr.rel (%p340) target = $region69
        $region68: #{atrou_mmu_forward.3} parent=23 // pred_region
          %s343 = smul.u32 4, %s20
          %p344 = scmp.lt.s32.totalorder %s19, 1
          %s345 = scalar_select %p344, %s19, 1
          %p346 = scmp.lt.s32.totalorder %s343, 7
          %s347 = scalar_select %p346, %s343, 7
          %s348 = smul.addr %s345, 8
          %s349 = sadd.s32 %s347, %s348
          %s350 = smul.addr %s349, 4
          %s351 = scalar_lea.vmem %s1, %s350
          %s352 = smul.u32 4, %s20
        $region69: #{atrou_mmu_forward.3} parent=23 // pred_fallthru
          _
        // Predicated region
        $region70: #{atrou_mmu_forward.3} parent=23 // pred_check
          %p353 = pneg %p100
        $region71: #{atrou_mmu_forward.3} parent=23 // pred_check_branch
          %355 = sbr.rel (%p353) target = $region73
        $region72: #{atrou_mmu_forward.3} parent=23 // pred_region
          %p356 = scmp.lt.s32.totalorder %s19, 1
          %s357 = scalar_select %p356, %s19, 1
          %s358 = smul.addr %s357, 4
          %s359 = scalar_lea.vmem %s2, %s358
        $region73: #{atrou_mmu_forward.3} parent=23 // pred_fallthru
          _
        // Predicated region
        $region74: #{atrou_mmu_forward.3} parent=23 // pred_check
          %p360 = pneg %p126
        $region75: #{atrou_mmu_forward.3} parent=23 // pred_check_branch
          %362 = sbr.rel (%p360) target = $region77
        $region76: #{atrou_mmu_forward.3} parent=23 // pred_region
          %p363 = scmp.lt.s32.totalorder %s19, 1
          %s364 = scalar_select %p363, %s19, 1
          %s365 = smul.addr %s364, 4
          %s366 = scalar_lea.vmem %s3, %s365
        $region77: #{atrou_mmu_forward.3} parent=23 // pred_fallthru
          _
      $region24: #{atrou_mmu_forward.3} parent=5 // pred_fallthru
        _
      %p367 = scmp.le.s32.totalorder 1, %s12
      %p368 = scmp.lt.s32.totalorder %s12, 5
      %p369 = pnand %p367, %p368
      %p370 = pneg %p369
      // Predicated region
      $region78: #{atrou_mmu_forward.3} parent=5 // pred_check
        _
      $region79: #{atrou_mmu_forward.3} parent=5 // pred_check_branch
        %372 = sbr.rel (%p369) target = $region81
      $region80: #{atrou_mmu_forward.3} parent=5 // pred_region
        %s373 = ssub.s32 %s12, 1
        %s374 = sand.u32 %s39, 1
        %s375 = sand.u32 %s39, 1
        %s376 = smul.addr %s375, 64
        %s377 = scalar_lea.vmem [#allocation2], %s376
        // Predicated region
        $region82: #{atrou_mmu_forward.3} parent=80 // pred_check
          %p378 = pneg %p52
        $region83: #{atrou_mmu_forward.3} parent=80 // pred_check_branch
          %380 = sbr.rel (%p378) target = $region85
        $region84: #{atrou_mmu_forward.3} parent=80 // pred_region
          _
        $region85: #{atrou_mmu_forward.3} parent=80 // pred_fallthru
          _
        %s381 = sand.u32 %s39, 1
        %s382 = sand.u32 %s39, 1
        %s383 = smul.addr %s382, 64
        %s384 = scalar_lea.vmem [#allocation2], %s383
        %p385 = pneg %p52
        %p386 = pneg %p49
        %s387 = smul.u32 4, %s22
        %p388 = scmp.lt.s32.totalorder %s21, 1
        %s389 = scalar_select %p388, %s21, 1
        %p390 = scmp.lt.s32.totalorder %s387, 7
        %s391 = scalar_select %p390, %s387, 7
        %s392 = smul.addr %s389, 8
        %s393 = sadd.s32 %s391, %s392
        %s394 = smul.addr %s393, 4
        %s395 = scalar_lea.vmem %s1, %s394
        %p396 = pneg %p80
        %p397 = pneg %p77
        %p398 = scmp.lt.s32.totalorder %s21, 1
        %s399 = scalar_select %p398, %s21, 1
        %s400 = smul.addr %s399, 4
        %s401 = scalar_lea.vmem %s2, %s400
        %p402 = pneg %p106
        %p403 = pneg %p103
        %p404 = scmp.lt.s32.totalorder %s21, 1
        %s405 = scalar_select %p404, %s21, 1
        %s406 = smul.addr %s405, 4
        %s407 = scalar_lea.vmem %s3, %s406
        %p408 = pneg %p132
        %p409 = pneg %p129
        %p410 = pneg %p153
        %p411 = pneg %p150
        %p412 = pneg %p174
        %p413 = pneg %p171
        %p414 = pneg %p202
        %p415 = pneg %p199
        %s416 = smul.u32 4, %s22
        %p417 = scmp.lt.s32.totalorder %s21, 1
        %s418 = scalar_select %p417, %s21, 1
        %p419 = scmp.lt.s32.totalorder %s416, 7
        %s420 = scalar_select %p419, %s416, 7
        %s421 = smul.addr %s418, 8
        %s422 = sadd.s32 %s420, %s421
        %s423 = smul.addr %s422, 8
        %s424 = scalar_lea.vmem %s6, %s423
        %s425 = smul.u32 4, %s22
        %s426 = smul.u32 4, %s22
        %p427 = scmp.lt.s32.totalorder %s21, 1
        %s428 = scalar_select %p427, %s21, 1
        %p429 = scmp.lt.s32.totalorder %s426, 7
        %s430 = scalar_select %p429, %s426, 7
        %s431 = smul.addr %s428, 8
        %s432 = sadd.s32 %s430, %s431
        %s433 = smul.addr %s432, 4
        %s434 = scalar_lea.vmem %s1, %s433
        %s435 = smul.u32 4, %s22
        %p436 = scmp.lt.s32.totalorder %s21, 1
        %s437 = scalar_select %p436, %s21, 1
        %s438 = smul.addr %s437, 4
        %s439 = scalar_lea.vmem %s2, %s438
        %p440 = scmp.lt.s32.totalorder %s21, 1
        %s441 = scalar_select %p440, %s21, 1
        %s442 = smul.addr %s441, 4
        %s443 = scalar_lea.vmem %s3, %s442
        %s444 = smul.u32 4, %s22
        %p445 = scmp.lt.s32.totalorder %s21, 1
        %s446 = scalar_select %p445, %s21, 1
        %p447 = scmp.lt.s32.totalorder %s444, 7
        %s448 = scalar_select %p447, %s444, 7
        %s449 = smul.addr %s446, 8
        %s450 = sadd.s32 %s448, %s449
        %s451 = smul.addr %s450, 8
        %s452 = scalar_lea.vmem %s6, %s451
        %s453 = smul.u32 4, %s22
        %v455 = vld [vmem:[%s377] sm:$0xf]
        %v456 = vld [vmem:[%s377 + $0x4] sm:$0xf]
        %v457 = vld [vmem:[%s377 + $0x8] sm:$0xf]
        %v458 = vld [vmem:[%s377 + $0xc] sm:$0xf]
        %v459 = vunpack.c.l.bf16 %v455
        %v460 = vunpack.c.l.bf16 %v456
        %v461 = vunpack.c.l.bf16 %v457
        %v462 = vunpack.c.l.bf16 %v458
        %v463 = vld [vmem:[%s439] sm:$0x1]
        %v464 = vlaneseq
        %v465 = vshrl.u32 %v464, 7
        %v466 = vsub.s32 0, %v465
        %v467 = vrot.slane %v463, %v466
        %v468 = vmul.f32 %v459, %v467
        %v469 = vmul.f32 %v460, %v467
        %v470 = vmul.f32 %v461, %v467
        %v471 = vmul.f32 %v462, %v467
        %v472 = vld [vmem:[%s443] sm:$0x1]
        %v473 = vlaneseq
        %v474 = vshrl.u32 %v473, 7
        %v475 = vsub.s32 0, %v474
        %v476 = vrot.slane %v472, %v475
        %v477 = vadd.f32 %v468, %v476
        %v478 = vadd.f32 %v469, %v476
        %v479 = vadd.f32 %v470, %v476
        %v480 = vadd.f32 %v471, %v476
        %v481 = vmax.f32 %v477, 0.0
        %v482 = vmax.f32 %v478, 0.0
        %v483 = vmax.f32 %v479, 0.0
        %v484 = vmax.f32 %v480, 0.0
        %v485 = vpack.c.bf16 %v482, %v481
        %v486 = vpack.c.bf16 %v484, %v483
        %v487 = vld [vmem:[%s4] sm:$0xf]
        %v488 = vld [vmem:[%s4 + $0x4] sm:$0xf]
        %v489 = vld [vmem:[%s4 + $0x8] sm:$0xf]
        %v490 = vld [vmem:[%s4 + $0xc] sm:$0xf]
        %v491 = vld [vmem:[%s4 + $0x10] sm:$0xf]
        %v492 = vld [vmem:[%s4 + $0x14] sm:$0xf]
        %v493 = vld [vmem:[%s4 + $0x18] sm:$0xf]
        %v494 = vld [vmem:[%s4 + $0x1c] sm:$0xf]
        %v495 = vld [vmem:[%s4 + $0x20] sm:$0xf]
        %v496 = vld [vmem:[%s4 + $0x24] sm:$0xf]
        %v497 = vld [vmem:[%s4 + $0x28] sm:$0xf]
        %v498 = vld [vmem:[%s4 + $0x2c] sm:$0xf]
        %v499 = vld [vmem:[%s4 + $0x30] sm:$0xf]
        %v500 = vld [vmem:[%s4 + $0x34] sm:$0xf]
        %v501 = vld [vmem:[%s4 + $0x38] sm:$0xf]
        %v502 = vld [vmem:[%s4 + $0x3c] sm:$0xf]
        %s503 = scalar_lea.vmem %s377, 16 [#allocation2]
        %v504 = vld [vmem:[%s503] sm:$0xf]
        %v505 = vld [vmem:[%s503 + $0x4] sm:$0xf]
        %v506 = vld [vmem:[%s503 + $0x8] sm:$0xf]
        %v507 = vld [vmem:[%s503 + $0xc] sm:$0xf]
        %v508 = vunpack.c.l.bf16 %v504
        %v509 = vunpack.c.l.bf16 %v505
        %v510 = vunpack.c.l.bf16 %v506
        %v511 = vunpack.c.l.bf16 %v507
        %v512 = vld [vmem:[%s439 + $0x1] sm:$0x1]
        %v513 = vlaneseq
        %v514 = vshrl.u32 %v513, 7
        %v515 = vsub.s32 0, %v514
        %v516 = vrot.slane %v512, %v515
        %v517 = vmul.f32 %v508, %v516
        %v518 = vmul.f32 %v509, %v516
        %v519 = vmul.f32 %v510, %v516
        %v520 = vmul.f32 %v511, %v516
        %v521 = vld [vmem:[%s443 + $0x1] sm:$0x1]
        %v522 = vlaneseq
        %v523 = vshrl.u32 %v522, 7
        %v524 = vsub.s32 0, %v523
        %v525 = vrot.slane %v521, %v524
        %v526 = vadd.f32 %v517, %v525
        %v527 = vadd.f32 %v518, %v525
        %v528 = vadd.f32 %v519, %v525
        %v529 = vadd.f32 %v520, %v525
        %v530 = vmax.f32 %v526, 0.0
        %v531 = vmax.f32 %v527, 0.0
        %v532 = vmax.f32 %v528, 0.0
        %v533 = vmax.f32 %v529, 0.0
        %v534 = vpack.c.bf16 %v531, %v530
        %v535 = vpack.c.bf16 %v533, %v532
        %s536 = scalar_lea.vmem %s4, 64
        %v537 = vld [vmem:[%s536] sm:$0xf]
        %v538 = vld [vmem:[%s536 + $0x4] sm:$0xf]
        %v539 = vld [vmem:[%s536 + $0x8] sm:$0xf]
        %v540 = vld [vmem:[%s536 + $0xc] sm:$0xf]
        %v541 = vld [vmem:[%s536 + $0x10] sm:$0xf]
        %v542 = vld [vmem:[%s536 + $0x14] sm:$0xf]
        %v543 = vld [vmem:[%s536 + $0x18] sm:$0xf]
        %v544 = vld [vmem:[%s536 + $0x1c] sm:$0xf]
        %v545 = vld [vmem:[%s536 + $0x20] sm:$0xf]
        %v546 = vld [vmem:[%s536 + $0x24] sm:$0xf]
        %v547 = vld [vmem:[%s536 + $0x28] sm:$0xf]
        %v548 = vld [vmem:[%s536 + $0x2c] sm:$0xf]
        %v549 = vld [vmem:[%s536 + $0x30] sm:$0xf]
        %v550 = vld [vmem:[%s536 + $0x34] sm:$0xf]
        %v551 = vld [vmem:[%s536 + $0x38] sm:$0xf]
        %v552 = vld [vmem:[%s536 + $0x3c] sm:$0xf]
        %v569 = vunpack.c.l.b16 %v537
        %v570 = vunpack.c.l.b16 %v538
        %v571 = vunpack.c.l.b16 %v539
        %v572 = vunpack.c.l.b16 %v540
        %v573 = vunpack.c.l.b16 %v541
        %v574 = vunpack.c.l.b16 %v542
        %v575 = vunpack.c.l.b16 %v543
        %v576 = vunpack.c.l.b16 %v544
        %v577 = vunpack.c.l.b16 %v545
        %v578 = vunpack.c.l.b16 %v546
        %v579 = vunpack.c.l.b16 %v547
        %v580 = vunpack.c.l.b16 %v548
        %v581 = vunpack.c.l.b16 %v549
        %v582 = vunpack.c.l.b16 %v550
        %v583 = vunpack.c.l.b16 %v551
        %v584 = vunpack.c.l.b16 %v552
        %v585 = vpack.c.b16 %v570, %v569
        %v586 = vpack.c.b16 %v572, %v571
        %v587 = vpack.c.b16 %v574, %v573
        %v588 = vpack.c.b16 %v576, %v575
        %v589 = vpack.c.b16 %v578, %v577
        %v590 = vpack.c.b16 %v580, %v579
        %v591 = vpack.c.b16 %v582, %v581
        %v592 = vpack.c.b16 %v584, %v583
        %601 = vmatprep.subr.bf16.mxu0 0
        %602 = vmatpush1.bf16.msra.mxu0 %v592
        %603 = vmatprep.subr.bf16.mxu0 0
        %604 = vmatpush1.bf16.msra.mxu0 %v591
        %605 = vmatprep.subr.bf16.mxu0 0
        %606 = vmatpush1.bf16.msra.mxu0 %v590
        %607 = vmatprep.subr.bf16.mxu0 0
        %608 = vmatpush1.bf16.msra.mxu0 %v589
        %609 = vmatprep.subr.bf16.mxu0 0
        %610 = vmatpush1.bf16.msra.mxu0 %v588
        %611 = vmatprep.subr.bf16.mxu0 0
        %612 = vmatpush1.bf16.msra.mxu0 %v587
        %613 = vmatprep.subr.bf16.mxu0 0
        %614 = vmatpush1.bf16.msra.mxu0 %v586
        %615 = vmatprep.subr.bf16.mxu0 0
        %616 = vmatpush1.bf16.msra.mxu0 %v585
        %617 = vmatprep.subr.bf16.mxu0 0
        %618 = vmatpush2.bf16.msra.mxu0 0
        %619 = vmatprep.subr.bf16.mxu0 0
        %620 = vmatpush2.bf16.msra.mxu0 0
        %621 = vmatprep.subr.bf16.mxu0 0
        %622 = vmatpush2.bf16.msra.mxu0 0
        %623 = vmatprep.subr.bf16.mxu0 0
        %624 = vmatpush2.bf16.msra.mxu0 0
        %625 = vmatprep.subr.bf16.mxu0 0
        %626 = vmatpush2.bf16.msra.mxu0 0
        %627 = vmatprep.subr.bf16.mxu0 0
        %628 = vmatpush2.bf16.msra.mxu0 0
        %629 = vmatprep.subr.bf16.mxu0 0
        %630 = vmatpush2.bf16.msra.mxu0 0
        %631 = vmatprep.subr.bf16.mxu0 0
        %632 = vmatpush2.bf16.msra.mxu0 0
        %633 = vmatprep.mubr.bf16.mxu0 0
        %634 = vmatmul.mubr.bf16.gmra.mxu0 %v534
        %v635 = vpop.f32.mrf.mxu0
        %v636 = vadd.f32 0.0, %v635
        %v637 = vpop.f32.mrf.mxu0
        %v638 = vpop.f32.mrf.mxu0
        %v639 = vadd.f32 0.0, %v638
        %v640 = vpop.f32.mrf.mxu0
        %641 = vmatprep.mubr.bf16.mxu0 0
        %642 = vmatmul.mubr.bf16.gmra.mxu0 %v535
        %v643 = vpop.f32.mrf.mxu0
        %v644 = vadd.f32 0.0, %v643
        %v645 = vpop.f32.mrf.mxu0
        %v646 = vpop.f32.mrf.mxu0
        %v647 = vadd.f32 0.0, %v646
        %v648 = vpop.f32.mrf.mxu0
        %649 = vdwg.mxu0
        %v666 = vunpack.c.l.b16 %v487
        %v667 = vunpack.c.l.b16 %v488
        %v668 = vunpack.c.l.b16 %v489
        %v669 = vunpack.c.l.b16 %v490
        %v670 = vunpack.c.l.b16 %v491
        %v671 = vunpack.c.l.b16 %v492
        %v672 = vunpack.c.l.b16 %v493
        %v673 = vunpack.c.l.b16 %v494
        %v674 = vunpack.c.l.b16 %v495
        %v675 = vunpack.c.l.b16 %v496
        %v676 = vunpack.c.l.b16 %v497
        %v677 = vunpack.c.l.b16 %v498
        %v678 = vunpack.c.l.b16 %v499
        %v679 = vunpack.c.l.b16 %v500
        %v680 = vunpack.c.l.b16 %v501
        %v681 = vunpack.c.l.b16 %v502
        %v682 = vpack.c.b16 %v667, %v666
        %v683 = vpack.c.b16 %v669, %v668
        %v684 = vpack.c.b16 %v671, %v670
        %v685 = vpack.c.b16 %v673, %v672
        %v686 = vpack.c.b16 %v675, %v674
        %v687 = vpack.c.b16 %v677, %v676
        %v688 = vpack.c.b16 %v679, %v678
        %v689 = vpack.c.b16 %v681, %v680
        %698 = vmatprep.subr.bf16.mxu0 0
        %699 = vmatpush1.bf16.msra.mxu0 %v689
        %700 = vmatprep.subr.bf16.mxu0 0
        %701 = vmatpush1.bf16.msra.mxu0 %v688
        %702 = vmatprep.subr.bf16.mxu0 0
        %703 = vmatpush1.bf16.msra.mxu0 %v687
        %704 = vmatprep.subr.bf16.mxu0 0
        %705 = vmatpush1.bf16.msra.mxu0 %v686
        %706 = vmatprep.subr.bf16.mxu0 0
        %707 = vmatpush1.bf16.msra.mxu0 %v685
        %708 = vmatprep.subr.bf16.mxu0 0
        %709 = vmatpush1.bf16.msra.mxu0 %v684
        %710 = vmatprep.subr.bf16.mxu0 0
        %711 = vmatpush1.bf16.msra.mxu0 %v683
        %712 = vmatprep.subr.bf16.mxu0 0
        %713 = vmatpush1.bf16.msra.mxu0 %v682
        %714 = vmatprep.subr.bf16.mxu0 0
        %715 = vmatpush2.bf16.msra.mxu0 0
        %716 = vmatprep.subr.bf16.mxu0 0
        %717 = vmatpush2.bf16.msra.mxu0 0
        %718 = vmatprep.subr.bf16.mxu0 0
        %719 = vmatpush2.bf16.msra.mxu0 0
        %720 = vmatprep.subr.bf16.mxu0 0
        %721 = vmatpush2.bf16.msra.mxu0 0
        %722 = vmatprep.subr.bf16.mxu0 0
        %723 = vmatpush2.bf16.msra.mxu0 0
        %724 = vmatprep.subr.bf16.mxu0 0
        %725 = vmatpush2.bf16.msra.mxu0 0
        %726 = vmatprep.subr.bf16.mxu0 0
        %727 = vmatpush2.bf16.msra.mxu0 0
        %728 = vmatprep.subr.bf16.mxu0 0
        %729 = vmatpush2.bf16.msra.mxu0 0
        %730 = vmatprep.mubr.bf16.mxu0 0
        %731 = vmatmul.mubr.bf16.gmra.mxu0 %v485
        %v732 = vpop.f32.mrf.mxu0
        %v733 = vadd.f32 %v636, %v732
        %v734 = vpop.f32.mrf.mxu0
        %v735 = vpop.f32.mrf.mxu0
        %v736 = vadd.f32 %v639, %v735
        %v737 = vpop.f32.mrf.mxu0
        %738 = vmatprep.mubr.bf16.mxu0 0
        %739 = vmatmul.mubr.bf16.gmra.mxu0 %v486
        %v740 = vpop.f32.mrf.mxu0
        %v741 = vadd.f32 %v644, %v740
        %v742 = vpop.f32.mrf.mxu0
        %v743 = vpop.f32.mrf.mxu0
        %v744 = vadd.f32 %v647, %v743
        %v745 = vpop.f32.mrf.mxu0
        %746 = vdwg.mxu0
        %s747 = scalar_lea.vmem %s377, 32 [#allocation2]
        %v748 = vld [vmem:[%s747] sm:$0xf]
        %v749 = vld [vmem:[%s747 + $0x4] sm:$0xf]
        %v750 = vld [vmem:[%s747 + $0x8] sm:$0xf]
        %v751 = vld [vmem:[%s747 + $0xc] sm:$0xf]
        %v752 = vunpack.c.l.bf16 %v748
        %v753 = vunpack.c.l.bf16 %v749
        %v754 = vunpack.c.l.bf16 %v750
        %v755 = vunpack.c.l.bf16 %v751
        %v756 = vld [vmem:[%s439 + $0x2] sm:$0x1]
        %v757 = vlaneseq
        %v758 = vshrl.u32 %v757, 7
        %v759 = vsub.s32 0, %v758
        %v760 = vrot.slane %v756, %v759
        %v761 = vmul.f32 %v752, %v760
        %v762 = vmul.f32 %v753, %v760
        %v763 = vmul.f32 %v754, %v760
        %v764 = vmul.f32 %v755, %v760
        %v765 = vld [vmem:[%s443 + $0x2] sm:$0x1]
        %v766 = vlaneseq
        %v767 = vshrl.u32 %v766, 7
        %v768 = vsub.s32 0, %v767
        %v769 = vrot.slane %v765, %v768
        %v770 = vadd.f32 %v761, %v769
        %v771 = vadd.f32 %v762, %v769
        %v772 = vadd.f32 %v763, %v769
        %v773 = vadd.f32 %v764, %v769
        %v774 = vmax.f32 %v770, 0.0
        %v775 = vmax.f32 %v771, 0.0
        %v776 = vmax.f32 %v772, 0.0
        %v777 = vmax.f32 %v773, 0.0
        %v778 = vpack.c.bf16 %v775, %v774
        %v779 = vpack.c.bf16 %v777, %v776
        %s780 = scalar_lea.vmem %s4, 128
        %v781 = vld [vmem:[%s780] sm:$0xf]
        %v782 = vld [vmem:[%s780 + $0x4] sm:$0xf]
        %v783 = vld [vmem:[%s780 + $0x8] sm:$0xf]
        %v784 = vld [vmem:[%s780 + $0xc] sm:$0xf]
        %v785 = vld [vmem:[%s780 + $0x10] sm:$0xf]
        %v786 = vld [vmem:[%s780 + $0x14] sm:$0xf]
        %v787 = vld [vmem:[%s780 + $0x18] sm:$0xf]
        %v788 = vld [vmem:[%s780 + $0x1c] sm:$0xf]
        %v789 = vld [vmem:[%s780 + $0x20] sm:$0xf]
        %v790 = vld [vmem:[%s780 + $0x24] sm:$0xf]
        %v791 = vld [vmem:[%s780 + $0x28] sm:$0xf]
        %v792 = vld [vmem:[%s780 + $0x2c] sm:$0xf]
        %v793 = vld [vmem:[%s780 + $0x30] sm:$0xf]
        %v794 = vld [vmem:[%s780 + $0x34] sm:$0xf]
        %v795 = vld [vmem:[%s780 + $0x38] sm:$0xf]
        %v796 = vld [vmem:[%s780 + $0x3c] sm:$0xf]
        %v813 = vunpack.c.l.b16 %v781
        %v814 = vunpack.c.l.b16 %v782
        %v815 = vunpack.c.l.b16 %v783
        %v816 = vunpack.c.l.b16 %v784
        %v817 = vunpack.c.l.b16 %v785
        %v818 = vunpack.c.l.b16 %v786
        %v819 = vunpack.c.l.b16 %v787
        %v820 = vunpack.c.l.b16 %v788
        %v821 = vunpack.c.l.b16 %v789
        %v822 = vunpack.c.l.b16 %v790
        %v823 = vunpack.c.l.b16 %v791
        %v824 = vunpack.c.l.b16 %v792
        %v825 = vunpack.c.l.b16 %v793
        %v826 = vunpack.c.l.b16 %v794
        %v827 = vunpack.c.l.b16 %v795
        %v828 = vunpack.c.l.b16 %v796
        %v829 = vpack.c.b16 %v814, %v813
        %v830 = vpack.c.b16 %v816, %v815
        %v831 = vpack.c.b16 %v818, %v817
        %v832 = vpack.c.b16 %v820, %v819
        %v833 = vpack.c.b16 %v822, %v821
        %v834 = vpack.c.b16 %v824, %v823
        %v835 = vpack.c.b16 %v826, %v825
        %v836 = vpack.c.b16 %v828, %v827
        %845 = vmatprep.subr.bf16.mxu0 0
        %846 = vmatpush1.bf16.msra.mxu0 %v836
        %847 = vmatprep.subr.bf16.mxu0 0
        %848 = vmatpush1.bf16.msra.mxu0 %v835
        %849 = vmatprep.subr.bf16.mxu0 0
        %850 = vmatpush1.bf16.msra.mxu0 %v834
        %851 = vmatprep.subr.bf16.mxu0 0
        %852 = vmatpush1.bf16.msra.mxu0 %v833
        %853 = vmatprep.subr.bf16.mxu0 0
        %854 = vmatpush1.bf16.msra.mxu0 %v832
        %855 = vmatprep.subr.bf16.mxu0 0
        %856 = vmatpush1.bf16.msra.mxu0 %v831
        %857 = vmatprep.subr.bf16.mxu0 0
        %858 = vmatpush1.bf16.msra.mxu0 %v830
        %859 = vmatprep.subr.bf16.mxu0 0
        %860 = vmatpush1.bf16.msra.mxu0 %v829
        %861 = vmatprep.subr.bf16.mxu0 0
        %862 = vmatpush2.bf16.msra.mxu0 0
        %863 = vmatprep.subr.bf16.mxu0 0
        %864 = vmatpush2.bf16.msra.mxu0 0
        %865 = vmatprep.subr.bf16.mxu0 0
        %866 = vmatpush2.bf16.msra.mxu0 0
        %867 = vmatprep.subr.bf16.mxu0 0
        %868 = vmatpush2.bf16.msra.mxu0 0
        %869 = vmatprep.subr.bf16.mxu0 0
        %870 = vmatpush2.bf16.msra.mxu0 0
        %871 = vmatprep.subr.bf16.mxu0 0
        %872 = vmatpush2.bf16.msra.mxu0 0
        %873 = vmatprep.subr.bf16.mxu0 0
        %874 = vmatpush2.bf16.msra.mxu0 0
        %875 = vmatprep.subr.bf16.mxu0 0
        %876 = vmatpush2.bf16.msra.mxu0 0
        %877 = vmatprep.mubr.bf16.mxu0 0
        %878 = vmatmul.mubr.bf16.gmra.mxu0 %v778
        %v879 = vpop.f32.mrf.mxu0
        %v880 = vadd.f32 0.0, %v879
        %v881 = vpop.f32.mrf.mxu0
        %v882 = vpop.f32.mrf.mxu0
        %v883 = vadd.f32 0.0, %v882
        %v884 = vpop.f32.mrf.mxu0
        %885 = vmatprep.mubr.bf16.mxu0 0
        %886 = vmatmul.mubr.bf16.gmra.mxu0 %v779
        %v887 = vpop.f32.mrf.mxu0
        %v888 = vadd.f32 0.0, %v887
        %v889 = vpop.f32.mrf.mxu0
        %v890 = vpop.f32.mrf.mxu0
        %v891 = vadd.f32 0.0, %v890
        %v892 = vpop.f32.mrf.mxu0
        %893 = vdwg.mxu0
        %v894 = vadd.f32 %v733, %v880
        %v895 = vadd.f32 %v736, %v883
        %v896 = vadd.f32 %v741, %v888
        %v897 = vadd.f32 %v744, %v891
        %s898 = scalar_lea.vmem %s377, 48 [#allocation2]
        %v899 = vld [vmem:[%s898] sm:$0xf]
        %v900 = vld [vmem:[%s898 + $0x4] sm:$0xf]
        %v901 = vld [vmem:[%s898 + $0x8] sm:$0xf]
        %v902 = vld [vmem:[%s898 + $0xc] sm:$0xf]
        %v903 = vunpack.c.l.bf16 %v899
        %v904 = vunpack.c.l.bf16 %v900
        %v905 = vunpack.c.l.bf16 %v901
        %v906 = vunpack.c.l.bf16 %v902
        %v907 = vld [vmem:[%s439 + $0x3] sm:$0x1]
        %v908 = vlaneseq
        %v909 = vshrl.u32 %v908, 7
        %v910 = vsub.s32 0, %v909
        %v911 = vrot.slane %v907, %v910
        %v912 = vmul.f32 %v903, %v911
        %v913 = vmul.f32 %v904, %v911
        %v914 = vmul.f32 %v905, %v911
        %v915 = vmul.f32 %v906, %v911
        %v916 = vld [vmem:[%s443 + $0x3] sm:$0x1]
        %v917 = vlaneseq
        %v918 = vshrl.u32 %v917, 7
        %v919 = vsub.s32 0, %v918
        %v920 = vrot.slane %v916, %v919
        %v921 = vadd.f32 %v912, %v920
        %v922 = vadd.f32 %v913, %v920
        %v923 = vadd.f32 %v914, %v920
        %v924 = vadd.f32 %v915, %v920
        %v925 = vmax.f32 %v921, 0.0
        %v926 = vmax.f32 %v922, 0.0
        %v927 = vmax.f32 %v923, 0.0
        %v928 = vmax.f32 %v924, 0.0
        %v929 = vpack.c.bf16 %v926, %v925
        %v930 = vpack.c.bf16 %v928, %v927
        %s931 = scalar_lea.vmem %s4, 192
        %v932 = vld [vmem:[%s931] sm:$0xf]
        %v933 = vld [vmem:[%s931 + $0x4] sm:$0xf]
        %v934 = vld [vmem:[%s931 + $0x8] sm:$0xf]
        %v935 = vld [vmem:[%s931 + $0xc] sm:$0xf]
        %v936 = vld [vmem:[%s931 + $0x10] sm:$0xf]
        %v937 = vld [vmem:[%s931 + $0x14] sm:$0xf]
        %v938 = vld [vmem:[%s931 + $0x18] sm:$0xf]
        %v939 = vld [vmem:[%s931 + $0x1c] sm:$0xf]
        %v940 = vld [vmem:[%s931 + $0x20] sm:$0xf]
        %v941 = vld [vmem:[%s931 + $0x24] sm:$0xf]
        %v942 = vld [vmem:[%s931 + $0x28] sm:$0xf]
        %v943 = vld [vmem:[%s931 + $0x2c] sm:$0xf]
        %v944 = vld [vmem:[%s931 + $0x30] sm:$0xf]
        %v945 = vld [vmem:[%s931 + $0x34] sm:$0xf]
        %v946 = vld [vmem:[%s931 + $0x38] sm:$0xf]
        %v947 = vld [vmem:[%s931 + $0x3c] sm:$0xf]
        %v964 = vunpack.c.l.b16 %v932
        %v965 = vunpack.c.l.b16 %v933
        %v966 = vunpack.c.l.b16 %v934
        %v967 = vunpack.c.l.b16 %v935
        %v968 = vunpack.c.l.b16 %v936
        %v969 = vunpack.c.l.b16 %v937
        %v970 = vunpack.c.l.b16 %v938
        %v971 = vunpack.c.l.b16 %v939
        %v972 = vunpack.c.l.b16 %v940
        %v973 = vunpack.c.l.b16 %v941
        %v974 = vunpack.c.l.b16 %v942
        %v975 = vunpack.c.l.b16 %v943
        %v976 = vunpack.c.l.b16 %v944
        %v977 = vunpack.c.l.b16 %v945
        %v978 = vunpack.c.l.b16 %v946
        %v979 = vunpack.c.l.b16 %v947
        %v980 = vpack.c.b16 %v965, %v964
        %v981 = vpack.c.b16 %v967, %v966
        %v982 = vpack.c.b16 %v969, %v968
        %v983 = vpack.c.b16 %v971, %v970
        %v984 = vpack.c.b16 %v973, %v972
        %v985 = vpack.c.b16 %v975, %v974
        %v986 = vpack.c.b16 %v977, %v976
        %v987 = vpack.c.b16 %v979, %v978
        %996 = vmatprep.subr.bf16.mxu0 0
        %997 = vmatpush1.bf16.msra.mxu0 %v987
        %998 = vmatprep.subr.bf16.mxu0 0
        %999 = vmatpush1.bf16.msra.mxu0 %v986
        %1000 = vmatprep.subr.bf16.mxu0 0
        %1001 = vmatpush1.bf16.msra.mxu0 %v985
        %1002 = vmatprep.subr.bf16.mxu0 0
        %1003 = vmatpush1.bf16.msra.mxu0 %v984
        %1004 = vmatprep.subr.bf16.mxu0 0
        %1005 = vmatpush1.bf16.msra.mxu0 %v983
        %1006 = vmatprep.subr.bf16.mxu0 0
        %1007 = vmatpush1.bf16.msra.mxu0 %v982
        %1008 = vmatprep.subr.bf16.mxu0 0
        %1009 = vmatpush1.bf16.msra.mxu0 %v981
        %1010 = vmatprep.subr.bf16.mxu0 0
        %1011 = vmatpush1.bf16.msra.mxu0 %v980
        %1012 = vmatprep.subr.bf16.mxu0 0
        %1013 = vmatpush2.bf16.msra.mxu0 0
        %1014 = vmatprep.subr.bf16.mxu0 0
        %1015 = vmatpush2.bf16.msra.mxu0 0
        %1016 = vmatprep.subr.bf16.mxu0 0
        %1017 = vmatpush2.bf16.msra.mxu0 0
        %1018 = vmatprep.subr.bf16.mxu0 0
        %1019 = vmatpush2.bf16.msra.mxu0 0
        %1020 = vmatprep.subr.bf16.mxu0 0
        %1021 = vmatpush2.bf16.msra.mxu0 0
        %1022 = vmatprep.subr.bf16.mxu0 0
        %1023 = vmatpush2.bf16.msra.mxu0 0
        %1024 = vmatprep.subr.bf16.mxu0 0
        %1025 = vmatpush2.bf16.msra.mxu0 0
        %1026 = vmatprep.subr.bf16.mxu0 0
        %1027 = vmatpush2.bf16.msra.mxu0 0
        %1028 = vmatprep.mubr.bf16.mxu0 0
        %1029 = vmatmul.mubr.bf16.gmra.mxu0 %v929
        %v1030 = vpop.f32.mrf.mxu0
        %v1031 = vadd.f32 0.0, %v1030
        %v1032 = vpop.f32.mrf.mxu0
        %v1033 = vpop.f32.mrf.mxu0
        %v1034 = vadd.f32 0.0, %v1033
        %v1035 = vpop.f32.mrf.mxu0
        %1036 = vmatprep.mubr.bf16.mxu0 0
        %1037 = vmatmul.mubr.bf16.gmra.mxu0 %v930
        %v1038 = vpop.f32.mrf.mxu0
        %v1039 = vadd.f32 0.0, %v1038
        %v1040 = vpop.f32.mrf.mxu0
        %v1041 = vpop.f32.mrf.mxu0
        %v1042 = vadd.f32 0.0, %v1041
        %v1043 = vpop.f32.mrf.mxu0
        %1044 = vdwg.mxu0
        %v1045 = vadd.f32 %v894, %v1031
        %v1046 = vadd.f32 %v895, %v1034
        %v1047 = vadd.f32 %v896, %v1039
        %v1048 = vadd.f32 %v897, %v1042
        %v1049 = vld [vmem:[%s434] sm:$0xf]
        %v1050 = vld [vmem:[%s434 + $0x4] sm:$0xf]
        %v1051 = vld [vmem:[%s434 + $0x8] sm:$0xf]
        %v1052 = vld [vmem:[%s434 + $0xc] sm:$0xf]
        %s1053 = scalar_lea.vmem %s4, 256
        %v1054 = vld [vmem:[%s1053] sm:$0xf]
        %v1055 = vld [vmem:[%s1053 + $0x4] sm:$0xf]
        %v1056 = vld [vmem:[%s1053 + $0x8] sm:$0xf]
        %v1057 = vld [vmem:[%s1053 + $0xc] sm:$0xf]
        %v1058 = vld [vmem:[%s1053 + $0x10] sm:$0xf]
        %v1059 = vld [vmem:[%s1053 + $0x14] sm:$0xf]
        %v1060 = vld [vmem:[%s1053 + $0x18] sm:$0xf]
        %v1061 = vld [vmem:[%s1053 + $0x1c] sm:$0xf]
        %v1062 = vld [vmem:[%s1053 + $0x20] sm:$0xf]
        %v1063 = vld [vmem:[%s1053 + $0x24] sm:$0xf]
        %v1064 = vld [vmem:[%s1053 + $0x28] sm:$0xf]
        %v1065 = vld [vmem:[%s1053 + $0x2c] sm:$0xf]
        %v1066 = vld [vmem:[%s1053 + $0x30] sm:$0xf]
        %v1067 = vld [vmem:[%s1053 + $0x34] sm:$0xf]
        %v1068 = vld [vmem:[%s1053 + $0x38] sm:$0xf]
        %v1069 = vld [vmem:[%s1053 + $0x3c] sm:$0xf]
        %v1074 = vunpack.c.l.b16 %v1049
        %v1075 = vunpack.c.l.b16 %v1050
        %v1076 = vunpack.c.l.b16 %v1051
        %v1077 = vunpack.c.l.b16 %v1052
        %v1078 = vpack.c.b16 %v1075, %v1074
        %v1079 = vpack.c.b16 %v1077, %v1076
        %v1098 = vunpack.c.l.b16 %v1054
        %v1099 = vunpack.c.l.b16 %v1055
        %v1100 = vunpack.c.l.b16 %v1056
        %v1101 = vunpack.c.l.b16 %v1057
        %v1102 = vunpack.c.l.b16 %v1058
        %v1103 = vunpack.c.l.b16 %v1059
        %v1104 = vunpack.c.l.b16 %v1060
        %v1105 = vunpack.c.l.b16 %v1061
        %v1106 = vunpack.c.l.b16 %v1062
        %v1107 = vunpack.c.l.b16 %v1063
        %v1108 = vunpack.c.l.b16 %v1064
        %v1109 = vunpack.c.l.b16 %v1065
        %v1110 = vunpack.c.l.b16 %v1066
        %v1111 = vunpack.c.l.b16 %v1067
        %v1112 = vunpack.c.l.b16 %v1068
        %v1113 = vunpack.c.l.b16 %v1069
        %v1114 = vpack.c.b16 %v1099, %v1098
        %v1115 = vpack.c.b16 %v1101, %v1100
        %v1116 = vpack.c.b16 %v1103, %v1102
        %v1117 = vpack.c.b16 %v1105, %v1104
        %v1118 = vpack.c.b16 %v1107, %v1106
        %v1119 = vpack.c.b16 %v1109, %v1108
        %v1120 = vpack.c.b16 %v1111, %v1110
        %v1121 = vpack.c.b16 %v1113, %v1112
        %1130 = vmatprep.subr.bf16.mxu0 0
        %1131 = vmatpush1.bf16.msra.mxu0 %v1121
        %1132 = vmatprep.subr.bf16.mxu0 0
        %1133 = vmatpush1.bf16.msra.mxu0 %v1120
        %1134 = vmatprep.subr.bf16.mxu0 0
        %1135 = vmatpush1.bf16.msra.mxu0 %v1119
        %1136 = vmatprep.subr.bf16.mxu0 0
        %1137 = vmatpush1.bf16.msra.mxu0 %v1118
        %1138 = vmatprep.subr.bf16.mxu0 0
        %1139 = vmatpush1.bf16.msra.mxu0 %v1117
        %1140 = vmatprep.subr.bf16.mxu0 0
        %1141 = vmatpush1.bf16.msra.mxu0 %v1116
        %1142 = vmatprep.subr.bf16.mxu0 0
        %1143 = vmatpush1.bf16.msra.mxu0 %v1115
        %1144 = vmatprep.subr.bf16.mxu0 0
        %1145 = vmatpush1.bf16.msra.mxu0 %v1114
        %1146 = vmatprep.subr.bf16.mxu0 0
        %1147 = vmatpush2.bf16.msra.mxu0 0
        %1148 = vmatprep.subr.bf16.mxu0 0
        %1149 = vmatpush2.bf16.msra.mxu0 0
        %1150 = vmatprep.subr.bf16.mxu0 0
        %1151 = vmatpush2.bf16.msra.mxu0 0
        %1152 = vmatprep.subr.bf16.mxu0 0
        %1153 = vmatpush2.bf16.msra.mxu0 0
        %1154 = vmatprep.subr.bf16.mxu0 0
        %1155 = vmatpush2.bf16.msra.mxu0 0
        %1156 = vmatprep.subr.bf16.mxu0 0
        %1157 = vmatpush2.bf16.msra.mxu0 0
        %1158 = vmatprep.subr.bf16.mxu0 0
        %1159 = vmatpush2.bf16.msra.mxu0 0
        %1160 = vmatprep.subr.bf16.mxu0 0
        %1161 = vmatpush2.bf16.msra.mxu0 0
        %1162 = vmatprep.mubr.bf16.mxu0 0
        %1163 = vmatmul.mubr.bf16.gmra.mxu0 %v1078
        %v1164 = vpop.f32.mrf.mxu0
        %v1165 = vadd.f32 0.0, %v1164
        %v1166 = vpop.f32.mrf.mxu0
        %v1167 = vpop.f32.mrf.mxu0
        %v1168 = vadd.f32 0.0, %v1167
        %v1169 = vpop.f32.mrf.mxu0
        %1170 = vmatprep.mubr.bf16.mxu0 0
        %1171 = vmatmul.mubr.bf16.gmra.mxu0 %v1079
        %v1172 = vpop.f32.mrf.mxu0
        %v1173 = vadd.f32 0.0, %v1172
        %v1174 = vpop.f32.mrf.mxu0
        %v1175 = vpop.f32.mrf.mxu0
        %v1176 = vadd.f32 0.0, %v1175
        %v1177 = vpop.f32.mrf.mxu0
        %1178 = vdwg.mxu0
        %v1179 = vadd.f32 %v1045, %v1165
        %v1180 = vadd.f32 %v1046, %v1168
        %v1181 = vadd.f32 %v1047, %v1173
        %v1182 = vadd.f32 %v1048, %v1176
        %v1183 = vld [vmem:[%s5] sm:$0x1]
        %v1185 = vlaneseq
        %v1186 = vshrl.u32 %v1185, 7
        %v1187 = vsub.s32 0, %v1186
        %v1188 = vrot.slane %v1183, %v1187
        %v1190 = vadd.f32 %v1179, %v1188
        %v1191 = vadd.f32 %v1180, %v1188
        %v1192 = vadd.f32 %v1181, %v1188
        %v1193 = vadd.f32 %v1182, %v1188
        %1194 = vst [vmem:[%s452] sm:$0xff] %v1190
        %1195 = vst [vmem:[%s452 + $0x8] sm:$0xff] %v1191
        %1196 = vst [vmem:[%s452 + $0x10] sm:$0xff] %v1192
        %1197 = vst [vmem:[%s452 + $0x18] sm:$0xff] %v1193
        %s1198 = smul.u32 4, %s22
        %p1199 = scmp.lt.s32.totalorder %s21, 1
        %s1200 = scalar_select %p1199, %s21, 1
        %p1201 = scmp.lt.s32.totalorder %s1198, 7
        %s1202 = scalar_select %p1201, %s1198, 7
        %s1203 = smul.addr %s1200, 8
        %s1204 = sadd.s32 %s1202, %s1203
        %s1205 = smul.addr %s1204, 8
        %s1206 = scalar_lea.vmem %s6, %s1205
        // Predicated region
        $region86: #{atrou_mmu_forward.3} parent=80 // pred_check
          %p1207 = pneg %p199
        $region87: #{atrou_mmu_forward.3} parent=80 // pred_check_branch
          %1209 = sbr.rel (%p1207) target = $region89
        $region88: #{atrou_mmu_forward.3} parent=80 // pred_region
          %s1210 = smul.u32 4, %s22
        $region89: #{atrou_mmu_forward.3} parent=80 // pred_fallthru
          _
      $region81: #{atrou_mmu_forward.3} parent=5 // pred_fallthru
        _
      %p1211 = scmp.le.s32.totalorder 2, %s12
      // Predicated region
      $region90: #{atrou_mmu_forward.3} parent=5 // pred_check
        %p1212 = pneg %p1211
      $region91: #{atrou_mmu_forward.3} parent=5 // pred_check_branch
        %1214 = sbr.rel (%p1212) target = $region93
      $region92: #{atrou_mmu_forward.3} parent=5 // pred_region
        %s1215 = ssub.s32 %s12, 2
        // Predicated region
        $region94: #{atrou_mmu_forward.3} parent=92 // pred_check
          %p1216 = pneg %p205
        $region95: #{atrou_mmu_forward.3} parent=92 // pred_check_branch
          %1218 = sbr.rel (%p1216) target = $region97
        $region96: #{atrou_mmu_forward.3} parent=92 // pred_region
          %s1219 = smul.u32 4, %s24
          %p1220 = scmp.lt.s32.totalorder %s23, 1
          %s1221 = scalar_select %p1220, %s23, 1
          %p1222 = scmp.lt.s32.totalorder %s1219, 7
          %s1223 = scalar_select %p1222, %s1219, 7
          %s1224 = smul.addr %s1221, 8
          %s1225 = sadd.s32 %s1223, %s1224
          %s1226 = smul.addr %s1225, 8
          %s1227 = scalar_lea.vmem %s6, %s1226
        $region97: #{atrou_mmu_forward.3} parent=92 // pred_fallthru
          _
      $region93: #{atrou_mmu_forward.3} parent=5 // pred_fallthru
        _
    $region6: #{atrou_mmu_forward.3} parent=1 // loop_footer
      %s16 = sadd.s32 1, %s12
    $region7: #{atrou_mmu_forward.3} parent=1 // loop_footer_branch
      %11 = sbr.rel target = $region3
    $region8: #{atrou_mmu_forward.3} parent=1 // loop_exit
      _

// kernel: atrou_mmu_forward.2
$region0: #{atrou_mmu_forward.2}
  #allocation0 [shape = 'u32[]', space=smem, size = 0x4, offset = 0x4, fixed_abs, tag = 'smem constant byte address 0x4 - core index']
  #allocation1 [shape = 'u32[144,128]{1,0:T(1,128)}', space=vmem, size = 0x12000, scoped, tag = 'internal scratch']
  %s0 = inlined_call_operand.vmem [shape: bf16[2,2,3072,128], index: 0, kind: input, shape index: {}]
  %s1 = inlined_call_operand.vmem [shape: bf16[4,9,128,128], index: 1, kind: input, shape index: {}]
  %s2 = inlined_call_operand.vmem [shape: f32[2,32,128], index: 2, kind: input, shape index: {}]
  %s3 = inlined_call_operand.vmem [shape: bf16[4,2,64,128], index: 3, kind: output, shape index: {0}]
  %s4 = inlined_call_operand.vmem [shape: f32[2,2,8,128], index: 4, kind: output, shape index: {1}]
  %5 = xla_tuple %s3, %s4
  %s6 = sld [smem:[#allocation0]]
  $region90: #{atrou_mmu_forward.2} parent=0
    _
  %s8 = ssub.s32 1, %s6
  %s9 = scalar_select 0, %s8, %s6
  $region1: #{atrou_mmu_forward.2} parent=0
    #allocation2 [shape = 'u8[65536]{0}', space=vmem, size = 0x10000, scoped, tag = 'output window, operand 0']
    loop: start=0, step=1, limit=6
    $region2: #{atrou_mmu_forward.2} parent=1 // loop_pre_header
      _
    $region3: #{atrou_mmu_forward.2} parent=1 // loop_header
      %s11 = sphi 0, %s15
      %p12 = scmp.ge.s32.totalorder %s11, 6
      %s18 = sphi 0, %s30
      %s19 = sphi 0, %s26
      %s20 = sphi 0, %s18
      %s21 = sphi 0, %s19
      %s22 = sphi 0, %s20
      %s23 = sphi 0, %s21
      %s35 = sphi 0, %s37
      %s38 = sphi 0, %s35
      %s39 = sphi 0, %s38
      %s55 = sphi 0, %s39
      %s59 = sphi 0, %s59
      %s61 = sphi 0, %s59
      %s62 = sphi 0, %s61
      %s76 = sphi 0, %s62
      %s82 = sphi 0, %s84
      %s85 = sphi 0, %s82
      %s86 = sphi 0, %s85
      %s102 = sphi 0, %s86
      %s110 = sphi 0, %s112
      %s113 = sphi 0, %s110
      %s114 = sphi 0, %s113
      %s130 = sphi 0, %s114
      %s138 = sphi 0, %s140
      %s141 = sphi 0, %s138
      %s142 = sphi 0, %s141
      %s158 = sphi 0, %s142
    $region4: #{atrou_mmu_forward.2} parent=1 // loop_header_branch
      %14 = sbr.rel (%p12) target = $region8
    $region5: #{atrou_mmu_forward.2} parent=1 // loop_body
      %s16 = ssub.s32 %s11, 1
      %s17 = ssub.s32 %s11, 2
      %s24 = sadd.s32 1, %s19
      %p25 = scmp.ge.s32.totalorder %s24, 2
      %s26 = scalar_select %p25, 0, %s24
      %s27 = sadd.s32 1, %s18
      %s28 = scalar_select %p25, %s27, %s18
      %p29 = scmp.ge.s32.totalorder %s28, 2
      %s30 = scalar_select %p29, 0, %s28
      %s31 = ssub.s32 %s18, %s30
      %s32 = ssub.s32 %s19, %s26
      %s33 = sor.u32 %s31, %s32
      %p34 = scmp.eq.s32.totalorder %s33, 0
      %s36 = sadd.s32 %s35, 1
      %s37 = scalar_select %p34, %s35, %s36
      %p40 = pneg %p34
      %p41 = scmp.eq.s32.totalorder %s11, 3
      %p42 = por %p40, %p41
      %p43 = scmp.ne.s32.totalorder %s35, %s38
      %p44 = scmp.eq.s32.totalorder %s11, 0
      %p45 = por %p43, %p44
      %p46 = scmp.ne.s32.totalorder %s35, %s38
      %p47 = scmp.eq.s32.totalorder %s16, 3
      %p48 = por %p46, %p47
      %p49 = scmp.ne.s32.totalorder %s38, %s39
      %p50 = scmp.eq.s32.totalorder %s16, 0
      %p51 = por %p49, %p50
      %p52 = scmp.ne.s32.totalorder %s38, %s39
      %p53 = scmp.eq.s32.totalorder %s17, 3
      %p54 = por %p52, %p53
      %p56 = scmp.ne.s32.totalorder %s39, %s55
      %p57 = scmp.eq.s32.totalorder %s17, 0
      %p58 = por %p56, %p57
      %s60 = sadd.s32 %s59, 1
      %p63 = scmp.eq.s32.totalorder %s11, 3
      %p64 = scmp.ne.s32.totalorder %s59, %s61
      %p65 = scmp.eq.s32.totalorder %s11, 0
      %p66 = por %p64, %p65
      %p67 = scmp.ne.s32.totalorder %s59, %s61
      %p68 = scmp.eq.s32.totalorder %s16, 3
      %p69 = por %p67, %p68
      %p70 = scmp.ne.s32.totalorder %s61, %s62
      %p71 = scmp.eq.s32.totalorder %s16, 0
      %p72 = por %p70, %p71
      %p73 = scmp.ne.s32.totalorder %s61, %s62
      %p74 = scmp.eq.s32.totalorder %s17, 3
      %p75 = por %p73, %p74
      %p77 = scmp.ne.s32.totalorder %s62, %s76
      %p78 = scmp.eq.s32.totalorder %s17, 0
      %p79 = por %p77, %p78
      %s80 = ssub.s32 %s19, %s26
      %p81 = scmp.eq.s32.totalorder %s80, 0
      %s83 = sadd.s32 %s82, 1
      %s84 = scalar_select %p81, %s82, %s83
      %p87 = pneg %p81
      %p88 = scmp.eq.s32.totalorder %s11, 3
      %p89 = por %p87, %p88
      %p90 = scmp.ne.s32.totalorder %s82, %s85
      %p91 = scmp.eq.s32.totalorder %s11, 0
      %p92 = por %p90, %p91
      %p93 = scmp.ne.s32.totalorder %s82, %s85
      %p94 = scmp.eq.s32.totalorder %s16, 3
      %p95 = por %p93, %p94
      %p96 = scmp.ne.s32.totalorder %s85, %s86
      %p97 = scmp.eq.s32.totalorder %s16, 0
      %p98 = por %p96, %p97
      %p99 = scmp.ne.s32.totalorder %s85, %s86
      %p100 = scmp.eq.s32.totalorder %s17, 3
      %p101 = por %p99, %p100
      %p103 = scmp.ne.s32.totalorder %s86, %s102
      %p104 = scmp.eq.s32.totalorder %s17, 0
      %p105 = por %p103, %p104
      %s106 = ssub.s32 %s18, %s30
      %s107 = ssub.s32 %s19, %s26
      %s108 = sor.u32 %s106, %s107
      %p109 = scmp.eq.s32.totalorder %s108, 0
      %s111 = sadd.s32 %s110, 1
      %s112 = scalar_select %p109, %s110, %s111
      %p115 = pneg %p109
      %p116 = scmp.eq.s32.totalorder %s11, 3
      %p117 = por %p115, %p116
      %p118 = scmp.ne.s32.totalorder %s110, %s113
      %p119 = scmp.eq.s32.totalorder %s11, 0
      %p120 = por %p118, %p119
      %p121 = scmp.ne.s32.totalorder %s110, %s113
      %p122 = scmp.eq.s32.totalorder %s16, 3
      %p123 = por %p121, %p122
      %p124 = scmp.ne.s32.totalorder %s113, %s114
      %p125 = scmp.eq.s32.totalorder %s16, 0
      %p126 = por %p124, %p125
      %p127 = scmp.ne.s32.totalorder %s113, %s114
      %p128 = scmp.eq.s32.totalorder %s17, 3
      %p129 = por %p127, %p128
      %p131 = scmp.ne.s32.totalorder %s114, %s130
      %p132 = scmp.eq.s32.totalorder %s17, 0
      %p133 = por %p131, %p132
      %s134 = ssub.s32 %s18, %s30
      %s135 = ssub.s32 %s19, %s26
      %s136 = sor.u32 %s134, %s135
      %p137 = scmp.eq.s32.totalorder %s136, 0
      %s139 = sadd.s32 %s138, 1
      %s140 = scalar_select %p137, %s138, %s139
      %p143 = pneg %p137
      %p144 = scmp.eq.s32.totalorder %s11, 3
      %p145 = por %p143, %p144
      %p146 = scmp.ne.s32.totalorder %s138, %s141
      %p147 = scmp.eq.s32.totalorder %s11, 0
      %p148 = por %p146, %p147
      %p149 = scmp.ne.s32.totalorder %s138, %s141
      %p150 = scmp.eq.s32.totalorder %s16, 3
      %p151 = por %p149, %p150
      %p152 = scmp.ne.s32.totalorder %s141, %s142
      %p153 = scmp.eq.s32.totalorder %s16, 0
      %p154 = por %p152, %p153
      %p155 = scmp.ne.s32.totalorder %s141, %s142
      %p156 = scmp.eq.s32.totalorder %s17, 3
      %p157 = por %p155, %p156
      %p159 = scmp.ne.s32.totalorder %s142, %s158
      %p160 = scmp.eq.s32.totalorder %s17, 0
      %p161 = por %p159, %p160
      %p162 = scmp.le.s32.totalorder 1, %s11
      %p163 = scmp.lt.s32.totalorder %s11, 5
      %p164 = pnand %p162, %p163
      %p165 = pneg %p164
      // Predicated region
      $region9: #{atrou_mmu_forward.2} parent=5 // pred_check
        _
      $region10: #{atrou_mmu_forward.2} parent=5 // pred_check_branch
        %167 = sbr.rel (%p164) target = $region12
      $region11: #{atrou_mmu_forward.2} parent=5 // pred_region
        %s168 = ssub.s32 %s11, 1
        // Predicated region
        $region13: #{atrou_mmu_forward.2} parent=11 // pred_check
          %p169 = pneg %p72
        $region14: #{atrou_mmu_forward.2} parent=11 // pred_check_branch
          %171 = sbr.rel (%p169) target = $region16
        $region15: #{atrou_mmu_forward.2} parent=11 // pred_region
          _
        $region16: #{atrou_mmu_forward.2} parent=11 // pred_fallthru
          _
      $region12: #{atrou_mmu_forward.2} parent=5 // pred_fallthru
        _
      %p172 = scmp.lt.s32.totalorder %s11, 4
      // Predicated region
      $region17: #{atrou_mmu_forward.2} parent=5 // pred_check
        %p173 = pneg %p172
      $region18: #{atrou_mmu_forward.2} parent=5 // pred_check_branch
        %175 = sbr.rel (%p173) target = $region20
      $region19: #{atrou_mmu_forward.2} parent=5 // pred_region
        // Predicated region
        $region21: #{atrou_mmu_forward.2} parent=19 // pred_check
          %p176 = pneg %p45
        $region22: #{atrou_mmu_forward.2} parent=19 // pred_check_branch
          %178 = sbr.rel (%p176) target = $region24
        $region23: #{atrou_mmu_forward.2} parent=19 // pred_region
          %p179 = scmp.lt.s32.totalorder %s18, 1
          %s180 = scalar_select %p179, %s18, 1
          %p181 = scmp.lt.s32.totalorder %s19, 1
          %s182 = scalar_select %p181, %s19, 1
          %s183 = smul.addr %s182, 384
          %s184 = smul.addr %s180, 768
          %s185 = sadd.s32 %s183, %s184
          %s186 = smul.addr %s185, 4
          %s187 = scalar_lea.vmem %s0, %s186
        $region24: #{atrou_mmu_forward.2} parent=19 // pred_fallthru
          _
        // Predicated region
        $region25: #{atrou_mmu_forward.2} parent=19 // pred_check
          %p188 = pneg %p92
        $region26: #{atrou_mmu_forward.2} parent=19 // pred_check_branch
          %190 = sbr.rel (%p188) target = $region28
        $region27: #{atrou_mmu_forward.2} parent=19 // pred_region
          %p191 = scmp.lt.s32.totalorder %s19, 1
          %s192 = scalar_select %p191, %s19, 1
          %s193 = smul.addr %s192, 4
          %s194 = smul.addr %s193, 8
          %s195 = scalar_lea.vmem %s2, %s194
        $region28: #{atrou_mmu_forward.2} parent=19 // pred_fallthru
          _
      $region20: #{atrou_mmu_forward.2} parent=5 // pred_fallthru
        _
      %p196 = scmp.le.s32.totalorder 1, %s11
      %p197 = scmp.lt.s32.totalorder %s11, 5
      %p198 = pnand %p196, %p197
      %p199 = pneg %p198
      // Predicated region
      $region29: #{atrou_mmu_forward.2} parent=5 // pred_check
        _
      $region30: #{atrou_mmu_forward.2} parent=5 // pred_check_branch
        %201 = sbr.rel (%p198) target = $region32
      $region31: #{atrou_mmu_forward.2} parent=5 // pred_region
        %s202 = ssub.s32 %s11, 1
        %p203 = scmp.lt.s32.totalorder %s20, 1
        %s204 = scalar_select %p203, %s20, 1
        %p205 = scmp.lt.s32.totalorder %s21, 1
        %s206 = scalar_select %p205, %s21, 1
        %s207 = smul.addr %s206, 384
        %s208 = smul.addr %s204, 768
        %s209 = sadd.s32 %s207, %s208
        %s210 = smul.addr %s209, 4
        %s211 = scalar_lea.vmem %s0, %s210
        %p212 = pneg %p51
        %p213 = pneg %p48
        %p214 = pneg %p72
        %p215 = pneg %p69
        %p216 = scmp.lt.s32.totalorder %s21, 1
        %s217 = scalar_select %p216, %s21, 1
        %s218 = smul.addr %s217, 4
        %s219 = smul.addr %s218, 8
        %s220 = scalar_lea.vmem %s2, %s219
        %p221 = pneg %p98
        %p222 = pneg %p95
        %p223 = pneg %p126
        %p224 = pneg %p123
        %s225 = sand.u32 %s113, 1
        %s226 = sand.u32 %s113, 1
        %s227 = smul.addr %s226, 64
        %s228 = scalar_lea.vmem [#allocation2], %s227
        %p229 = pneg %p154
        %p230 = pneg %p151
        %p231 = scmp.lt.s32.totalorder %s20, 1
        %s232 = scalar_select %p231, %s20, 1
        %p233 = scmp.lt.s32.totalorder %s21, 1
        %s234 = scalar_select %p233, %s21, 1
        %s235 = smul.addr %s232, 2
        %s236 = sadd.s32 %s234, %s235
        %s237 = smul.addr %s236, 8
        %s238 = scalar_lea.vmem %s4, %s237
        %p239 = scmp.lt.s32.totalorder %s20, 1
        %s240 = scalar_select %p239, %s20, 1
        %p241 = scmp.lt.s32.totalorder %s21, 1
        %s242 = scalar_select %p241, %s21, 1
        %s243 = smul.addr %s242, 384
        %s244 = smul.addr %s240, 768
        %s245 = sadd.s32 %s243, %s244
        %s246 = smul.addr %s245, 4
        %s247 = scalar_lea.vmem %s0, %s246
        %p248 = scmp.lt.s32.totalorder %s21, 1
        %s249 = scalar_select %p248, %s21, 1
        %s250 = smul.addr %s249, 4
        %s251 = smul.addr %s250, 8
        %s252 = scalar_lea.vmem %s2, %s251
        %s253 = smul.u32 4, %s21
        %p254 = scmp.lt.s32.totalorder %s20, 1
        %s255 = scalar_select %p254, %s20, 1
        %p256 = scmp.lt.s32.totalorder %s21, 1
        %s257 = scalar_select %p256, %s21, 1
        %s258 = smul.addr %s255, 2
        %s259 = sadd.s32 %s257, %s258
        %s260 = smul.addr %s259, 8
        %s261 = scalar_lea.vmem %s4, %s260
        %v263 = vld [vmem:[%s252] sm:$0xff]
        %v264 = vld [vmem:[%s252 + $0x8] sm:$0xff]
        %v265 = vld [vmem:[%s252 + $0x10] sm:$0xff]
        %v266 = vld [vmem:[%s252 + $0x18] sm:$0xff]
        %v267 = vld [vmem:[%s247 + $0x200] sm:$0xc]
        %v268 = vld [vmem:[%s247 + $0x204] sm:$0xf]
        %v269 = vld [vmem:[%s247 + $0x208] sm:$0xf]
        %v270 = vld [vmem:[%s247 + $0x20c] sm:$0xf]
        %v271 = vld [vmem:[%s247 + $0x210] sm:$0x3]
        %v272 = vld [vmem:[%s1] sm:$0xf]
        %v273 = vld [vmem:[%s1 + $0x4] sm:$0xf]
        %v274 = vld [vmem:[%s1 + $0x8] sm:$0xf]
        %v275 = vld [vmem:[%s1 + $0xc] sm:$0xf]
        %v276 = vld [vmem:[%s1 + $0x10] sm:$0xf]
        %v277 = vld [vmem:[%s1 + $0x14] sm:$0xf]
        %v278 = vld [vmem:[%s1 + $0x18] sm:$0xf]
        %v279 = vld [vmem:[%s1 + $0x1c] sm:$0xf]
        %v280 = vld [vmem:[%s1 + $0x20] sm:$0xf]
        %v281 = vld [vmem:[%s1 + $0x24] sm:$0xf]
        %v282 = vld [vmem:[%s1 + $0x28] sm:$0xf]
        %v283 = vld [vmem:[%s1 + $0x2c] sm:$0xf]
        %v284 = vld [vmem:[%s1 + $0x30] sm:$0xf]
        %v285 = vld [vmem:[%s1 + $0x34] sm:$0xf]
        %v286 = vld [vmem:[%s1 + $0x38] sm:$0xf]
        %v287 = vld [vmem:[%s1 + $0x3c] sm:$0xf]
        %v288 = vld [vmem:[%s247 + $0x260] sm:$0xc]
        %v289 = vld [vmem:[%s247 + $0x264] sm:$0xf]
        %v290 = vld [vmem:[%s247 + $0x268] sm:$0xf]
        %v291 = vld [vmem:[%s247 + $0x26c] sm:$0xf]
        %v292 = vld [vmem:[%s247 + $0x270] sm:$0x3]
        %s293 = scalar_lea.vmem %s1, 64
        %v294 = vld [vmem:[%s293] sm:$0xf]
        %v295 = vld [vmem:[%s293 + $0x4] sm:$0xf]
        %v296 = vld [vmem:[%s293 + $0x8] sm:$0xf]
        %v297 = vld [vmem:[%s293 + $0xc] sm:$0xf]
        %v298 = vld [vmem:[%s293 + $0x10] sm:$0xf]
        %v299 = vld [vmem:[%s293 + $0x14] sm:$0xf]
        %v300 = vld [vmem:[%s293 + $0x18] sm:$0xf]
        %v301 = vld [vmem:[%s293 + $0x1c] sm:$0xf]
        %v302 = vld [vmem:[%s293 + $0x20] sm:$0xf]
        %v303 = vld [vmem:[%s293 + $0x24] sm:$0xf]
        %v304 = vld [vmem:[%s293 + $0x28] sm:$0xf]
        %v305 = vld [vmem:[%s293 + $0x2c] sm:$0xf]
        %v306 = vld [vmem:[%s293 + $0x30] sm:$0xf]
        %v307 = vld [vmem:[%s293 + $0x34] sm:$0xf]
        %v308 = vld [vmem:[%s293 + $0x38] sm:$0xf]
        %v309 = vld [vmem:[%s293 + $0x3c] sm:$0xf]
        %v315 = vunpack.c.l.b16 %v288
        %v316 = vunpack.c.l.b16 %v289
        %v317 = vunpack.c.l.b16 %v290
        %v318 = vunpack.c.l.b16 %v291
        %v319 = vunpack.c.l.b16 %v292
        %v320 = vpack.c.b16 %v316, %v315
        %v321 = vpack.c.b16 %v318, %v317
        %v322 = vpack.c.b16 %v319, %v319
        %vm323 = vcmask 1045504
        %v324 = vrot.slane %v320, 2
        %v325 = vrot.slane %v321, 2
        %v326 = vsel %vm323, %v324, %v325
        %v327 = vrot.slane %v322, 2
        %v328 = vsel %vm323, %v325, %v327
        %v347 = vunpack.c.l.b16 %v294
        %v348 = vunpack.c.l.b16 %v295
        %v349 = vunpack.c.l.b16 %v296
        %v350 = vunpack.c.l.b16 %v297
        %v351 = vunpack.c.l.b16 %v298
        %v352 = vunpack.c.l.b16 %v299
        %v353 = vunpack.c.l.b16 %v300
        %v354 = vunpack.c.l.b16 %v301
        %v355 = vunpack.c.l.b16 %v302
        %v356 = vunpack.c.l.b16 %v303
        %v357 = vunpack.c.l.b16 %v304
        %v358 = vunpack.c.l.b16 %v305
        %v359 = vunpack.c.l.b16 %v306
        %v360 = vunpack.c.l.b16 %v307
        %v361 = vunpack.c.l.b16 %v308
        %v362 = vunpack.c.l.b16 %v309
        %v363 = vpack.c.b16 %v348, %v347
        %v364 = vpack.c.b16 %v350, %v349
        %v365 = vpack.c.b16 %v352, %v351
        %v366 = vpack.c.b16 %v354, %v353
        %v367 = vpack.c.b16 %v356, %v355
        %v368 = vpack.c.b16 %v358, %v357
        %v369 = vpack.c.b16 %v360, %v359
        %v370 = vpack.c.b16 %v362, %v361
        %379 = vmatprep.subr.bf16.mxu0 0
        %380 = vmatpush1.bf16.msra.mxu0 %v370
        %381 = vmatprep.subr.bf16.mxu0 0
        %382 = vmatpush1.bf16.msra.mxu0 %v369
        %383 = vmatprep.subr.bf16.mxu0 0
        %384 = vmatpush1.bf16.msra.mxu0 %v368
        %385 = vmatprep.subr.bf16.mxu0 0
        %386 = vmatpush1.bf16.msra.mxu0 %v367
        %387 = vmatprep.subr.bf16.mxu0 0
        %388 = vmatpush1.bf16.msra.mxu0 %v366
        %389 = vmatprep.subr.bf16.mxu0 0
        %390 = vmatpush1.bf16.msra.mxu0 %v365
        %391 = vmatprep.subr.bf16.mxu0 0
        %392 = vmatpush1.bf16.msra.mxu0 %v364
        %393 = vmatprep.subr.bf16.mxu0 0
        %394 = vmatpush1.bf16.msra.mxu0 %v363
        %395 = vmatprep.subr.bf16.mxu0 0
        %396 = vmatpush2.bf16.msra.mxu0 0
        %397 = vmatprep.subr.bf16.mxu0 0
        %398 = vmatpush2.bf16.msra.mxu0 0
        %399 = vmatprep.subr.bf16.mxu0 0
        %400 = vmatpush2.bf16.msra.mxu0 0
        %401 = vmatprep.subr.bf16.mxu0 0
        %402 = vmatpush2.bf16.msra.mxu0 0
        %403 = vmatprep.subr.bf16.mxu0 0
        %404 = vmatpush2.bf16.msra.mxu0 0
        %405 = vmatprep.subr.bf16.mxu0 0
        %406 = vmatpush2.bf16.msra.mxu0 0
        %407 = vmatprep.subr.bf16.mxu0 0
        %408 = vmatpush2.bf16.msra.mxu0 0
        %409 = vmatprep.subr.bf16.mxu0 0
        %410 = vmatpush2.bf16.msra.mxu0 0
        %411 = vmatprep.mubr.bf16.mxu0 0
        %412 = vmatmul.mubr.bf16.gmra.mxu0 %v326
        %v413 = vpop.f32.mrf.mxu0
        %v414 = vadd.f32 0.0, %v413
        %v415 = vpop.f32.mrf.mxu0
        %v416 = vpop.f32.mrf.mxu0
        %v417 = vadd.f32 0.0, %v416
        %v418 = vpop.f32.mrf.mxu0
        %419 = vmatprep.mubr.bf16.mxu0 0
        %420 = vmatmul.mubr.bf16.gmra.mxu0 %v328
        %v421 = vpop.f32.mrf.mxu0
        %v422 = vadd.f32 0.0, %v421
        %v423 = vpop.f32.mrf.mxu0
        %v424 = vpop.f32.mrf.mxu0
        %v425 = vadd.f32 0.0, %v424
        %v426 = vpop.f32.mrf.mxu0
        %427 = vdwg.mxu0
        %v433 = vunpack.c.l.b16 %v267
        %v434 = vunpack.c.l.b16 %v268
        %v435 = vunpack.c.l.b16 %v269
        %v436 = vunpack.c.l.b16 %v270
        %v437 = vunpack.c.l.b16 %v271
        %v438 = vpack.c.b16 %v434, %v433
        %v439 = vpack.c.b16 %v436, %v435
        %v440 = vpack.c.b16 %v437, %v437
        %v441 = vrot.slane %v438, 2
        %v442 = vrot.slane %v439, 2
        %v443 = vsel %vm323, %v441, %v442
        %v444 = vrot.slane %v440, 2
        %v445 = vsel %vm323, %v442, %v444
        %v464 = vunpack.c.l.b16 %v272
        %v465 = vunpack.c.l.b16 %v273
        %v466 = vunpack.c.l.b16 %v274
        %v467 = vunpack.c.l.b16 %v275
        %v468 = vunpack.c.l.b16 %v276
        %v469 = vunpack.c.l.b16 %v277
        %v470 = vunpack.c.l.b16 %v278
        %v471 = vunpack.c.l.b16 %v279
        %v472 = vunpack.c.l.b16 %v280
        %v473 = vunpack.c.l.b16 %v281
        %v474 = vunpack.c.l.b16 %v282
        %v475 = vunpack.c.l.b16 %v283
        %v476 = vunpack.c.l.b16 %v284
        %v477 = vunpack.c.l.b16 %v285
        %v478 = vunpack.c.l.b16 %v286
        %v479 = vunpack.c.l.b16 %v287
        %v480 = vpack.c.b16 %v465, %v464
        %v481 = vpack.c.b16 %v467, %v466
        %v482 = vpack.c.b16 %v469, %v468
        %v483 = vpack.c.b16 %v471, %v470
        %v484 = vpack.c.b16 %v473, %v472
        %v485 = vpack.c.b16 %v475, %v474
        %v486 = vpack.c.b16 %v477, %v476
        %v487 = vpack.c.b16 %v479, %v478
        %496 = vmatprep.subr.bf16.mxu0 0
        %497 = vmatpush1.bf16.msra.mxu0 %v487
        %498 = vmatprep.subr.bf16.mxu0 0
        %499 = vmatpush1.bf16.msra.mxu0 %v486
        %500 = vmatprep.subr.bf16.mxu0 0
        %501 = vmatpush1.bf16.msra.mxu0 %v485
        %502 = vmatprep.subr.bf16.mxu0 0
        %503 = vmatpush1.bf16.msra.mxu0 %v484
        %504 = vmatprep.subr.bf16.mxu0 0
        %505 = vmatpush1.bf16.msra.mxu0 %v483
        %506 = vmatprep.subr.bf16.mxu0 0
        %507 = vmatpush1.bf16.msra.mxu0 %v482
        %508 = vmatprep.subr.bf16.mxu0 0
        %509 = vmatpush1.bf16.msra.mxu0 %v481
        %510 = vmatprep.subr.bf16.mxu0 0
        %511 = vmatpush1.bf16.msra.mxu0 %v480
        %512 = vmatprep.subr.bf16.mxu0 0
        %513 = vmatpush2.bf16.msra.mxu0 0
        %514 = vmatprep.subr.bf16.mxu0 0
        %515 = vmatpush2.bf16.msra.mxu0 0
        %516 = vmatprep.subr.bf16.mxu0 0
        %517 = vmatpush2.bf16.msra.mxu0 0
        %518 = vmatprep.subr.bf16.mxu0 0
        %519 = vmatpush2.bf16.msra.mxu0 0
        %520 = vmatprep.subr.bf16.mxu0 0
        %521 = vmatpush2.bf16.msra.mxu0 0
        %522 = vmatprep.subr.bf16.mxu0 0
        %523 = vmatpush2.bf16.msra.mxu0 0
        %524 = vmatprep.subr.bf16.mxu0 0
        %525 = vmatpush2.bf16.msra.mxu0 0
        %526 = vmatprep.subr.bf16.mxu0 0
        %527 = vmatpush2.bf16.msra.mxu0 0
        %528 = vmatprep.mubr.bf16.mxu0 0
        %529 = vmatmul.mubr.bf16.gmra.mxu0 %v443
        %v530 = vpop.f32.mrf.mxu0
        %v531 = vadd.f32 %v414, %v530
        %v532 = vpop.f32.mrf.mxu0
        %v533 = vpop.f32.mrf.mxu0
        %v534 = vadd.f32 %v417, %v533
        %v535 = vpop.f32.mrf.mxu0
        %536 = vmatprep.mubr.bf16.mxu0 0
        %537 = vmatmul.mubr.bf16.gmra.mxu0 %v445
        %v538 = vpop.f32.mrf.mxu0
        %v539 = vadd.f32 %v422, %v538
        %v540 = vpop.f32.mrf.mxu0
        %v541 = vpop.f32.mrf.mxu0
        %v542 = vadd.f32 %v425, %v541
        %v543 = vpop.f32.mrf.mxu0
        %544 = vdwg.mxu0
        %v545 = vld [vmem:[%s247 + $0x2c0] sm:$0xc]
        %v546 = vld [vmem:[%s247 + $0x2c4] sm:$0xf]
        %v547 = vld [vmem:[%s247 + $0x2c8] sm:$0xf]
        %v548 = vld [vmem:[%s247 + $0x2cc] sm:$0xf]
        %v549 = vld [vmem:[%s247 + $0x2d0] sm:$0x3]
        %s550 = scalar_lea.vmem %s1, 128
        %v551 = vld [vmem:[%s550] sm:$0xf]
        %v552 = vld [vmem:[%s550 + $0x4] sm:$0xf]
        %v553 = vld [vmem:[%s550 + $0x8] sm:$0xf]
        %v554 = vld [vmem:[%s550 + $0xc] sm:$0xf]
        %v555 = vld [vmem:[%s550 + $0x10] sm:$0xf]
        %v556 = vld [vmem:[%s550 + $0x14] sm:$0xf]
        %v557 = vld [vmem:[%s550 + $0x18] sm:$0xf]
        %v558 = vld [vmem:[%s550 + $0x1c] sm:$0xf]
        %v559 = vld [vmem:[%s550 + $0x20] sm:$0xf]
        %v560 = vld [vmem:[%s550 + $0x24] sm:$0xf]
        %v561 = vld [vmem:[%s550 + $0x28] sm:$0xf]
        %v562 = vld [vmem:[%s550 + $0x2c] sm:$0xf]
        %v563 = vld [vmem:[%s550 + $0x30] sm:$0xf]
        %v564 = vld [vmem:[%s550 + $0x34] sm:$0xf]
        %v565 = vld [vmem:[%s550 + $0x38] sm:$0xf]
        %v566 = vld [vmem:[%s550 + $0x3c] sm:$0xf]
        %v572 = vunpack.c.l.b16 %v545
        %v573 = vunpack.c.l.b16 %v546
        %v574 = vunpack.c.l.b16 %v547
        %v575 = vunpack.c.l.b16 %v548
        %v576 = vunpack.c.l.b16 %v549
        %v577 = vpack.c.b16 %v573, %v572
        %v578 = vpack.c.b16 %v575, %v574
        %v579 = vpack.c.b16 %v576, %v576
        %v580 = vrot.slane %v577, 2
        %v581 = vrot.slane %v578, 2
        %v582 = vsel %vm323, %v580, %v581
        %v583 = vrot.slane %v579, 2
        %v584 = vsel %vm323, %v581, %v583
        %v603 = vunpack.c.l.b16 %v551
        %v604 = vunpack.c.l.b16 %v552
        %v605 = vunpack.c.l.b16 %v553
        %v606 = vunpack.c.l.b16 %v554
        %v607 = vunpack.c.l.b16 %v555
        %v608 = vunpack.c.l.b16 %v556
        %v609 = vunpack.c.l.b16 %v557
        %v610 = vunpack.c.l.b16 %v558
        %v611 = vunpack.c.l.b16 %v559
        %v612 = vunpack.c.l.b16 %v560
        %v613 = vunpack.c.l.b16 %v561
        %v614 = vunpack.c.l.b16 %v562
        %v615 = vunpack.c.l.b16 %v563
        %v616 = vunpack.c.l.b16 %v564
        %v617 = vunpack.c.l.b16 %v565
        %v618 = vunpack.c.l.b16 %v566
        %v619 = vpack.c.b16 %v604, %v603
        %v620 = vpack.c.b16 %v606, %v605
        %v621 = vpack.c.b16 %v608, %v607
        %v622 = vpack.c.b16 %v610, %v609
        %v623 = vpack.c.b16 %v612, %v611
        %v624 = vpack.c.b16 %v614, %v613
        %v625 = vpack.c.b16 %v616, %v615
        %v626 = vpack.c.b16 %v618, %v617
        %635 = vmatprep.subr.bf16.mxu0 0
        %636 = vmatpush1.bf16.msra.mxu0 %v626
        %637 = vmatprep.subr.bf16.mxu0 0
        %638 = vmatpush1.bf16.msra.mxu0 %v625
        %639 = vmatprep.subr.bf16.mxu0 0
        %640 = vmatpush1.bf16.msra.mxu0 %v624
        %641 = vmatprep.subr.bf16.mxu0 0
        %642 = vmatpush1.bf16.msra.mxu0 %v623
        %643 = vmatprep.subr.bf16.mxu0 0
        %644 = vmatpush1.bf16.msra.mxu0 %v622
        %645 = vmatprep.subr.bf16.mxu0 0
        %646 = vmatpush1.bf16.msra.mxu0 %v621
        %647 = vmatprep.subr.bf16.mxu0 0
        %648 = vmatpush1.bf16.msra.mxu0 %v620
        %649 = vmatprep.subr.bf16.mxu0 0
        %650 = vmatpush1.bf16.msra.mxu0 %v619
        %651 = vmatprep.subr.bf16.mxu0 0
        %652 = vmatpush2.bf16.msra.mxu0 0
        %653 = vmatprep.subr.bf16.mxu0 0
        %654 = vmatpush2.bf16.msra.mxu0 0
        %655 = vmatprep.subr.bf16.mxu0 0
        %656 = vmatpush2.bf16.msra.mxu0 0
        %657 = vmatprep.subr.bf16.mxu0 0
        %658 = vmatpush2.bf16.msra.mxu0 0
        %659 = vmatprep.subr.bf16.mxu0 0
        %660 = vmatpush2.bf16.msra.mxu0 0
        %661 = vmatprep.subr.bf16.mxu0 0
        %662 = vmatpush2.bf16.msra.mxu0 0
        %663 = vmatprep.subr.bf16.mxu0 0
        %664 = vmatpush2.bf16.msra.mxu0 0
        %665 = vmatprep.subr.bf16.mxu0 0
        %666 = vmatpush2.bf16.msra.mxu0 0
        %667 = vmatprep.mubr.bf16.mxu0 0
        %668 = vmatmul.mubr.bf16.gmra.mxu0 %v582
        %v669 = vpop.f32.mrf.mxu0
        %v670 = vadd.f32 0.0, %v669
        %v671 = vpop.f32.mrf.mxu0
        %v672 = vpop.f32.mrf.mxu0
        %v673 = vadd.f32 0.0, %v672
        %v674 = vpop.f32.mrf.mxu0
        %675 = vmatprep.mubr.bf16.mxu0 0
        %676 = vmatmul.mubr.bf16.gmra.mxu0 %v584
        %v677 = vpop.f32.mrf.mxu0
        %v678 = vadd.f32 0.0, %v677
        %v679 = vpop.f32.mrf.mxu0
        %v680 = vpop.f32.mrf.mxu0
        %v681 = vadd.f32 0.0, %v680
        %v682 = vpop.f32.mrf.mxu0
        %683 = vdwg.mxu0
        %v684 = vadd.f32 %v531, %v670
        %v685 = vadd.f32 %v534, %v673
        %v686 = vadd.f32 %v539, %v678
        %v687 = vadd.f32 %v542, %v681
        %v688 = vld [vmem:[%s247 + $0x380] sm:$0xc]
        %v689 = vld [vmem:[%s247 + $0x384] sm:$0xf]
        %v690 = vld [vmem:[%s247 + $0x388] sm:$0xf]
        %v691 = vld [vmem:[%s247 + $0x38c] sm:$0xf]
        %v692 = vld [vmem:[%s247 + $0x390] sm:$0x3]
        %s693 = scalar_lea.vmem %s1, 192
        %v694 = vld [vmem:[%s693] sm:$0xf]
        %v695 = vld [vmem:[%s693 + $0x4] sm:$0xf]
        %v696 = vld [vmem:[%s693 + $0x8] sm:$0xf]
        %v697 = vld [vmem:[%s693 + $0xc] sm:$0xf]
        %v698 = vld [vmem:[%s693 + $0x10] sm:$0xf]
        %v699 = vld [vmem:[%s693 + $0x14] sm:$0xf]
        %v700 = vld [vmem:[%s693 + $0x18] sm:$0xf]
        %v701 = vld [vmem:[%s693 + $0x1c] sm:$0xf]
        %v702 = vld [vmem:[%s693 + $0x20] sm:$0xf]
        %v703 = vld [vmem:[%s693 + $0x24] sm:$0xf]
        %v704 = vld [vmem:[%s693 + $0x28] sm:$0xf]
        %v705 = vld [vmem:[%s693 + $0x2c] sm:$0xf]
        %v706 = vld [vmem:[%s693 + $0x30] sm:$0xf]
        %v707 = vld [vmem:[%s693 + $0x34] sm:$0xf]
        %v708 = vld [vmem:[%s693 + $0x38] sm:$0xf]
        %v709 = vld [vmem:[%s693 + $0x3c] sm:$0xf]
        %v715 = vunpack.c.l.b16 %v688
        %v716 = vunpack.c.l.b16 %v689
        %v717 = vunpack.c.l.b16 %v690
        %v718 = vunpack.c.l.b16 %v691
        %v719 = vunpack.c.l.b16 %v692
        %v720 = vpack.c.b16 %v716, %v715
        %v721 = vpack.c.b16 %v718, %v717
        %v722 = vpack.c.b16 %v719, %v719
        %v723 = vrot.slane %v720, 2
        %v724 = vrot.slane %v721, 2
        %v725 = vsel %vm323, %v723, %v724
        %v726 = vrot.slane %v722, 2
        %v727 = vsel %vm323, %v724, %v726
        %v746 = vunpack.c.l.b16 %v694
        %v747 = vunpack.c.l.b16 %v695
        %v748 = vunpack.c.l.b16 %v696
        %v749 = vunpack.c.l.b16 %v697
        %v750 = vunpack.c.l.b16 %v698
        %v751 = vunpack.c.l.b16 %v699
        %v752 = vunpack.c.l.b16 %v700
        %v753 = vunpack.c.l.b16 %v701
        %v754 = vunpack.c.l.b16 %v702
        %v755 = vunpack.c.l.b16 %v703
        %v756 = vunpack.c.l.b16 %v704
        %v757 = vunpack.c.l.b16 %v705
        %v758 = vunpack.c.l.b16 %v706
        %v759 = vunpack.c.l.b16 %v707
        %v760 = vunpack.c.l.b16 %v708
        %v761 = vunpack.c.l.b16 %v709
        %v762 = vpack.c.b16 %v747, %v746
        %v763 = vpack.c.b16 %v749, %v748
        %v764 = vpack.c.b16 %v751, %v750
        %v765 = vpack.c.b16 %v753, %v752
        %v766 = vpack.c.b16 %v755, %v754
        %v767 = vpack.c.b16 %v757, %v756
        %v768 = vpack.c.b16 %v759, %v758
        %v769 = vpack.c.b16 %v761, %v760
        %778 = vmatprep.subr.bf16.mxu0 0
        %779 = vmatpush1.bf16.msra.mxu0 %v769
        %780 = vmatprep.subr.bf16.mxu0 0
        %781 = vmatpush1.bf16.msra.mxu0 %v768
        %782 = vmatprep.subr.bf16.mxu0 0
        %783 = vmatpush1.bf16.msra.mxu0 %v767
        %784 = vmatprep.subr.bf16.mxu0 0
        %785 = vmatpush1.bf16.msra.mxu0 %v766
        %786 = vmatprep.subr.bf16.mxu0 0
        %787 = vmatpush1.bf16.msra.mxu0 %v765
        %788 = vmatprep.subr.bf16.mxu0 0
        %789 = vmatpush1.bf16.msra.mxu0 %v764
        %790 = vmatprep.subr.bf16.mxu0 0
        %791 = vmatpush1.bf16.msra.mxu0 %v763
        %792 = vmatprep.subr.bf16.mxu0 0
        %793 = vmatpush1.bf16.msra.mxu0 %v762
        %794 = vmatprep.subr.bf16.mxu0 0
        %795 = vmatpush2.bf16.msra.mxu0 0
        %796 = vmatprep.subr.bf16.mxu0 0
        %797 = vmatpush2.bf16.msra.mxu0 0
        %798 = vmatprep.subr.bf16.mxu0 0
        %799 = vmatpush2.bf16.msra.mxu0 0
        %800 = vmatprep.subr.bf16.mxu0 0
        %801 = vmatpush2.bf16.msra.mxu0 0
        %802 = vmatprep.subr.bf16.mxu0 0
        %803 = vmatpush2.bf16.msra.mxu0 0
        %804 = vmatprep.subr.bf16.mxu0 0
        %805 = vmatpush2.bf16.msra.mxu0 0
        %806 = vmatprep.subr.bf16.mxu0 0
        %807 = vmatpush2.bf16.msra.mxu0 0
        %808 = vmatprep.subr.bf16.mxu0 0
        %809 = vmatpush2.bf16.msra.mxu0 0
        %810 = vmatprep.mubr.bf16.mxu0 0
        %811 = vmatmul.mubr.bf16.gmra.mxu0 %v725
        %v812 = vpop.f32.mrf.mxu0
        %v813 = vadd.f32 0.0, %v812
        %v814 = vpop.f32.mrf.mxu0
        %v815 = vpop.f32.mrf.mxu0
        %v816 = vadd.f32 0.0, %v815
        %v817 = vpop.f32.mrf.mxu0
        %818 = vmatprep.mubr.bf16.mxu0 0
        %819 = vmatmul.mubr.bf16.gmra.mxu0 %v727
        %v820 = vpop.f32.mrf.mxu0
        %v821 = vadd.f32 0.0, %v820
        %v822 = vpop.f32.mrf.mxu0
        %v823 = vpop.f32.mrf.mxu0
        %v824 = vadd.f32 0.0, %v823
        %v825 = vpop.f32.mrf.mxu0
        %826 = vdwg.mxu0
        %v827 = vadd.f32 %v684, %v813
        %v828 = vadd.f32 %v685, %v816
        %v829 = vadd.f32 %v686, %v821
        %v830 = vadd.f32 %v687, %v824
        %v831 = vld [vmem:[%s247 + $0x3e0] sm:$0xc]
        %v832 = vld [vmem:[%s247 + $0x3e4] sm:$0xf]
        %v833 = vld [vmem:[%s247 + $0x3e8] sm:$0xf]
        %v834 = vld [vmem:[%s247 + $0x3ec] sm:$0xf]
        %v835 = vld [vmem:[%s247 + $0x3f0] sm:$0x3]
        %s836 = scalar_lea.vmem %s1, 256
        %v837 = vld [vmem:[%s836] sm:$0xf]
        %v838 = vld [vmem:[%s836 + $0x4] sm:$0xf]
        %v839 = vld [vmem:[%s836 + $0x8] sm:$0xf]
        %v840 = vld [vmem:[%s836 + $0xc] sm:$0xf]
        %v841 = vld [vmem:[%s836 + $0x10] sm:$0xf]
        %v842 = vld [vmem:[%s836 + $0x14] sm:$0xf]
        %v843 = vld [vmem:[%s836 + $0x18] sm:$0xf]
        %v844 = vld [vmem:[%s836 + $0x1c] sm:$0xf]
        %v845 = vld [vmem:[%s836 + $0x20] sm:$0xf]
        %v846 = vld [vmem:[%s836 + $0x24] sm:$0xf]
        %v847 = vld [vmem:[%s836 + $0x28] sm:$0xf]
        %v848 = vld [vmem:[%s836 + $0x2c] sm:$0xf]
        %v849 = vld [vmem:[%s836 + $0x30] sm:$0xf]
        %v850 = vld [vmem:[%s836 + $0x34] sm:$0xf]
        %v851 = vld [vmem:[%s836 + $0x38] sm:$0xf]
        %v852 = vld [vmem:[%s836 + $0x3c] sm:$0xf]
        %v858 = vunpack.c.l.b16 %v831
        %v859 = vunpack.c.l.b16 %v832
        %v860 = vunpack.c.l.b16 %v833
        %v861 = vunpack.c.l.b16 %v834
        %v862 = vunpack.c.l.b16 %v835
        %v863 = vpack.c.b16 %v859, %v858
        %v864 = vpack.c.b16 %v861, %v860
        %v865 = vpack.c.b16 %v862, %v862
        %v866 = vrot.slane %v863, 2
        %v867 = vrot.slane %v864, 2
        %v868 = vsel %vm323, %v866, %v867
        %v869 = vrot.slane %v865, 2
        %v870 = vsel %vm323, %v867, %v869
        %v889 = vunpack.c.l.b16 %v837
        %v890 = vunpack.c.l.b16 %v838
        %v891 = vunpack.c.l.b16 %v839
        %v892 = vunpack.c.l.b16 %v840
        %v893 = vunpack.c.l.b16 %v841
        %v894 = vunpack.c.l.b16 %v842
        %v895 = vunpack.c.l.b16 %v843
        %v896 = vunpack.c.l.b16 %v844
        %v897 = vunpack.c.l.b16 %v845
        %v898 = vunpack.c.l.b16 %v846
        %v899 = vunpack.c.l.b16 %v847
        %v900 = vunpack.c.l.b16 %v848
        %v901 = vunpack.c.l.b16 %v849
        %v902 = vunpack.c.l.b16 %v850
        %v903 = vunpack.c.l.b16 %v851
        %v904 = vunpack.c.l.b16 %v852
        %v905 = vpack.c.b16 %v890, %v889
        %v906 = vpack.c.b16 %v892, %v891
        %v907 = vpack.c.b16 %v894, %v893
        %v908 = vpack.c.b16 %v896, %v895
        %v909 = vpack.c.b16 %v898, %v897
        %v910 = vpack.c.b16 %v900, %v899
        %v911 = vpack.c.b16 %v902, %v901
        %v912 = vpack.c.b16 %v904, %v903
        %921 = vmatprep.subr.bf16.mxu0 0
        %922 = vmatpush1.bf16.msra.mxu0 %v912
        %923 = vmatprep.subr.bf16.mxu0 0
        %924 = vmatpush1.bf16.msra.mxu0 %v911
        %925 = vmatprep.subr.bf16.mxu0 0
        %926 = vmatpush1.bf16.msra.mxu0 %v910
        %927 = vmatprep.subr.bf16.mxu0 0
        %928 = vmatpush1.bf16.msra.mxu0 %v909
        %929 = vmatprep.subr.bf16.mxu0 0
        %930 = vmatpush1.bf16.msra.mxu0 %v908
        %931 = vmatprep.subr.bf16.mxu0 0
        %932 = vmatpush1.bf16.msra.mxu0 %v907
        %933 = vmatprep.subr.bf16.mxu0 0
        %934 = vmatpush1.bf16.msra.mxu0 %v906
        %935 = vmatprep.subr.bf16.mxu0 0
        %936 = vmatpush1.bf16.msra.mxu0 %v905
        %937 = vmatprep.subr.bf16.mxu0 0
        %938 = vmatpush2.bf16.msra.mxu0 0
        %939 = vmatprep.subr.bf16.mxu0 0
        %940 = vmatpush2.bf16.msra.mxu0 0
        %941 = vmatprep.subr.bf16.mxu0 0
        %942 = vmatpush2.bf16.msra.mxu0 0
        %943 = vmatprep.subr.bf16.mxu0 0
        %944 = vmatpush2.bf16.msra.mxu0 0
        %945 = vmatprep.subr.bf16.mxu0 0
        %946 = vmatpush2.bf16.msra.mxu0 0
        %947 = vmatprep.subr.bf16.mxu0 0
        %948 = vmatpush2.bf16.msra.mxu0 0
        %949 = vmatprep.subr.bf16.mxu0 0
        %950 = vmatpush2.bf16.msra.mxu0 0
        %951 = vmatprep.subr.bf16.mxu0 0
        %952 = vmatpush2.bf16.msra.mxu0 0
        %953 = vmatprep.mubr.bf16.mxu0 0
        %954 = vmatmul.mubr.bf16.gmra.mxu0 %v868
        %v955 = vpop.f32.mrf.mxu0
        %v956 = vadd.f32 0.0, %v955
        %v957 = vpop.f32.mrf.mxu0
        %v958 = vpop.f32.mrf.mxu0
        %v959 = vadd.f32 0.0, %v958
        %v960 = vpop.f32.mrf.mxu0
        %961 = vmatprep.mubr.bf16.mxu0 0
        %962 = vmatmul.mubr.bf16.gmra.mxu0 %v870
        %v963 = vpop.f32.mrf.mxu0
        %v964 = vadd.f32 0.0, %v963
        %v965 = vpop.f32.mrf.mxu0
        %v966 = vpop.f32.mrf.mxu0
        %v967 = vadd.f32 0.0, %v966
        %v968 = vpop.f32.mrf.mxu0
        %969 = vdwg.mxu0
        %v970 = vadd.f32 %v827, %v956
        %v971 = vadd.f32 %v828, %v959
        %v972 = vadd.f32 %v829, %v964
        %v973 = vadd.f32 %v830, %v967
        %v974 = vld [vmem:[%s247 + $0x440] sm:$0xc]
        %v975 = vld [vmem:[%s247 + $0x444] sm:$0xf]
        %v976 = vld [vmem:[%s247 + $0x448] sm:$0xf]
        %v977 = vld [vmem:[%s247 + $0x44c] sm:$0xf]
        %v978 = vld [vmem:[%s247 + $0x450] sm:$0x3]
        %s979 = scalar_lea.vmem %s1, 320
        %v980 = vld [vmem:[%s979] sm:$0xf]
        %v981 = vld [vmem:[%s979 + $0x4] sm:$0xf]
        %v982 = vld [vmem:[%s979 + $0x8] sm:$0xf]
        %v983 = vld [vmem:[%s979 + $0xc] sm:$0xf]
        %v984 = vld [vmem:[%s979 + $0x10] sm:$0xf]
        %v985 = vld [vmem:[%s979 + $0x14] sm:$0xf]
        %v986 = vld [vmem:[%s979 + $0x18] sm:$0xf]
        %v987 = vld [vmem:[%s979 + $0x1c] sm:$0xf]
        %v988 = vld [vmem:[%s979 + $0x20] sm:$0xf]
        %v989 = vld [vmem:[%s979 + $0x24] sm:$0xf]
        %v990 = vld [vmem:[%s979 + $0x28] sm:$0xf]
        %v991 = vld [vmem:[%s979 + $0x2c] sm:$0xf]
        %v992 = vld [vmem:[%s979 + $0x30] sm:$0xf]
        %v993 = vld [vmem:[%s979 + $0x34] sm:$0xf]
        %v994 = vld [vmem:[%s979 + $0x38] sm:$0xf]
        %v995 = vld [vmem:[%s979 + $0x3c] sm:$0xf]
        %v1001 = vunpack.c.l.b16 %v974
        %v1002 = vunpack.c.l.b16 %v975
        %v1003 = vunpack.c.l.b16 %v976
        %v1004 = vunpack.c.l.b16 %v977
        %v1005 = vunpack.c.l.b16 %v978
        %v1006 = vpack.c.b16 %v1002, %v1001
        %v1007 = vpack.c.b16 %v1004, %v1003
        %v1008 = vpack.c.b16 %v1005, %v1005
        %v1009 = vrot.slane %v1006, 2
        %v1010 = vrot.slane %v1007, 2
        %v1011 = vsel %vm323, %v1009, %v1010
        %v1012 = vrot.slane %v1008, 2
        %v1013 = vsel %vm323, %v1010, %v1012
        %v1032 = vunpack.c.l.b16 %v980
        %v1033 = vunpack.c.l.b16 %v981
        %v1034 = vunpack.c.l.b16 %v982
        %v1035 = vunpack.c.l.b16 %v983
        %v1036 = vunpack.c.l.b16 %v984
        %v1037 = vunpack.c.l.b16 %v985
        %v1038 = vunpack.c.l.b16 %v986
        %v1039 = vunpack.c.l.b16 %v987
        %v1040 = vunpack.c.l.b16 %v988
        %v1041 = vunpack.c.l.b16 %v989
        %v1042 = vunpack.c.l.b16 %v990
        %v1043 = vunpack.c.l.b16 %v991
        %v1044 = vunpack.c.l.b16 %v992
        %v1045 = vunpack.c.l.b16 %v993
        %v1046 = vunpack.c.l.b16 %v994
        %v1047 = vunpack.c.l.b16 %v995
        %v1048 = vpack.c.b16 %v1033, %v1032
        %v1049 = vpack.c.b16 %v1035, %v1034
        %v1050 = vpack.c.b16 %v1037, %v1036
        %v1051 = vpack.c.b16 %v1039, %v1038
        %v1052 = vpack.c.b16 %v1041, %v1040
        %v1053 = vpack.c.b16 %v1043, %v1042
        %v1054 = vpack.c.b16 %v1045, %v1044
        %v1055 = vpack.c.b16 %v1047, %v1046
        %1064 = vmatprep.subr.bf16.mxu0 0
        %1065 = vmatpush1.bf16.msra.mxu0 %v1055
        %1066 = vmatprep.subr.bf16.mxu0 0
        %1067 = vmatpush1.bf16.msra.mxu0 %v1054
        %1068 = vmatprep.subr.bf16.mxu0 0
        %1069 = vmatpush1.bf16.msra.mxu0 %v1053
        %1070 = vmatprep.subr.bf16.mxu0 0
        %1071 = vmatpush1.bf16.msra.mxu0 %v1052
        %1072 = vmatprep.subr.bf16.mxu0 0
        %1073 = vmatpush1.bf16.msra.mxu0 %v1051
        %1074 = vmatprep.subr.bf16.mxu0 0
        %1075 = vmatpush1.bf16.msra.mxu0 %v1050
        %1076 = vmatprep.subr.bf16.mxu0 0
        %1077 = vmatpush1.bf16.msra.mxu0 %v1049
        %1078 = vmatprep.subr.bf16.mxu0 0
        %1079 = vmatpush1.bf16.msra.mxu0 %v1048
        %1080 = vmatprep.subr.bf16.mxu0 0
        %1081 = vmatpush2.bf16.msra.mxu0 0
        %1082 = vmatprep.subr.bf16.mxu0 0
        %1083 = vmatpush2.bf16.msra.mxu0 0
        %1084 = vmatprep.subr.bf16.mxu0 0
        %1085 = vmatpush2.bf16.msra.mxu0 0
        %1086 = vmatprep.subr.bf16.mxu0 0
        %1087 = vmatpush2.bf16.msra.mxu0 0
        %1088 = vmatprep.subr.bf16.mxu0 0
        %1089 = vmatpush2.bf16.msra.mxu0 0
        %1090 = vmatprep.subr.bf16.mxu0 0
        %1091 = vmatpush2.bf16.msra.mxu0 0
        %1092 = vmatprep.subr.bf16.mxu0 0
        %1093 = vmatpush2.bf16.msra.mxu0 0
        %1094 = vmatprep.subr.bf16.mxu0 0
        %1095 = vmatpush2.bf16.msra.mxu0 0
        %1096 = vmatprep.mubr.bf16.mxu0 0
        %1097 = vmatmul.mubr.bf16.gmra.mxu0 %v1011
        %v1098 = vpop.f32.mrf.mxu0
        %v1099 = vadd.f32 0.0, %v1098
        %v1100 = vpop.f32.mrf.mxu0
        %v1101 = vpop.f32.mrf.mxu0
        %v1102 = vadd.f32 0.0, %v1101
        %v1103 = vpop.f32.mrf.mxu0
        %1104 = vmatprep.mubr.bf16.mxu0 0
        %1105 = vmatmul.mubr.bf16.gmra.mxu0 %v1013
        %v1106 = vpop.f32.mrf.mxu0
        %v1107 = vadd.f32 0.0, %v1106
        %v1108 = vpop.f32.mrf.mxu0
        %v1109 = vpop.f32.mrf.mxu0
        %v1110 = vadd.f32 0.0, %v1109
        %v1111 = vpop.f32.mrf.mxu0
        %1112 = vdwg.mxu0
        %v1113 = vadd.f32 %v970, %v1099
        %v1114 = vadd.f32 %v971, %v1102
        %v1115 = vadd.f32 %v972, %v1107
        %v1116 = vadd.f32 %v973, %v1110
        %v1117 = vld [vmem:[%s247 + $0x500] sm:$0xc]
        %v1118 = vld [vmem:[%s247 + $0x504] sm:$0xf]
        %v1119 = vld [vmem:[%s247 + $0x508] sm:$0xf]
        %v1120 = vld [vmem:[%s247 + $0x50c] sm:$0xf]
        %v1121 = vld [vmem:[%s247 + $0x510] sm:$0x3]
        %s1122 = scalar_lea.vmem %s1, 384
        %v1123 = vld [vmem:[%s1122] sm:$0xf]
        %v1124 = vld [vmem:[%s1122 + $0x4] sm:$0xf]
        %v1125 = vld [vmem:[%s1122 + $0x8] sm:$0xf]
        %v1126 = vld [vmem:[%s1122 + $0xc] sm:$0xf]
        %v1127 = vld [vmem:[%s1122 + $0x10] sm:$0xf]
        %v1128 = vld [vmem:[%s1122 + $0x14] sm:$0xf]
        %v1129 = vld [vmem:[%s1122 + $0x18] sm:$0xf]
        %v1130 = vld [vmem:[%s1122 + $0x1c] sm:$0xf]
        %v1131 = vld [vmem:[%s1122 + $0x20] sm:$0xf]
        %v1132 = vld [vmem:[%s1122 + $0x24] sm:$0xf]
        %v1133 = vld [vmem:[%s1122 + $0x28] sm:$0xf]
        %v1134 = vld [vmem:[%s1122 + $0x2c] sm:$0xf]
        %v1135 = vld [vmem:[%s1122 + $0x30] sm:$0xf]
        %v1136 = vld [vmem:[%s1122 + $0x34] sm:$0xf]
        %v1137 = vld [vmem:[%s1122 + $0x38] sm:$0xf]
        %v1138 = vld [vmem:[%s1122 + $0x3c] sm:$0xf]
        %v1144 = vunpack.c.l.b16 %v1117
        %v1145 = vunpack.c.l.b16 %v1118
        %v1146 = vunpack.c.l.b16 %v1119
        %v1147 = vunpack.c.l.b16 %v1120
        %v1148 = vunpack.c.l.b16 %v1121
        %v1149 = vpack.c.b16 %v1145, %v1144
        %v1150 = vpack.c.b16 %v1147, %v1146
        %v1151 = vpack.c.b16 %v1148, %v1148
        %v1152 = vrot.slane %v1149, 2
        %v1153 = vrot.slane %v1150, 2
        %v1154 = vsel %vm323, %v1152, %v1153
        %v1155 = vrot.slane %v1151, 2
        %v1156 = vsel %vm323, %v1153, %v1155
        %v1175 = vunpack.c.l.b16 %v1123
        %v1176 = vunpack.c.l.b16 %v1124
        %v1177 = vunpack.c.l.b16 %v1125
        %v1178 = vunpack.c.l.b16 %v1126
        %v1179 = vunpack.c.l.b16 %v1127
        %v1180 = vunpack.c.l.b16 %v1128
        %v1181 = vunpack.c.l.b16 %v1129
        %v1182 = vunpack.c.l.b16 %v1130
        %v1183 = vunpack.c.l.b16 %v1131
        %v1184 = vunpack.c.l.b16 %v1132
        %v1185 = vunpack.c.l.b16 %v1133
        %v1186 = vunpack.c.l.b16 %v1134
        %v1187 = vunpack.c.l.b16 %v1135
        %v1188 = vunpack.c.l.b16 %v1136
        %v1189 = vunpack.c.l.b16 %v1137
        %v1190 = vunpack.c.l.b16 %v1138
        %v1191 = vpack.c.b16 %v1176, %v1175
        %v1192 = vpack.c.b16 %v1178, %v1177
        %v1193 = vpack.c.b16 %v1180, %v1179
        %v1194 = vpack.c.b16 %v1182, %v1181
        %v1195 = vpack.c.b16 %v1184, %v1183
        %v1196 = vpack.c.b16 %v1186, %v1185
        %v1197 = vpack.c.b16 %v1188, %v1187
        %v1198 = vpack.c.b16 %v1190, %v1189
        %1207 = vmatprep.subr.bf16.mxu0 0
        %1208 = vmatpush1.bf16.msra.mxu0 %v1198
        %1209 = vmatprep.subr.bf16.mxu0 0
        %1210 = vmatpush1.bf16.msra.mxu0 %v1197
        %1211 = vmatprep.subr.bf16.mxu0 0
        %1212 = vmatpush1.bf16.msra.mxu0 %v1196
        %1213 = vmatprep.subr.bf16.mxu0 0
        %1214 = vmatpush1.bf16.msra.mxu0 %v1195
        %1215 = vmatprep.subr.bf16.mxu0 0
        %1216 = vmatpush1.bf16.msra.mxu0 %v1194
        %1217 = vmatprep.subr.bf16.mxu0 0
        %1218 = vmatpush1.bf16.msra.mxu0 %v1193
        %1219 = vmatprep.subr.bf16.mxu0 0
        %1220 = vmatpush1.bf16.msra.mxu0 %v1192
        %1221 = vmatprep.subr.bf16.mxu0 0
        %1222 = vmatpush1.bf16.msra.mxu0 %v1191
        %1223 = vmatprep.subr.bf16.mxu0 0
        %1224 = vmatpush2.bf16.msra.mxu0 0
        %1225 = vmatprep.subr.bf16.mxu0 0
        %1226 = vmatpush2.bf16.msra.mxu0 0
        %1227 = vmatprep.subr.bf16.mxu0 0
        %1228 = vmatpush2.bf16.msra.mxu0 0
        %1229 = vmatprep.subr.bf16.mxu0 0
        %1230 = vmatpush2.bf16.msra.mxu0 0
        %1231 = vmatprep.subr.bf16.mxu0 0
        %1232 = vmatpush2.bf16.msra.mxu0 0
        %1233 = vmatprep.subr.bf16.mxu0 0
        %1234 = vmatpush2.bf16.msra.mxu0 0
        %1235 = vmatprep.subr.bf16.mxu0 0
        %1236 = vmatpush2.bf16.msra.mxu0 0
        %1237 = vmatprep.subr.bf16.mxu0 0
        %1238 = vmatpush2.bf16.msra.mxu0 0
        %1239 = vmatprep.mubr.bf16.mxu0 0
        %1240 = vmatmul.mubr.bf16.gmra.mxu0 %v1154
        %v1241 = vpop.f32.mrf.mxu0
        %v1242 = vadd.f32 0.0, %v1241
        %v1243 = vpop.f32.mrf.mxu0
        %v1244 = vpop.f32.mrf.mxu0
        %v1245 = vadd.f32 0.0, %v1244
        %v1246 = vpop.f32.mrf.mxu0
        %1247 = vmatprep.mubr.bf16.mxu0 0
        %1248 = vmatmul.mubr.bf16.gmra.mxu0 %v1156
        %v1249 = vpop.f32.mrf.mxu0
        %v1250 = vadd.f32 0.0, %v1249
        %v1251 = vpop.f32.mrf.mxu0
        %v1252 = vpop.f32.mrf.mxu0
        %v1253 = vadd.f32 0.0, %v1252
        %v1254 = vpop.f32.mrf.mxu0
        %1255 = vdwg.mxu0
        %v1256 = vadd.f32 %v1113, %v1242
        %v1257 = vadd.f32 %v1114, %v1245
        %v1258 = vadd.f32 %v1115, %v1250
        %v1259 = vadd.f32 %v1116, %v1253
        %v1260 = vld [vmem:[%s247 + $0x560] sm:$0xc]
        %v1261 = vld [vmem:[%s247 + $0x564] sm:$0xf]
        %v1262 = vld [vmem:[%s247 + $0x568] sm:$0xf]
        %v1263 = vld [vmem:[%s247 + $0x56c] sm:$0xf]
        %v1264 = vld [vmem:[%s247 + $0x570] sm:$0x3]
        %s1265 = scalar_lea.vmem %s1, 448
        %v1266 = vld [vmem:[%s1265] sm:$0xf]
        %v1267 = vld [vmem:[%s1265 + $0x4] sm:$0xf]
        %v1268 = vld [vmem:[%s1265 + $0x8] sm:$0xf]
        %v1269 = vld [vmem:[%s1265 + $0xc] sm:$0xf]
        %v1270 = vld [vmem:[%s1265 + $0x10] sm:$0xf]
        %v1271 = vld [vmem:[%s1265 + $0x14] sm:$0xf]
        %v1272 = vld [vmem:[%s1265 + $0x18] sm:$0xf]
        %v1273 = vld [vmem:[%s1265 + $0x1c] sm:$0xf]
        %v1274 = vld [vmem:[%s1265 + $0x20] sm:$0xf]
        %v1275 = vld [vmem:[%s1265 + $0x24] sm:$0xf]
        %v1276 = vld [vmem:[%s1265 + $0x28] sm:$0xf]
        %v1277 = vld [vmem:[%s1265 + $0x2c] sm:$0xf]
        %v1278 = vld [vmem:[%s1265 + $0x30] sm:$0xf]
        %v1279 = vld [vmem:[%s1265 + $0x34] sm:$0xf]
        %v1280 = vld [vmem:[%s1265 + $0x38] sm:$0xf]
        %v1281 = vld [vmem:[%s1265 + $0x3c] sm:$0xf]
        %v1287 = vunpack.c.l.b16 %v1260
        %v1288 = vunpack.c.l.b16 %v1261
        %v1289 = vunpack.c.l.b16 %v1262
        %v1290 = vunpack.c.l.b16 %v1263
        %v1291 = vunpack.c.l.b16 %v1264
        %v1292 = vpack.c.b16 %v1288, %v1287
        %v1293 = vpack.c.b16 %v1290, %v1289
        %v1294 = vpack.c.b16 %v1291, %v1291
        %v1295 = vrot.slane %v1292, 2
        %v1296 = vrot.slane %v1293, 2
        %v1297 = vsel %vm323, %v1295, %v1296
        %v1298 = vrot.slane %v1294, 2
        %v1299 = vsel %vm323, %v1296, %v1298
        %v1318 = vunpack.c.l.b16 %v1266
        %v1319 = vunpack.c.l.b16 %v1267
        %v1320 = vunpack.c.l.b16 %v1268
        %v1321 = vunpack.c.l.b16 %v1269
        %v1322 = vunpack.c.l.b16 %v1270
        %v1323 = vunpack.c.l.b16 %v1271
        %v1324 = vunpack.c.l.b16 %v1272
        %v1325 = vunpack.c.l.b16 %v1273
        %v1326 = vunpack.c.l.b16 %v1274
        %v1327 = vunpack.c.l.b16 %v1275
        %v1328 = vunpack.c.l.b16 %v1276
        %v1329 = vunpack.c.l.b16 %v1277
        %v1330 = vunpack.c.l.b16 %v1278
        %v1331 = vunpack.c.l.b16 %v1279
        %v1332 = vunpack.c.l.b16 %v1280
        %v1333 = vunpack.c.l.b16 %v1281
        %v1334 = vpack.c.b16 %v1319, %v1318
        %v1335 = vpack.c.b16 %v1321, %v1320
        %v1336 = vpack.c.b16 %v1323, %v1322
        %v1337 = vpack.c.b16 %v1325, %v1324
        %v1338 = vpack.c.b16 %v1327, %v1326
        %v1339 = vpack.c.b16 %v1329, %v1328
        %v1340 = vpack.c.b16 %v1331, %v1330
        %v1341 = vpack.c.b16 %v1333, %v1332
        %1350 = vmatprep.subr.bf16.mxu0 0
        %1351 = vmatpush1.bf16.msra.mxu0 %v1341
        %1352 = vmatprep.subr.bf16.mxu0 0
        %1353 = vmatpush1.bf16.msra.mxu0 %v1340
        %1354 = vmatprep.subr.bf16.mxu0 0
        %1355 = vmatpush1.bf16.msra.mxu0 %v1339
        %1356 = vmatprep.subr.bf16.mxu0 0
        %1357 = vmatpush1.bf16.msra.mxu0 %v1338
        %1358 = vmatprep.subr.bf16.mxu0 0
        %1359 = vmatpush1.bf16.msra.mxu0 %v1337
        %1360 = vmatprep.subr.bf16.mxu0 0
        %1361 = vmatpush1.bf16.msra.mxu0 %v1336
        %1362 = vmatprep.subr.bf16.mxu0 0
        %1363 = vmatpush1.bf16.msra.mxu0 %v1335
        %1364 = vmatprep.subr.bf16.mxu0 0
        %1365 = vmatpush1.bf16.msra.mxu0 %v1334
        %1366 = vmatprep.subr.bf16.mxu0 0
        %1367 = vmatpush2.bf16.msra.mxu0 0
        %1368 = vmatprep.subr.bf16.mxu0 0
        %1369 = vmatpush2.bf16.msra.mxu0 0
        %1370 = vmatprep.subr.bf16.mxu0 0
        %1371 = vmatpush2.bf16.msra.mxu0 0
        %1372 = vmatprep.subr.bf16.mxu0 0
        %1373 = vmatpush2.bf16.msra.mxu0 0
        %1374 = vmatprep.subr.bf16.mxu0 0
        %1375 = vmatpush2.bf16.msra.mxu0 0
        %1376 = vmatprep.subr.bf16.mxu0 0
        %1377 = vmatpush2.bf16.msra.mxu0 0
        %1378 = vmatprep.subr.bf16.mxu0 0
        %1379 = vmatpush2.bf16.msra.mxu0 0
        %1380 = vmatprep.subr.bf16.mxu0 0
        %1381 = vmatpush2.bf16.msra.mxu0 0
        %1382 = vmatprep.mubr.bf16.mxu0 0
        %1383 = vmatmul.mubr.bf16.gmra.mxu0 %v1297
        %v1384 = vpop.f32.mrf.mxu0
        %v1385 = vadd.f32 0.0, %v1384
        %v1386 = vpop.f32.mrf.mxu0
        %v1387 = vpop.f32.mrf.mxu0
        %v1388 = vadd.f32 0.0, %v1387
        %v1389 = vpop.f32.mrf.mxu0
        %1390 = vmatprep.mubr.bf16.mxu0 0
        %1391 = vmatmul.mubr.bf16.gmra.mxu0 %v1299
        %v1392 = vpop.f32.mrf.mxu0
        %v1393 = vadd.f32 0.0, %v1392
        %v1394 = vpop.f32.mrf.mxu0
        %v1395 = vpop.f32.mrf.mxu0
        %v1396 = vadd.f32 0.0, %v1395
        %v1397 = vpop.f32.mrf.mxu0
        %1398 = vdwg.mxu0
        %v1399 = vadd.f32 %v1256, %v1385
        %v1400 = vadd.f32 %v1257, %v1388
        %v1401 = vadd.f32 %v1258, %v1393
        %v1402 = vadd.f32 %v1259, %v1396
        %v1403 = vld [vmem:[%s247 + $0x5c0] sm:$0xc]
        %v1404 = vld [vmem:[%s247 + $0x5c4] sm:$0xf]
        %v1405 = vld [vmem:[%s247 + $0x5c8] sm:$0xf]
        %v1406 = vld [vmem:[%s247 + $0x5cc] sm:$0xf]
        %v1407 = vld [vmem:[%s247 + $0x5d0] sm:$0x3]
        %s1408 = scalar_lea.vmem %s1, 512
        %v1409 = vld [vmem:[%s1408] sm:$0xf]
        %v1410 = vld [vmem:[%s1408 + $0x4] sm:$0xf]
        %v1411 = vld [vmem:[%s1408 + $0x8] sm:$0xf]
        %v1412 = vld [vmem:[%s1408 + $0xc] sm:$0xf]
        %v1413 = vld [vmem:[%s1408 + $0x10] sm:$0xf]
        %v1414 = vld [vmem:[%s1408 + $0x14] sm:$0xf]
        %v1415 = vld [vmem:[%s1408 + $0x18] sm:$0xf]
        %v1416 = vld [vmem:[%s1408 + $0x1c] sm:$0xf]
        %v1417 = vld [vmem:[%s1408 + $0x20] sm:$0xf]
        %v1418 = vld [vmem:[%s1408 + $0x24] sm:$0xf]
        %v1419 = vld [vmem:[%s1408 + $0x28] sm:$0xf]
        %v1420 = vld [vmem:[%s1408 + $0x2c] sm:$0xf]
        %v1421 = vld [vmem:[%s1408 + $0x30] sm:$0xf]
        %v1422 = vld [vmem:[%s1408 + $0x34] sm:$0xf]
        %v1423 = vld [vmem:[%s1408 + $0x38] sm:$0xf]
        %v1424 = vld [vmem:[%s1408 + $0x3c] sm:$0xf]
        %v1430 = vunpack.c.l.b16 %v1403
        %v1431 = vunpack.c.l.b16 %v1404
        %v1432 = vunpack.c.l.b16 %v1405
        %v1433 = vunpack.c.l.b16 %v1406
        %v1434 = vunpack.c.l.b16 %v1407
        %v1435 = vpack.c.b16 %v1431, %v1430
        %v1436 = vpack.c.b16 %v1433, %v1432
        %v1437 = vpack.c.b16 %v1434, %v1434
        %v1438 = vrot.slane %v1435, 2
        %v1439 = vrot.slane %v1436, 2
        %v1440 = vsel %vm323, %v1438, %v1439
        %v1441 = vrot.slane %v1437, 2
        %v1442 = vsel %vm323, %v1439, %v1441
        %v1461 = vunpack.c.l.b16 %v1409
        %v1462 = vunpack.c.l.b16 %v1410
        %v1463 = vunpack.c.l.b16 %v1411
        %v1464 = vunpack.c.l.b16 %v1412
        %v1465 = vunpack.c.l.b16 %v1413
        %v1466 = vunpack.c.l.b16 %v1414
        %v1467 = vunpack.c.l.b16 %v1415
        %v1468 = vunpack.c.l.b16 %v1416
        %v1469 = vunpack.c.l.b16 %v1417
        %v1470 = vunpack.c.l.b16 %v1418
        %v1471 = vunpack.c.l.b16 %v1419
        %v1472 = vunpack.c.l.b16 %v1420
        %v1473 = vunpack.c.l.b16 %v1421
        %v1474 = vunpack.c.l.b16 %v1422
        %v1475 = vunpack.c.l.b16 %v1423
        %v1476 = vunpack.c.l.b16 %v1424
        %v1477 = vpack.c.b16 %v1462, %v1461
        %v1478 = vpack.c.b16 %v1464, %v1463
        %v1479 = vpack.c.b16 %v1466, %v1465
        %v1480 = vpack.c.b16 %v1468, %v1467
        %v1481 = vpack.c.b16 %v1470, %v1469
        %v1482 = vpack.c.b16 %v1472, %v1471
        %v1483 = vpack.c.b16 %v1474, %v1473
        %v1484 = vpack.c.b16 %v1476, %v1475
        %1493 = vmatprep.subr.bf16.mxu0 0
        %1494 = vmatpush1.bf16.msra.mxu0 %v1484
        %1495 = vmatprep.subr.bf16.mxu0 0
        %1496 = vmatpush1.bf16.msra.mxu0 %v1483
        %1497 = vmatprep.subr.bf16.mxu0 0
        %1498 = vmatpush1.bf16.msra.mxu0 %v1482
        %1499 = vmatprep.subr.bf16.mxu0 0
        %1500 = vmatpush1.bf16.msra.mxu0 %v1481
        %1501 = vmatprep.subr.bf16.mxu0 0
        %1502 = vmatpush1.bf16.msra.mxu0 %v1480
        %1503 = vmatprep.subr.bf16.mxu0 0
        %1504 = vmatpush1.bf16.msra.mxu0 %v1479
        %1505 = vmatprep.subr.bf16.mxu0 0
        %1506 = vmatpush1.bf16.msra.mxu0 %v1478
        %1507 = vmatprep.subr.bf16.mxu0 0
        %1508 = vmatpush1.bf16.msra.mxu0 %v1477
        %1509 = vmatprep.subr.bf16.mxu0 0
        %1510 = vmatpush2.bf16.msra.mxu0 0
        %1511 = vmatprep.subr.bf16.mxu0 0
        %1512 = vmatpush2.bf16.msra.mxu0 0
        %1513 = vmatprep.subr.bf16.mxu0 0
        %1514 = vmatpush2.bf16.msra.mxu0 0
        %1515 = vmatprep.subr.bf16.mxu0 0
        %1516 = vmatpush2.bf16.msra.mxu0 0
        %1517 = vmatprep.subr.bf16.mxu0 0
        %1518 = vmatpush2.bf16.msra.mxu0 0
        %1519 = vmatprep.subr.bf16.mxu0 0
        %1520 = vmatpush2.bf16.msra.mxu0 0
        %1521 = vmatprep.subr.bf16.mxu0 0
        %1522 = vmatpush2.bf16.msra.mxu0 0
        %1523 = vmatprep.subr.bf16.mxu0 0
        %1524 = vmatpush2.bf16.msra.mxu0 0
        %1525 = vmatprep.mubr.bf16.mxu0 0
        %1526 = vmatmul.mubr.bf16.gmra.mxu0 %v1440
        %v1527 = vpop.f32.mrf.mxu0
        %v1528 = vadd.f32 0.0, %v1527
        %v1529 = vpop.f32.mrf.mxu0
        %v1530 = vpop.f32.mrf.mxu0
        %v1531 = vadd.f32 0.0, %v1530
        %v1532 = vpop.f32.mrf.mxu0
        %1533 = vmatprep.mubr.bf16.mxu0 0
        %1534 = vmatmul.mubr.bf16.gmra.mxu0 %v1442
        %v1535 = vpop.f32.mrf.mxu0
        %v1536 = vadd.f32 0.0, %v1535
        %v1537 = vpop.f32.mrf.mxu0
        %v1538 = vpop.f32.mrf.mxu0
        %v1539 = vadd.f32 0.0, %v1538
        %v1540 = vpop.f32.mrf.mxu0
        %1541 = vdwg.mxu0
        %v1542 = vadd.f32 %v1399, %v1528
        %v1543 = vadd.f32 %v1400, %v1531
        %v1544 = vadd.f32 %v1401, %v1536
        %v1545 = vadd.f32 %v1402, %v1539
        %v1546 = vpack.c.bf16 %v1543, %v1542
        %v1547 = vpack.c.bf16 %v1545, %v1544
        %v1550 = vunpack.c.l.b16 %v1546
        %v1551 = vunpack.c.h.b16 %v1546
        %v1552 = vunpack.c.l.b16 %v1547
        %v1553 = vunpack.c.h.b16 %v1547
        %v1554 = vpack.c.b16 %v1550, %v1550
        %v1555 = vpack.c.b16 %v1551, %v1551
        %v1556 = vpack.c.b16 %v1552, %v1552
        %v1557 = vpack.c.b16 %v1553, %v1553
        %1562 = vst [vmem:[%s228] sm:$0xf] %v1554
        %1563 = vst [vmem:[%s228 + $0x4] sm:$0xf] %v1555
        %1564 = vst [vmem:[%s228 + $0x8] sm:$0xf] %v1556
        %1565 = vst [vmem:[%s228 + $0xc] sm:$0xf] %v1557
        %v1566 = vmul.f32 %v1542, %v263
        %v1567 = vmul.f32 %v1543, %v264
        %v1568 = vmul.f32 %v1544, %v265
        %v1569 = vmul.f32 %v1545, %v266
        %v1570 = vadd.f32 %v1566, %v1567
        %v1571 = vadd.f32 %v1570, %v1568
        %v1572 = vadd.f32 %v1571, %v1569
        %v1573 = vrot.slane %v1572, 4
        %v1574 = vadd.f32 %v1572, %v1573
        %v1575 = vrot.slane %v1574, 2
        %v1576 = vadd.f32 %v1574, %v1575
        %v1577 = vrot.slane %v1576, 1
        %v1578 = vadd.f32 %v1576, %v1577
        %1579 = vst [vmem:[%s261] sm:$0x1] %v1578
        %v1580 = vmul.f32 %v1566, %v1542
        %v1581 = vmul.f32 %v1567, %v1543
        %v1582 = vmul.f32 %v1568, %v1544
        %v1583 = vmul.f32 %v1569, %v1545
        %v1584 = vadd.f32 %v1580, %v1581
        %v1585 = vadd.f32 %v1584, %v1582
        %v1586 = vadd.f32 %v1585, %v1583
        %v1587 = vrot.slane %v1586, 4
        %v1588 = vadd.f32 %v1586, %v1587
        %v1589 = vrot.slane %v1588, 2
        %v1590 = vadd.f32 %v1588, %v1589
        %v1591 = vrot.slane %v1590, 1
        %v1592 = vadd.f32 %v1590, %v1591
        %1593 = vst [vmem:[%s261 + $0x4] sm:$0x1] %v1592
        %v1594 = vld [vmem:[%s247 + $0x18] sm:$0xe]
        %v1595 = vld [vmem:[%s247 + $0x1c] sm:$0xf]
        %v1596 = vld [vmem:[%s247 + $0x20] sm:$0xf]
        %v1597 = vld [vmem:[%s247 + $0x24] sm:$0xf]
        %v1598 = vld [vmem:[%s247 + $0x28] sm:$0x3]
        %s1599 = scalar_lea.vmem %s1, 576
        %v1600 = vld [vmem:[%s1599] sm:$0xf]
        %v1601 = vld [vmem:[%s1599 + $0x4] sm:$0xf]
        %v1602 = vld [vmem:[%s1599 + $0x8] sm:$0xf]
        %v1603 = vld [vmem:[%s1599 + $0xc] sm:$0xf]
        %v1604 = vld [vmem:[%s1599 + $0x10] sm:$0xf]
        %v1605 = vld [vmem:[%s1599 + $0x14] sm:$0xf]
        %v1606 = vld [vmem:[%s1599 + $0x18] sm:$0xf]
        %v1607 = vld [vmem:[%s1599 + $0x1c] sm:$0xf]
        %v1608 = vld [vmem:[%s1599 + $0x20] sm:$0xf]
        %v1609 = vld [vmem:[%s1599 + $0x24] sm:$0xf]
        %v1610 = vld [vmem:[%s1599 + $0x28] sm:$0xf]
        %v1611 = vld [vmem:[%s1599 + $0x2c] sm:$0xf]
        %v1612 = vld [vmem:[%s1599 + $0x30] sm:$0xf]
        %v1613 = vld [vmem:[%s1599 + $0x34] sm:$0xf]
        %v1614 = vld [vmem:[%s1599 + $0x38] sm:$0xf]
        %v1615 = vld [vmem:[%s1599 + $0x3c] sm:$0xf]
        %v1616 = vld [vmem:[%s247 + $0xd8] sm:$0xc]
        %v1617 = vld [vmem:[%s247 + $0xdc] sm:$0xf]
        %v1618 = vld [vmem:[%s247 + $0xe0] sm:$0xf]
        %v1619 = vld [vmem:[%s247 + $0xe4] sm:$0xf]
        %v1620 = vld [vmem:[%s247 + $0xe8] sm:$0x3]
        %s1621 = scalar_lea.vmem %s1, 640
        %v1622 = vld [vmem:[%s1621] sm:$0xf]
        %v1623 = vld [vmem:[%s1621 + $0x4] sm:$0xf]
        %v1624 = vld [vmem:[%s1621 + $0x8] sm:$0xf]
        %v1625 = vld [vmem:[%s1621 + $0xc] sm:$0xf]
        %v1626 = vld [vmem:[%s1621 + $0x10] sm:$0xf]
        %v1627 = vld [vmem:[%s1621 + $0x14] sm:$0xf]
        %v1628 = vld [vmem:[%s1621 + $0x18] sm:$0xf]
        %v1629 = vld [vmem:[%s1621 + $0x1c] sm:$0xf]
        %v1630 = vld [vmem:[%s1621 + $0x20] sm:$0xf]
        %v1631 = vld [vmem:[%s1621 + $0x24] sm:$0xf]
        %v1632 = vld [vmem:[%s1621 + $0x28] sm:$0xf]
        %v1633 = vld [vmem:[%s1621 + $0x2c] sm:$0xf]
        %v1634 = vld [vmem:[%s1621 + $0x30] sm:$0xf]
        %v1635 = vld [vmem:[%s1621 + $0x34] sm:$0xf]
        %v1636 = vld [vmem:[%s1621 + $0x38] sm:$0xf]
        %v1637 = vld [vmem:[%s1621 + $0x3c] sm:$0xf]
        %v1643 = vunpack.c.l.b16 %v1616
        %v1644 = vunpack.c.l.b16 %v1617
        %v1645 = vunpack.c.l.b16 %v1618
        %v1646 = vunpack.c.l.b16 %v1619
        %v1647 = vunpack.c.l.b16 %v1620
        %v1648 = vpack.c.b16 %v1644, %v1643
        %v1649 = vpack.c.b16 %v1646, %v1645
        %v1650 = vpack.c.b16 %v1647, %v1647
        %v1651 = vrot.slane %v1648, 2
        %v1652 = vrot.slane %v1649, 2
        %v1653 = vsel %vm323, %v1651, %v1652
        %v1654 = vrot.slane %v1650, 2
        %v1655 = vsel %vm323, %v1652, %v1654
        %v1674 = vunpack.c.l.b16 %v1622
        %v1675 = vunpack.c.l.b16 %v1623
        %v1676 = vunpack.c.l.b16 %v1624
        %v1677 = vunpack.c.l.b16 %v1625
        %v1678 = vunpack.c.l.b16 %v1626
        %v1679 = vunpack.c.l.b16 %v1627
        %v1680 = vunpack.c.l.b16 %v1628
        %v1681 = vunpack.c.l.b16 %v1629
        %v1682 = vunpack.c.l.b16 %v1630
        %v1683 = vunpack.c.l.b16 %v1631
        %v1684 = vunpack.c.l.b16 %v1632
        %v1685 = vunpack.c.l.b16 %v1633
        %v1686 = vunpack.c.l.b16 %v1634
        %v1687 = vunpack.c.l.b16 %v1635
        %v1688 = vunpack.c.l.b16 %v1636
        %v1689 = vunpack.c.l.b16 %v1637
        %v1690 = vpack.c.b16 %v1675, %v1674
        %v1691 = vpack.c.b16 %v1677, %v1676
        %v1692 = vpack.c.b16 %v1679, %v1678
        %v1693 = vpack.c.b16 %v1681, %v1680
        %v1694 = vpack.c.b16 %v1683, %v1682
        %v1695 = vpack.c.b16 %v1685, %v1684
        %v1696 = vpack.c.b16 %v1687, %v1686
        %v1697 = vpack.c.b16 %v1689, %v1688
        %1706 = vmatprep.subr.bf16.mxu0 0
        %1707 = vmatpush1.bf16.msra.mxu0 %v1697
        %1708 = vmatprep.subr.bf16.mxu0 0
        %1709 = vmatpush1.bf16.msra.mxu0 %v1696
        %1710 = vmatprep.subr.bf16.mxu0 0
        %1711 = vmatpush1.bf16.msra.mxu0 %v1695
        %1712 = vmatprep.subr.bf16.mxu0 0
        %1713 = vmatpush1.bf16.msra.mxu0 %v1694
        %1714 = vmatprep.subr.bf16.mxu0 0
        %1715 = vmatpush1.bf16.msra.mxu0 %v1693
        %1716 = vmatprep.subr.bf16.mxu0 0
        %1717 = vmatpush1.bf16.msra.mxu0 %v1692
        %1718 = vmatprep.subr.bf16.mxu0 0
        %1719 = vmatpush1.bf16.msra.mxu0 %v1691
        %1720 = vmatprep.subr.bf16.mxu0 0
        %1721 = vmatpush1.bf16.msra.mxu0 %v1690
        %1722 = vmatprep.subr.bf16.mxu0 0
        %1723 = vmatpush2.bf16.msra.mxu0 0
        %1724 = vmatprep.subr.bf16.mxu0 0
        %1725 = vmatpush2.bf16.msra.mxu0 0
        %1726 = vmatprep.subr.bf16.mxu0 0
        %1727 = vmatpush2.bf16.msra.mxu0 0
        %1728 = vmatprep.subr.bf16.mxu0 0
        %1729 = vmatpush2.bf16.msra.mxu0 0
        %1730 = vmatprep.subr.bf16.mxu0 0
        %1731 = vmatpush2.bf16.msra.mxu0 0
        %1732 = vmatprep.subr.bf16.mxu0 0
        %1733 = vmatpush2.bf16.msra.mxu0 0
        %1734 = vmatprep.subr.bf16.mxu0 0
        %1735 = vmatpush2.bf16.msra.mxu0 0
        %1736 = vmatprep.subr.bf16.mxu0 0
        %1737 = vmatpush2.bf16.msra.mxu0 0
        %1738 = vmatprep.mubr.bf16.mxu0 0
        %1739 = vmatmul.mubr.bf16.gmra.mxu0 %v1653
        %v1740 = vpop.f32.mrf.mxu0
        %v1741 = vadd.f32 0.0, %v1740
        %v1742 = vpop.f32.mrf.mxu0
        %v1743 = vpop.f32.mrf.mxu0
        %v1744 = vadd.f32 0.0, %v1743
        %v1745 = vpop.f32.mrf.mxu0
        %1746 = vmatprep.mubr.bf16.mxu0 0
        %1747 = vmatmul.mubr.bf16.gmra.mxu0 %v1655
        %v1748 = vpop.f32.mrf.mxu0
        %v1749 = vadd.f32 0.0, %v1748
        %v1750 = vpop.f32.mrf.mxu0
        %v1751 = vpop.f32.mrf.mxu0
        %v1752 = vadd.f32 0.0, %v1751
        %v1753 = vpop.f32.mrf.mxu0
        %1754 = vdwg.mxu0
        %v1760 = vunpack.c.l.b16 %v1594
        %v1761 = vunpack.c.l.b16 %v1595
        %v1762 = vunpack.c.l.b16 %v1596
        %v1763 = vunpack.c.l.b16 %v1597
        %v1764 = vunpack.c.l.b16 %v1598
        %v1765 = vpack.c.b16 %v1761, %v1760
        %v1766 = vpack.c.b16 %v1763, %v1762
        %v1767 = vpack.c.b16 %v1764, %v1764
        %vm1768 = vsmask.f32 6400
        %v1770 = vshrl.u32 %v1765, 16
        %v1772 = vrot.slane %v1770, 1
        %v1773 = vshll.u32 %v1765, 16
        %v1775 = vrot.slane %v1773, 2
        %v1776 = vor.u32 %v1772, %v1775
        %v1778 = vshrl.u32 %v1766, 16
        %v1780 = vrot.slane %v1778, 1
        %v1781 = vshll.u32 %v1766, 16
        %v1783 = vrot.slane %v1781, 2
        %v1784 = vor.u32 %v1780, %v1783
        %v1785 = vsel %vm1768, %v1776, %v1784
        %v1787 = vshrl.u32 %v1767, 16
        %v1789 = vrot.slane %v1787, 1
        %v1790 = vshll.u32 %v1767, 16
        %v1792 = vrot.slane %v1790, 2
        %v1793 = vor.u32 %v1789, %v1792
        %v1794 = vsel %vm1768, %v1784, %v1793
        %v1813 = vunpack.c.l.b16 %v1600
        %v1814 = vunpack.c.l.b16 %v1601
        %v1815 = vunpack.c.l.b16 %v1602
        %v1816 = vunpack.c.l.b16 %v1603
        %v1817 = vunpack.c.l.b16 %v1604
        %v1818 = vunpack.c.l.b16 %v1605
        %v1819 = vunpack.c.l.b16 %v1606
        %v1820 = vunpack.c.l.b16 %v1607
        %v1821 = vunpack.c.l.b16 %v1608
        %v1822 = vunpack.c.l.b16 %v1609
        %v1823 = vunpack.c.l.b16 %v1610
        %v1824 = vunpack.c.l.b16 %v1611
        %v1825 = vunpack.c.l.b16 %v1612
        %v1826 = vunpack.c.l.b16 %v1613
        %v1827 = vunpack.c.l.b16 %v1614
        %v1828 = vunpack.c.l.b16 %v1615
        %v1829 = vpack.c.b16 %v1814, %v1813
        %v1830 = vpack.c.b16 %v1816, %v1815
        %v1831 = vpack.c.b16 %v1818, %v1817
        %v1832 = vpack.c.b16 %v1820, %v1819
        %v1833 = vpack.c.b16 %v1822, %v1821
        %v1834 = vpack.c.b16 %v1824, %v1823
        %v1835 = vpack.c.b16 %v1826, %v1825
        %v1836 = vpack.c.b16 %v1828, %v1827
        %1845 = vmatprep.subr.bf16.mxu0 0
        %1846 = vmatpush1.bf16.msra.mxu0 %v1836
        %1847 = vmatprep.subr.bf16.mxu0 0
        %1848 = vmatpush1.bf16.msra.mxu0 %v1835
        %1849 = vmatprep.subr.bf16.mxu0 0
        %1850 = vmatpush1.bf16.msra.mxu0 %v1834
        %1851 = vmatprep.subr.bf16.mxu0 0
        %1852 = vmatpush1.bf16.msra.mxu0 %v1833
        %1853 = vmatprep.subr.bf16.mxu0 0
        %1854 = vmatpush1.bf16.msra.mxu0 %v1832
        %1855 = vmatprep.subr.bf16.mxu0 0
        %1856 = vmatpush1.bf16.msra.mxu0 %v1831
        %1857 = vmatprep.subr.bf16.mxu0 0
        %1858 = vmatpush1.bf16.msra.mxu0 %v1830
        %1859 = vmatprep.subr.bf16.mxu0 0
        %1860 = vmatpush1.bf16.msra.mxu0 %v1829
        %1861 = vmatprep.subr.bf16.mxu0 0
        %1862 = vmatpush2.bf16.msra.mxu0 0
        %1863 = vmatprep.subr.bf16.mxu0 0
        %1864 = vmatpush2.bf16.msra.mxu0 0
        %1865 = vmatprep.subr.bf16.mxu0 0
        %1866 = vmatpush2.bf16.msra.mxu0 0
        %1867 = vmatprep.subr.bf16.mxu0 0
        %1868 = vmatpush2.bf16.msra.mxu0 0
        %1869 = vmatprep.subr.bf16.mxu0 0
        %1870 = vmatpush2.bf16.msra.mxu0 0
        %1871 = vmatprep.subr.bf16.mxu0 0
        %1872 = vmatpush2.bf16.msra.mxu0 0
        %1873 = vmatprep.subr.bf16.mxu0 0
        %1874 = vmatpush2.bf16.msra.mxu0 0
        %1875 = vmatprep.subr.bf16.mxu0 0
        %1876 = vmatpush2.bf16.msra.mxu0 0
        %1877 = vmatprep.mubr.bf16.mxu0 0
        %1878 = vmatmul.mubr.bf16.gmra.mxu0 %v1785
        %v1879 = vpop.f32.mrf.mxu0
        %v1880 = vadd.f32 %v1741, %v1879
        %v1881 = vpop.f32.mrf.mxu0
        %v1882 = vpop.f32.mrf.mxu0
        %v1883 = vadd.f32 %v1744, %v1882
        %v1884 = vpop.f32.mrf.mxu0
        %1885 = vmatprep.mubr.bf16.mxu0 0
        %1886 = vmatmul.mubr.bf16.gmra.mxu0 %v1794
        %v1887 = vpop.f32.mrf.mxu0
        %v1888 = vadd.f32 %v1749, %v1887
        %v1889 = vpop.f32.mrf.mxu0
        %v1890 = vpop.f32.mrf.mxu0
        %v1891 = vadd.f32 %v1752, %v1890
        %v1892 = vpop.f32.mrf.mxu0
        %1893 = vdwg.mxu0
        %v1894 = vld [vmem:[%s247 + $0x18] sm:$0x8]
        %v1895 = vld [vmem:[%s247 + $0x28] sm:$0x7]
        %s1896 = scalar_lea.vmem %s1, 704
        %v1897 = vld [vmem:[%s1896] sm:$0xf]
        %v1898 = vld [vmem:[%s1896 + $0x4] sm:$0xf]
        %v1899 = vld [vmem:[%s1896 + $0x8] sm:$0xf]
        %v1900 = vld [vmem:[%s1896 + $0xc] sm:$0xf]
        %v1901 = vld [vmem:[%s1896 + $0x10] sm:$0xf]
        %v1902 = vld [vmem:[%s1896 + $0x14] sm:$0xf]
        %v1903 = vld [vmem:[%s1896 + $0x18] sm:$0xf]
        %v1904 = vld [vmem:[%s1896 + $0x1c] sm:$0xf]
        %v1905 = vld [vmem:[%s1896 + $0x20] sm:$0xf]
        %v1906 = vld [vmem:[%s1896 + $0x24] sm:$0xf]
        %v1907 = vld [vmem:[%s1896 + $0x28] sm:$0xf]
        %v1908 = vld [vmem:[%s1896 + $0x2c] sm:$0xf]
        %v1909 = vld [vmem:[%s1896 + $0x30] sm:$0xf]
        %v1910 = vld [vmem:[%s1896 + $0x34] sm:$0xf]
        %v1911 = vld [vmem:[%s1896 + $0x38] sm:$0xf]
        %v1912 = vld [vmem:[%s1896 + $0x3c] sm:$0xf]
        %v1915 = vunpack.c.l.b16 %v1894
        %v1916 = vunpack.c.l.b16 %v1895
        %v1917 = vpack.c.b16 %v1761, %v1915
        %v1918 = vpack.c.b16 %v1916, %v1916
        %vm1919 = vcmask 1044480
        %v1920 = vrot.slane %v1917, 3
        %v1921 = vrot.slane %v1766, 3
        %v1922 = vsel %vm1919, %v1920, %v1921
        %v1923 = vrot.slane %v1918, 3
        %v1924 = vsel %vm1919, %v1921, %v1923
        %v1943 = vunpack.c.l.b16 %v1897
        %v1944 = vunpack.c.l.b16 %v1898
        %v1945 = vunpack.c.l.b16 %v1899
        %v1946 = vunpack.c.l.b16 %v1900
        %v1947 = vunpack.c.l.b16 %v1901
        %v1948 = vunpack.c.l.b16 %v1902
        %v1949 = vunpack.c.l.b16 %v1903
        %v1950 = vunpack.c.l.b16 %v1904
        %v1951 = vunpack.c.l.b16 %v1905
        %v1952 = vunpack.c.l.b16 %v1906
        %v1953 = vunpack.c.l.b16 %v1907
        %v1954 = vunpack.c.l.b16 %v1908
        %v1955 = vunpack.c.l.b16 %v1909
        %v1956 = vunpack.c.l.b16 %v1910
        %v1957 = vunpack.c.l.b16 %v1911
        %v1958 = vunpack.c.l.b16 %v1912
        %v1959 = vpack.c.b16 %v1944, %v1943
        %v1960 = vpack.c.b16 %v1946, %v1945
        %v1961 = vpack.c.b16 %v1948, %v1947
        %v1962 = vpack.c.b16 %v1950, %v1949
        %v1963 = vpack.c.b16 %v1952, %v1951
        %v1964 = vpack.c.b16 %v1954, %v1953
        %v1965 = vpack.c.b16 %v1956, %v1955
        %v1966 = vpack.c.b16 %v1958, %v1957
        %1975 = vmatprep.subr.bf16.mxu0 0
        %1976 = vmatpush1.bf16.msra.mxu0 %v1966
        %1977 = vmatprep.subr.bf16.mxu0 0
        %1978 = vmatpush1.bf16.msra.mxu0 %v1965
        %1979 = vmatprep.subr.bf16.mxu0 0
        %1980 = vmatpush1.bf16.msra.mxu0 %v1964
        %1981 = vmatprep.subr.bf16.mxu0 0
        %1982 = vmatpush1.bf16.msra.mxu0 %v1963
        %1983 = vmatprep.subr.bf16.mxu0 0
        %1984 = vmatpush1.bf16.msra.mxu0 %v1962
        %1985 = vmatprep.subr.bf16.mxu0 0
        %1986 = vmatpush1.bf16.msra.mxu0 %v1961
        %1987 = vmatprep.subr.bf16.mxu0 0
        %1988 = vmatpush1.bf16.msra.mxu0 %v1960
        %1989 = vmatprep.subr.bf16.mxu0 0
        %1990 = vmatpush1.bf16.msra.mxu0 %v1959
        %1991 = vmatprep.subr.bf16.mxu0 0
        %1992 = vmatpush2.bf16.msra.mxu0 0
        %1993 = vmatprep.subr.bf16.mxu0 0
        %1994 = vmatpush2.bf16.msra.mxu0 0
        %1995 = vmatprep.subr.bf16.mxu0 0
        %1996 = vmatpush2.bf16.msra.mxu0 0
        %1997 = vmatprep.subr.bf16.mxu0 0
        %1998 = vmatpush2.bf16.msra.mxu0 0
        %1999 = vmatprep.subr.bf16.mxu0 0
        %2000 = vmatpush2.bf16.msra.mxu0 0
        %2001 = vmatprep.subr.bf16.mxu0 0
        %2002 = vmatpush2.bf16.msra.mxu0 0
        %2003 = vmatprep.subr.bf16.mxu0 0
        %2004 = vmatpush2.bf16.msra.mxu0 0
        %2005 = vmatprep.subr.bf16.mxu0 0
        %2006 = vmatpush2.bf16.msra.mxu0 0
        %2007 = vmatprep.mubr.bf16.mxu0 0
        %2008 = vmatmul.mubr.bf16.gmra.mxu0 %v1922
        %v2009 = vpop.f32.mrf.mxu0
        %v2010 = vadd.f32 0.0, %v2009
        %v2011 = vpop.f32.mrf.mxu0
        %v2012 = vpop.f32.mrf.mxu0
        %v2013 = vadd.f32 0.0, %v2012
        %v2014 = vpop.f32.mrf.mxu0
        %2015 = vmatprep.mubr.bf16.mxu0 0
        %2016 = vmatmul.mubr.bf16.gmra.mxu0 %v1924
        %v2017 = vpop.f32.mrf.mxu0
        %v2018 = vadd.f32 0.0, %v2017
        %v2019 = vpop.f32.mrf.mxu0
        %v2020 = vpop.f32.mrf.mxu0
        %v2021 = vadd.f32 0.0, %v2020
        %v2022 = vpop.f32.mrf.mxu0
        %2023 = vdwg.mxu0
        %v2024 = vadd.f32 %v1880, %v2010
        %v2025 = vadd.f32 %v1883, %v2013
        %v2026 = vadd.f32 %v1888, %v2018
        %v2027 = vadd.f32 %v1891, %v2021
        %v2028 = vld [vmem:[%s247 + $0x320] sm:$0xe]
        %v2029 = vld [vmem:[%s247 + $0x324] sm:$0xf]
        %v2030 = vld [vmem:[%s247 + $0x328] sm:$0xf]
        %v2031 = vld [vmem:[%s247 + $0x32c] sm:$0xf]
        %v2032 = vld [vmem:[%s247 + $0x330] sm:$0x3]
        %s2033 = scalar_lea.vmem %s1, 768
        %v2034 = vld [vmem:[%s2033] sm:$0xf]
        %v2035 = vld [vmem:[%s2033 + $0x4] sm:$0xf]
        %v2036 = vld [vmem:[%s2033 + $0x8] sm:$0xf]
        %v2037 = vld [vmem:[%s2033 + $0xc] sm:$0xf]
        %v2038 = vld [vmem:[%s2033 + $0x10] sm:$0xf]
        %v2039 = vld [vmem:[%s2033 + $0x14] sm:$0xf]
        %v2040 = vld [vmem:[%s2033 + $0x18] sm:$0xf]
        %v2041 = vld [vmem:[%s2033 + $0x1c] sm:$0xf]
        %v2042 = vld [vmem:[%s2033 + $0x20] sm:$0xf]
        %v2043 = vld [vmem:[%s2033 + $0x24] sm:$0xf]
        %v2044 = vld [vmem:[%s2033 + $0x28] sm:$0xf]
        %v2045 = vld [vmem:[%s2033 + $0x2c] sm:$0xf]
        %v2046 = vld [vmem:[%s2033 + $0x30] sm:$0xf]
        %v2047 = vld [vmem:[%s2033 + $0x34] sm:$0xf]
        %v2048 = vld [vmem:[%s2033 + $0x38] sm:$0xf]
        %v2049 = vld [vmem:[%s2033 + $0x3c] sm:$0xf]
        %v2055 = vunpack.c.l.b16 %v2028
        %v2056 = vunpack.c.l.b16 %v2029
        %v2057 = vunpack.c.l.b16 %v2030
        %v2058 = vunpack.c.l.b16 %v2031
        %v2059 = vunpack.c.l.b16 %v2032
        %v2060 = vpack.c.b16 %v2056, %v2055
        %v2061 = vpack.c.b16 %v2058, %v2057
        %v2062 = vpack.c.b16 %v2059, %v2059
        %v2064 = vshrl.u32 %v2060, 16
        %v2066 = vrot.slane %v2064, 1
        %v2067 = vshll.u32 %v2060, 16
        %v2069 = vrot.slane %v2067, 2
        %v2070 = vor.u32 %v2066, %v2069
        %v2072 = vshrl.u32 %v2061, 16
        %v2074 = vrot.slane %v2072, 1
        %v2075 = vshll.u32 %v2061, 16
        %v2077 = vrot.slane %v2075, 2
        %v2078 = vor.u32 %v2074, %v2077
        %v2079 = vsel %vm1768, %v2070, %v2078
        %v2081 = vshrl.u32 %v2062, 16
        %v2083 = vrot.slane %v2081, 1
        %v2084 = vshll.u32 %v2062, 16
        %v2086 = vrot.slane %v2084, 2
        %v2087 = vor.u32 %v2083, %v2086
        %v2088 = vsel %vm1768, %v2078, %v2087
        %v2107 = vunpack.c.l.b16 %v2034
        %v2108 = vunpack.c.l.b16 %v2035
        %v2109 = vunpack.c.l.b16 %v2036
        %v2110 = vunpack.c.l.b16 %v2037
        %v2111 = vunpack.c.l.b16 %v2038
        %v2112 = vunpack.c.l.b16 %v2039
        %v2113 = vunpack.c.l.b16 %v2040
        %v2114 = vunpack.c.l.b16 %v2041
        %v2115 = vunpack.c.l.b16 %v2042
        %v2116 = vunpack.c.l.b16 %v2043
        %v2117 = vunpack.c.l.b16 %v2044
        %v2118 = vunpack.c.l.b16 %v2045
        %v2119 = vunpack.c.l.b16 %v2046
        %v2120 = vunpack.c.l.b16 %v2047
        %v2121 = vunpack.c.l.b16 %v2048
        %v2122 = vunpack.c.l.b16 %v2049
        %v2123 = vpack.c.b16 %v2108, %v2107
        %v2124 = vpack.c.b16 %v2110, %v2109
        %v2125 = vpack.c.b16 %v2112, %v2111
        %v2126 = vpack.c.b16 %v2114, %v2113
        %v2127 = vpack.c.b16 %v2116, %v2115
        %v2128 = vpack.c.b16 %v2118, %v2117
        %v2129 = vpack.c.b16 %v2120, %v2119
        %v2130 = vpack.c.b16 %v2122, %v2121
        %2139 = vmatprep.subr.bf16.mxu0 0
        %2140 = vmatpush1.bf16.msra.mxu0 %v2130
        %2141 = vmatprep.subr.bf16.mxu0 0
        %2142 = vmatpush1.bf16.msra.mxu0 %v2129
        %2143 = vmatprep.subr.bf16.mxu0 0
        %2144 = vmatpush1.bf16.msra.mxu0 %v2128
        %2145 = vmatprep.subr.bf16.mxu0 0
        %2146 = vmatpush1.bf16.msra.mxu0 %v2127
        %2147 = vmatprep.subr.bf16.mxu0 0
        %2148 = vmatpush1.bf16.msra.mxu0 %v2126
        %2149 = vmatprep.subr.bf16.mxu0 0
        %2150 = vmatpush1.bf16.msra.mxu0 %v2125
        %2151 = vmatprep.subr.bf16.mxu0 0
        %2152 = vmatpush1.bf16.msra.mxu0 %v2124
        %2153 = vmatprep.subr.bf16.mxu0 0
        %2154 = vmatpush1.bf16.msra.mxu0 %v2123
        %2155 = vmatprep.subr.bf16.mxu0 0
        %2156 = vmatpush2.bf16.msra.mxu0 0
        %2157 = vmatprep.subr.bf16.mxu0 0
        %2158 = vmatpush2.bf16.msra.mxu0 0
        %2159 = vmatprep.subr.bf16.mxu0 0
        %2160 = vmatpush2.bf16.msra.mxu0 0
        %2161 = vmatprep.subr.bf16.mxu0 0
        %2162 = vmatpush2.bf16.msra.mxu0 0
        %2163 = vmatprep.subr.bf16.mxu0 0
        %2164 = vmatpush2.bf16.msra.mxu0 0
        %2165 = vmatprep.subr.bf16.mxu0 0
        %2166 = vmatpush2.bf16.msra.mxu0 0
        %2167 = vmatprep.subr.bf16.mxu0 0
        %2168 = vmatpush2.bf16.msra.mxu0 0
        %2169 = vmatprep.subr.bf16.mxu0 0
        %2170 = vmatpush2.bf16.msra.mxu0 0
        %2171 = vmatprep.mubr.bf16.mxu0 0
        %2172 = vmatmul.mubr.bf16.gmra.mxu0 %v2079
        %v2173 = vpop.f32.mrf.mxu0
        %v2174 = vadd.f32 0.0, %v2173
        %v2175 = vpop.f32.mrf.mxu0
        %v2176 = vpop.f32.mrf.mxu0
        %v2177 = vadd.f32 0.0, %v2176
        %v2178 = vpop.f32.mrf.mxu0
        %2179 = vmatprep.mubr.bf16.mxu0 0
        %2180 = vmatmul.mubr.bf16.gmra.mxu0 %v2088
        %v2181 = vpop.f32.mrf.mxu0
        %v2182 = vadd.f32 0.0, %v2181
        %v2183 = vpop.f32.mrf.mxu0
        %v2184 = vpop.f32.mrf.mxu0
        %v2185 = vadd.f32 0.0, %v2184
        %v2186 = vpop.f32.mrf.mxu0
        %2187 = vdwg.mxu0
        %v2188 = vadd.f32 %v2024, %v2174
        %v2189 = vadd.f32 %v2025, %v2177
        %v2190 = vadd.f32 %v2026, %v2182
        %v2191 = vadd.f32 %v2027, %v2185
        %v2192 = vld [vmem:[%s247 + $0x3e0] sm:$0xc]
        %v2193 = vld [vmem:[%s247 + $0x3e4] sm:$0xf]
        %v2194 = vld [vmem:[%s247 + $0x3e8] sm:$0xf]
        %v2195 = vld [vmem:[%s247 + $0x3ec] sm:$0xf]
        %v2196 = vld [vmem:[%s247 + $0x3f0] sm:$0x3]
        %s2197 = scalar_lea.vmem %s1, 832
        %v2198 = vld [vmem:[%s2197] sm:$0xf]
        %v2199 = vld [vmem:[%s2197 + $0x4] sm:$0xf]
        %v2200 = vld [vmem:[%s2197 + $0x8] sm:$0xf]
        %v2201 = vld [vmem:[%s2197 + $0xc] sm:$0xf]
        %v2202 = vld [vmem:[%s2197 + $0x10] sm:$0xf]
        %v2203 = vld [vmem:[%s2197 + $0x14] sm:$0xf]
        %v2204 = vld [vmem:[%s2197 + $0x18] sm:$0xf]
        %v2205 = vld [vmem:[%s2197 + $0x1c] sm:$0xf]
        %v2206 = vld [vmem:[%s2197 + $0x20] sm:$0xf]
        %v2207 = vld [vmem:[%s2197 + $0x24] sm:$0xf]
        %v2208 = vld [vmem:[%s2197 + $0x28] sm:$0xf]
        %v2209 = vld [vmem:[%s2197 + $0x2c] sm:$0xf]
        %v2210 = vld [vmem:[%s2197 + $0x30] sm:$0xf]
        %v2211 = vld [vmem:[%s2197 + $0x34] sm:$0xf]
        %v2212 = vld [vmem:[%s2197 + $0x38] sm:$0xf]
        %v2213 = vld [vmem:[%s2197 + $0x3c] sm:$0xf]
        %v2219 = vunpack.c.l.b16 %v2192
        %v2220 = vunpack.c.l.b16 %v2193
        %v2221 = vunpack.c.l.b16 %v2194
        %v2222 = vunpack.c.l.b16 %v2195
        %v2223 = vunpack.c.l.b16 %v2196
        %v2224 = vpack.c.b16 %v2220, %v2219
        %v2225 = vpack.c.b16 %v2222, %v2221
        %v2226 = vpack.c.b16 %v2223, %v2223
        %v2227 = vrot.slane %v2224, 2
        %v2228 = vrot.slane %v2225, 2
        %v2229 = vsel %vm323, %v2227, %v2228
        %v2230 = vrot.slane %v2226, 2
        %v2231 = vsel %vm323, %v2228, %v2230
        %v2250 = vunpack.c.l.b16 %v2198
        %v2251 = vunpack.c.l.b16 %v2199
        %v2252 = vunpack.c.l.b16 %v2200
        %v2253 = vunpack.c.l.b16 %v2201
        %v2254 = vunpack.c.l.b16 %v2202
        %v2255 = vunpack.c.l.b16 %v2203
        %v2256 = vunpack.c.l.b16 %v2204
        %v2257 = vunpack.c.l.b16 %v2205
        %v2258 = vunpack.c.l.b16 %v2206
        %v2259 = vunpack.c.l.b16 %v2207
        %v2260 = vunpack.c.l.b16 %v2208
        %v2261 = vunpack.c.l.b16 %v2209
        %v2262 = vunpack.c.l.b16 %v2210
        %v2263 = vunpack.c.l.b16 %v2211
        %v2264 = vunpack.c.l.b16 %v2212
        %v2265 = vunpack.c.l.b16 %v2213
        %v2266 = vpack.c.b16 %v2251, %v2250
        %v2267 = vpack.c.b16 %v2253, %v2252
        %v2268 = vpack.c.b16 %v2255, %v2254
        %v2269 = vpack.c.b16 %v2257, %v2256
        %v2270 = vpack.c.b16 %v2259, %v2258
        %v2271 = vpack.c.b16 %v2261, %v2260
        %v2272 = vpack.c.b16 %v2263, %v2262
        %v2273 = vpack.c.b16 %v2265, %v2264
        %2282 = vmatprep.subr.bf16.mxu0 0
        %2283 = vmatpush1.bf16.msra.mxu0 %v2273
        %2284 = vmatprep.subr.bf16.mxu0 0
        %2285 = vmatpush1.bf16.msra.mxu0 %v2272
        %2286 = vmatprep.subr.bf16.mxu0 0
        %2287 = vmatpush1.bf16.msra.mxu0 %v2271
        %2288 = vmatprep.subr.bf16.mxu0 0
        %2289 = vmatpush1.bf16.msra.mxu0 %v2270
        %2290 = vmatprep.subr.bf16.mxu0 0
        %2291 = vmatpush1.bf16.msra.mxu0 %v2269
        %2292 = vmatprep.subr.bf16.mxu0 0
        %2293 = vmatpush1.bf16.msra.mxu0 %v2268
        %2294 = vmatprep.subr.bf16.mxu0 0
        %2295 = vmatpush1.bf16.msra.mxu0 %v2267
        %2296 = vmatprep.subr.bf16.mxu0 0
        %2297 = vmatpush1.bf16.msra.mxu0 %v2266
        %2298 = vmatprep.subr.bf16.mxu0 0
        %2299 = vmatpush2.bf16.msra.mxu0 0
        %2300 = vmatprep.subr.bf16.mxu0 0
        %2301 = vmatpush2.bf16.msra.mxu0 0
        %2302 = vmatprep.subr.bf16.mxu0 0
        %2303 = vmatpush2.bf16.msra.mxu0 0
        %2304 = vmatprep.subr.bf16.mxu0 0
        %2305 = vmatpush2.bf16.msra.mxu0 0
        %2306 = vmatprep.subr.bf16.mxu0 0
        %2307 = vmatpush2.bf16.msra.mxu0 0
        %2308 = vmatprep.subr.bf16.mxu0 0
        %2309 = vmatpush2.bf16.msra.mxu0 0
        %2310 = vmatprep.subr.bf16.mxu0 0
        %2311 = vmatpush2.bf16.msra.mxu0 0
        %2312 = vmatprep.subr.bf16.mxu0 0
        %2313 = vmatpush2.bf16.msra.mxu0 0
        %2314 = vmatprep.mubr.bf16.mxu0 0
        %2315 = vmatmul.mubr.bf16.gmra.mxu0 %v2229
        %v2316 = vpop.f32.mrf.mxu0
        %v2317 = vadd.f32 0.0, %v2316
        %v2318 = vpop.f32.mrf.mxu0
        %v2319 = vpop.f32.mrf.mxu0
        %v2320 = vadd.f32 0.0, %v2319
        %v2321 = vpop.f32.mrf.mxu0
        %2322 = vmatprep.mubr.bf16.mxu0 0
        %2323 = vmatmul.mubr.bf16.gmra.mxu0 %v2231
        %v2324 = vpop.f32.mrf.mxu0
        %v2325 = vadd.f32 0.0, %v2324
        %v2326 = vpop.f32.mrf.mxu0
        %v2327 = vpop.f32.mrf.mxu0
        %v2328 = vadd.f32 0.0, %v2327
        %v2329 = vpop.f32.mrf.mxu0
        %2330 = vdwg.mxu0
        %v2331 = vadd.f32 %v2188, %v2317
        %v2332 = vadd.f32 %v2189, %v2320
        %v2333 = vadd.f32 %v2190, %v2325
        %v2334 = vadd.f32 %v2191, %v2328
        %v2335 = vld [vmem:[%s247 + $0x320] sm:$0x8]
        %v2336 = vld [vmem:[%s247 + $0x330] sm:$0x7]
        %s2337 = scalar_lea.vmem %s1, 896
        %v2338 = vld [vmem:[%s2337] sm:$0xf]
        %v2339 = vld [vmem:[%s2337 + $0x4] sm:$0xf]
        %v2340 = vld [vmem:[%s2337 + $0x8] sm:$0xf]
        %v2341 = vld [vmem:[%s2337 + $0xc] sm:$0xf]
        %v2342 = vld [vmem:[%s2337 + $0x10] sm:$0xf]
        %v2343 = vld [vmem:[%s2337 + $0x14] sm:$0xf]
        %v2344 = vld [vmem:[%s2337 + $0x18] sm:$0xf]
        %v2345 = vld [vmem:[%s2337 + $0x1c] sm:$0xf]
        %v2346 = vld [vmem:[%s2337 + $0x20] sm:$0xf]
        %v2347 = vld [vmem:[%s2337 + $0x24] sm:$0xf]
        %v2348 = vld [vmem:[%s2337 + $0x28] sm:$0xf]
        %v2349 = vld [vmem:[%s2337 + $0x2c] sm:$0xf]
        %v2350 = vld [vmem:[%s2337 + $0x30] sm:$0xf]
        %v2351 = vld [vmem:[%s2337 + $0x34] sm:$0xf]
        %v2352 = vld [vmem:[%s2337 + $0x38] sm:$0xf]
        %v2353 = vld [vmem:[%s2337 + $0x3c] sm:$0xf]
        %v2356 = vunpack.c.l.b16 %v2335
        %v2357 = vunpack.c.l.b16 %v2336
        %v2358 = vpack.c.b16 %v2056, %v2356
        %v2359 = vpack.c.b16 %v2357, %v2357
        %v2360 = vrot.slane %v2358, 3
        %v2361 = vrot.slane %v2061, 3
        %v2362 = vsel %vm1919, %v2360, %v2361
        %v2363 = vrot.slane %v2359, 3
        %v2364 = vsel %vm1919, %v2361, %v2363
        %v2383 = vunpack.c.l.b16 %v2338
        %v2384 = vunpack.c.l.b16 %v2339
        %v2385 = vunpack.c.l.b16 %v2340
        %v2386 = vunpack.c.l.b16 %v2341
        %v2387 = vunpack.c.l.b16 %v2342
        %v2388 = vunpack.c.l.b16 %v2343
        %v2389 = vunpack.c.l.b16 %v2344
        %v2390 = vunpack.c.l.b16 %v2345
        %v2391 = vunpack.c.l.b16 %v2346
        %v2392 = vunpack.c.l.b16 %v2347
        %v2393 = vunpack.c.l.b16 %v2348
        %v2394 = vunpack.c.l.b16 %v2349
        %v2395 = vunpack.c.l.b16 %v2350
        %v2396 = vunpack.c.l.b16 %v2351
        %v2397 = vunpack.c.l.b16 %v2352
        %v2398 = vunpack.c.l.b16 %v2353
        %v2399 = vpack.c.b16 %v2384, %v2383
        %v2400 = vpack.c.b16 %v2386, %v2385
        %v2401 = vpack.c.b16 %v2388, %v2387
        %v2402 = vpack.c.b16 %v2390, %v2389
        %v2403 = vpack.c.b16 %v2392, %v2391
        %v2404 = vpack.c.b16 %v2394, %v2393
        %v2405 = vpack.c.b16 %v2396, %v2395
        %v2406 = vpack.c.b16 %v2398, %v2397
        %2415 = vmatprep.subr.bf16.mxu0 0
        %2416 = vmatpush1.bf16.msra.mxu0 %v2406
        %2417 = vmatprep.subr.bf16.mxu0 0
        %2418 = vmatpush1.bf16.msra.mxu0 %v2405
        %2419 = vmatprep.subr.bf16.mxu0 0
        %2420 = vmatpush1.bf16.msra.mxu0 %v2404
        %2421 = vmatprep.subr.bf16.mxu0 0
        %2422 = vmatpush1.bf16.msra.mxu0 %v2403
        %2423 = vmatprep.subr.bf16.mxu0 0
        %2424 = vmatpush1.bf16.msra.mxu0 %v2402
        %2425 = vmatprep.subr.bf16.mxu0 0
        %2426 = vmatpush1.bf16.msra.mxu0 %v2401
        %2427 = vmatprep.subr.bf16.mxu0 0
        %2428 = vmatpush1.bf16.msra.mxu0 %v2400
        %2429 = vmatprep.subr.bf16.mxu0 0
        %2430 = vmatpush1.bf16.msra.mxu0 %v2399
        %2431 = vmatprep.subr.bf16.mxu0 0
        %2432 = vmatpush2.bf16.msra.mxu0 0
        %2433 = vmatprep.subr.bf16.mxu0 0
        %2434 = vmatpush2.bf16.msra.mxu0 0
        %2435 = vmatprep.subr.bf16.mxu0 0
        %2436 = vmatpush2.bf16.msra.mxu0 0
        %2437 = vmatprep.subr.bf16.mxu0 0
        %2438 = vmatpush2.bf16.msra.mxu0 0
        %2439 = vmatprep.subr.bf16.mxu0 0
        %2440 = vmatpush2.bf16.msra.mxu0 0
        %2441 = vmatprep.subr.bf16.mxu0 0
        %2442 = vmatpush2.bf16.msra.mxu0 0
        %2443 = vmatprep.subr.bf16.mxu0 0
        %2444 = vmatpush2.bf16.msra.mxu0 0
        %2445 = vmatprep.subr.bf16.mxu0 0
        %2446 = vmatpush2.bf16.msra.mxu0 0
        %2447 = vmatprep.mubr.bf16.mxu0 0
        %2448 = vmatmul.mubr.bf16.gmra.mxu0 %v2362
        %v2449 = vpop.f32.mrf.mxu0
        %v2450 = vadd.f32 0.0, %v2449
        %v2451 = vpop.f32.mrf.mxu0
        %v2452 = vpop.f32.mrf.mxu0
        %v2453 = vadd.f32 0.0, %v2452
        %v2454 = vpop.f32.mrf.mxu0
        %2455 = vmatprep.mubr.bf16.mxu0 0
        %2456 = vmatmul.mubr.bf16.gmra.mxu0 %v2364
        %v2457 = vpop.f32.mrf.mxu0
        %v2458 = vadd.f32 0.0, %v2457
        %v2459 = vpop.f32.mrf.mxu0
        %v2460 = vpop.f32.mrf.mxu0
        %v2461 = vadd.f32 0.0, %v2460
        %v2462 = vpop.f32.mrf.mxu0
        %2463 = vdwg.mxu0
        %v2464 = vadd.f32 %v2331, %v2450
        %v2465 = vadd.f32 %v2332, %v2453
        %v2466 = vadd.f32 %v2333, %v2458
        %v2467 = vadd.f32 %v2334, %v2461
        %v2468 = vld [vmem:[%s247 + $0x30] sm:$0xe]
        %v2469 = vld [vmem:[%s247 + $0x34] sm:$0xf]
        %v2470 = vld [vmem:[%s247 + $0x38] sm:$0xf]
        %v2471 = vld [vmem:[%s247 + $0x3c] sm:$0xf]
        %v2472 = vld [vmem:[%s247 + $0x40] sm:$0x3]
        %s2473 = scalar_lea.vmem %s1, 960
        %v2474 = vld [vmem:[%s2473] sm:$0xf]
        %v2475 = vld [vmem:[%s2473 + $0x4] sm:$0xf]
        %v2476 = vld [vmem:[%s2473 + $0x8] sm:$0xf]
        %v2477 = vld [vmem:[%s2473 + $0xc] sm:$0xf]
        %v2478 = vld [vmem:[%s2473 + $0x10] sm:$0xf]
        %v2479 = vld [vmem:[%s2473 + $0x14] sm:$0xf]
        %v2480 = vld [vmem:[%s2473 + $0x18] sm:$0xf]
        %v2481 = vld [vmem:[%s2473 + $0x1c] sm:$0xf]
        %v2482 = vld [vmem:[%s2473 + $0x20] sm:$0xf]
        %v2483 = vld [vmem:[%s2473 + $0x24] sm:$0xf]
        %v2484 = vld [vmem:[%s2473 + $0x28] sm:$0xf]
        %v2485 = vld [vmem:[%s2473 + $0x2c] sm:$0xf]
        %v2486 = vld [vmem:[%s2473 + $0x30] sm:$0xf]
        %v2487 = vld [vmem:[%s2473 + $0x34] sm:$0xf]
        %v2488 = vld [vmem:[%s2473 + $0x38] sm:$0xf]
        %v2489 = vld [vmem:[%s2473 + $0x3c] sm:$0xf]
        %v2495 = vunpack.c.l.b16 %v2468
        %v2496 = vunpack.c.l.b16 %v2469
        %v2497 = vunpack.c.l.b16 %v2470
        %v2498 = vunpack.c.l.b16 %v2471
        %v2499 = vunpack.c.l.b16 %v2472
        %v2500 = vpack.c.b16 %v2496, %v2495
        %v2501 = vpack.c.b16 %v2498, %v2497
        %v2502 = vpack.c.b16 %v2499, %v2499
        %v2504 = vshrl.u32 %v2500, 16
        %v2506 = vrot.slane %v2504, 1
        %v2507 = vshll.u32 %v2500, 16
        %v2509 = vrot.slane %v2507, 2
        %v2510 = vor.u32 %v2506, %v2509
        %v2512 = vshrl.u32 %v2501, 16
        %v2514 = vrot.slane %v2512, 1
        %v2515 = vshll.u32 %v2501, 16
        %v2517 = vrot.slane %v2515, 2
        %v2518 = vor.u32 %v2514, %v2517
        %v2519 = vsel %vm1768, %v2510, %v2518
        %v2521 = vshrl.u32 %v2502, 16
        %v2523 = vrot.slane %v2521, 1
        %v2524 = vshll.u32 %v2502, 16
        %v2526 = vrot.slane %v2524, 2
        %v2527 = vor.u32 %v2523, %v2526
        %v2528 = vsel %vm1768, %v2518, %v2527
        %v2547 = vunpack.c.l.b16 %v2474
        %v2548 = vunpack.c.l.b16 %v2475
        %v2549 = vunpack.c.l.b16 %v2476
        %v2550 = vunpack.c.l.b16 %v2477
        %v2551 = vunpack.c.l.b16 %v2478
        %v2552 = vunpack.c.l.b16 %v2479
        %v2553 = vunpack.c.l.b16 %v2480
        %v2554 = vunpack.c.l.b16 %v2481
        %v2555 = vunpack.c.l.b16 %v2482
        %v2556 = vunpack.c.l.b16 %v2483
        %v2557 = vunpack.c.l.b16 %v2484
        %v2558 = vunpack.c.l.b16 %v2485
        %v2559 = vunpack.c.l.b16 %v2486
        %v2560 = vunpack.c.l.b16 %v2487
        %v2561 = vunpack.c.l.b16 %v2488
        %v2562 = vunpack.c.l.b16 %v2489
        %v2563 = vpack.c.b16 %v2548, %v2547
        %v2564 = vpack.c.b16 %v2550, %v2549
        %v2565 = vpack.c.b16 %v2552, %v2551
        %v2566 = vpack.c.b16 %v2554, %v2553
        %v2567 = vpack.c.b16 %v2556, %v2555
        %v2568 = vpack.c.b16 %v2558, %v2557
        %v2569 = vpack.c.b16 %v2560, %v2559
        %v2570 = vpack.c.b16 %v2562, %v2561
        %2579 = vmatprep.subr.bf16.mxu0 0
        %2580 = vmatpush1.bf16.msra.mxu0 %v2570
        %2581 = vmatprep.subr.bf16.mxu0 0
        %2582 = vmatpush1.bf16.msra.mxu0 %v2569
        %2583 = vmatprep.subr.bf16.mxu0 0
        %2584 = vmatpush1.bf16.msra.mxu0 %v2568
        %2585 = vmatprep.subr.bf16.mxu0 0
        %2586 = vmatpush1.bf16.msra.mxu0 %v2567
        %2587 = vmatprep.subr.bf16.mxu0 0
        %2588 = vmatpush1.bf16.msra.mxu0 %v2566
        %2589 = vmatprep.subr.bf16.mxu0 0
        %2590 = vmatpush1.bf16.msra.mxu0 %v2565
        %2591 = vmatprep.subr.bf16.mxu0 0
        %2592 = vmatpush1.bf16.msra.mxu0 %v2564
        %2593 = vmatprep.subr.bf16.mxu0 0
        %2594 = vmatpush1.bf16.msra.mxu0 %v2563
        %2595 = vmatprep.subr.bf16.mxu0 0
        %2596 = vmatpush2.bf16.msra.mxu0 0
        %2597 = vmatprep.subr.bf16.mxu0 0
        %2598 = vmatpush2.bf16.msra.mxu0 0
        %2599 = vmatprep.subr.bf16.mxu0 0
        %2600 = vmatpush2.bf16.msra.mxu0 0
        %2601 = vmatprep.subr.bf16.mxu0 0
        %2602 = vmatpush2.bf16.msra.mxu0 0
        %2603 = vmatprep.subr.bf16.mxu0 0
        %2604 = vmatpush2.bf16.msra.mxu0 0
        %2605 = vmatprep.subr.bf16.mxu0 0
        %2606 = vmatpush2.bf16.msra.mxu0 0
        %2607 = vmatprep.subr.bf16.mxu0 0
        %2608 = vmatpush2.bf16.msra.mxu0 0
        %2609 = vmatprep.subr.bf16.mxu0 0
        %2610 = vmatpush2.bf16.msra.mxu0 0
        %2611 = vmatprep.mubr.bf16.mxu0 0
        %2612 = vmatmul.mubr.bf16.gmra.mxu0 %v2519
        %v2613 = vpop.f32.mrf.mxu0
        %v2614 = vadd.f32 0.0, %v2613
        %v2615 = vpop.f32.mrf.mxu0
        %v2616 = vpop.f32.mrf.mxu0
        %v2617 = vadd.f32 0.0, %v2616
        %v2618 = vpop.f32.mrf.mxu0
        %2619 = vmatprep.mubr.bf16.mxu0 0
        %2620 = vmatmul.mubr.bf16.gmra.mxu0 %v2528
        %v2621 = vpop.f32.mrf.mxu0
        %v2622 = vadd.f32 0.0, %v2621
        %v2623 = vpop.f32.mrf.mxu0
        %v2624 = vpop.f32.mrf.mxu0
        %v2625 = vadd.f32 0.0, %v2624
        %v2626 = vpop.f32.mrf.mxu0
        %2627 = vdwg.mxu0
        %v2628 = vadd.f32 %v2464, %v2614
        %v2629 = vadd.f32 %v2465, %v2617
        %v2630 = vadd.f32 %v2466, %v2622
        %v2631 = vadd.f32 %v2467, %v2625
        %v2632 = vld [vmem:[%s247 + $0xf0] sm:$0xc]
        %v2633 = vld [vmem:[%s247 + $0xf4] sm:$0xf]
        %v2634 = vld [vmem:[%s247 + $0xf8] sm:$0xf]
        %v2635 = vld [vmem:[%s247 + $0xfc] sm:$0xf]
        %v2636 = vld [vmem:[%s247 + $0x100] sm:$0x3]
        %s2637 = scalar_lea.vmem %s1, 1024
        %v2638 = vld [vmem:[%s2637] sm:$0xf]
        %v2639 = vld [vmem:[%s2637 + $0x4] sm:$0xf]
        %v2640 = vld [vmem:[%s2637 + $0x8] sm:$0xf]
        %v2641 = vld [vmem:[%s2637 + $0xc] sm:$0xf]
        %v2642 = vld [vmem:[%s2637 + $0x10] sm:$0xf]
        %v2643 = vld [vmem:[%s2637 + $0x14] sm:$0xf]
        %v2644 = vld [vmem:[%s2637 + $0x18] sm:$0xf]
        %v2645 = vld [vmem:[%s2637 + $0x1c] sm:$0xf]
        %v2646 = vld [vmem:[%s2637 + $0x20] sm:$0xf]
        %v2647 = vld [vmem:[%s2637 + $0x24] sm:$0xf]
        %v2648 = vld [vmem:[%s2637 + $0x28] sm:$0xf]
        %v2649 = vld [vmem:[%s2637 + $0x2c] sm:$0xf]
        %v2650 = vld [vmem:[%s2637 + $0x30] sm:$0xf]
        %v2651 = vld [vmem:[%s2637 + $0x34] sm:$0xf]
        %v2652 = vld [vmem:[%s2637 + $0x38] sm:$0xf]
        %v2653 = vld [vmem:[%s2637 + $0x3c] sm:$0xf]
        %v2659 = vunpack.c.l.b16 %v2632
        %v2660 = vunpack.c.l.b16 %v2633
        %v2661 = vunpack.c.l.b16 %v2634
        %v2662 = vunpack.c.l.b16 %v2635
        %v2663 = vunpack.c.l.b16 %v2636
        %v2664 = vpack.c.b16 %v2660, %v2659
        %v2665 = vpack.c.b16 %v2662, %v2661
        %v2666 = vpack.c.b16 %v2663, %v2663
        %v2667 = vrot.slane %v2664, 2
        %v2668 = vrot.slane %v2665, 2
        %v2669 = vsel %vm323, %v2667, %v2668
        %v2670 = vrot.slane %v2666, 2
        %v2671 = vsel %vm323, %v2668, %v2670
        %v2690 = vunpack.c.l.b16 %v2638
        %v2691 = vunpack.c.l.b16 %v2639
        %v2692 = vunpack.c.l.b16 %v2640
        %v2693 = vunpack.c.l.b16 %v2641
        %v2694 = vunpack.c.l.b16 %v2642
        %v2695 = vunpack.c.l.b16 %v2643
        %v2696 = vunpack.c.l.b16 %v2644
        %v2697 = vunpack.c.l.b16 %v2645
        %v2698 = vunpack.c.l.b16 %v2646
        %v2699 = vunpack.c.l.b16 %v2647
        %v2700 = vunpack.c.l.b16 %v2648
        %v2701 = vunpack.c.l.b16 %v2649
        %v2702 = vunpack.c.l.b16 %v2650
        %v2703 = vunpack.c.l.b16 %v2651
        %v2704 = vunpack.c.l.b16 %v2652
        %v2705 = vunpack.c.l.b16 %v2653
        %v2706 = vpack.c.b16 %v2691, %v2690
        %v2707 = vpack.c.b16 %v2693, %v2692
        %v2708 = vpack.c.b16 %v2695, %v2694
        %v2709 = vpack.c.b16 %v2697, %v2696
        %v2710 = vpack.c.b16 %v2699, %v2698
        %v2711 = vpack.c.b16 %v2701, %v2700
        %v2712 = vpack.c.b16 %v2703, %v2702
        %v2713 = vpack.c.b16 %v2705, %v2704
        %2722 = vmatprep.subr.bf16.mxu0 0
        %2723 = vmatpush1.bf16.msra.mxu0 %v2713
        %2724 = vmatprep.subr.bf16.mxu0 0
        %2725 = vmatpush1.bf16.msra.mxu0 %v2712
        %2726 = vmatprep.subr.bf16.mxu0 0
        %2727 = vmatpush1.bf16.msra.mxu0 %v2711
        %2728 = vmatprep.subr.bf16.mxu0 0
        %2729 = vmatpush1.bf16.msra.mxu0 %v2710
        %2730 = vmatprep.subr.bf16.mxu0 0
        %2731 = vmatpush1.bf16.msra.mxu0 %v2709
        %2732 = vmatprep.subr.bf16.mxu0 0
        %2733 = vmatpush1.bf16.msra.mxu0 %v2708
        %2734 = vmatprep.subr.bf16.mxu0 0
        %2735 = vmatpush1.bf16.msra.mxu0 %v2707
        %2736 = vmatprep.subr.bf16.mxu0 0
        %2737 = vmatpush1.bf16.msra.mxu0 %v2706
        %2738 = vmatprep.subr.bf16.mxu0 0
        %2739 = vmatpush2.bf16.msra.mxu0 0
        %2740 = vmatprep.subr.bf16.mxu0 0
        %2741 = vmatpush2.bf16.msra.mxu0 0
        %2742 = vmatprep.subr.bf16.mxu0 0
        %2743 = vmatpush2.bf16.msra.mxu0 0
        %2744 = vmatprep.subr.bf16.mxu0 0
        %2745 = vmatpush2.bf16.msra.mxu0 0
        %2746 = vmatprep.subr.bf16.mxu0 0
        %2747 = vmatpush2.bf16.msra.mxu0 0
        %2748 = vmatprep.subr.bf16.mxu0 0
        %2749 = vmatpush2.bf16.msra.mxu0 0
        %2750 = vmatprep.subr.bf16.mxu0 0
        %2751 = vmatpush2.bf16.msra.mxu0 0
        %2752 = vmatprep.subr.bf16.mxu0 0
        %2753 = vmatpush2.bf16.msra.mxu0 0
        %2754 = vmatprep.mubr.bf16.mxu0 0
        %2755 = vmatmul.mubr.bf16.gmra.mxu0 %v2669
        %v2756 = vpop.f32.mrf.mxu0
        %v2757 = vadd.f32 0.0, %v2756
        %v2758 = vpop.f32.mrf.mxu0
        %v2759 = vpop.f32.mrf.mxu0
        %v2760 = vadd.f32 0.0, %v2759
        %v2761 = vpop.f32.mrf.mxu0
        %2762 = vmatprep.mubr.bf16.mxu0 0
        %2763 = vmatmul.mubr.bf16.gmra.mxu0 %v2671
        %v2764 = vpop.f32.mrf.mxu0
        %v2765 = vadd.f32 0.0, %v2764
        %v2766 = vpop.f32.mrf.mxu0
        %v2767 = vpop.f32.mrf.mxu0
        %v2768 = vadd.f32 0.0, %v2767
        %v2769 = vpop.f32.mrf.mxu0
        %2770 = vdwg.mxu0
        %v2771 = vadd.f32 %v2628, %v2757
        %v2772 = vadd.f32 %v2629, %v2760
        %v2773 = vadd.f32 %v2630, %v2765
        %v2774 = vadd.f32 %v2631, %v2768
        %v2775 = vld [vmem:[%s247 + $0x30] sm:$0x8]
        %v2776 = vld [vmem:[%s247 + $0x40] sm:$0x7]
        %s2777 = scalar_lea.vmem %s1, 1088
        %v2778 = vld [vmem:[%s2777] sm:$0xf]
        %v2779 = vld [vmem:[%s2777 + $0x4] sm:$0xf]
        %v2780 = vld [vmem:[%s2777 + $0x8] sm:$0xf]
        %v2781 = vld [vmem:[%s2777 + $0xc] sm:$0xf]
        %v2782 = vld [vmem:[%s2777 + $0x10] sm:$0xf]
        %v2783 = vld [vmem:[%s2777 + $0x14] sm:$0xf]
        %v2784 = vld [vmem:[%s2777 + $0x18] sm:$0xf]
        %v2785 = vld [vmem:[%s2777 + $0x1c] sm:$0xf]
        %v2786 = vld [vmem:[%s2777 + $0x20] sm:$0xf]
        %v2787 = vld [vmem:[%s2777 + $0x24] sm:$0xf]
        %v2788 = vld [vmem:[%s2777 + $0x28] sm:$0xf]
        %v2789 = vld [vmem:[%s2777 + $0x2c] sm:$0xf]
        %v2790 = vld [vmem:[%s2777 + $0x30] sm:$0xf]
        %v2791 = vld [vmem:[%s2777 + $0x34] sm:$0xf]
        %v2792 = vld [vmem:[%s2777 + $0x38] sm:$0xf]
        %v2793 = vld [vmem:[%s2777 + $0x3c] sm:$0xf]
        %v2796 = vunpack.c.l.b16 %v2775
        %v2797 = vunpack.c.l.b16 %v2776
        %v2798 = vpack.c.b16 %v2496, %v2796
        %v2799 = vpack.c.b16 %v2797, %v2797
        %v2800 = vrot.slane %v2798, 3
        %v2801 = vrot.slane %v2501, 3
        %v2802 = vsel %vm1919, %v2800, %v2801
        %v2803 = vrot.slane %v2799, 3
        %v2804 = vsel %vm1919, %v2801, %v2803
        %v2823 = vunpack.c.l.b16 %v2778
        %v2824 = vunpack.c.l.b16 %v2779
        %v2825 = vunpack.c.l.b16 %v2780
        %v2826 = vunpack.c.l.b16 %v2781
        %v2827 = vunpack.c.l.b16 %v2782
        %v2828 = vunpack.c.l.b16 %v2783
        %v2829 = vunpack.c.l.b16 %v2784
        %v2830 = vunpack.c.l.b16 %v2785
        %v2831 = vunpack.c.l.b16 %v2786
        %v2832 = vunpack.c.l.b16 %v2787
        %v2833 = vunpack.c.l.b16 %v2788
        %v2834 = vunpack.c.l.b16 %v2789
        %v2835 = vunpack.c.l.b16 %v2790
        %v2836 = vunpack.c.l.b16 %v2791
        %v2837 = vunpack.c.l.b16 %v2792
        %v2838 = vunpack.c.l.b16 %v2793
        %v2839 = vpack.c.b16 %v2824, %v2823
        %v2840 = vpack.c.b16 %v2826, %v2825
        %v2841 = vpack.c.b16 %v2828, %v2827
        %v2842 = vpack.c.b16 %v2830, %v2829
        %v2843 = vpack.c.b16 %v2832, %v2831
        %v2844 = vpack.c.b16 %v2834, %v2833
        %v2845 = vpack.c.b16 %v2836, %v2835
        %v2846 = vpack.c.b16 %v2838, %v2837
        %2855 = vmatprep.subr.bf16.mxu0 0
        %2856 = vmatpush1.bf16.msra.mxu0 %v2846
        %2857 = vmatprep.subr.bf16.mxu0 0
        %2858 = vmatpush1.bf16.msra.mxu0 %v2845
        %2859 = vmatprep.subr.bf16.mxu0 0
        %2860 = vmatpush1.bf16.msra.mxu0 %v2844
        %2861 = vmatprep.subr.bf16.mxu0 0
        %2862 = vmatpush1.bf16.msra.mxu0 %v2843
        %2863 = vmatprep.subr.bf16.mxu0 0
        %2864 = vmatpush1.bf16.msra.mxu0 %v2842
        %2865 = vmatprep.subr.bf16.mxu0 0
        %2866 = vmatpush1.bf16.msra.mxu0 %v2841
        %2867 = vmatprep.subr.bf16.mxu0 0
        %2868 = vmatpush1.bf16.msra.mxu0 %v2840
        %2869 = vmatprep.subr.bf16.mxu0 0
        %2870 = vmatpush1.bf16.msra.mxu0 %v2839
        %2871 = vmatprep.subr.bf16.mxu0 0
        %2872 = vmatpush2.bf16.msra.mxu0 0
        %2873 = vmatprep.subr.bf16.mxu0 0
        %2874 = vmatpush2.bf16.msra.mxu0 0
        %2875 = vmatprep.subr.bf16.mxu0 0
        %2876 = vmatpush2.bf16.msra.mxu0 0
        %2877 = vmatprep.subr.bf16.mxu0 0
        %2878 = vmatpush2.bf16.msra.mxu0 0
        %2879 = vmatprep.subr.bf16.mxu0 0
        %2880 = vmatpush2.bf16.msra.mxu0 0
        %2881 = vmatprep.subr.bf16.mxu0 0
        %2882 = vmatpush2.bf16.msra.mxu0 0
        %2883 = vmatprep.subr.bf16.mxu0 0
        %2884 = vmatpush2.bf16.msra.mxu0 0
        %2885 = vmatprep.subr.bf16.mxu0 0
        %2886 = vmatpush2.bf16.msra.mxu0 0
        %2887 = vmatprep.mubr.bf16.mxu0 0
        %2888 = vmatmul.mubr.bf16.gmra.mxu0 %v2802
        %v2889 = vpop.f32.mrf.mxu0
        %v2890 = vadd.f32 0.0, %v2889
        %v2891 = vpop.f32.mrf.mxu0
        %v2892 = vpop.f32.mrf.mxu0
        %v2893 = vadd.f32 0.0, %v2892
        %v2894 = vpop.f32.mrf.mxu0
        %2895 = vmatprep.mubr.bf16.mxu0 0
        %2896 = vmatmul.mubr.bf16.gmra.mxu0 %v2804
        %v2897 = vpop.f32.mrf.mxu0
        %v2898 = vadd.f32 0.0, %v2897
        %v2899 = vpop.f32.mrf.mxu0
        %v2900 = vpop.f32.mrf.mxu0
        %v2901 = vadd.f32 0.0, %v2900
        %v2902 = vpop.f32.mrf.mxu0
        %2903 = vdwg.mxu0
        %v2904 = vadd.f32 %v2771, %v2890
        %v2905 = vadd.f32 %v2772, %v2893
        %v2906 = vadd.f32 %v2773, %v2898
        %v2907 = vadd.f32 %v2774, %v2901
        %v2908 = vpack.c.bf16 %v2905, %v2904
        %v2909 = vpack.c.bf16 %v2907, %v2906
        %v2912 = vunpack.c.l.b16 %v2908
        %v2913 = vunpack.c.h.b16 %v2908
        %v2914 = vunpack.c.l.b16 %v2909
        %v2915 = vunpack.c.h.b16 %v2909
        %v2916 = vpack.c.b16 %v2912, %v2912
        %v2917 = vpack.c.b16 %v2913, %v2913
        %v2918 = vpack.c.b16 %v2914, %v2914
        %v2919 = vpack.c.b16 %v2915, %v2915
        %s2924 = scalar_lea.vmem %s228, 16 [#allocation2]
        %2925 = vst [vmem:[%s2924] sm:$0xf] %v2916
        %2926 = vst [vmem:[%s2924 + $0x4] sm:$0xf] %v2917
        %2927 = vst [vmem:[%s2924 + $0x8] sm:$0xf] %v2918
        %2928 = vst [vmem:[%s2924 + $0xc] sm:$0xf] %v2919
        %v2929 = vmul.f32 %v2904, %v263
        %v2930 = vmul.f32 %v2905, %v264
        %v2931 = vmul.f32 %v2906, %v265
        %v2932 = vmul.f32 %v2907, %v266
        %v2933 = vadd.f32 %v2929, %v2930
        %v2934 = vadd.f32 %v2933, %v2931
        %v2935 = vadd.f32 %v2934, %v2932
        %v2936 = vrot.slane %v2935, 4
        %v2937 = vadd.f32 %v2935, %v2936
        %v2938 = vrot.slane %v2937, 2
        %v2939 = vadd.f32 %v2937, %v2938
        %v2940 = vrot.slane %v2939, 1
        %v2941 = vadd.f32 %v2939, %v2940
        %2942 = vst [vmem:[%s261 + $0x1] sm:$0x1] %v2941
        %v2943 = vmul.f32 %v2929, %v2904
        %v2944 = vmul.f32 %v2930, %v2905
        %v2945 = vmul.f32 %v2931, %v2906
        %v2946 = vmul.f32 %v2932, %v2907
        %v2947 = vadd.f32 %v2943, %v2944
        %v2948 = vadd.f32 %v2947, %v2945
        %v2949 = vadd.f32 %v2948, %v2946
        %v2950 = vrot.slane %v2949, 4
        %v2951 = vadd.f32 %v2949, %v2950
        %v2952 = vrot.slane %v2951, 2
        %v2953 = vadd.f32 %v2951, %v2952
        %v2954 = vrot.slane %v2953, 1
        %v2955 = vadd.f32 %v2953, %v2954
        %2956 = vst [vmem:[%s261 + $0x5] sm:$0x1] %v2955
        %v2957 = vld [vmem:[%s247 + $0x3c8] sm:$0xf]
        %v2958 = vld [vmem:[%s247 + $0x3cc] sm:$0xf]
        %v2959 = vld [vmem:[%s247 + $0x3d0] sm:$0xf]
        %v2960 = vld [vmem:[%s247 + $0x3d4] sm:$0xf]
        %v2961 = vld [vmem:[%s247 + $0x3d8] sm:$0x1]
        %s2962 = scalar_lea.vmem %s1, 1152
        %v2963 = vld [vmem:[%s2962] sm:$0xf]
        %v2964 = vld [vmem:[%s2962 + $0x4] sm:$0xf]
        %v2965 = vld [vmem:[%s2962 + $0x8] sm:$0xf]
        %v2966 = vld [vmem:[%s2962 + $0xc] sm:$0xf]
        %v2967 = vld [vmem:[%s2962 + $0x10] sm:$0xf]
        %v2968 = vld [vmem:[%s2962 + $0x14] sm:$0xf]
        %v2969 = vld [vmem:[%s2962 + $0x18] sm:$0xf]
        %v2970 = vld [vmem:[%s2962 + $0x1c] sm:$0xf]
        %v2971 = vld [vmem:[%s2962 + $0x20] sm:$0xf]
        %v2972 = vld [vmem:[%s2962 + $0x24] sm:$0xf]
        %v2973 = vld [vmem:[%s2962 + $0x28] sm:$0xf]
        %v2974 = vld [vmem:[%s2962 + $0x2c] sm:$0xf]
        %v2975 = vld [vmem:[%s2962 + $0x30] sm:$0xf]
        %v2976 = vld [vmem:[%s2962 + $0x34] sm:$0xf]
        %v2977 = vld [vmem:[%s2962 + $0x38] sm:$0xf]
        %v2978 = vld [vmem:[%s2962 + $0x3c] sm:$0xf]
        %v2979 = vld [vmem:[%s247 + $0x3c8] sm:$0xc]
        %v2980 = vld [vmem:[%s247 + $0x3d8] sm:$0x3]
        %s2981 = scalar_lea.vmem %s1, 1216
        %v2982 = vld [vmem:[%s2981] sm:$0xf]
        %v2983 = vld [vmem:[%s2981 + $0x4] sm:$0xf]
        %v2984 = vld [vmem:[%s2981 + $0x8] sm:$0xf]
        %v2985 = vld [vmem:[%s2981 + $0xc] sm:$0xf]
        %v2986 = vld [vmem:[%s2981 + $0x10] sm:$0xf]
        %v2987 = vld [vmem:[%s2981 + $0x14] sm:$0xf]
        %v2988 = vld [vmem:[%s2981 + $0x18] sm:$0xf]
        %v2989 = vld [vmem:[%s2981 + $0x1c] sm:$0xf]
        %v2990 = vld [vmem:[%s2981 + $0x20] sm:$0xf]
        %v2991 = vld [vmem:[%s2981 + $0x24] sm:$0xf]
        %v2992 = vld [vmem:[%s2981 + $0x28] sm:$0xf]
        %v2993 = vld [vmem:[%s2981 + $0x2c] sm:$0xf]
        %v2994 = vld [vmem:[%s2981 + $0x30] sm:$0xf]
        %v2995 = vld [vmem:[%s2981 + $0x34] sm:$0xf]
        %v2996 = vld [vmem:[%s2981 + $0x38] sm:$0xf]
        %v2997 = vld [vmem:[%s2981 + $0x3c] sm:$0xf]
        %v3003 = vunpack.c.l.b16 %v2979
        %v3004 = vunpack.c.l.b16 %v2958
        %v3005 = vunpack.c.l.b16 %v2959
        %v3006 = vunpack.c.l.b16 %v2960
        %v3007 = vunpack.c.l.b16 %v2980
        %v3008 = vpack.c.b16 %v3004, %v3003
        %v3009 = vpack.c.b16 %v3006, %v3005
        %v3010 = vpack.c.b16 %v3007, %v3007
        %v3011 = vrot.slane %v3008, 2
        %v3012 = vrot.slane %v3009, 2
        %v3013 = vsel %vm323, %v3011, %v3012
        %v3014 = vrot.slane %v3010, 2
        %v3015 = vsel %vm323, %v3012, %v3014
        %v3034 = vunpack.c.l.b16 %v2982
        %v3035 = vunpack.c.l.b16 %v2983
        %v3036 = vunpack.c.l.b16 %v2984
        %v3037 = vunpack.c.l.b16 %v2985
        %v3038 = vunpack.c.l.b16 %v2986
        %v3039 = vunpack.c.l.b16 %v2987
        %v3040 = vunpack.c.l.b16 %v2988
        %v3041 = vunpack.c.l.b16 %v2989
        %v3042 = vunpack.c.l.b16 %v2990
        %v3043 = vunpack.c.l.b16 %v2991
        %v3044 = vunpack.c.l.b16 %v2992
        %v3045 = vunpack.c.l.b16 %v2993
        %v3046 = vunpack.c.l.b16 %v2994
        %v3047 = vunpack.c.l.b16 %v2995
        %v3048 = vunpack.c.l.b16 %v2996
        %v3049 = vunpack.c.l.b16 %v2997
        %v3050 = vpack.c.b16 %v3035, %v3034
        %v3051 = vpack.c.b16 %v3037, %v3036
        %v3052 = vpack.c.b16 %v3039, %v3038
        %v3053 = vpack.c.b16 %v3041, %v3040
        %v3054 = vpack.c.b16 %v3043, %v3042
        %v3055 = vpack.c.b16 %v3045, %v3044
        %v3056 = vpack.c.b16 %v3047, %v3046
        %v3057 = vpack.c.b16 %v3049, %v3048
        %3066 = vmatprep.subr.bf16.mxu0 0
        %3067 = vmatpush1.bf16.msra.mxu0 %v3057
        %3068 = vmatprep.subr.bf16.mxu0 0
        %3069 = vmatpush1.bf16.msra.mxu0 %v3056
        %3070 = vmatprep.subr.bf16.mxu0 0
        %3071 = vmatpush1.bf16.msra.mxu0 %v3055
        %3072 = vmatprep.subr.bf16.mxu0 0
        %3073 = vmatpush1.bf16.msra.mxu0 %v3054
        %3074 = vmatprep.subr.bf16.mxu0 0
        %3075 = vmatpush1.bf16.msra.mxu0 %v3053
        %3076 = vmatprep.subr.bf16.mxu0 0
        %3077 = vmatpush1.bf16.msra.mxu0 %v3052
        %3078 = vmatprep.subr.bf16.mxu0 0
        %3079 = vmatpush1.bf16.msra.mxu0 %v3051
        %3080 = vmatprep.subr.bf16.mxu0 0
        %3081 = vmatpush1.bf16.msra.mxu0 %v3050
        %3082 = vmatprep.subr.bf16.mxu0 0
        %3083 = vmatpush2.bf16.msra.mxu0 0
        %3084 = vmatprep.subr.bf16.mxu0 0
        %3085 = vmatpush2.bf16.msra.mxu0 0
        %3086 = vmatprep.subr.bf16.mxu0 0
        %3087 = vmatpush2.bf16.msra.mxu0 0
        %3088 = vmatprep.subr.bf16.mxu0 0
        %3089 = vmatpush2.bf16.msra.mxu0 0
        %3090 = vmatprep.subr.bf16.mxu0 0
        %3091 = vmatpush2.bf16.msra.mxu0 0
        %3092 = vmatprep.subr.bf16.mxu0 0
        %3093 = vmatpush2.bf16.msra.mxu0 0
        %3094 = vmatprep.subr.bf16.mxu0 0
        %3095 = vmatpush2.bf16.msra.mxu0 0
        %3096 = vmatprep.subr.bf16.mxu0 0
        %3097 = vmatpush2.bf16.msra.mxu0 0
        %3098 = vmatprep.mubr.bf16.mxu0 0
        %3099 = vmatmul.mubr.bf16.gmra.mxu0 %v3013
        %v3100 = vpop.f32.mrf.mxu0
        %v3101 = vadd.f32 0.0, %v3100
        %v3102 = vpop.f32.mrf.mxu0
        %v3103 = vpop.f32.mrf.mxu0
        %v3104 = vadd.f32 0.0, %v3103
        %v3105 = vpop.f32.mrf.mxu0
        %3106 = vmatprep.mubr.bf16.mxu0 0
        %3107 = vmatmul.mubr.bf16.gmra.mxu0 %v3015
        %v3108 = vpop.f32.mrf.mxu0
        %v3109 = vadd.f32 0.0, %v3108
        %v3110 = vpop.f32.mrf.mxu0
        %v3111 = vpop.f32.mrf.mxu0
        %v3112 = vadd.f32 0.0, %v3111
        %v3113 = vpop.f32.mrf.mxu0
        %3114 = vdwg.mxu0
        %v3117 = vunpack.c.l.b16 %v2957
        %v3118 = vunpack.c.l.b16 %v2961
        %v3119 = vpack.c.b16 %v3004, %v3117
        %v3120 = vpack.c.b16 %v3118, %v3118
        %vm3121 = vsmask.f32 7424
        %v3123 = vshrl.u32 %v3119, 16
        %v3125 = vshll.u32 %v3119, 16
        %v3127 = vrot.slane %v3125, 1
        %v3128 = vor.u32 %v3123, %v3127
        %v3130 = vshll.u32 %v3009, 16
        %v3132 = vrot.slane %v3130, 1
        %v3133 = vsel %vm3121, %v3128, %v3132
        %v3134 = vshrl.u32 %v3009, 16
        %v3136 = vor.u32 %v3134, %v3132
        %v3138 = vshll.u32 %v3120, 16
        %v3140 = vrot.slane %v3138, 1
        %v3141 = vsel %vm3121, %v3136, %v3140
        %v3160 = vunpack.c.l.b16 %v2963
        %v3161 = vunpack.c.l.b16 %v2964
        %v3162 = vunpack.c.l.b16 %v2965
        %v3163 = vunpack.c.l.b16 %v2966
        %v3164 = vunpack.c.l.b16 %v2967
        %v3165 = vunpack.c.l.b16 %v2968
        %v3166 = vunpack.c.l.b16 %v2969
        %v3167 = vunpack.c.l.b16 %v2970
        %v3168 = vunpack.c.l.b16 %v2971
        %v3169 = vunpack.c.l.b16 %v2972
        %v3170 = vunpack.c.l.b16 %v2973
        %v3171 = vunpack.c.l.b16 %v2974
        %v3172 = vunpack.c.l.b16 %v2975
        %v3173 = vunpack.c.l.b16 %v2976
        %v3174 = vunpack.c.l.b16 %v2977
        %v3175 = vunpack.c.l.b16 %v2978
        %v3176 = vpack.c.b16 %v3161, %v3160
        %v3177 = vpack.c.b16 %v3163, %v3162
        %v3178 = vpack.c.b16 %v3165, %v3164
        %v3179 = vpack.c.b16 %v3167, %v3166
        %v3180 = vpack.c.b16 %v3169, %v3168
        %v3181 = vpack.c.b16 %v3171, %v3170
        %v3182 = vpack.c.b16 %v3173, %v3172
        %v3183 = vpack.c.b16 %v3175, %v3174
        %3192 = vmatprep.subr.bf16.mxu0 0
        %3193 = vmatpush1.bf16.msra.mxu0 %v3183
        %3194 = vmatprep.subr.bf16.mxu0 0
        %3195 = vmatpush1.bf16.msra.mxu0 %v3182
        %3196 = vmatprep.subr.bf16.mxu0 0
        %3197 = vmatpush1.bf16.msra.mxu0 %v3181
        %3198 = vmatprep.subr.bf16.mxu0 0
        %3199 = vmatpush1.bf16.msra.mxu0 %v3180
        %3200 = vmatprep.subr.bf16.mxu0 0
        %3201 = vmatpush1.bf16.msra.mxu0 %v3179
        %3202 = vmatprep.subr.bf16.mxu0 0
        %3203 = vmatpush1.bf16.msra.mxu0 %v3178
        %3204 = vmatprep.subr.bf16.mxu0 0
        %3205 = vmatpush1.bf16.msra.mxu0 %v3177
        %3206 = vmatprep.subr.bf16.mxu0 0
        %3207 = vmatpush1.bf16.msra.mxu0 %v3176
        %3208 = vmatprep.subr.bf16.mxu0 0
        %3209 = vmatpush2.bf16.msra.mxu0 0
        %3210 = vmatprep.subr.bf16.mxu0 0
        %3211 = vmatpush2.bf16.msra.mxu0 0
        %3212 = vmatprep.subr.bf16.mxu0 0
        %3213 = vmatpush2.bf16.msra.mxu0 0
        %3214 = vmatprep.subr.bf16.mxu0 0
        %3215 = vmatpush2.bf16.msra.mxu0 0
        %3216 = vmatprep.subr.bf16.mxu0 0
        %3217 = vmatpush2.bf16.msra.mxu0 0
        %3218 = vmatprep.subr.bf16.mxu0 0
        %3219 = vmatpush2.bf16.msra.mxu0 0
        %3220 = vmatprep.subr.bf16.mxu0 0
        %3221 = vmatpush2.bf16.msra.mxu0 0
        %3222 = vmatprep.subr.bf16.mxu0 0
        %3223 = vmatpush2.bf16.msra.mxu0 0
        %3224 = vmatprep.mubr.bf16.mxu0 0
        %3225 = vmatmul.mubr.bf16.gmra.mxu0 %v3133
        %v3226 = vpop.f32.mrf.mxu0
        %v3227 = vadd.f32 %v3101, %v3226
        %v3228 = vpop.f32.mrf.mxu0
        %v3229 = vpop.f32.mrf.mxu0
        %v3230 = vadd.f32 %v3104, %v3229
        %v3231 = vpop.f32.mrf.mxu0
        %3232 = vmatprep.mubr.bf16.mxu0 0
        %3233 = vmatmul.mubr.bf16.gmra.mxu0 %v3141
        %v3234 = vpop.f32.mrf.mxu0
        %v3235 = vadd.f32 %v3109, %v3234
        %v3236 = vpop.f32.mrf.mxu0
        %v3237 = vpop.f32.mrf.mxu0
        %v3238 = vadd.f32 %v3112, %v3237
        %v3239 = vpop.f32.mrf.mxu0
        %3240 = vdwg.mxu0
        %v3241 = vld [vmem:[%s247 + $0x3c8] sm:$0x8]
        %v3242 = vld [vmem:[%s247 + $0x3d8] sm:$0xf]
        %s3243 = scalar_lea.vmem %s1, 1280
        %v3244 = vld [vmem:[%s3243] sm:$0xf]
        %v3245 = vld [vmem:[%s3243 + $0x4] sm:$0xf]
        %v3246 = vld [vmem:[%s3243 + $0x8] sm:$0xf]
        %v3247 = vld [vmem:[%s3243 + $0xc] sm:$0xf]
        %v3248 = vld [vmem:[%s3243 + $0x10] sm:$0xf]
        %v3249 = vld [vmem:[%s3243 + $0x14] sm:$0xf]
        %v3250 = vld [vmem:[%s3243 + $0x18] sm:$0xf]
        %v3251 = vld [vmem:[%s3243 + $0x1c] sm:$0xf]
        %v3252 = vld [vmem:[%s3243 + $0x20] sm:$0xf]
        %v3253 = vld [vmem:[%s3243 + $0x24] sm:$0xf]
        %v3254 = vld [vmem:[%s3243 + $0x28] sm:$0xf]
        %v3255 = vld [vmem:[%s3243 + $0x2c] sm:$0xf]
        %v3256 = vld [vmem:[%s3243 + $0x30] sm:$0xf]
        %v3257 = vld [vmem:[%s3243 + $0x34] sm:$0xf]
        %v3258 = vld [vmem:[%s3243 + $0x38] sm:$0xf]
        %v3259 = vld [vmem:[%s3243 + $0x3c] sm:$0xf]
        %v3262 = vunpack.c.l.b16 %v3241
        %v3263 = vunpack.c.l.b16 %v3242
        %v3264 = vpack.c.b16 %v3004, %v3262
        %v3265 = vpack.c.b16 %v3263, %v3263
        %vm3266 = vsmask.f32 4352
        %v3268 = vshrl.u32 %v3264, 16
        %v3270 = vrot.slane %v3268, 3
        %v3271 = vshll.u32 %v3264, 16
        %v3273 = vrot.slane %v3271, 4
        %v3274 = vor.u32 %v3270, %v3273
        %v3275 = vrot.slane %v3134, 3
        %v3276 = vrot.slane %v3130, 4
        %v3277 = vor.u32 %v3275, %v3276
        %v3278 = vsel %vm3266, %v3274, %v3277
        %v3280 = vshrl.u32 %v3265, 16
        %v3282 = vrot.slane %v3280, 3
        %v3283 = vshll.u32 %v3265, 16
        %v3285 = vrot.slane %v3283, 4
        %v3286 = vor.u32 %v3282, %v3285
        %v3287 = vsel %vm3266, %v3277, %v3286
        %v3306 = vunpack.c.l.b16 %v3244
        %v3307 = vunpack.c.l.b16 %v3245
        %v3308 = vunpack.c.l.b16 %v3246
        %v3309 = vunpack.c.l.b16 %v3247
        %v3310 = vunpack.c.l.b16 %v3248
        %v3311 = vunpack.c.l.b16 %v3249
        %v3312 = vunpack.c.l.b16 %v3250
        %v3313 = vunpack.c.l.b16 %v3251
        %v3314 = vunpack.c.l.b16 %v3252
        %v3315 = vunpack.c.l.b16 %v3253
        %v3316 = vunpack.c.l.b16 %v3254
        %v3317 = vunpack.c.l.b16 %v3255
        %v3318 = vunpack.c.l.b16 %v3256
        %v3319 = vunpack.c.l.b16 %v3257
        %v3320 = vunpack.c.l.b16 %v3258
        %v3321 = vunpack.c.l.b16 %v3259
        %v3322 = vpack.c.b16 %v3307, %v3306
        %v3323 = vpack.c.b16 %v3309, %v3308
        %v3324 = vpack.c.b16 %v3311, %v3310
        %v3325 = vpack.c.b16 %v3313, %v3312
        %v3326 = vpack.c.b16 %v3315, %v3314
        %v3327 = vpack.c.b16 %v3317, %v3316
        %v3328 = vpack.c.b16 %v3319, %v3318
        %v3329 = vpack.c.b16 %v3321, %v3320
        %3338 = vmatprep.subr.bf16.mxu0 0
        %3339 = vmatpush1.bf16.msra.mxu0 %v3329
        %3340 = vmatprep.subr.bf16.mxu0 0
        %3341 = vmatpush1.bf16.msra.mxu0 %v3328
        %3342 = vmatprep.subr.bf16.mxu0 0
        %3343 = vmatpush1.bf16.msra.mxu0 %v3327
        %3344 = vmatprep.subr.bf16.mxu0 0
        %3345 = vmatpush1.bf16.msra.mxu0 %v3326
        %3346 = vmatprep.subr.bf16.mxu0 0
        %3347 = vmatpush1.bf16.msra.mxu0 %v3325
        %3348 = vmatprep.subr.bf16.mxu0 0
        %3349 = vmatpush1.bf16.msra.mxu0 %v3324
        %3350 = vmatprep.subr.bf16.mxu0 0
        %3351 = vmatpush1.bf16.msra.mxu0 %v3323
        %3352 = vmatprep.subr.bf16.mxu0 0
        %3353 = vmatpush1.bf16.msra.mxu0 %v3322
        %3354 = vmatprep.subr.bf16.mxu0 0
        %3355 = vmatpush2.bf16.msra.mxu0 0
        %3356 = vmatprep.subr.bf16.mxu0 0
        %3357 = vmatpush2.bf16.msra.mxu0 0
        %3358 = vmatprep.subr.bf16.mxu0 0
        %3359 = vmatpush2.bf16.msra.mxu0 0
        %3360 = vmatprep.subr.bf16.mxu0 0
        %3361 = vmatpush2.bf16.msra.mxu0 0
        %3362 = vmatprep.subr.bf16.mxu0 0
        %3363 = vmatpush2.bf16.msra.mxu0 0
        %3364 = vmatprep.subr.bf16.mxu0 0
        %3365 = vmatpush2.bf16.msra.mxu0 0
        %3366 = vmatprep.subr.bf16.mxu0 0
        %3367 = vmatpush2.bf16.msra.mxu0 0
        %3368 = vmatprep.subr.bf16.mxu0 0
        %3369 = vmatpush2.bf16.msra.mxu0 0
        %3370 = vmatprep.mubr.bf16.mxu0 0
        %3371 = vmatmul.mubr.bf16.gmra.mxu0 %v3278
        %v3372 = vpop.f32.mrf.mxu0
        %v3373 = vadd.f32 0.0, %v3372
        %v3374 = vpop.f32.mrf.mxu0
        %v3375 = vpop.f32.mrf.mxu0
        %v3376 = vadd.f32 0.0, %v3375
        %v3377 = vpop.f32.mrf.mxu0
        %3378 = vmatprep.mubr.bf16.mxu0 0
        %3379 = vmatmul.mubr.bf16.gmra.mxu0 %v3287
        %v3380 = vpop.f32.mrf.mxu0
        %v3381 = vadd.f32 0.0, %v3380
        %v3382 = vpop.f32.mrf.mxu0
        %v3383 = vpop.f32.mrf.mxu0
        %v3384 = vadd.f32 0.0, %v3383
        %v3385 = vpop.f32.mrf.mxu0
        %3386 = vdwg.mxu0
        %v3387 = vadd.f32 %v3227, %v3373
        %v3388 = vadd.f32 %v3230, %v3376
        %v3389 = vadd.f32 %v3235, %v3381
        %v3390 = vadd.f32 %v3238, %v3384
        %v3391 = vld [vmem:[%s247 + $0x3e0] sm:$0xf]
        %v3392 = vld [vmem:[%s247 + $0x3e4] sm:$0xf]
        %v3393 = vld [vmem:[%s247 + $0x3e8] sm:$0xf]
        %v3394 = vld [vmem:[%s247 + $0x3ec] sm:$0xf]
        %v3395 = vld [vmem:[%s247 + $0x3f0] sm:$0x1]
        %s3396 = scalar_lea.vmem %s1, 1344
        %v3397 = vld [vmem:[%s3396] sm:$0xf]
        %v3398 = vld [vmem:[%s3396 + $0x4] sm:$0xf]
        %v3399 = vld [vmem:[%s3396 + $0x8] sm:$0xf]
        %v3400 = vld [vmem:[%s3396 + $0xc] sm:$0xf]
        %v3401 = vld [vmem:[%s3396 + $0x10] sm:$0xf]
        %v3402 = vld [vmem:[%s3396 + $0x14] sm:$0xf]
        %v3403 = vld [vmem:[%s3396 + $0x18] sm:$0xf]
        %v3404 = vld [vmem:[%s3396 + $0x1c] sm:$0xf]
        %v3405 = vld [vmem:[%s3396 + $0x20] sm:$0xf]
        %v3406 = vld [vmem:[%s3396 + $0x24] sm:$0xf]
        %v3407 = vld [vmem:[%s3396 + $0x28] sm:$0xf]
        %v3408 = vld [vmem:[%s3396 + $0x2c] sm:$0xf]
        %v3409 = vld [vmem:[%s3396 + $0x30] sm:$0xf]
        %v3410 = vld [vmem:[%s3396 + $0x34] sm:$0xf]
        %v3411 = vld [vmem:[%s3396 + $0x38] sm:$0xf]
        %v3412 = vld [vmem:[%s3396 + $0x3c] sm:$0xf]
        %v3418 = vunpack.c.l.b16 %v3391
        %v3419 = vunpack.c.l.b16 %v3392
        %v3420 = vunpack.c.l.b16 %v3393
        %v3421 = vunpack.c.l.b16 %v3394
        %v3422 = vunpack.c.l.b16 %v3395
        %v3423 = vpack.c.b16 %v3419, %v3418
        %v3424 = vpack.c.b16 %v3421, %v3420
        %v3425 = vpack.c.b16 %v3422, %v3422
        %v3427 = vshrl.u32 %v3423, 16
        %v3429 = vshll.u32 %v3423, 16
        %v3431 = vrot.slane %v3429, 1
        %v3432 = vor.u32 %v3427, %v3431
        %v3434 = vshll.u32 %v3424, 16
        %v3436 = vrot.slane %v3434, 1
        %v3437 = vsel %vm3121, %v3432, %v3436
        %v3438 = vshrl.u32 %v3424, 16
        %v3440 = vor.u32 %v3438, %v3436
        %v3442 = vshll.u32 %v3425, 16
        %v3444 = vrot.slane %v3442, 1
        %v3445 = vsel %vm3121, %v3440, %v3444
        %v3464 = vunpack.c.l.b16 %v3397
        %v3465 = vunpack.c.l.b16 %v3398
        %v3466 = vunpack.c.l.b16 %v3399
        %v3467 = vunpack.c.l.b16 %v3400
        %v3468 = vunpack.c.l.b16 %v3401
        %v3469 = vunpack.c.l.b16 %v3402
        %v3470 = vunpack.c.l.b16 %v3403
        %v3471 = vunpack.c.l.b16 %v3404
        %v3472 = vunpack.c.l.b16 %v3405
        %v3473 = vunpack.c.l.b16 %v3406
        %v3474 = vunpack.c.l.b16 %v3407
        %v3475 = vunpack.c.l.b16 %v3408
        %v3476 = vunpack.c.l.b16 %v3409
        %v3477 = vunpack.c.l.b16 %v3410
        %v3478 = vunpack.c.l.b16 %v3411
        %v3479 = vunpack.c.l.b16 %v3412
        %v3480 = vpack.c.b16 %v3465, %v3464
        %v3481 = vpack.c.b16 %v3467, %v3466
        %v3482 = vpack.c.b16 %v3469, %v3468
        %v3483 = vpack.c.b16 %v3471, %v3470
        %v3484 = vpack.c.b16 %v3473, %v3472
        %v3485 = vpack.c.b16 %v3475, %v3474
        %v3486 = vpack.c.b16 %v3477, %v3476
        %v3487 = vpack.c.b16 %v3479, %v3478
        %3496 = vmatprep.subr.bf16.mxu0 0
        %3497 = vmatpush1.bf16.msra.mxu0 %v3487
        %3498 = vmatprep.subr.bf16.mxu0 0
        %3499 = vmatpush1.bf16.msra.mxu0 %v3486
        %3500 = vmatprep.subr.bf16.mxu0 0
        %3501 = vmatpush1.bf16.msra.mxu0 %v3485
        %3502 = vmatprep.subr.bf16.mxu0 0
        %3503 = vmatpush1.bf16.msra.mxu0 %v3484
        %3504 = vmatprep.subr.bf16.mxu0 0
        %3505 = vmatpush1.bf16.msra.mxu0 %v3483
        %3506 = vmatprep.subr.bf16.mxu0 0
        %3507 = vmatpush1.bf16.msra.mxu0 %v3482
        %3508 = vmatprep.subr.bf16.mxu0 0
        %3509 = vmatpush1.bf16.msra.mxu0 %v3481
        %3510 = vmatprep.subr.bf16.mxu0 0
        %3511 = vmatpush1.bf16.msra.mxu0 %v3480
        %3512 = vmatprep.subr.bf16.mxu0 0
        %3513 = vmatpush2.bf16.msra.mxu0 0
        %3514 = vmatprep.subr.bf16.mxu0 0
        %3515 = vmatpush2.bf16.msra.mxu0 0
        %3516 = vmatprep.subr.bf16.mxu0 0
        %3517 = vmatpush2.bf16.msra.mxu0 0
        %3518 = vmatprep.subr.bf16.mxu0 0
        %3519 = vmatpush2.bf16.msra.mxu0 0
        %3520 = vmatprep.subr.bf16.mxu0 0
        %3521 = vmatpush2.bf16.msra.mxu0 0
        %3522 = vmatprep.subr.bf16.mxu0 0
        %3523 = vmatpush2.bf16.msra.mxu0 0
        %3524 = vmatprep.subr.bf16.mxu0 0
        %3525 = vmatpush2.bf16.msra.mxu0 0
        %3526 = vmatprep.subr.bf16.mxu0 0
        %3527 = vmatpush2.bf16.msra.mxu0 0
        %3528 = vmatprep.mubr.bf16.mxu0 0
        %3529 = vmatmul.mubr.bf16.gmra.mxu0 %v3437
        %v3530 = vpop.f32.mrf.mxu0
        %v3531 = vadd.f32 0.0, %v3530
        %v3532 = vpop.f32.mrf.mxu0
        %v3533 = vpop.f32.mrf.mxu0
        %v3534 = vadd.f32 0.0, %v3533
        %v3535 = vpop.f32.mrf.mxu0
        %3536 = vmatprep.mubr.bf16.mxu0 0
        %3537 = vmatmul.mubr.bf16.gmra.mxu0 %v3445
        %v3538 = vpop.f32.mrf.mxu0
        %v3539 = vadd.f32 0.0, %v3538
        %v3540 = vpop.f32.mrf.mxu0
        %v3541 = vpop.f32.mrf.mxu0
        %v3542 = vadd.f32 0.0, %v3541
        %v3543 = vpop.f32.mrf.mxu0
        %3544 = vdwg.mxu0
        %v3545 = vadd.f32 %v3387, %v3531
        %v3546 = vadd.f32 %v3388, %v3534
        %v3547 = vadd.f32 %v3389, %v3539
        %v3548 = vadd.f32 %v3390, %v3542
        %v3549 = vld [vmem:[%s247 + $0x3e0] sm:$0xc]
        %v3550 = vld [vmem:[%s247 + $0x3f0] sm:$0x3]
        %s3551 = scalar_lea.vmem %s1, 1408
        %v3552 = vld [vmem:[%s3551] sm:$0xf]
        %v3553 = vld [vmem:[%s3551 + $0x4] sm:$0xf]
        %v3554 = vld [vmem:[%s3551 + $0x8] sm:$0xf]
        %v3555 = vld [vmem:[%s3551 + $0xc] sm:$0xf]
        %v3556 = vld [vmem:[%s3551 + $0x10] sm:$0xf]
        %v3557 = vld [vmem:[%s3551 + $0x14] sm:$0xf]
        %v3558 = vld [vmem:[%s3551 + $0x18] sm:$0xf]
        %v3559 = vld [vmem:[%s3551 + $0x1c] sm:$0xf]
        %v3560 = vld [vmem:[%s3551 + $0x20] sm:$0xf]
        %v3561 = vld [vmem:[%s3551 + $0x24] sm:$0xf]
        %v3562 = vld [vmem:[%s3551 + $0x28] sm:$0xf]
        %v3563 = vld [vmem:[%s3551 + $0x2c] sm:$0xf]
        %v3564 = vld [vmem:[%s3551 + $0x30] sm:$0xf]
        %v3565 = vld [vmem:[%s3551 + $0x34] sm:$0xf]
        %v3566 = vld [vmem:[%s3551 + $0x38] sm:$0xf]
        %v3567 = vld [vmem:[%s3551 + $0x3c] sm:$0xf]
        %v3570 = vunpack.c.l.b16 %v3549
        %v3571 = vunpack.c.l.b16 %v3550
        %v3572 = vpack.c.b16 %v3419, %v3570
        %v3573 = vpack.c.b16 %v3571, %v3571
        %v3574 = vrot.slane %v3572, 2
        %v3575 = vrot.slane %v3424, 2
        %v3576 = vsel %vm323, %v3574, %v3575
        %v3577 = vrot.slane %v3573, 2
        %v3578 = vsel %vm323, %v3575, %v3577
        %v3597 = vunpack.c.l.b16 %v3552
        %v3598 = vunpack.c.l.b16 %v3553
        %v3599 = vunpack.c.l.b16 %v3554
        %v3600 = vunpack.c.l.b16 %v3555
        %v3601 = vunpack.c.l.b16 %v3556
        %v3602 = vunpack.c.l.b16 %v3557
        %v3603 = vunpack.c.l.b16 %v3558
        %v3604 = vunpack.c.l.b16 %v3559
        %v3605 = vunpack.c.l.b16 %v3560
        %v3606 = vunpack.c.l.b16 %v3561
        %v3607 = vunpack.c.l.b16 %v3562
        %v3608 = vunpack.c.l.b16 %v3563
        %v3609 = vunpack.c.l.b16 %v3564
        %v3610 = vunpack.c.l.b16 %v3565
        %v3611 = vunpack.c.l.b16 %v3566
        %v3612 = vunpack.c.l.b16 %v3567
        %v3613 = vpack.c.b16 %v3598, %v3597
        %v3614 = vpack.c.b16 %v3600, %v3599
        %v3615 = vpack.c.b16 %v3602, %v3601
        %v3616 = vpack.c.b16 %v3604, %v3603
        %v3617 = vpack.c.b16 %v3606, %v3605
        %v3618 = vpack.c.b16 %v3608, %v3607
        %v3619 = vpack.c.b16 %v3610, %v3609
        %v3620 = vpack.c.b16 %v3612, %v3611
        %3629 = vmatprep.subr.bf16.mxu0 0
        %3630 = vmatpush1.bf16.msra.mxu0 %v3620
        %3631 = vmatprep.subr.bf16.mxu0 0
        %3632 = vmatpush1.bf16.msra.mxu0 %v3619
        %3633 = vmatprep.subr.bf16.mxu0 0
        %3634 = vmatpush1.bf16.msra.mxu0 %v3618
        %3635 = vmatprep.subr.bf16.mxu0 0
        %3636 = vmatpush1.bf16.msra.mxu0 %v3617
        %3637 = vmatprep.subr.bf16.mxu0 0
        %3638 = vmatpush1.bf16.msra.mxu0 %v3616
        %3639 = vmatprep.subr.bf16.mxu0 0
        %3640 = vmatpush1.bf16.msra.mxu0 %v3615
        %3641 = vmatprep.subr.bf16.mxu0 0
        %3642 = vmatpush1.bf16.msra.mxu0 %v3614
        %3643 = vmatprep.subr.bf16.mxu0 0
        %3644 = vmatpush1.bf16.msra.mxu0 %v3613
        %3645 = vmatprep.subr.bf16.mxu0 0
        %3646 = vmatpush2.bf16.msra.mxu0 0
        %3647 = vmatprep.subr.bf16.mxu0 0
        %3648 = vmatpush2.bf16.msra.mxu0 0
        %3649 = vmatprep.subr.bf16.mxu0 0
        %3650 = vmatpush2.bf16.msra.mxu0 0
        %3651 = vmatprep.subr.bf16.mxu0 0
        %3652 = vmatpush2.bf16.msra.mxu0 0
        %3653 = vmatprep.subr.bf16.mxu0 0
        %3654 = vmatpush2.bf16.msra.mxu0 0
        %3655 = vmatprep.subr.bf16.mxu0 0
        %3656 = vmatpush2.bf16.msra.mxu0 0
        %3657 = vmatprep.subr.bf16.mxu0 0
        %3658 = vmatpush2.bf16.msra.mxu0 0
        %3659 = vmatprep.subr.bf16.mxu0 0
        %3660 = vmatpush2.bf16.msra.mxu0 0
        %3661 = vmatprep.mubr.bf16.mxu0 0
        %3662 = vmatmul.mubr.bf16.gmra.mxu0 %v3576
        %v3663 = vpop.f32.mrf.mxu0
        %v3664 = vadd.f32 0.0, %v3663
        %v3665 = vpop.f32.mrf.mxu0
        %v3666 = vpop.f32.mrf.mxu0
        %v3667 = vadd.f32 0.0, %v3666
        %v3668 = vpop.f32.mrf.mxu0
        %3669 = vmatprep.mubr.bf16.mxu0 0
        %3670 = vmatmul.mubr.bf16.gmra.mxu0 %v3578
        %v3671 = vpop.f32.mrf.mxu0
        %v3672 = vadd.f32 0.0, %v3671
        %v3673 = vpop.f32.mrf.mxu0
        %v3674 = vpop.f32.mrf.mxu0
        %v3675 = vadd.f32 0.0, %v3674
        %v3676 = vpop.f32.mrf.mxu0
        %3677 = vdwg.mxu0
        %v3678 = vadd.f32 %v3545, %v3664
        %v3679 = vadd.f32 %v3546, %v3667
        %v3680 = vadd.f32 %v3547, %v3672
        %v3681 = vadd.f32 %v3548, %v3675
        %v3682 = vld [vmem:[%s247 + $0x3e0] sm:$0x8]
        %v3683 = vld [vmem:[%s247 + $0x3f0] sm:$0xf]
        %s3684 = scalar_lea.vmem %s1, 1472
        %v3685 = vld [vmem:[%s3684] sm:$0xf]
        %v3686 = vld [vmem:[%s3684 + $0x4] sm:$0xf]
        %v3687 = vld [vmem:[%s3684 + $0x8] sm:$0xf]
        %v3688 = vld [vmem:[%s3684 + $0xc] sm:$0xf]
        %v3689 = vld [vmem:[%s3684 + $0x10] sm:$0xf]
        %v3690 = vld [vmem:[%s3684 + $0x14] sm:$0xf]
        %v3691 = vld [vmem:[%s3684 + $0x18] sm:$0xf]
        %v3692 = vld [vmem:[%s3684 + $0x1c] sm:$0xf]
        %v3693 = vld [vmem:[%s3684 + $0x20] sm:$0xf]
        %v3694 = vld [vmem:[%s3684 + $0x24] sm:$0xf]
        %v3695 = vld [vmem:[%s3684 + $0x28] sm:$0xf]
        %v3696 = vld [vmem:[%s3684 + $0x2c] sm:$0xf]
        %v3697 = vld [vmem:[%s3684 + $0x30] sm:$0xf]
        %v3698 = vld [vmem:[%s3684 + $0x34] sm:$0xf]
        %v3699 = vld [vmem:[%s3684 + $0x38] sm:$0xf]
        %v3700 = vld [vmem:[%s3684 + $0x3c] sm:$0xf]
        %v3703 = vunpack.c.l.b16 %v3682
        %v3704 = vunpack.c.l.b16 %v3683
        %v3705 = vpack.c.b16 %v3419, %v3703
        %v3706 = vpack.c.b16 %v3704, %v3704
        %v3708 = vshrl.u32 %v3705, 16
        %v3710 = vrot.slane %v3708, 3
        %v3711 = vshll.u32 %v3705, 16
        %v3713 = vrot.slane %v3711, 4
        %v3714 = vor.u32 %v3710, %v3713
        %v3715 = vrot.slane %v3438, 3
        %v3716 = vrot.slane %v3434, 4
        %v3717 = vor.u32 %v3715, %v3716
        %v3718 = vsel %vm3266, %v3714, %v3717
        %v3720 = vshrl.u32 %v3706, 16
        %v3722 = vrot.slane %v3720, 3
        %v3723 = vshll.u32 %v3706, 16
        %v3725 = vrot.slane %v3723, 4
        %v3726 = vor.u32 %v3722, %v3725
        %v3727 = vsel %vm3266, %v3717, %v3726
        %v3746 = vunpack.c.l.b16 %v3685
        %v3747 = vunpack.c.l.b16 %v3686
        %v3748 = vunpack.c.l.b16 %v3687
        %v3749 = vunpack.c.l.b16 %v3688
        %v3750 = vunpack.c.l.b16 %v3689
        %v3751 = vunpack.c.l.b16 %v3690
        %v3752 = vunpack.c.l.b16 %v3691
        %v3753 = vunpack.c.l.b16 %v3692
        %v3754 = vunpack.c.l.b16 %v3693
        %v3755 = vunpack.c.l.b16 %v3694
        %v3756 = vunpack.c.l.b16 %v3695
        %v3757 = vunpack.c.l.b16 %v3696
        %v3758 = vunpack.c.l.b16 %v3697
        %v3759 = vunpack.c.l.b16 %v3698
        %v3760 = vunpack.c.l.b16 %v3699
        %v3761 = vunpack.c.l.b16 %v3700
        %v3762 = vpack.c.b16 %v3747, %v3746
        %v3763 = vpack.c.b16 %v3749, %v3748
        %v3764 = vpack.c.b16 %v3751, %v3750
        %v3765 = vpack.c.b16 %v3753, %v3752
        %v3766 = vpack.c.b16 %v3755, %v3754
        %v3767 = vpack.c.b16 %v3757, %v3756
        %v3768 = vpack.c.b16 %v3759, %v3758
        %v3769 = vpack.c.b16 %v3761, %v3760
        %3778 = vmatprep.subr.bf16.mxu0 0
        %3779 = vmatpush1.bf16.msra.mxu0 %v3769
        %3780 = vmatprep.subr.bf16.mxu0 0
        %3781 = vmatpush1.bf16.msra.mxu0 %v3768
        %3782 = vmatprep.subr.bf16.mxu0 0
        %3783 = vmatpush1.bf16.msra.mxu0 %v3767
        %3784 = vmatprep.subr.bf16.mxu0 0
        %3785 = vmatpush1.bf16.msra.mxu0 %v3766
        %3786 = vmatprep.subr.bf16.mxu0 0
        %3787 = vmatpush1.bf16.msra.mxu0 %v3765
        %3788 = vmatprep.subr.bf16.mxu0 0
        %3789 = vmatpush1.bf16.msra.mxu0 %v3764
        %3790 = vmatprep.subr.bf16.mxu0 0
        %3791 = vmatpush1.bf16.msra.mxu0 %v3763
        %3792 = vmatprep.subr.bf16.mxu0 0
        %3793 = vmatpush1.bf16.msra.mxu0 %v3762
        %3794 = vmatprep.subr.bf16.mxu0 0
        %3795 = vmatpush2.bf16.msra.mxu0 0
        %3796 = vmatprep.subr.bf16.mxu0 0
        %3797 = vmatpush2.bf16.msra.mxu0 0
        %3798 = vmatprep.subr.bf16.mxu0 0
        %3799 = vmatpush2.bf16.msra.mxu0 0
        %3800 = vmatprep.subr.bf16.mxu0 0
        %3801 = vmatpush2.bf16.msra.mxu0 0
        %3802 = vmatprep.subr.bf16.mxu0 0
        %3803 = vmatpush2.bf16.msra.mxu0 0
        %3804 = vmatprep.subr.bf16.mxu0 0
        %3805 = vmatpush2.bf16.msra.mxu0 0
        %3806 = vmatprep.subr.bf16.mxu0 0
        %3807 = vmatpush2.bf16.msra.mxu0 0
        %3808 = vmatprep.subr.bf16.mxu0 0
        %3809 = vmatpush2.bf16.msra.mxu0 0
        %3810 = vmatprep.mubr.bf16.mxu0 0
        %3811 = vmatmul.mubr.bf16.gmra.mxu0 %v3718
        %v3812 = vpop.f32.mrf.mxu0
        %v3813 = vadd.f32 0.0, %v3812
        %v3814 = vpop.f32.mrf.mxu0
        %v3815 = vpop.f32.mrf.mxu0
        %v3816 = vadd.f32 0.0, %v3815
        %v3817 = vpop.f32.mrf.mxu0
        %3818 = vmatprep.mubr.bf16.mxu0 0
        %3819 = vmatmul.mubr.bf16.gmra.mxu0 %v3727
        %v3820 = vpop.f32.mrf.mxu0
        %v3821 = vadd.f32 0.0, %v3820
        %v3822 = vpop.f32.mrf.mxu0
        %v3823 = vpop.f32.mrf.mxu0
        %v3824 = vadd.f32 0.0, %v3823
        %v3825 = vpop.f32.mrf.mxu0
        %3826 = vdwg.mxu0
        %v3827 = vadd.f32 %v3678, %v3813
        %v3828 = vadd.f32 %v3679, %v3816
        %v3829 = vadd.f32 %v3680, %v3821
        %v3830 = vadd.f32 %v3681, %v3824
        %v3831 = vld [vmem:[%s247 + $0x3f8] sm:$0xf]
        %v3832 = vld [vmem:[%s247 + $0x3fc] sm:$0xf]
        %v3833 = vld [vmem:[%s247 + $0x400] sm:$0xf]
        %v3834 = vld [vmem:[%s247 + $0x404] sm:$0xf]
        %v3835 = vld [vmem:[%s247 + $0x408] sm:$0x1]
        %s3836 = scalar_lea.vmem %s1, 1536
        %v3837 = vld [vmem:[%s3836] sm:$0xf]
        %v3838 = vld [vmem:[%s3836 + $0x4] sm:$0xf]
        %v3839 = vld [vmem:[%s3836 + $0x8] sm:$0xf]
        %v3840 = vld [vmem:[%s3836 + $0xc] sm:$0xf]
        %v3841 = vld [vmem:[%s3836 + $0x10] sm:$0xf]
        %v3842 = vld [vmem:[%s3836 + $0x14] sm:$0xf]
        %v3843 = vld [vmem:[%s3836 + $0x18] sm:$0xf]
        %v3844 = vld [vmem:[%s3836 + $0x1c] sm:$0xf]
        %v3845 = vld [vmem:[%s3836 + $0x20] sm:$0xf]
        %v3846 = vld [vmem:[%s3836 + $0x24] sm:$0xf]
        %v3847 = vld [vmem:[%s3836 + $0x28] sm:$0xf]
        %v3848 = vld [vmem:[%s3836 + $0x2c] sm:$0xf]
        %v3849 = vld [vmem:[%s3836 + $0x30] sm:$0xf]
        %v3850 = vld [vmem:[%s3836 + $0x34] sm:$0xf]
        %v3851 = vld [vmem:[%s3836 + $0x38] sm:$0xf]
        %v3852 = vld [vmem:[%s3836 + $0x3c] sm:$0xf]
        %v3858 = vunpack.c.l.b16 %v3831
        %v3859 = vunpack.c.l.b16 %v3832
        %v3860 = vunpack.c.l.b16 %v3833
        %v3861 = vunpack.c.l.b16 %v3834
        %v3862 = vunpack.c.l.b16 %v3835
        %v3863 = vpack.c.b16 %v3859, %v3858
        %v3864 = vpack.c.b16 %v3861, %v3860
        %v3865 = vpack.c.b16 %v3862, %v3862
        %v3867 = vshrl.u32 %v3863, 16
        %v3869 = vshll.u32 %v3863, 16
        %v3871 = vrot.slane %v3869, 1
        %v3872 = vor.u32 %v3867, %v3871
        %v3874 = vshll.u32 %v3864, 16
        %v3876 = vrot.slane %v3874, 1
        %v3877 = vsel %vm3121, %v3872, %v3876
        %v3878 = vshrl.u32 %v3864, 16
        %v3880 = vor.u32 %v3878, %v3876
        %v3882 = vshll.u32 %v3865, 16
        %v3884 = vrot.slane %v3882, 1
        %v3885 = vsel %vm3121, %v3880, %v3884
        %v3904 = vunpack.c.l.b16 %v3837
        %v3905 = vunpack.c.l.b16 %v3838
        %v3906 = vunpack.c.l.b16 %v3839
        %v3907 = vunpack.c.l.b16 %v3840
        %v3908 = vunpack.c.l.b16 %v3841
        %v3909 = vunpack.c.l.b16 %v3842
        %v3910 = vunpack.c.l.b16 %v3843
        %v3911 = vunpack.c.l.b16 %v3844
        %v3912 = vunpack.c.l.b16 %v3845
        %v3913 = vunpack.c.l.b16 %v3846
        %v3914 = vunpack.c.l.b16 %v3847
        %v3915 = vunpack.c.l.b16 %v3848
        %v3916 = vunpack.c.l.b16 %v3849
        %v3917 = vunpack.c.l.b16 %v3850
        %v3918 = vunpack.c.l.b16 %v3851
        %v3919 = vunpack.c.l.b16 %v3852
        %v3920 = vpack.c.b16 %v3905, %v3904
        %v3921 = vpack.c.b16 %v3907, %v3906
        %v3922 = vpack.c.b16 %v3909, %v3908
        %v3923 = vpack.c.b16 %v3911, %v3910
        %v3924 = vpack.c.b16 %v3913, %v3912
        %v3925 = vpack.c.b16 %v3915, %v3914
        %v3926 = vpack.c.b16 %v3917, %v3916
        %v3927 = vpack.c.b16 %v3919, %v3918
        %3936 = vmatprep.subr.bf16.mxu0 0
        %3937 = vmatpush1.bf16.msra.mxu0 %v3927
        %3938 = vmatprep.subr.bf16.mxu0 0
        %3939 = vmatpush1.bf16.msra.mxu0 %v3926
        %3940 = vmatprep.subr.bf16.mxu0 0
        %3941 = vmatpush1.bf16.msra.mxu0 %v3925
        %3942 = vmatprep.subr.bf16.mxu0 0
        %3943 = vmatpush1.bf16.msra.mxu0 %v3924
        %3944 = vmatprep.subr.bf16.mxu0 0
        %3945 = vmatpush1.bf16.msra.mxu0 %v3923
        %3946 = vmatprep.subr.bf16.mxu0 0
        %3947 = vmatpush1.bf16.msra.mxu0 %v3922
        %3948 = vmatprep.subr.bf16.mxu0 0
        %3949 = vmatpush1.bf16.msra.mxu0 %v3921
        %3950 = vmatprep.subr.bf16.mxu0 0
        %3951 = vmatpush1.bf16.msra.mxu0 %v3920
        %3952 = vmatprep.subr.bf16.mxu0 0
        %3953 = vmatpush2.bf16.msra.mxu0 0
        %3954 = vmatprep.subr.bf16.mxu0 0
        %3955 = vmatpush2.bf16.msra.mxu0 0
        %3956 = vmatprep.subr.bf16.mxu0 0
        %3957 = vmatpush2.bf16.msra.mxu0 0
        %3958 = vmatprep.subr.bf16.mxu0 0
        %3959 = vmatpush2.bf16.msra.mxu0 0
        %3960 = vmatprep.subr.bf16.mxu0 0
        %3961 = vmatpush2.bf16.msra.mxu0 0
        %3962 = vmatprep.subr.bf16.mxu0 0
        %3963 = vmatpush2.bf16.msra.mxu0 0
        %3964 = vmatprep.subr.bf16.mxu0 0
        %3965 = vmatpush2.bf16.msra.mxu0 0
        %3966 = vmatprep.subr.bf16.mxu0 0
        %3967 = vmatpush2.bf16.msra.mxu0 0
        %3968 = vmatprep.mubr.bf16.mxu0 0
        %3969 = vmatmul.mubr.bf16.gmra.mxu0 %v3877
        %v3970 = vpop.f32.mrf.mxu0
        %v3971 = vadd.f32 0.0, %v3970
        %v3972 = vpop.f32.mrf.mxu0
        %v3973 = vpop.f32.mrf.mxu0
        %v3974 = vadd.f32 0.0, %v3973
        %v3975 = vpop.f32.mrf.mxu0
        %3976 = vmatprep.mubr.bf16.mxu0 0
        %3977 = vmatmul.mubr.bf16.gmra.mxu0 %v3885
        %v3978 = vpop.f32.mrf.mxu0
        %v3979 = vadd.f32 0.0, %v3978
        %v3980 = vpop.f32.mrf.mxu0
        %v3981 = vpop.f32.mrf.mxu0
        %v3982 = vadd.f32 0.0, %v3981
        %v3983 = vpop.f32.mrf.mxu0
        %3984 = vdwg.mxu0
        %v3985 = vadd.f32 %v3827, %v3971
        %v3986 = vadd.f32 %v3828, %v3974
        %v3987 = vadd.f32 %v3829, %v3979
        %v3988 = vadd.f32 %v3830, %v3982
        %v3989 = vld [vmem:[%s247 + $0x3f8] sm:$0xc]
        %v3990 = vld [vmem:[%s247 + $0x408] sm:$0x3]
        %s3991 = scalar_lea.vmem %s1, 1600
        %v3992 = vld [vmem:[%s3991] sm:$0xf]
        %v3993 = vld [vmem:[%s3991 + $0x4] sm:$0xf]
        %v3994 = vld [vmem:[%s3991 + $0x8] sm:$0xf]
        %v3995 = vld [vmem:[%s3991 + $0xc] sm:$0xf]
        %v3996 = vld [vmem:[%s3991 + $0x10] sm:$0xf]
        %v3997 = vld [vmem:[%s3991 + $0x14] sm:$0xf]
        %v3998 = vld [vmem:[%s3991 + $0x18] sm:$0xf]
        %v3999 = vld [vmem:[%s3991 + $0x1c] sm:$0xf]
        %v4000 = vld [vmem:[%s3991 + $0x20] sm:$0xf]
        %v4001 = vld [vmem:[%s3991 + $0x24] sm:$0xf]
        %v4002 = vld [vmem:[%s3991 + $0x28] sm:$0xf]
        %v4003 = vld [vmem:[%s3991 + $0x2c] sm:$0xf]
        %v4004 = vld [vmem:[%s3991 + $0x30] sm:$0xf]
        %v4005 = vld [vmem:[%s3991 + $0x34] sm:$0xf]
        %v4006 = vld [vmem:[%s3991 + $0x38] sm:$0xf]
        %v4007 = vld [vmem:[%s3991 + $0x3c] sm:$0xf]
        %v4010 = vunpack.c.l.b16 %v3989
        %v4011 = vunpack.c.l.b16 %v3990
        %v4012 = vpack.c.b16 %v3859, %v4010
        %v4013 = vpack.c.b16 %v4011, %v4011
        %v4014 = vrot.slane %v4012, 2
        %v4015 = vrot.slane %v3864, 2
        %v4016 = vsel %vm323, %v4014, %v4015
        %v4017 = vrot.slane %v4013, 2
        %v4018 = vsel %vm323, %v4015, %v4017
        %v4037 = vunpack.c.l.b16 %v3992
        %v4038 = vunpack.c.l.b16 %v3993
        %v4039 = vunpack.c.l.b16 %v3994
        %v4040 = vunpack.c.l.b16 %v3995
        %v4041 = vunpack.c.l.b16 %v3996
        %v4042 = vunpack.c.l.b16 %v3997
        %v4043 = vunpack.c.l.b16 %v3998
        %v4044 = vunpack.c.l.b16 %v3999
        %v4045 = vunpack.c.l.b16 %v4000
        %v4046 = vunpack.c.l.b16 %v4001
        %v4047 = vunpack.c.l.b16 %v4002
        %v4048 = vunpack.c.l.b16 %v4003
        %v4049 = vunpack.c.l.b16 %v4004
        %v4050 = vunpack.c.l.b16 %v4005
        %v4051 = vunpack.c.l.b16 %v4006
        %v4052 = vunpack.c.l.b16 %v4007
        %v4053 = vpack.c.b16 %v4038, %v4037
        %v4054 = vpack.c.b16 %v4040, %v4039
        %v4055 = vpack.c.b16 %v4042, %v4041
        %v4056 = vpack.c.b16 %v4044, %v4043
        %v4057 = vpack.c.b16 %v4046, %v4045
        %v4058 = vpack.c.b16 %v4048, %v4047
        %v4059 = vpack.c.b16 %v4050, %v4049
        %v4060 = vpack.c.b16 %v4052, %v4051
        %4069 = vmatprep.subr.bf16.mxu0 0
        %4070 = vmatpush1.bf16.msra.mxu0 %v4060
        %4071 = vmatprep.subr.bf16.mxu0 0
        %4072 = vmatpush1.bf16.msra.mxu0 %v4059
        %4073 = vmatprep.subr.bf16.mxu0 0
        %4074 = vmatpush1.bf16.msra.mxu0 %v4058
        %4075 = vmatprep.subr.bf16.mxu0 0
        %4076 = vmatpush1.bf16.msra.mxu0 %v4057
        %4077 = vmatprep.subr.bf16.mxu0 0
        %4078 = vmatpush1.bf16.msra.mxu0 %v4056
        %4079 = vmatprep.subr.bf16.mxu0 0
        %4080 = vmatpush1.bf16.msra.mxu0 %v4055
        %4081 = vmatprep.subr.bf16.mxu0 0
        %4082 = vmatpush1.bf16.msra.mxu0 %v4054
        %4083 = vmatprep.subr.bf16.mxu0 0
        %4084 = vmatpush1.bf16.msra.mxu0 %v4053
        %4085 = vmatprep.subr.bf16.mxu0 0
        %4086 = vmatpush2.bf16.msra.mxu0 0
        %4087 = vmatprep.subr.bf16.mxu0 0
        %4088 = vmatpush2.bf16.msra.mxu0 0
        %4089 = vmatprep.subr.bf16.mxu0 0
        %4090 = vmatpush2.bf16.msra.mxu0 0
        %4091 = vmatprep.subr.bf16.mxu0 0
        %4092 = vmatpush2.bf16.msra.mxu0 0
        %4093 = vmatprep.subr.bf16.mxu0 0
        %4094 = vmatpush2.bf16.msra.mxu0 0
        %4095 = vmatprep.subr.bf16.mxu0 0
        %4096 = vmatpush2.bf16.msra.mxu0 0
        %4097 = vmatprep.subr.bf16.mxu0 0
        %4098 = vmatpush2.bf16.msra.mxu0 0
        %4099 = vmatprep.subr.bf16.mxu0 0
        %4100 = vmatpush2.bf16.msra.mxu0 0
        %4101 = vmatprep.mubr.bf16.mxu0 0
        %4102 = vmatmul.mubr.bf16.gmra.mxu0 %v4016
        %v4103 = vpop.f32.mrf.mxu0
        %v4104 = vadd.f32 0.0, %v4103
        %v4105 = vpop.f32.mrf.mxu0
        %v4106 = vpop.f32.mrf.mxu0
        %v4107 = vadd.f32 0.0, %v4106
        %v4108 = vpop.f32.mrf.mxu0
        %4109 = vmatprep.mubr.bf16.mxu0 0
        %4110 = vmatmul.mubr.bf16.gmra.mxu0 %v4018
        %v4111 = vpop.f32.mrf.mxu0
        %v4112 = vadd.f32 0.0, %v4111
        %v4113 = vpop.f32.mrf.mxu0
        %v4114 = vpop.f32.mrf.mxu0
        %v4115 = vadd.f32 0.0, %v4114
        %v4116 = vpop.f32.mrf.mxu0
        %4117 = vdwg.mxu0
        %v4118 = vadd.f32 %v3985, %v4104
        %v4119 = vadd.f32 %v3986, %v4107
        %v4120 = vadd.f32 %v3987, %v4112
        %v4121 = vadd.f32 %v3988, %v4115
        %v4122 = vld [vmem:[%s247 + $0x3f8] sm:$0x8]
        %v4123 = vld [vmem:[%s247 + $0x408] sm:$0xf]
        %s4124 = scalar_lea.vmem %s1, 1664
        %v4125 = vld [vmem:[%s4124] sm:$0xf]
        %v4126 = vld [vmem:[%s4124 + $0x4] sm:$0xf]
        %v4127 = vld [vmem:[%s4124 + $0x8] sm:$0xf]
        %v4128 = vld [vmem:[%s4124 + $0xc] sm:$0xf]
        %v4129 = vld [vmem:[%s4124 + $0x10] sm:$0xf]
        %v4130 = vld [vmem:[%s4124 + $0x14] sm:$0xf]
        %v4131 = vld [vmem:[%s4124 + $0x18] sm:$0xf]
        %v4132 = vld [vmem:[%s4124 + $0x1c] sm:$0xf]
        %v4133 = vld [vmem:[%s4124 + $0x20] sm:$0xf]
        %v4134 = vld [vmem:[%s4124 + $0x24] sm:$0xf]
        %v4135 = vld [vmem:[%s4124 + $0x28] sm:$0xf]
        %v4136 = vld [vmem:[%s4124 + $0x2c] sm:$0xf]
        %v4137 = vld [vmem:[%s4124 + $0x30] sm:$0xf]
        %v4138 = vld [vmem:[%s4124 + $0x34] sm:$0xf]
        %v4139 = vld [vmem:[%s4124 + $0x38] sm:$0xf]
        %v4140 = vld [vmem:[%s4124 + $0x3c] sm:$0xf]
        %v4143 = vunpack.c.l.b16 %v4122
        %v4144 = vunpack.c.l.b16 %v4123
        %v4145 = vpack.c.b16 %v3859, %v4143
        %v4146 = vpack.c.b16 %v4144, %v4144
        %v4148 = vshrl.u32 %v4145, 16
        %v4150 = vrot.slane %v4148, 3
        %v4151 = vshll.u32 %v4145, 16
        %v4153 = vrot.slane %v4151, 4
        %v4154 = vor.u32 %v4150, %v4153
        %v4155 = vrot.slane %v3878, 3
        %v4156 = vrot.slane %v3874, 4
        %v4157 = vor.u32 %v4155, %v4156
        %v4158 = vsel %vm3266, %v4154, %v4157
        %v4160 = vshrl.u32 %v4146, 16
        %v4162 = vrot.slane %v4160, 3
        %v4163 = vshll.u32 %v4146, 16
        %v4165 = vrot.slane %v4163, 4
        %v4166 = vor.u32 %v4162, %v4165
        %v4167 = vsel %vm3266, %v4157, %v4166
        %v4186 = vunpack.c.l.b16 %v4125
        %v4187 = vunpack.c.l.b16 %v4126
        %v4188 = vunpack.c.l.b16 %v4127
        %v4189 = vunpack.c.l.b16 %v4128
        %v4190 = vunpack.c.l.b16 %v4129
        %v4191 = vunpack.c.l.b16 %v4130
        %v4192 = vunpack.c.l.b16 %v4131
        %v4193 = vunpack.c.l.b16 %v4132
        %v4194 = vunpack.c.l.b16 %v4133
        %v4195 = vunpack.c.l.b16 %v4134
        %v4196 = vunpack.c.l.b16 %v4135
        %v4197 = vunpack.c.l.b16 %v4136
        %v4198 = vunpack.c.l.b16 %v4137
        %v4199 = vunpack.c.l.b16 %v4138
        %v4200 = vunpack.c.l.b16 %v4139
        %v4201 = vunpack.c.l.b16 %v4140
        %v4202 = vpack.c.b16 %v4187, %v4186
        %v4203 = vpack.c.b16 %v4189, %v4188
        %v4204 = vpack.c.b16 %v4191, %v4190
        %v4205 = vpack.c.b16 %v4193, %v4192
        %v4206 = vpack.c.b16 %v4195, %v4194
        %v4207 = vpack.c.b16 %v4197, %v4196
        %v4208 = vpack.c.b16 %v4199, %v4198
        %v4209 = vpack.c.b16 %v4201, %v4200
        %4218 = vmatprep.subr.bf16.mxu0 0
        %4219 = vmatpush1.bf16.msra.mxu0 %v4209
        %4220 = vmatprep.subr.bf16.mxu0 0
        %4221 = vmatpush1.bf16.msra.mxu0 %v4208
        %4222 = vmatprep.subr.bf16.mxu0 0
        %4223 = vmatpush1.bf16.msra.mxu0 %v4207
        %4224 = vmatprep.subr.bf16.mxu0 0
        %4225 = vmatpush1.bf16.msra.mxu0 %v4206
        %4226 = vmatprep.subr.bf16.mxu0 0
        %4227 = vmatpush1.bf16.msra.mxu0 %v4205
        %4228 = vmatprep.subr.bf16.mxu0 0
        %4229 = vmatpush1.bf16.msra.mxu0 %v4204
        %4230 = vmatprep.subr.bf16.mxu0 0
        %4231 = vmatpush1.bf16.msra.mxu0 %v4203
        %4232 = vmatprep.subr.bf16.mxu0 0
        %4233 = vmatpush1.bf16.msra.mxu0 %v4202
        %4234 = vmatprep.subr.bf16.mxu0 0
        %4235 = vmatpush2.bf16.msra.mxu0 0
        %4236 = vmatprep.subr.bf16.mxu0 0
        %4237 = vmatpush2.bf16.msra.mxu0 0
        %4238 = vmatprep.subr.bf16.mxu0 0
        %4239 = vmatpush2.bf16.msra.mxu0 0
        %4240 = vmatprep.subr.bf16.mxu0 0
        %4241 = vmatpush2.bf16.msra.mxu0 0
        %4242 = vmatprep.subr.bf16.mxu0 0
        %4243 = vmatpush2.bf16.msra.mxu0 0
        %4244 = vmatprep.subr.bf16.mxu0 0
        %4245 = vmatpush2.bf16.msra.mxu0 0
        %4246 = vmatprep.subr.bf16.mxu0 0
        %4247 = vmatpush2.bf16.msra.mxu0 0
        %4248 = vmatprep.subr.bf16.mxu0 0
        %4249 = vmatpush2.bf16.msra.mxu0 0
        %4250 = vmatprep.mubr.bf16.mxu0 0
        %4251 = vmatmul.mubr.bf16.gmra.mxu0 %v4158
        %v4252 = vpop.f32.mrf.mxu0
        %v4253 = vadd.f32 0.0, %v4252
        %v4254 = vpop.f32.mrf.mxu0
        %v4255 = vpop.f32.mrf.mxu0
        %v4256 = vadd.f32 0.0, %v4255
        %v4257 = vpop.f32.mrf.mxu0
        %4258 = vmatprep.mubr.bf16.mxu0 0
        %4259 = vmatmul.mubr.bf16.gmra.mxu0 %v4167
        %v4260 = vpop.f32.mrf.mxu0
        %v4261 = vadd.f32 0.0, %v4260
        %v4262 = vpop.f32.mrf.mxu0
        %v4263 = vpop.f32.mrf.mxu0
        %v4264 = vadd.f32 0.0, %v4263
        %v4265 = vpop.f32.mrf.mxu0
        %4266 = vdwg.mxu0
        %v4267 = vadd.f32 %v4118, %v4253
        %v4268 = vadd.f32 %v4119, %v4256
        %v4269 = vadd.f32 %v4120, %v4261
        %v4270 = vadd.f32 %v4121, %v4264
        %v4271 = vpack.c.bf16 %v4268, %v4267
        %v4272 = vpack.c.bf16 %v4270, %v4269
        %v4275 = vunpack.c.l.b16 %v4271
        %v4276 = vunpack.c.h.b16 %v4271
        %v4277 = vunpack.c.l.b16 %v4272
        %v4278 = vunpack.c.h.b16 %v4272
        %v4279 = vpack.c.b16 %v4275, %v4275
        %v4280 = vpack.c.b16 %v4276, %v4276
        %v4281 = vpack.c.b16 %v4277, %v4277
        %v4282 = vpack.c.b16 %v4278, %v4278
        %s4287 = scalar_lea.vmem %s228, 32 [#allocation2]
        %4288 = vst [vmem:[%s4287] sm:$0xf] %v4279
        %4289 = vst [vmem:[%s4287 + $0x4] sm:$0xf] %v4280
        %4290 = vst [vmem:[%s4287 + $0x8] sm:$0xf] %v4281
        %4291 = vst [vmem:[%s4287 + $0xc] sm:$0xf] %v4282
        %v4292 = vmul.f32 %v4267, %v263
        %v4293 = vmul.f32 %v4268, %v264
        %v4294 = vmul.f32 %v4269, %v265
        %v4295 = vmul.f32 %v4270, %v266
        %v4296 = vadd.f32 %v4292, %v4293
        %v4297 = vadd.f32 %v4296, %v4294
        %v4298 = vadd.f32 %v4297, %v4295
        %v4299 = vrot.slane %v4298, 4
        %v4300 = vadd.f32 %v4298, %v4299
        %v4301 = vrot.slane %v4300, 2
        %v4302 = vadd.f32 %v4300, %v4301
        %v4303 = vrot.slane %v4302, 1
        %v4304 = vadd.f32 %v4302, %v4303
        %4305 = vst [vmem:[%s261 + $0x2] sm:$0x1] %v4304
        %v4306 = vmul.f32 %v4292, %v4267
        %v4307 = vmul.f32 %v4293, %v4268
        %v4308 = vmul.f32 %v4294, %v4269
        %v4309 = vmul.f32 %v4295, %v4270
        %v4310 = vadd.f32 %v4306, %v4307
        %v4311 = vadd.f32 %v4310, %v4308
        %v4312 = vadd.f32 %v4311, %v4309
        %v4313 = vrot.slane %v4312, 4
        %v4314 = vadd.f32 %v4312, %v4313
        %v4315 = vrot.slane %v4314, 2
        %v4316 = vadd.f32 %v4314, %v4315
        %v4317 = vrot.slane %v4316, 1
        %v4318 = vadd.f32 %v4316, %v4317
        %4319 = vst [vmem:[%s261 + $0x6] sm:$0x1] %v4318
        %v4320 = vld [vmem:[%s247] sm:$0xf]
        %v4321 = vld [vmem:[%s247 + $0x4] sm:$0xf]
        %v4322 = vld [vmem:[%s247 + $0x8] sm:$0xf]
        %v4323 = vld [vmem:[%s247 + $0xc] sm:$0xf]
        %s4324 = scalar_lea.vmem %s1, 1728
        %v4325 = vld [vmem:[%s4324] sm:$0xf]
        %v4326 = vld [vmem:[%s4324 + $0x4] sm:$0xf]
        %v4327 = vld [vmem:[%s4324 + $0x8] sm:$0xf]
        %v4328 = vld [vmem:[%s4324 + $0xc] sm:$0xf]
        %v4329 = vld [vmem:[%s4324 + $0x10] sm:$0xf]
        %v4330 = vld [vmem:[%s4324 + $0x14] sm:$0xf]
        %v4331 = vld [vmem:[%s4324 + $0x18] sm:$0xf]
        %v4332 = vld [vmem:[%s4324 + $0x1c] sm:$0xf]
        %v4333 = vld [vmem:[%s4324 + $0x20] sm:$0xf]
        %v4334 = vld [vmem:[%s4324 + $0x24] sm:$0xf]
        %v4335 = vld [vmem:[%s4324 + $0x28] sm:$0xf]
        %v4336 = vld [vmem:[%s4324 + $0x2c] sm:$0xf]
        %v4337 = vld [vmem:[%s4324 + $0x30] sm:$0xf]
        %v4338 = vld [vmem:[%s4324 + $0x34] sm:$0xf]
        %v4339 = vld [vmem:[%s4324 + $0x38] sm:$0xf]
        %v4340 = vld [vmem:[%s4324 + $0x3c] sm:$0xf]
        %v4341 = vld [vmem:[%s247 + $0xc0] sm:$0xc]
        %v4342 = vld [vmem:[%s247 + $0xc4] sm:$0xf]
        %v4343 = vld [vmem:[%s247 + $0xc8] sm:$0xf]
        %v4344 = vld [vmem:[%s247 + $0xcc] sm:$0xf]
        %v4345 = vld [vmem:[%s247 + $0xd0] sm:$0x3]
        %s4346 = scalar_lea.vmem %s1, 1792
        %v4347 = vld [vmem:[%s4346] sm:$0xf]
        %v4348 = vld [vmem:[%s4346 + $0x4] sm:$0xf]
        %v4349 = vld [vmem:[%s4346 + $0x8] sm:$0xf]
        %v4350 = vld [vmem:[%s4346 + $0xc] sm:$0xf]
        %v4351 = vld [vmem:[%s4346 + $0x10] sm:$0xf]
        %v4352 = vld [vmem:[%s4346 + $0x14] sm:$0xf]
        %v4353 = vld [vmem:[%s4346 + $0x18] sm:$0xf]
        %v4354 = vld [vmem:[%s4346 + $0x1c] sm:$0xf]
        %v4355 = vld [vmem:[%s4346 + $0x20] sm:$0xf]
        %v4356 = vld [vmem:[%s4346 + $0x24] sm:$0xf]
        %v4357 = vld [vmem:[%s4346 + $0x28] sm:$0xf]
        %v4358 = vld [vmem:[%s4346 + $0x2c] sm:$0xf]
        %v4359 = vld [vmem:[%s4346 + $0x30] sm:$0xf]
        %v4360 = vld [vmem:[%s4346 + $0x34] sm:$0xf]
        %v4361 = vld [vmem:[%s4346 + $0x38] sm:$0xf]
        %v4362 = vld [vmem:[%s4346 + $0x3c] sm:$0xf]
        %v4368 = vunpack.c.l.b16 %v4341
        %v4369 = vunpack.c.l.b16 %v4342
        %v4370 = vunpack.c.l.b16 %v4343
        %v4371 = vunpack.c.l.b16 %v4344
        %v4372 = vunpack.c.l.b16 %v4345
        %v4373 = vpack.c.b16 %v4369, %v4368
        %v4374 = vpack.c.b16 %v4371, %v4370
        %v4375 = vpack.c.b16 %v4372, %v4372
        %v4376 = vrot.slane %v4373, 2
        %v4377 = vrot.slane %v4374, 2
        %v4378 = vsel %vm323, %v4376, %v4377
        %v4379 = vrot.slane %v4375, 2
        %v4380 = vsel %vm323, %v4377, %v4379
        %v4399 = vunpack.c.l.b16 %v4347
        %v4400 = vunpack.c.l.b16 %v4348
        %v4401 = vunpack.c.l.b16 %v4349
        %v4402 = vunpack.c.l.b16 %v4350
        %v4403 = vunpack.c.l.b16 %v4351
        %v4404 = vunpack.c.l.b16 %v4352
        %v4405 = vunpack.c.l.b16 %v4353
        %v4406 = vunpack.c.l.b16 %v4354
        %v4407 = vunpack.c.l.b16 %v4355
        %v4408 = vunpack.c.l.b16 %v4356
        %v4409 = vunpack.c.l.b16 %v4357
        %v4410 = vunpack.c.l.b16 %v4358
        %v4411 = vunpack.c.l.b16 %v4359
        %v4412 = vunpack.c.l.b16 %v4360
        %v4413 = vunpack.c.l.b16 %v4361
        %v4414 = vunpack.c.l.b16 %v4362
        %v4415 = vpack.c.b16 %v4400, %v4399
        %v4416 = vpack.c.b16 %v4402, %v4401
        %v4417 = vpack.c.b16 %v4404, %v4403
        %v4418 = vpack.c.b16 %v4406, %v4405
        %v4419 = vpack.c.b16 %v4408, %v4407
        %v4420 = vpack.c.b16 %v4410, %v4409
        %v4421 = vpack.c.b16 %v4412, %v4411
        %v4422 = vpack.c.b16 %v4414, %v4413
        %4431 = vmatprep.subr.bf16.mxu0 0
        %4432 = vmatpush1.bf16.msra.mxu0 %v4422
        %4433 = vmatprep.subr.bf16.mxu0 0
        %4434 = vmatpush1.bf16.msra.mxu0 %v4421
        %4435 = vmatprep.subr.bf16.mxu0 0
        %4436 = vmatpush1.bf16.msra.mxu0 %v4420
        %4437 = vmatprep.subr.bf16.mxu0 0
        %4438 = vmatpush1.bf16.msra.mxu0 %v4419
        %4439 = vmatprep.subr.bf16.mxu0 0
        %4440 = vmatpush1.bf16.msra.mxu0 %v4418
        %4441 = vmatprep.subr.bf16.mxu0 0
        %4442 = vmatpush1.bf16.msra.mxu0 %v4417
        %4443 = vmatprep.subr.bf16.mxu0 0
        %4444 = vmatpush1.bf16.msra.mxu0 %v4416
        %4445 = vmatprep.subr.bf16.mxu0 0
        %4446 = vmatpush1.bf16.msra.mxu0 %v4415
        %4447 = vmatprep.subr.bf16.mxu0 0
        %4448 = vmatpush2.bf16.msra.mxu0 0
        %4449 = vmatprep.subr.bf16.mxu0 0
        %4450 = vmatpush2.bf16.msra.mxu0 0
        %4451 = vmatprep.subr.bf16.mxu0 0
        %4452 = vmatpush2.bf16.msra.mxu0 0
        %4453 = vmatprep.subr.bf16.mxu0 0
        %4454 = vmatpush2.bf16.msra.mxu0 0
        %4455 = vmatprep.subr.bf16.mxu0 0
        %4456 = vmatpush2.bf16.msra.mxu0 0
        %4457 = vmatprep.subr.bf16.mxu0 0
        %4458 = vmatpush2.bf16.msra.mxu0 0
        %4459 = vmatprep.subr.bf16.mxu0 0
        %4460 = vmatpush2.bf16.msra.mxu0 0
        %4461 = vmatprep.subr.bf16.mxu0 0
        %4462 = vmatpush2.bf16.msra.mxu0 0
        %4463 = vmatprep.mubr.bf16.mxu0 0
        %4464 = vmatmul.mubr.bf16.gmra.mxu0 %v4378
        %v4465 = vpop.f32.mrf.mxu0
        %v4466 = vadd.f32 0.0, %v4465
        %v4467 = vpop.f32.mrf.mxu0
        %v4468 = vpop.f32.mrf.mxu0
        %v4469 = vadd.f32 0.0, %v4468
        %v4470 = vpop.f32.mrf.mxu0
        %4471 = vmatprep.mubr.bf16.mxu0 0
        %4472 = vmatmul.mubr.bf16.gmra.mxu0 %v4380
        %v4473 = vpop.f32.mrf.mxu0
        %v4474 = vadd.f32 0.0, %v4473
        %v4475 = vpop.f32.mrf.mxu0
        %v4476 = vpop.f32.mrf.mxu0
        %v4477 = vadd.f32 0.0, %v4476
        %v4478 = vpop.f32.mrf.mxu0
        %4479 = vdwg.mxu0
        %v4484 = vunpack.c.l.b16 %v4320
        %v4485 = vunpack.c.l.b16 %v4321
        %v4486 = vunpack.c.l.b16 %v4322
        %v4487 = vunpack.c.l.b16 %v4323
        %v4488 = vpack.c.b16 %v4485, %v4484
        %v4489 = vpack.c.b16 %v4487, %v4486
        %v4508 = vunpack.c.l.b16 %v4325
        %v4509 = vunpack.c.l.b16 %v4326
        %v4510 = vunpack.c.l.b16 %v4327
        %v4511 = vunpack.c.l.b16 %v4328
        %v4512 = vunpack.c.l.b16 %v4329
        %v4513 = vunpack.c.l.b16 %v4330
        %v4514 = vunpack.c.l.b16 %v4331
        %v4515 = vunpack.c.l.b16 %v4332
        %v4516 = vunpack.c.l.b16 %v4333
        %v4517 = vunpack.c.l.b16 %v4334
        %v4518 = vunpack.c.l.b16 %v4335
        %v4519 = vunpack.c.l.b16 %v4336
        %v4520 = vunpack.c.l.b16 %v4337
        %v4521 = vunpack.c.l.b16 %v4338
        %v4522 = vunpack.c.l.b16 %v4339
        %v4523 = vunpack.c.l.b16 %v4340
        %v4524 = vpack.c.b16 %v4509, %v4508
        %v4525 = vpack.c.b16 %v4511, %v4510
        %v4526 = vpack.c.b16 %v4513, %v4512
        %v4527 = vpack.c.b16 %v4515, %v4514
        %v4528 = vpack.c.b16 %v4517, %v4516
        %v4529 = vpack.c.b16 %v4519, %v4518
        %v4530 = vpack.c.b16 %v4521, %v4520
        %v4531 = vpack.c.b16 %v4523, %v4522
        %4540 = vmatprep.subr.bf16.mxu0 0
        %4541 = vmatpush1.bf16.msra.mxu0 %v4531
        %4542 = vmatprep.subr.bf16.mxu0 0
        %4543 = vmatpush1.bf16.msra.mxu0 %v4530
        %4544 = vmatprep.subr.bf16.mxu0 0
        %4545 = vmatpush1.bf16.msra.mxu0 %v4529
        %4546 = vmatprep.subr.bf16.mxu0 0
        %4547 = vmatpush1.bf16.msra.mxu0 %v4528
        %4548 = vmatprep.subr.bf16.mxu0 0
        %4549 = vmatpush1.bf16.msra.mxu0 %v4527
        %4550 = vmatprep.subr.bf16.mxu0 0
        %4551 = vmatpush1.bf16.msra.mxu0 %v4526
        %4552 = vmatprep.subr.bf16.mxu0 0
        %4553 = vmatpush1.bf16.msra.mxu0 %v4525
        %4554 = vmatprep.subr.bf16.mxu0 0
        %4555 = vmatpush1.bf16.msra.mxu0 %v4524
        %4556 = vmatprep.subr.bf16.mxu0 0
        %4557 = vmatpush2.bf16.msra.mxu0 0
        %4558 = vmatprep.subr.bf16.mxu0 0
        %4559 = vmatpush2.bf16.msra.mxu0 0
        %4560 = vmatprep.subr.bf16.mxu0 0
        %4561 = vmatpush2.bf16.msra.mxu0 0
        %4562 = vmatprep.subr.bf16.mxu0 0
        %4563 = vmatpush2.bf16.msra.mxu0 0
        %4564 = vmatprep.subr.bf16.mxu0 0
        %4565 = vmatpush2.bf16.msra.mxu0 0
        %4566 = vmatprep.subr.bf16.mxu0 0
        %4567 = vmatpush2.bf16.msra.mxu0 0
        %4568 = vmatprep.subr.bf16.mxu0 0
        %4569 = vmatpush2.bf16.msra.mxu0 0
        %4570 = vmatprep.subr.bf16.mxu0 0
        %4571 = vmatpush2.bf16.msra.mxu0 0
        %4572 = vmatprep.mubr.bf16.mxu0 0
        %4573 = vmatmul.mubr.bf16.gmra.mxu0 %v4488
        %v4574 = vpop.f32.mrf.mxu0
        %v4575 = vadd.f32 %v4466, %v4574
        %v4576 = vpop.f32.mrf.mxu0
        %v4577 = vpop.f32.mrf.mxu0
        %v4578 = vadd.f32 %v4469, %v4577
        %v4579 = vpop.f32.mrf.mxu0
        %4580 = vmatprep.mubr.bf16.mxu0 0
        %4581 = vmatmul.mubr.bf16.gmra.mxu0 %v4489
        %v4582 = vpop.f32.mrf.mxu0
        %v4583 = vadd.f32 %v4474, %v4582
        %v4584 = vpop.f32.mrf.mxu0
        %v4585 = vpop.f32.mrf.mxu0
        %v4586 = vadd.f32 %v4477, %v4585
        %v4587 = vpop.f32.mrf.mxu0
        %4588 = vdwg.mxu0
        %v4589 = vld [vmem:[%s247 + $0x4] sm:$0xf]
        %v4590 = vld [vmem:[%s247 + $0x8] sm:$0xf]
        %v4591 = vld [vmem:[%s247 + $0xc] sm:$0xf]
        %v4592 = vld [vmem:[%s247 + $0x10] sm:$0xf]
        %v4593 = vld [vmem:[%s247 + $0x14] sm:$0x1]
        %s4594 = scalar_lea.vmem %s1, 1856
        %v4595 = vld [vmem:[%s4594] sm:$0xf]
        %v4596 = vld [vmem:[%s4594 + $0x4] sm:$0xf]
        %v4597 = vld [vmem:[%s4594 + $0x8] sm:$0xf]
        %v4598 = vld [vmem:[%s4594 + $0xc] sm:$0xf]
        %v4599 = vld [vmem:[%s4594 + $0x10] sm:$0xf]
        %v4600 = vld [vmem:[%s4594 + $0x14] sm:$0xf]
        %v4601 = vld [vmem:[%s4594 + $0x18] sm:$0xf]
        %v4602 = vld [vmem:[%s4594 + $0x1c] sm:$0xf]
        %v4603 = vld [vmem:[%s4594 + $0x20] sm:$0xf]
        %v4604 = vld [vmem:[%s4594 + $0x24] sm:$0xf]
        %v4605 = vld [vmem:[%s4594 + $0x28] sm:$0xf]
        %v4606 = vld [vmem:[%s4594 + $0x2c] sm:$0xf]
        %v4607 = vld [vmem:[%s4594 + $0x30] sm:$0xf]
        %v4608 = vld [vmem:[%s4594 + $0x34] sm:$0xf]
        %v4609 = vld [vmem:[%s4594 + $0x38] sm:$0xf]
        %v4610 = vld [vmem:[%s4594 + $0x3c] sm:$0xf]
        %v4616 = vunpack.c.l.b16 %v4589
        %v4617 = vunpack.c.l.b16 %v4590
        %v4618 = vunpack.c.l.b16 %v4591
        %v4619 = vunpack.c.l.b16 %v4592
        %v4620 = vunpack.c.l.b16 %v4593
        %v4621 = vpack.c.b16 %v4617, %v4616
        %v4622 = vpack.c.b16 %v4619, %v4618
        %v4623 = vpack.c.b16 %v4620, %v4620
        %v4625 = vshrl.u32 %v4621, 16
        %v4627 = vshll.u32 %v4621, 16
        %v4629 = vrot.slane %v4627, 1
        %v4630 = vor.u32 %v4625, %v4629
        %v4632 = vshll.u32 %v4622, 16
        %v4634 = vrot.slane %v4632, 1
        %v4635 = vsel %vm3121, %v4630, %v4634
        %v4636 = vshrl.u32 %v4622, 16
        %v4638 = vor.u32 %v4636, %v4634
        %v4640 = vshll.u32 %v4623, 16
        %v4642 = vrot.slane %v4640, 1
        %v4643 = vsel %vm3121, %v4638, %v4642
        %v4662 = vunpack.c.l.b16 %v4595
        %v4663 = vunpack.c.l.b16 %v4596
        %v4664 = vunpack.c.l.b16 %v4597
        %v4665 = vunpack.c.l.b16 %v4598
        %v4666 = vunpack.c.l.b16 %v4599
        %v4667 = vunpack.c.l.b16 %v4600
        %v4668 = vunpack.c.l.b16 %v4601
        %v4669 = vunpack.c.l.b16 %v4602
        %v4670 = vunpack.c.l.b16 %v4603
        %v4671 = vunpack.c.l.b16 %v4604
        %v4672 = vunpack.c.l.b16 %v4605
        %v4673 = vunpack.c.l.b16 %v4606
        %v4674 = vunpack.c.l.b16 %v4607
        %v4675 = vunpack.c.l.b16 %v4608
        %v4676 = vunpack.c.l.b16 %v4609
        %v4677 = vunpack.c.l.b16 %v4610
        %v4678 = vpack.c.b16 %v4663, %v4662
        %v4679 = vpack.c.b16 %v4665, %v4664
        %v4680 = vpack.c.b16 %v4667, %v4666
        %v4681 = vpack.c.b16 %v4669, %v4668
        %v4682 = vpack.c.b16 %v4671, %v4670
        %v4683 = vpack.c.b16 %v4673, %v4672
        %v4684 = vpack.c.b16 %v4675, %v4674
        %v4685 = vpack.c.b16 %v4677, %v4676
        %4694 = vmatprep.subr.bf16.mxu0 0
        %4695 = vmatpush1.bf16.msra.mxu0 %v4685
        %4696 = vmatprep.subr.bf16.mxu0 0
        %4697 = vmatpush1.bf16.msra.mxu0 %v4684
        %4698 = vmatprep.subr.bf16.mxu0 0
        %4699 = vmatpush1.bf16.msra.mxu0 %v4683
        %4700 = vmatprep.subr.bf16.mxu0 0
        %4701 = vmatpush1.bf16.msra.mxu0 %v4682
        %4702 = vmatprep.subr.bf16.mxu0 0
        %4703 = vmatpush1.bf16.msra.mxu0 %v4681
        %4704 = vmatprep.subr.bf16.mxu0 0
        %4705 = vmatpush1.bf16.msra.mxu0 %v4680
        %4706 = vmatprep.subr.bf16.mxu0 0
        %4707 = vmatpush1.bf16.msra.mxu0 %v4679
        %4708 = vmatprep.subr.bf16.mxu0 0
        %4709 = vmatpush1.bf16.msra.mxu0 %v4678
        %4710 = vmatprep.subr.bf16.mxu0 0
        %4711 = vmatpush2.bf16.msra.mxu0 0
        %4712 = vmatprep.subr.bf16.mxu0 0
        %4713 = vmatpush2.bf16.msra.mxu0 0
        %4714 = vmatprep.subr.bf16.mxu0 0
        %4715 = vmatpush2.bf16.msra.mxu0 0
        %4716 = vmatprep.subr.bf16.mxu0 0
        %4717 = vmatpush2.bf16.msra.mxu0 0
        %4718 = vmatprep.subr.bf16.mxu0 0
        %4719 = vmatpush2.bf16.msra.mxu0 0
        %4720 = vmatprep.subr.bf16.mxu0 0
        %4721 = vmatpush2.bf16.msra.mxu0 0
        %4722 = vmatprep.subr.bf16.mxu0 0
        %4723 = vmatpush2.bf16.msra.mxu0 0
        %4724 = vmatprep.subr.bf16.mxu0 0
        %4725 = vmatpush2.bf16.msra.mxu0 0
        %4726 = vmatprep.mubr.bf16.mxu0 0
        %4727 = vmatmul.mubr.bf16.gmra.mxu0 %v4635
        %v4728 = vpop.f32.mrf.mxu0
        %v4729 = vadd.f32 0.0, %v4728
        %v4730 = vpop.f32.mrf.mxu0
        %v4731 = vpop.f32.mrf.mxu0
        %v4732 = vadd.f32 0.0, %v4731
        %v4733 = vpop.f32.mrf.mxu0
        %4734 = vmatprep.mubr.bf16.mxu0 0
        %4735 = vmatmul.mubr.bf16.gmra.mxu0 %v4643
        %v4736 = vpop.f32.mrf.mxu0
        %v4737 = vadd.f32 0.0, %v4736
        %v4738 = vpop.f32.mrf.mxu0
        %v4739 = vpop.f32.mrf.mxu0
        %v4740 = vadd.f32 0.0, %v4739
        %v4741 = vpop.f32.mrf.mxu0
        %4742 = vdwg.mxu0
        %v4743 = vadd.f32 %v4575, %v4729
        %v4744 = vadd.f32 %v4578, %v4732
        %v4745 = vadd.f32 %v4583, %v4737
        %v4746 = vadd.f32 %v4586, %v4740
        %v4747 = vld [vmem:[%s247 + $0x320] sm:$0xf]
        %v4748 = vld [vmem:[%s247 + $0x324] sm:$0xf]
        %v4749 = vld [vmem:[%s247 + $0x328] sm:$0xf]
        %v4750 = vld [vmem:[%s247 + $0x32c] sm:$0xf]
        %s4751 = scalar_lea.vmem %s1, 1920
        %v4752 = vld [vmem:[%s4751] sm:$0xf]
        %v4753 = vld [vmem:[%s4751 + $0x4] sm:$0xf]
        %v4754 = vld [vmem:[%s4751 + $0x8] sm:$0xf]
        %v4755 = vld [vmem:[%s4751 + $0xc] sm:$0xf]
        %v4756 = vld [vmem:[%s4751 + $0x10] sm:$0xf]
        %v4757 = vld [vmem:[%s4751 + $0x14] sm:$0xf]
        %v4758 = vld [vmem:[%s4751 + $0x18] sm:$0xf]
        %v4759 = vld [vmem:[%s4751 + $0x1c] sm:$0xf]
        %v4760 = vld [vmem:[%s4751 + $0x20] sm:$0xf]
        %v4761 = vld [vmem:[%s4751 + $0x24] sm:$0xf]
        %v4762 = vld [vmem:[%s4751 + $0x28] sm:$0xf]
        %v4763 = vld [vmem:[%s4751 + $0x2c] sm:$0xf]
        %v4764 = vld [vmem:[%s4751 + $0x30] sm:$0xf]
        %v4765 = vld [vmem:[%s4751 + $0x34] sm:$0xf]
        %v4766 = vld [vmem:[%s4751 + $0x38] sm:$0xf]
        %v4767 = vld [vmem:[%s4751 + $0x3c] sm:$0xf]
        %v4772 = vunpack.c.l.b16 %v4747
        %v4773 = vunpack.c.l.b16 %v4748
        %v4774 = vunpack.c.l.b16 %v4749
        %v4775 = vunpack.c.l.b16 %v4750
        %v4776 = vpack.c.b16 %v4773, %v4772
        %v4777 = vpack.c.b16 %v4775, %v4774
        %v4796 = vunpack.c.l.b16 %v4752
        %v4797 = vunpack.c.l.b16 %v4753
        %v4798 = vunpack.c.l.b16 %v4754
        %v4799 = vunpack.c.l.b16 %v4755
        %v4800 = vunpack.c.l.b16 %v4756
        %v4801 = vunpack.c.l.b16 %v4757
        %v4802 = vunpack.c.l.b16 %v4758
        %v4803 = vunpack.c.l.b16 %v4759
        %v4804 = vunpack.c.l.b16 %v4760
        %v4805 = vunpack.c.l.b16 %v4761
        %v4806 = vunpack.c.l.b16 %v4762
        %v4807 = vunpack.c.l.b16 %v4763
        %v4808 = vunpack.c.l.b16 %v4764
        %v4809 = vunpack.c.l.b16 %v4765
        %v4810 = vunpack.c.l.b16 %v4766
        %v4811 = vunpack.c.l.b16 %v4767
        %v4812 = vpack.c.b16 %v4797, %v4796
        %v4813 = vpack.c.b16 %v4799, %v4798
        %v4814 = vpack.c.b16 %v4801, %v4800
        %v4815 = vpack.c.b16 %v4803, %v4802
        %v4816 = vpack.c.b16 %v4805, %v4804
        %v4817 = vpack.c.b16 %v4807, %v4806
        %v4818 = vpack.c.b16 %v4809, %v4808
        %v4819 = vpack.c.b16 %v4811, %v4810
        %4828 = vmatprep.subr.bf16.mxu0 0
        %4829 = vmatpush1.bf16.msra.mxu0 %v4819
        %4830 = vmatprep.subr.bf16.mxu0 0
        %4831 = vmatpush1.bf16.msra.mxu0 %v4818
        %4832 = vmatprep.subr.bf16.mxu0 0
        %4833 = vmatpush1.bf16.msra.mxu0 %v4817
        %4834 = vmatprep.subr.bf16.mxu0 0
        %4835 = vmatpush1.bf16.msra.mxu0 %v4816
        %4836 = vmatprep.subr.bf16.mxu0 0
        %4837 = vmatpush1.bf16.msra.mxu0 %v4815
        %4838 = vmatprep.subr.bf16.mxu0 0
        %4839 = vmatpush1.bf16.msra.mxu0 %v4814
        %4840 = vmatprep.subr.bf16.mxu0 0
        %4841 = vmatpush1.bf16.msra.mxu0 %v4813
        %4842 = vmatprep.subr.bf16.mxu0 0
        %4843 = vmatpush1.bf16.msra.mxu0 %v4812
        %4844 = vmatprep.subr.bf16.mxu0 0
        %4845 = vmatpush2.bf16.msra.mxu0 0
        %4846 = vmatprep.subr.bf16.mxu0 0
        %4847 = vmatpush2.bf16.msra.mxu0 0
        %4848 = vmatprep.subr.bf16.mxu0 0
        %4849 = vmatpush2.bf16.msra.mxu0 0
        %4850 = vmatprep.subr.bf16.mxu0 0
        %4851 = vmatpush2.bf16.msra.mxu0 0
        %4852 = vmatprep.subr.bf16.mxu0 0
        %4853 = vmatpush2.bf16.msra.mxu0 0
        %4854 = vmatprep.subr.bf16.mxu0 0
        %4855 = vmatpush2.bf16.msra.mxu0 0
        %4856 = vmatprep.subr.bf16.mxu0 0
        %4857 = vmatpush2.bf16.msra.mxu0 0
        %4858 = vmatprep.subr.bf16.mxu0 0
        %4859 = vmatpush2.bf16.msra.mxu0 0
        %4860 = vmatprep.mubr.bf16.mxu0 0
        %4861 = vmatmul.mubr.bf16.gmra.mxu0 %v4776
        %v4862 = vpop.f32.mrf.mxu0
        %v4863 = vadd.f32 0.0, %v4862
        %v4864 = vpop.f32.mrf.mxu0
        %v4865 = vpop.f32.mrf.mxu0
        %v4866 = vadd.f32 0.0, %v4865
        %v4867 = vpop.f32.mrf.mxu0
        %4868 = vmatprep.mubr.bf16.mxu0 0
        %4869 = vmatmul.mubr.bf16.gmra.mxu0 %v4777
        %v4870 = vpop.f32.mrf.mxu0
        %v4871 = vadd.f32 0.0, %v4870
        %v4872 = vpop.f32.mrf.mxu0
        %v4873 = vpop.f32.mrf.mxu0
        %v4874 = vadd.f32 0.0, %v4873
        %v4875 = vpop.f32.mrf.mxu0
        %4876 = vdwg.mxu0
        %v4877 = vadd.f32 %v4743, %v4863
        %v4878 = vadd.f32 %v4744, %v4866
        %v4879 = vadd.f32 %v4745, %v4871
        %v4880 = vadd.f32 %v4746, %v4874
        %v4881 = vld [vmem:[%s247 + $0x3e0] sm:$0xc]
        %v4882 = vld [vmem:[%s247 + $0x3e4] sm:$0xf]
        %v4883 = vld [vmem:[%s247 + $0x3e8] sm:$0xf]
        %v4884 = vld [vmem:[%s247 + $0x3ec] sm:$0xf]
        %v4885 = vld [vmem:[%s247 + $0x3f0] sm:$0x3]
        %s4886 = scalar_lea.vmem %s1, 1984
        %v4887 = vld [vmem:[%s4886] sm:$0xf]
        %v4888 = vld [vmem:[%s4886 + $0x4] sm:$0xf]
        %v4889 = vld [vmem:[%s4886 + $0x8] sm:$0xf]
        %v4890 = vld [vmem:[%s4886 + $0xc] sm:$0xf]
        %v4891 = vld [vmem:[%s4886 + $0x10] sm:$0xf]
        %v4892 = vld [vmem:[%s4886 + $0x14] sm:$0xf]
        %v4893 = vld [vmem:[%s4886 + $0x18] sm:$0xf]
        %v4894 = vld [vmem:[%s4886 + $0x1c] sm:$0xf]
        %v4895 = vld [vmem:[%s4886 + $0x20] sm:$0xf]
        %v4896 = vld [vmem:[%s4886 + $0x24] sm:$0xf]
        %v4897 = vld [vmem:[%s4886 + $0x28] sm:$0xf]
        %v4898 = vld [vmem:[%s4886 + $0x2c] sm:$0xf]
        %v4899 = vld [vmem:[%s4886 + $0x30] sm:$0xf]
        %v4900 = vld [vmem:[%s4886 + $0x34] sm:$0xf]
        %v4901 = vld [vmem:[%s4886 + $0x38] sm:$0xf]
        %v4902 = vld [vmem:[%s4886 + $0x3c] sm:$0xf]
        %v4908 = vunpack.c.l.b16 %v4881
        %v4909 = vunpack.c.l.b16 %v4882
        %v4910 = vunpack.c.l.b16 %v4883
        %v4911 = vunpack.c.l.b16 %v4884
        %v4912 = vunpack.c.l.b16 %v4885
        %v4913 = vpack.c.b16 %v4909, %v4908
        %v4914 = vpack.c.b16 %v4911, %v4910
        %v4915 = vpack.c.b16 %v4912, %v4912
        %v4916 = vrot.slane %v4913, 2
        %v4917 = vrot.slane %v4914, 2
        %v4918 = vsel %vm323, %v4916, %v4917
        %v4919 = vrot.slane %v4915, 2
        %v4920 = vsel %vm323, %v4917, %v4919
        %v4939 = vunpack.c.l.b16 %v4887
        %v4940 = vunpack.c.l.b16 %v4888
        %v4941 = vunpack.c.l.b16 %v4889
        %v4942 = vunpack.c.l.b16 %v4890
        %v4943 = vunpack.c.l.b16 %v4891
        %v4944 = vunpack.c.l.b16 %v4892
        %v4945 = vunpack.c.l.b16 %v4893
        %v4946 = vunpack.c.l.b16 %v4894
        %v4947 = vunpack.c.l.b16 %v4895
        %v4948 = vunpack.c.l.b16 %v4896
        %v4949 = vunpack.c.l.b16 %v4897
        %v4950 = vunpack.c.l.b16 %v4898
        %v4951 = vunpack.c.l.b16 %v4899
        %v4952 = vunpack.c.l.b16 %v4900
        %v4953 = vunpack.c.l.b16 %v4901
        %v4954 = vunpack.c.l.b16 %v4902
        %v4955 = vpack.c.b16 %v4940, %v4939
        %v4956 = vpack.c.b16 %v4942, %v4941
        %v4957 = vpack.c.b16 %v4944, %v4943
        %v4958 = vpack.c.b16 %v4946, %v4945
        %v4959 = vpack.c.b16 %v4948, %v4947
        %v4960 = vpack.c.b16 %v4950, %v4949
        %v4961 = vpack.c.b16 %v4952, %v4951
        %v4962 = vpack.c.b16 %v4954, %v4953
        %4971 = vmatprep.subr.bf16.mxu0 0
        %4972 = vmatpush1.bf16.msra.mxu0 %v4962
        %4973 = vmatprep.subr.bf16.mxu0 0
        %4974 = vmatpush1.bf16.msra.mxu0 %v4961
        %4975 = vmatprep.subr.bf16.mxu0 0
        %4976 = vmatpush1.bf16.msra.mxu0 %v4960
        %4977 = vmatprep.subr.bf16.mxu0 0
        %4978 = vmatpush1.bf16.msra.mxu0 %v4959
        %4979 = vmatprep.subr.bf16.mxu0 0
        %4980 = vmatpush1.bf16.msra.mxu0 %v4958
        %4981 = vmatprep.subr.bf16.mxu0 0
        %4982 = vmatpush1.bf16.msra.mxu0 %v4957
        %4983 = vmatprep.subr.bf16.mxu0 0
        %4984 = vmatpush1.bf16.msra.mxu0 %v4956
        %4985 = vmatprep.subr.bf16.mxu0 0
        %4986 = vmatpush1.bf16.msra.mxu0 %v4955
        %4987 = vmatprep.subr.bf16.mxu0 0
        %4988 = vmatpush2.bf16.msra.mxu0 0
        %4989 = vmatprep.subr.bf16.mxu0 0
        %4990 = vmatpush2.bf16.msra.mxu0 0
        %4991 = vmatprep.subr.bf16.mxu0 0
        %4992 = vmatpush2.bf16.msra.mxu0 0
        %4993 = vmatprep.subr.bf16.mxu0 0
        %4994 = vmatpush2.bf16.msra.mxu0 0
        %4995 = vmatprep.subr.bf16.mxu0 0
        %4996 = vmatpush2.bf16.msra.mxu0 0
        %4997 = vmatprep.subr.bf16.mxu0 0
        %4998 = vmatpush2.bf16.msra.mxu0 0
        %4999 = vmatprep.subr.bf16.mxu0 0
        %5000 = vmatpush2.bf16.msra.mxu0 0
        %5001 = vmatprep.subr.bf16.mxu0 0
        %5002 = vmatpush2.bf16.msra.mxu0 0
        %5003 = vmatprep.mubr.bf16.mxu0 0
        %5004 = vmatmul.mubr.bf16.gmra.mxu0 %v4918
        %v5005 = vpop.f32.mrf.mxu0
        %v5006 = vadd.f32 0.0, %v5005
        %v5007 = vpop.f32.mrf.mxu0
        %v5008 = vpop.f32.mrf.mxu0
        %v5009 = vadd.f32 0.0, %v5008
        %v5010 = vpop.f32.mrf.mxu0
        %5011 = vmatprep.mubr.bf16.mxu0 0
        %5012 = vmatmul.mubr.bf16.gmra.mxu0 %v4920
        %v5013 = vpop.f32.mrf.mxu0
        %v5014 = vadd.f32 0.0, %v5013
        %v5015 = vpop.f32.mrf.mxu0
        %v5016 = vpop.f32.mrf.mxu0
        %v5017 = vadd.f32 0.0, %v5016
        %v5018 = vpop.f32.mrf.mxu0
        %5019 = vdwg.mxu0
        %v5020 = vadd.f32 %v4877, %v5006
        %v5021 = vadd.f32 %v4878, %v5009
        %v5022 = vadd.f32 %v4879, %v5014
        %v5023 = vadd.f32 %v4880, %v5017
        %v5024 = vld [vmem:[%s247 + $0x324] sm:$0xf]
        %v5025 = vld [vmem:[%s247 + $0x328] sm:$0xf]
        %v5026 = vld [vmem:[%s247 + $0x32c] sm:$0xf]
        %v5027 = vld [vmem:[%s247 + $0x330] sm:$0xf]
        %v5028 = vld [vmem:[%s247 + $0x334] sm:$0x1]
        %s5029 = scalar_lea.vmem %s1, 2048
        %v5030 = vld [vmem:[%s5029] sm:$0xf]
        %v5031 = vld [vmem:[%s5029 + $0x4] sm:$0xf]
        %v5032 = vld [vmem:[%s5029 + $0x8] sm:$0xf]
        %v5033 = vld [vmem:[%s5029 + $0xc] sm:$0xf]
        %v5034 = vld [vmem:[%s5029 + $0x10] sm:$0xf]
        %v5035 = vld [vmem:[%s5029 + $0x14] sm:$0xf]
        %v5036 = vld [vmem:[%s5029 + $0x18] sm:$0xf]
        %v5037 = vld [vmem:[%s5029 + $0x1c] sm:$0xf]
        %v5038 = vld [vmem:[%s5029 + $0x20] sm:$0xf]
        %v5039 = vld [vmem:[%s5029 + $0x24] sm:$0xf]
        %v5040 = vld [vmem:[%s5029 + $0x28] sm:$0xf]
        %v5041 = vld [vmem:[%s5029 + $0x2c] sm:$0xf]
        %v5042 = vld [vmem:[%s5029 + $0x30] sm:$0xf]
        %v5043 = vld [vmem:[%s5029 + $0x34] sm:$0xf]
        %v5044 = vld [vmem:[%s5029 + $0x38] sm:$0xf]
        %v5045 = vld [vmem:[%s5029 + $0x3c] sm:$0xf]
        %v5051 = vunpack.c.l.b16 %v5024
        %v5052 = vunpack.c.l.b16 %v5025
        %v5053 = vunpack.c.l.b16 %v5026
        %v5054 = vunpack.c.l.b16 %v5027
        %v5055 = vunpack.c.l.b16 %v5028
        %v5056 = vpack.c.b16 %v5052, %v5051
        %v5057 = vpack.c.b16 %v5054, %v5053
        %v5058 = vpack.c.b16 %v5055, %v5055
        %v5060 = vshrl.u32 %v5056, 16
        %v5062 = vshll.u32 %v5056, 16
        %v5064 = vrot.slane %v5062, 1
        %v5065 = vor.u32 %v5060, %v5064
        %v5067 = vshll.u32 %v5057, 16
        %v5069 = vrot.slane %v5067, 1
        %v5070 = vsel %vm3121, %v5065, %v5069
        %v5071 = vshrl.u32 %v5057, 16
        %v5073 = vor.u32 %v5071, %v5069
        %v5075 = vshll.u32 %v5058, 16
        %v5077 = vrot.slane %v5075, 1
        %v5078 = vsel %vm3121, %v5073, %v5077
        %v5097 = vunpack.c.l.b16 %v5030
        %v5098 = vunpack.c.l.b16 %v5031
        %v5099 = vunpack.c.l.b16 %v5032
        %v5100 = vunpack.c.l.b16 %v5033
        %v5101 = vunpack.c.l.b16 %v5034
        %v5102 = vunpack.c.l.b16 %v5035
        %v5103 = vunpack.c.l.b16 %v5036
        %v5104 = vunpack.c.l.b16 %v5037
        %v5105 = vunpack.c.l.b16 %v5038
        %v5106 = vunpack.c.l.b16 %v5039
        %v5107 = vunpack.c.l.b16 %v5040
        %v5108 = vunpack.c.l.b16 %v5041
        %v5109 = vunpack.c.l.b16 %v5042
        %v5110 = vunpack.c.l.b16 %v5043
        %v5111 = vunpack.c.l.b16 %v5044
        %v5112 = vunpack.c.l.b16 %v5045
        %v5113 = vpack.c.b16 %v5098, %v5097
        %v5114 = vpack.c.b16 %v5100, %v5099
        %v5115 = vpack.c.b16 %v5102, %v5101
        %v5116 = vpack.c.b16 %v5104, %v5103
        %v5117 = vpack.c.b16 %v5106, %v5105
        %v5118 = vpack.c.b16 %v5108, %v5107
        %v5119 = vpack.c.b16 %v5110, %v5109
        %v5120 = vpack.c.b16 %v5112, %v5111
        %5129 = vmatprep.subr.bf16.mxu0 0
        %5130 = vmatpush1.bf16.msra.mxu0 %v5120
        %5131 = vmatprep.subr.bf16.mxu0 0
        %5132 = vmatpush1.bf16.msra.mxu0 %v5119
        %5133 = vmatprep.subr.bf16.mxu0 0
        %5134 = vmatpush1.bf16.msra.mxu0 %v5118
        %5135 = vmatprep.subr.bf16.mxu0 0
        %5136 = vmatpush1.bf16.msra.mxu0 %v5117
        %5137 = vmatprep.subr.bf16.mxu0 0
        %5138 = vmatpush1.bf16.msra.mxu0 %v5116
        %5139 = vmatprep.subr.bf16.mxu0 0
        %5140 = vmatpush1.bf16.msra.mxu0 %v5115
        %5141 = vmatprep.subr.bf16.mxu0 0
        %5142 = vmatpush1.bf16.msra.mxu0 %v5114
        %5143 = vmatprep.subr.bf16.mxu0 0
        %5144 = vmatpush1.bf16.msra.mxu0 %v5113
        %5145 = vmatprep.subr.bf16.mxu0 0
        %5146 = vmatpush2.bf16.msra.mxu0 0
        %5147 = vmatprep.subr.bf16.mxu0 0
        %5148 = vmatpush2.bf16.msra.mxu0 0
        %5149 = vmatprep.subr.bf16.mxu0 0
        %5150 = vmatpush2.bf16.msra.mxu0 0
        %5151 = vmatprep.subr.bf16.mxu0 0
        %5152 = vmatpush2.bf16.msra.mxu0 0
        %5153 = vmatprep.subr.bf16.mxu0 0
        %5154 = vmatpush2.bf16.msra.mxu0 0
        %5155 = vmatprep.subr.bf16.mxu0 0
        %5156 = vmatpush2.bf16.msra.mxu0 0
        %5157 = vmatprep.subr.bf16.mxu0 0
        %5158 = vmatpush2.bf16.msra.mxu0 0
        %5159 = vmatprep.subr.bf16.mxu0 0
        %5160 = vmatpush2.bf16.msra.mxu0 0
        %5161 = vmatprep.mubr.bf16.mxu0 0
        %5162 = vmatmul.mubr.bf16.gmra.mxu0 %v5070
        %v5163 = vpop.f32.mrf.mxu0
        %v5164 = vadd.f32 0.0, %v5163
        %v5165 = vpop.f32.mrf.mxu0
        %v5166 = vpop.f32.mrf.mxu0
        %v5167 = vadd.f32 0.0, %v5166
        %v5168 = vpop.f32.mrf.mxu0
        %5169 = vmatprep.mubr.bf16.mxu0 0
        %5170 = vmatmul.mubr.bf16.gmra.mxu0 %v5078
        %v5171 = vpop.f32.mrf.mxu0
        %v5172 = vadd.f32 0.0, %v5171
        %v5173 = vpop.f32.mrf.mxu0
        %v5174 = vpop.f32.mrf.mxu0
        %v5175 = vadd.f32 0.0, %v5174
        %v5176 = vpop.f32.mrf.mxu0
        %5177 = vdwg.mxu0
        %v5178 = vadd.f32 %v5020, %v5164
        %v5179 = vadd.f32 %v5021, %v5167
        %v5180 = vadd.f32 %v5022, %v5172
        %v5181 = vadd.f32 %v5023, %v5175
        %v5182 = vld [vmem:[%s247 + $0x48] sm:$0xf]
        %v5183 = vld [vmem:[%s247 + $0x4c] sm:$0xf]
        %v5184 = vld [vmem:[%s247 + $0x50] sm:$0xf]
        %v5185 = vld [vmem:[%s247 + $0x54] sm:$0xf]
        %s5186 = scalar_lea.vmem %s1, 2112
        %v5187 = vld [vmem:[%s5186] sm:$0xf]
        %v5188 = vld [vmem:[%s5186 + $0x4] sm:$0xf]
        %v5189 = vld [vmem:[%s5186 + $0x8] sm:$0xf]
        %v5190 = vld [vmem:[%s5186 + $0xc] sm:$0xf]
        %v5191 = vld [vmem:[%s5186 + $0x10] sm:$0xf]
        %v5192 = vld [vmem:[%s5186 + $0x14] sm:$0xf]
        %v5193 = vld [vmem:[%s5186 + $0x18] sm:$0xf]
        %v5194 = vld [vmem:[%s5186 + $0x1c] sm:$0xf]
        %v5195 = vld [vmem:[%s5186 + $0x20] sm:$0xf]
        %v5196 = vld [vmem:[%s5186 + $0x24] sm:$0xf]
        %v5197 = vld [vmem:[%s5186 + $0x28] sm:$0xf]
        %v5198 = vld [vmem:[%s5186 + $0x2c] sm:$0xf]
        %v5199 = vld [vmem:[%s5186 + $0x30] sm:$0xf]
        %v5200 = vld [vmem:[%s5186 + $0x34] sm:$0xf]
        %v5201 = vld [vmem:[%s5186 + $0x38] sm:$0xf]
        %v5202 = vld [vmem:[%s5186 + $0x3c] sm:$0xf]
        %v5207 = vunpack.c.l.b16 %v5182
        %v5208 = vunpack.c.l.b16 %v5183
        %v5209 = vunpack.c.l.b16 %v5184
        %v5210 = vunpack.c.l.b16 %v5185
        %v5211 = vpack.c.b16 %v5208, %v5207
        %v5212 = vpack.c.b16 %v5210, %v5209
        %v5231 = vunpack.c.l.b16 %v5187
        %v5232 = vunpack.c.l.b16 %v5188
        %v5233 = vunpack.c.l.b16 %v5189
        %v5234 = vunpack.c.l.b16 %v5190
        %v5235 = vunpack.c.l.b16 %v5191
        %v5236 = vunpack.c.l.b16 %v5192
        %v5237 = vunpack.c.l.b16 %v5193
        %v5238 = vunpack.c.l.b16 %v5194
        %v5239 = vunpack.c.l.b16 %v5195
        %v5240 = vunpack.c.l.b16 %v5196
        %v5241 = vunpack.c.l.b16 %v5197
        %v5242 = vunpack.c.l.b16 %v5198
        %v5243 = vunpack.c.l.b16 %v5199
        %v5244 = vunpack.c.l.b16 %v5200
        %v5245 = vunpack.c.l.b16 %v5201
        %v5246 = vunpack.c.l.b16 %v5202
        %v5247 = vpack.c.b16 %v5232, %v5231
        %v5248 = vpack.c.b16 %v5234, %v5233
        %v5249 = vpack.c.b16 %v5236, %v5235
        %v5250 = vpack.c.b16 %v5238, %v5237
        %v5251 = vpack.c.b16 %v5240, %v5239
        %v5252 = vpack.c.b16 %v5242, %v5241
        %v5253 = vpack.c.b16 %v5244, %v5243
        %v5254 = vpack.c.b16 %v5246, %v5245
        %5263 = vmatprep.subr.bf16.mxu0 0
        %5264 = vmatpush1.bf16.msra.mxu0 %v5254
        %5265 = vmatprep.subr.bf16.mxu0 0
        %5266 = vmatpush1.bf16.msra.mxu0 %v5253
        %5267 = vmatprep.subr.bf16.mxu0 0
        %5268 = vmatpush1.bf16.msra.mxu0 %v5252
        %5269 = vmatprep.subr.bf16.mxu0 0
        %5270 = vmatpush1.bf16.msra.mxu0 %v5251
        %5271 = vmatprep.subr.bf16.mxu0 0
        %5272 = vmatpush1.bf16.msra.mxu0 %v5250
        %5273 = vmatprep.subr.bf16.mxu0 0
        %5274 = vmatpush1.bf16.msra.mxu0 %v5249
        %5275 = vmatprep.subr.bf16.mxu0 0
        %5276 = vmatpush1.bf16.msra.mxu0 %v5248
        %5277 = vmatprep.subr.bf16.mxu0 0
        %5278 = vmatpush1.bf16.msra.mxu0 %v5247
        %5279 = vmatprep.subr.bf16.mxu0 0
        %5280 = vmatpush2.bf16.msra.mxu0 0
        %5281 = vmatprep.subr.bf16.mxu0 0
        %5282 = vmatpush2.bf16.msra.mxu0 0
        %5283 = vmatprep.subr.bf16.mxu0 0
        %5284 = vmatpush2.bf16.msra.mxu0 0
        %5285 = vmatprep.subr.bf16.mxu0 0
        %5286 = vmatpush2.bf16.msra.mxu0 0
        %5287 = vmatprep.subr.bf16.mxu0 0
        %5288 = vmatpush2.bf16.msra.mxu0 0
        %5289 = vmatprep.subr.bf16.mxu0 0
        %5290 = vmatpush2.bf16.msra.mxu0 0
        %5291 = vmatprep.subr.bf16.mxu0 0
        %5292 = vmatpush2.bf16.msra.mxu0 0
        %5293 = vmatprep.subr.bf16.mxu0 0
        %5294 = vmatpush2.bf16.msra.mxu0 0
        %5295 = vmatprep.mubr.bf16.mxu0 0
        %5296 = vmatmul.mubr.bf16.gmra.mxu0 %v5211
        %v5297 = vpop.f32.mrf.mxu0
        %v5298 = vadd.f32 0.0, %v5297
        %v5299 = vpop.f32.mrf.mxu0
        %v5300 = vpop.f32.mrf.mxu0
        %v5301 = vadd.f32 0.0, %v5300
        %v5302 = vpop.f32.mrf.mxu0
        %5303 = vmatprep.mubr.bf16.mxu0 0
        %5304 = vmatmul.mubr.bf16.gmra.mxu0 %v5212
        %v5305 = vpop.f32.mrf.mxu0
        %v5306 = vadd.f32 0.0, %v5305
        %v5307 = vpop.f32.mrf.mxu0
        %v5308 = vpop.f32.mrf.mxu0
        %v5309 = vadd.f32 0.0, %v5308
        %v5310 = vpop.f32.mrf.mxu0
        %5311 = vdwg.mxu0
        %v5312 = vadd.f32 %v5178, %v5298
        %v5313 = vadd.f32 %v5179, %v5301
        %v5314 = vadd.f32 %v5180, %v5306
        %v5315 = vadd.f32 %v5181, %v5309
        %v5316 = vld [vmem:[%s247 + $0x108] sm:$0xc]
        %v5317 = vld [vmem:[%s247 + $0x10c] sm:$0xf]
        %v5318 = vld [vmem:[%s247 + $0x110] sm:$0xf]
        %v5319 = vld [vmem:[%s247 + $0x114] sm:$0xf]
        %v5320 = vld [vmem:[%s247 + $0x118] sm:$0x3]
        %s5321 = scalar_lea.vmem %s1, 2176
        %v5322 = vld [vmem:[%s5321] sm:$0xf]
        %v5323 = vld [vmem:[%s5321 + $0x4] sm:$0xf]
        %v5324 = vld [vmem:[%s5321 + $0x8] sm:$0xf]
        %v5325 = vld [vmem:[%s5321 + $0xc] sm:$0xf]
        %v5326 = vld [vmem:[%s5321 + $0x10] sm:$0xf]
        %v5327 = vld [vmem:[%s5321 + $0x14] sm:$0xf]
        %v5328 = vld [vmem:[%s5321 + $0x18] sm:$0xf]
        %v5329 = vld [vmem:[%s5321 + $0x1c] sm:$0xf]
        %v5330 = vld [vmem:[%s5321 + $0x20] sm:$0xf]
        %v5331 = vld [vmem:[%s5321 + $0x24] sm:$0xf]
        %v5332 = vld [vmem:[%s5321 + $0x28] sm:$0xf]
        %v5333 = vld [vmem:[%s5321 + $0x2c] sm:$0xf]
        %v5334 = vld [vmem:[%s5321 + $0x30] sm:$0xf]
        %v5335 = vld [vmem:[%s5321 + $0x34] sm:$0xf]
        %v5336 = vld [vmem:[%s5321 + $0x38] sm:$0xf]
        %v5337 = vld [vmem:[%s5321 + $0x3c] sm:$0xf]
        %v5343 = vunpack.c.l.b16 %v5316
        %v5344 = vunpack.c.l.b16 %v5317
        %v5345 = vunpack.c.l.b16 %v5318
        %v5346 = vunpack.c.l.b16 %v5319
        %v5347 = vunpack.c.l.b16 %v5320
        %v5348 = vpack.c.b16 %v5344, %v5343
        %v5349 = vpack.c.b16 %v5346, %v5345
        %v5350 = vpack.c.b16 %v5347, %v5347
        %v5351 = vrot.slane %v5348, 2
        %v5352 = vrot.slane %v5349, 2
        %v5353 = vsel %vm323, %v5351, %v5352
        %v5354 = vrot.slane %v5350, 2
        %v5355 = vsel %vm323, %v5352, %v5354
        %v5374 = vunpack.c.l.b16 %v5322
        %v5375 = vunpack.c.l.b16 %v5323
        %v5376 = vunpack.c.l.b16 %v5324
        %v5377 = vunpack.c.l.b16 %v5325
        %v5378 = vunpack.c.l.b16 %v5326
        %v5379 = vunpack.c.l.b16 %v5327
        %v5380 = vunpack.c.l.b16 %v5328
        %v5381 = vunpack.c.l.b16 %v5329
        %v5382 = vunpack.c.l.b16 %v5330
        %v5383 = vunpack.c.l.b16 %v5331
        %v5384 = vunpack.c.l.b16 %v5332
        %v5385 = vunpack.c.l.b16 %v5333
        %v5386 = vunpack.c.l.b16 %v5334
        %v5387 = vunpack.c.l.b16 %v5335
        %v5388 = vunpack.c.l.b16 %v5336
        %v5389 = vunpack.c.l.b16 %v5337
        %v5390 = vpack.c.b16 %v5375, %v5374
        %v5391 = vpack.c.b16 %v5377, %v5376
        %v5392 = vpack.c.b16 %v5379, %v5378
        %v5393 = vpack.c.b16 %v5381, %v5380
        %v5394 = vpack.c.b16 %v5383, %v5382
        %v5395 = vpack.c.b16 %v5385, %v5384
        %v5396 = vpack.c.b16 %v5387, %v5386
        %v5397 = vpack.c.b16 %v5389, %v5388
        %5406 = vmatprep.subr.bf16.mxu0 0
        %5407 = vmatpush1.bf16.msra.mxu0 %v5397
        %5408 = vmatprep.subr.bf16.mxu0 0
        %5409 = vmatpush1.bf16.msra.mxu0 %v5396
        %5410 = vmatprep.subr.bf16.mxu0 0
        %5411 = vmatpush1.bf16.msra.mxu0 %v5395
        %5412 = vmatprep.subr.bf16.mxu0 0
        %5413 = vmatpush1.bf16.msra.mxu0 %v5394
        %5414 = vmatprep.subr.bf16.mxu0 0
        %5415 = vmatpush1.bf16.msra.mxu0 %v5393
        %5416 = vmatprep.subr.bf16.mxu0 0
        %5417 = vmatpush1.bf16.msra.mxu0 %v5392
        %5418 = vmatprep.subr.bf16.mxu0 0
        %5419 = vmatpush1.bf16.msra.mxu0 %v5391
        %5420 = vmatprep.subr.bf16.mxu0 0
        %5421 = vmatpush1.bf16.msra.mxu0 %v5390
        %5422 = vmatprep.subr.bf16.mxu0 0
        %5423 = vmatpush2.bf16.msra.mxu0 0
        %5424 = vmatprep.subr.bf16.mxu0 0
        %5425 = vmatpush2.bf16.msra.mxu0 0
        %5426 = vmatprep.subr.bf16.mxu0 0
        %5427 = vmatpush2.bf16.msra.mxu0 0
        %5428 = vmatprep.subr.bf16.mxu0 0
        %5429 = vmatpush2.bf16.msra.mxu0 0
        %5430 = vmatprep.subr.bf16.mxu0 0
        %5431 = vmatpush2.bf16.msra.mxu0 0
        %5432 = vmatprep.subr.bf16.mxu0 0
        %5433 = vmatpush2.bf16.msra.mxu0 0
        %5434 = vmatprep.subr.bf16.mxu0 0
        %5435 = vmatpush2.bf16.msra.mxu0 0
        %5436 = vmatprep.subr.bf16.mxu0 0
        %5437 = vmatpush2.bf16.msra.mxu0 0
        %5438 = vmatprep.mubr.bf16.mxu0 0
        %5439 = vmatmul.mubr.bf16.gmra.mxu0 %v5353
        %v5440 = vpop.f32.mrf.mxu0
        %v5441 = vadd.f32 0.0, %v5440
        %v5442 = vpop.f32.mrf.mxu0
        %v5443 = vpop.f32.mrf.mxu0
        %v5444 = vadd.f32 0.0, %v5443
        %v5445 = vpop.f32.mrf.mxu0
        %5446 = vmatprep.mubr.bf16.mxu0 0
        %5447 = vmatmul.mubr.bf16.gmra.mxu0 %v5355
        %v5448 = vpop.f32.mrf.mxu0
        %v5449 = vadd.f32 0.0, %v5448
        %v5450 = vpop.f32.mrf.mxu0
        %v5451 = vpop.f32.mrf.mxu0
        %v5452 = vadd.f32 0.0, %v5451
        %v5453 = vpop.f32.mrf.mxu0
        %5454 = vdwg.mxu0
        %v5455 = vadd.f32 %v5312, %v5441
        %v5456 = vadd.f32 %v5313, %v5444
        %v5457 = vadd.f32 %v5314, %v5449
        %v5458 = vadd.f32 %v5315, %v5452
        %v5459 = vld [vmem:[%s247 + $0x4c] sm:$0xf]
        %v5460 = vld [vmem:[%s247 + $0x50] sm:$0xf]
        %v5461 = vld [vmem:[%s247 + $0x54] sm:$0xf]
        %v5462 = vld [vmem:[%s247 + $0x58] sm:$0xf]
        %v5463 = vld [vmem:[%s247 + $0x5c] sm:$0x1]
        %s5464 = scalar_lea.vmem %s1, 2240
        %v5465 = vld [vmem:[%s5464] sm:$0xf]
        %v5466 = vld [vmem:[%s5464 + $0x4] sm:$0xf]
        %v5467 = vld [vmem:[%s5464 + $0x8] sm:$0xf]
        %v5468 = vld [vmem:[%s5464 + $0xc] sm:$0xf]
        %v5469 = vld [vmem:[%s5464 + $0x10] sm:$0xf]
        %v5470 = vld [vmem:[%s5464 + $0x14] sm:$0xf]
        %v5471 = vld [vmem:[%s5464 + $0x18] sm:$0xf]
        %v5472 = vld [vmem:[%s5464 + $0x1c] sm:$0xf]
        %v5473 = vld [vmem:[%s5464 + $0x20] sm:$0xf]
        %v5474 = vld [vmem:[%s5464 + $0x24] sm:$0xf]
        %v5475 = vld [vmem:[%s5464 + $0x28] sm:$0xf]
        %v5476 = vld [vmem:[%s5464 + $0x2c] sm:$0xf]
        %v5477 = vld [vmem:[%s5464 + $0x30] sm:$0xf]
        %v5478 = vld [vmem:[%s5464 + $0x34] sm:$0xf]
        %v5479 = vld [vmem:[%s5464 + $0x38] sm:$0xf]
        %v5480 = vld [vmem:[%s5464 + $0x3c] sm:$0xf]
        %v5486 = vunpack.c.l.b16 %v5459
        %v5487 = vunpack.c.l.b16 %v5460
        %v5488 = vunpack.c.l.b16 %v5461
        %v5489 = vunpack.c.l.b16 %v5462
        %v5490 = vunpack.c.l.b16 %v5463
        %v5491 = vpack.c.b16 %v5487, %v5486
        %v5492 = vpack.c.b16 %v5489, %v5488
        %v5493 = vpack.c.b16 %v5490, %v5490
        %v5495 = vshrl.u32 %v5491, 16
        %v5497 = vshll.u32 %v5491, 16
        %v5499 = vrot.slane %v5497, 1
        %v5500 = vor.u32 %v5495, %v5499
        %v5502 = vshll.u32 %v5492, 16
        %v5504 = vrot.slane %v5502, 1
        %v5505 = vsel %vm3121, %v5500, %v5504
        %v5506 = vshrl.u32 %v5492, 16
        %v5508 = vor.u32 %v5506, %v5504
        %v5510 = vshll.u32 %v5493, 16
        %v5512 = vrot.slane %v5510, 1
        %v5513 = vsel %vm3121, %v5508, %v5512
        %v5532 = vunpack.c.l.b16 %v5465
        %v5533 = vunpack.c.l.b16 %v5466
        %v5534 = vunpack.c.l.b16 %v5467
        %v5535 = vunpack.c.l.b16 %v5468
        %v5536 = vunpack.c.l.b16 %v5469
        %v5537 = vunpack.c.l.b16 %v5470
        %v5538 = vunpack.c.l.b16 %v5471
        %v5539 = vunpack.c.l.b16 %v5472
        %v5540 = vunpack.c.l.b16 %v5473
        %v5541 = vunpack.c.l.b16 %v5474
        %v5542 = vunpack.c.l.b16 %v5475
        %v5543 = vunpack.c.l.b16 %v5476
        %v5544 = vunpack.c.l.b16 %v5477
        %v5545 = vunpack.c.l.b16 %v5478
        %v5546 = vunpack.c.l.b16 %v5479
        %v5547 = vunpack.c.l.b16 %v5480
        %v5548 = vpack.c.b16 %v5533, %v5532
        %v5549 = vpack.c.b16 %v5535, %v5534
        %v5550 = vpack.c.b16 %v5537, %v5536
        %v5551 = vpack.c.b16 %v5539, %v5538
        %v5552 = vpack.c.b16 %v5541, %v5540
        %v5553 = vpack.c.b16 %v5543, %v5542
        %v5554 = vpack.c.b16 %v5545, %v5544
        %v5555 = vpack.c.b16 %v5547, %v5546
        %5564 = vmatprep.subr.bf16.mxu0 0
        %5565 = vmatpush1.bf16.msra.mxu0 %v5555
        %5566 = vmatprep.subr.bf16.mxu0 0
        %5567 = vmatpush1.bf16.msra.mxu0 %v5554
        %5568 = vmatprep.subr.bf16.mxu0 0
        %5569 = vmatpush1.bf16.msra.mxu0 %v5553
        %5570 = vmatprep.subr.bf16.mxu0 0
        %5571 = vmatpush1.bf16.msra.mxu0 %v5552
        %5572 = vmatprep.subr.bf16.mxu0 0
        %5573 = vmatpush1.bf16.msra.mxu0 %v5551
        %5574 = vmatprep.subr.bf16.mxu0 0
        %5575 = vmatpush1.bf16.msra.mxu0 %v5550
        %5576 = vmatprep.subr.bf16.mxu0 0
        %5577 = vmatpush1.bf16.msra.mxu0 %v5549
        %5578 = vmatprep.subr.bf16.mxu0 0
        %5579 = vmatpush1.bf16.msra.mxu0 %v5548
        %5580 = vmatprep.subr.bf16.mxu0 0
        %5581 = vmatpush2.bf16.msra.mxu0 0
        %5582 = vmatprep.subr.bf16.mxu0 0
        %5583 = vmatpush2.bf16.msra.mxu0 0
        %5584 = vmatprep.subr.bf16.mxu0 0
        %5585 = vmatpush2.bf16.msra.mxu0 0
        %5586 = vmatprep.subr.bf16.mxu0 0
        %5587 = vmatpush2.bf16.msra.mxu0 0
        %5588 = vmatprep.subr.bf16.mxu0 0
        %5589 = vmatpush2.bf16.msra.mxu0 0
        %5590 = vmatprep.subr.bf16.mxu0 0
        %5591 = vmatpush2.bf16.msra.mxu0 0
        %5592 = vmatprep.subr.bf16.mxu0 0
        %5593 = vmatpush2.bf16.msra.mxu0 0
        %5594 = vmatprep.subr.bf16.mxu0 0
        %5595 = vmatpush2.bf16.msra.mxu0 0
        %5596 = vmatprep.mubr.bf16.mxu0 0
        %5597 = vmatmul.mubr.bf16.gmra.mxu0 %v5505
        %v5598 = vpop.f32.mrf.mxu0
        %v5599 = vadd.f32 0.0, %v5598
        %v5600 = vpop.f32.mrf.mxu0
        %v5601 = vpop.f32.mrf.mxu0
        %v5602 = vadd.f32 0.0, %v5601
        %v5603 = vpop.f32.mrf.mxu0
        %5604 = vmatprep.mubr.bf16.mxu0 0
        %5605 = vmatmul.mubr.bf16.gmra.mxu0 %v5513
        %v5606 = vpop.f32.mrf.mxu0
        %v5607 = vadd.f32 0.0, %v5606
        %v5608 = vpop.f32.mrf.mxu0
        %v5609 = vpop.f32.mrf.mxu0
        %v5610 = vadd.f32 0.0, %v5609
        %v5611 = vpop.f32.mrf.mxu0
        %5612 = vdwg.mxu0
        %v5613 = vadd.f32 %v5455, %v5599
        %v5614 = vadd.f32 %v5456, %v5602
        %v5615 = vadd.f32 %v5457, %v5607
        %v5616 = vadd.f32 %v5458, %v5610
        %v5617 = vpack.c.bf16 %v5614, %v5613
        %v5618 = vpack.c.bf16 %v5616, %v5615
        %v5621 = vunpack.c.l.b16 %v5617
        %v5622 = vunpack.c.h.b16 %v5617
        %v5623 = vunpack.c.l.b16 %v5618
        %v5624 = vunpack.c.h.b16 %v5618
        %v5625 = vpack.c.b16 %v5621, %v5621
        %v5626 = vpack.c.b16 %v5622, %v5622
        %v5627 = vpack.c.b16 %v5623, %v5623
        %v5628 = vpack.c.b16 %v5624, %v5624
        %s5633 = scalar_lea.vmem %s228, 48 [#allocation2]
        %5634 = vst [vmem:[%s5633] sm:$0xf] %v5625
        %5635 = vst [vmem:[%s5633 + $0x4] sm:$0xf] %v5626
        %5636 = vst [vmem:[%s5633 + $0x8] sm:$0xf] %v5627
        %5637 = vst [vmem:[%s5633 + $0xc] sm:$0xf] %v5628
        %v5638 = vmul.f32 %v5613, %v263
        %v5639 = vmul.f32 %v5614, %v264
        %v5640 = vmul.f32 %v5615, %v265
        %v5641 = vmul.f32 %v5616, %v266
        %v5642 = vadd.f32 %v5638, %v5639
        %v5643 = vadd.f32 %v5642, %v5640
        %v5644 = vadd.f32 %v5643, %v5641
        %v5645 = vrot.slane %v5644, 4
        %v5646 = vadd.f32 %v5644, %v5645
        %v5647 = vrot.slane %v5646, 2
        %v5648 = vadd.f32 %v5646, %v5647
        %v5649 = vrot.slane %v5648, 1
        %v5650 = vadd.f32 %v5648, %v5649
        %5651 = vst [vmem:[%s261 + $0x3] sm:$0x1] %v5650
        %v5652 = vmul.f32 %v5638, %v5613
        %v5653 = vmul.f32 %v5639, %v5614
        %v5654 = vmul.f32 %v5640, %v5615
        %v5655 = vmul.f32 %v5641, %v5616
        %v5656 = vadd.f32 %v5652, %v5653
        %v5657 = vadd.f32 %v5656, %v5654
        %v5658 = vadd.f32 %v5657, %v5655
        %v5659 = vrot.slane %v5658, 4
        %v5660 = vadd.f32 %v5658, %v5659
        %v5661 = vrot.slane %v5660, 2
        %v5662 = vadd.f32 %v5660, %v5661
        %v5663 = vrot.slane %v5662, 1
        %v5664 = vadd.f32 %v5662, %v5663
        %5665 = vst [vmem:[%s261 + $0x7] sm:$0x1] %v5664
        %s5666 = sand.u32 %s113, 1
        %s5667 = sand.u32 %s113, 1
        %s5668 = smul.addr %s5667, 64
        %s5669 = scalar_lea.vmem [#allocation2], %s5668
        %p5670 = scmp.lt.s32.totalorder %s20, 1
        %s5671 = scalar_select %p5670, %s20, 1
        %p5672 = scmp.lt.s32.totalorder %s21, 1
        %s5673 = scalar_select %p5672, %s21, 1
        %s5674 = smul.addr %s5671, 2
        %s5675 = sadd.s32 %s5673, %s5674
        %s5676 = smul.addr %s5675, 8
        %s5677 = scalar_lea.vmem %s4, %s5676
        // Predicated region
        $region33: #{atrou_mmu_forward.2} parent=31 // pred_check
          %p5678 = pneg %p123
        $region34: #{atrou_mmu_forward.2} parent=31 // pred_check_branch
          %5680 = sbr.rel (%p5678) target = $region36
        $region35: #{atrou_mmu_forward.2} parent=31 // pred_region
          %s5681 = smul.u32 4, %s21
          %s5682 = smul.addr %s20, 8
          %s5683 = sadd.s32 %s5681, %s5682
          %s5684 = smul.addr %s5683, 4
          %s5685 = scalar_lea.vmem %s3, %s5684
          // Predicated region
          $region37: #{atrou_mmu_forward.2} parent=35 // pred_check
            _
          $region38: #{atrou_mmu_forward.2} parent=35 // pred_check_branch
            %5687 = sbr.rel (0) target = $region40
          $region39: #{atrou_mmu_forward.2} parent=35 // pred_region
            // Predicated region
            $region41: #{atrou_mmu_forward.2} parent=39 // pred_check
              _
            $region42: #{atrou_mmu_forward.2} parent=39 // pred_check_branch
              %5689 = sbr.rel target = $region44
            $region43: #{atrou_mmu_forward.2} parent=39 // pred_region
              // Predicated region
              $region56: #{atrou_mmu_forward.2} parent=43 // pred_check
                _
              $region57: #{atrou_mmu_forward.2} parent=43 // pred_check_branch
                %5735 = sbr.rel (0) target = $region59
              $region58: #{atrou_mmu_forward.2} parent=43 // pred_region
                loop: start=0, step=1, limit=1
                $region60: #{atrou_mmu_forward.2} parent=58 // loop_pre_header
                  _
                $region61: #{atrou_mmu_forward.2} parent=58 // loop_header
                  %s5737 = sphi 0, %s5741
                  %p5738 = scmp.ge.s32.totalorder %s5737, 1
                  %s5742 = sphi %s5669, %s5669
                  %s5743 = sphi %s5685, %s5685
                $region62: #{atrou_mmu_forward.2} parent=58 // loop_header_branch
                  %5740 = sbr.rel (%p5738) target = $region66
                $region63: #{atrou_mmu_forward.2} parent=58 // loop_body
                  _
                $region64: #{atrou_mmu_forward.2} parent=58 // loop_footer
                  %s5741 = sadd.s32 1, %s5737
                $region65: #{atrou_mmu_forward.2} parent=58 // loop_footer_branch
                  %5736 = sbr.rel target = $region61
                $region66: #{atrou_mmu_forward.2} parent=58 // loop_exit
                  _
                %s5745 = ssub.s32 16, 1
                loop: start=0, step=1, limit=1
                $region67: #{atrou_mmu_forward.2} parent=58 // loop_pre_header
                  _
                $region68: #{atrou_mmu_forward.2} parent=58 // loop_header
                  %s5747 = sphi 0, %s5751
                  %p5748 = scmp.ge.s32.totalorder %s5747, 1
                  %s5752 = sphi %s5669, %s5669
                  %s5753 = sphi %s5685, %s5685
                $region69: #{atrou_mmu_forward.2} parent=58 // loop_header_branch
                  %5750 = sbr.rel (%p5748) target = $region73
                $region70: #{atrou_mmu_forward.2} parent=58 // loop_body
                  %v5754 = vld [vmem:[%s5752] sm:%s5745]
                  %5755 = vst [vmem:[%s5753] sm:%s5745] %v5754
                  %v5756 = vld [vmem:[%s5752 + $0x4] sm:%s5745]
                  %5757 = vst [vmem:[%s5753 + $0x4] sm:%s5745] %v5756
                  %v5758 = vld [vmem:[%s5752 + $0x8] sm:%s5745]
                  %5759 = vst [vmem:[%s5753 + $0x8] sm:%s5745] %v5758
                  %v5760 = vld [vmem:[%s5752 + $0xc] sm:%s5745]
                  %5761 = vst [vmem:[%s5753 + $0xc] sm:%s5745] %v5760
                  %v5762 = vld [vmem:[%s5752 + $0x10] sm:%s5745]
                  %5763 = vst [vmem:[%s5753 + $0x40] sm:%s5745] %v5762
                  %v5764 = vld [vmem:[%s5752 + $0x14] sm:%s5745]
                  %5765 = vst [vmem:[%s5753 + $0x44] sm:%s5745] %v5764
                  %v5766 = vld [vmem:[%s5752 + $0x18] sm:%s5745]
                  %5767 = vst [vmem:[%s5753 + $0x48] sm:%s5745] %v5766
                  %v5768 = vld [vmem:[%s5752 + $0x1c] sm:%s5745]
                  %5769 = vst [vmem:[%s5753 + $0x4c] sm:%s5745] %v5768
                  %v5770 = vld [vmem:[%s5752 + $0x20] sm:%s5745]
                  %5771 = vst [vmem:[%s5753 + $0x80] sm:%s5745] %v5770
                  %v5772 = vld [vmem:[%s5752 + $0x24] sm:%s5745]
                  %5773 = vst [vmem:[%s5753 + $0x84] sm:%s5745] %v5772
                  %v5774 = vld [vmem:[%s5752 + $0x28] sm:%s5745]
                  %5775 = vst [vmem:[%s5753 + $0x88] sm:%s5745] %v5774
                  %v5776 = vld [vmem:[%s5752 + $0x2c] sm:%s5745]
                  %5777 = vst [vmem:[%s5753 + $0x8c] sm:%s5745] %v5776
                  %v5778 = vld [vmem:[%s5752 + $0x30] sm:%s5745]
                  %5779 = vst [vmem:[%s5753 + $0xc0] sm:%s5745] %v5778
                  %v5780 = vld [vmem:[%s5752 + $0x34] sm:%s5745]
                  %5781 = vst [vmem:[%s5753 + $0xc4] sm:%s5745] %v5780
                  %v5782 = vld [vmem:[%s5752 + $0x38] sm:%s5745]
                  %5783 = vst [vmem:[%s5753 + $0xc8] sm:%s5745] %v5782
                  %v5784 = vld [vmem:[%s5752 + $0x3c] sm:%s5745]
                  %5785 = vst [vmem:[%s5753 + $0xcc] sm:%s5745] %v5784
                $region71: #{atrou_mmu_forward.2} parent=58 // loop_footer
                  %s5751 = sadd.s32 1, %s5747
                $region72: #{atrou_mmu_forward.2} parent=58 // loop_footer_branch
                  %5746 = sbr.rel target = $region68
                $region73: #{atrou_mmu_forward.2} parent=58 // loop_exit
                  _
              $region59: #{atrou_mmu_forward.2} parent=43 // pred_fallthru
                _
            $region44: #{atrou_mmu_forward.2} parent=39 // pred_fallthru
              _
            // Predicated region
            $region45: #{atrou_mmu_forward.2} parent=39 // pred_check
              _
            $region46: #{atrou_mmu_forward.2} parent=39 // pred_check_branch
              %5691 = sbr.rel (0) target = $region48
            $region47: #{atrou_mmu_forward.2} parent=39 // pred_region
              %s5693 = ssub.s32 16, 1
              loop: start=0, step=1, limit=1
              $region49: #{atrou_mmu_forward.2} parent=47 // loop_pre_header
                _
              $region50: #{atrou_mmu_forward.2} parent=47 // loop_header
                %s5695 = sphi 0, %s5699
                %p5696 = scmp.ge.s32.totalorder %s5695, 1
                %s5700 = sphi %s5669, %s5669
                %s5701 = sphi %s5685, %s5685
              $region51: #{atrou_mmu_forward.2} parent=47 // loop_header_branch
                %5698 = sbr.rel (%p5696) target = $region55
              $region52: #{atrou_mmu_forward.2} parent=47 // loop_body
                %v5702 = vld [vmem:[%s5700] sm:%s5693]
                %5703 = vst [vmem:[%s5701] sm:%s5693] %v5702
                %v5704 = vld [vmem:[%s5700 + $0x4] sm:%s5693]
                %5705 = vst [vmem:[%s5701 + $0x4] sm:%s5693] %v5704
                %v5706 = vld [vmem:[%s5700 + $0x8] sm:%s5693]
                %5707 = vst [vmem:[%s5701 + $0x8] sm:%s5693] %v5706
                %v5708 = vld [vmem:[%s5700 + $0xc] sm:%s5693]
                %5709 = vst [vmem:[%s5701 + $0xc] sm:%s5693] %v5708
                %v5710 = vld [vmem:[%s5700 + $0x10] sm:%s5693]
                %5711 = vst [vmem:[%s5701 + $0x40] sm:%s5693] %v5710
                %v5712 = vld [vmem:[%s5700 + $0x14] sm:%s5693]
                %5713 = vst [vmem:[%s5701 + $0x44] sm:%s5693] %v5712
                %v5714 = vld [vmem:[%s5700 + $0x18] sm:%s5693]
                %5715 = vst [vmem:[%s5701 + $0x48] sm:%s5693] %v5714
                %v5716 = vld [vmem:[%s5700 + $0x1c] sm:%s5693]
                %5717 = vst [vmem:[%s5701 + $0x4c] sm:%s5693] %v5716
                %v5718 = vld [vmem:[%s5700 + $0x20] sm:%s5693]
                %5719 = vst [vmem:[%s5701 + $0x80] sm:%s5693] %v5718
                %v5720 = vld [vmem:[%s5700 + $0x24] sm:%s5693]
                %5721 = vst [vmem:[%s5701 + $0x84] sm:%s5693] %v5720
                %v5722 = vld [vmem:[%s5700 + $0x28] sm:%s5693]
                %5723 = vst [vmem:[%s5701 + $0x88] sm:%s5693] %v5722
                %v5724 = vld [vmem:[%s5700 + $0x2c] sm:%s5693]
                %5725 = vst [vmem:[%s5701 + $0x8c] sm:%s5693] %v5724
                %v5726 = vld [vmem:[%s5700 + $0x30] sm:%s5693]
                %5727 = vst [vmem:[%s5701 + $0xc0] sm:%s5693] %v5726
                %v5728 = vld [vmem:[%s5700 + $0x34] sm:%s5693]
                %5729 = vst [vmem:[%s5701 + $0xc4] sm:%s5693] %v5728
                %v5730 = vld [vmem:[%s5700 + $0x38] sm:%s5693]
                %5731 = vst [vmem:[%s5701 + $0xc8] sm:%s5693] %v5730
                %v5732 = vld [vmem:[%s5700 + $0x3c] sm:%s5693]
                %5733 = vst [vmem:[%s5701 + $0xcc] sm:%s5693] %v5732
              $region53: #{atrou_mmu_forward.2} parent=47 // loop_footer
                %s5699 = sadd.s32 1, %s5695
              $region54: #{atrou_mmu_forward.2} parent=47 // loop_footer_branch
                %5694 = sbr.rel target = $region50
              $region55: #{atrou_mmu_forward.2} parent=47 // loop_exit
                _
            $region48: #{atrou_mmu_forward.2} parent=39 // pred_fallthru
              _
          $region40: #{atrou_mmu_forward.2} parent=35 // pred_fallthru
            _
          %5786 = vnop
        $region36: #{atrou_mmu_forward.2} parent=31 // pred_fallthru
          _
        // Predicated region
        $region74: #{atrou_mmu_forward.2} parent=31 // pred_check
          %p5787 = pneg %p151
        $region75: #{atrou_mmu_forward.2} parent=31 // pred_check_branch
          %5789 = sbr.rel (%p5787) target = $region77
        $region76: #{atrou_mmu_forward.2} parent=31 // pred_region
          _
        $region77: #{atrou_mmu_forward.2} parent=31 // pred_fallthru
          _
      $region32: #{atrou_mmu_forward.2} parent=5 // pred_fallthru
        _
      %p5790 = scmp.le.s32.totalorder 2, %s11
      // Predicated region
      $region78: #{atrou_mmu_forward.2} parent=5 // pred_check
        %p5791 = pneg %p5790
      $region79: #{atrou_mmu_forward.2} parent=5 // pred_check_branch
        %5793 = sbr.rel (%p5791) target = $region81
      $region80: #{atrou_mmu_forward.2} parent=5 // pred_region
        %s5794 = ssub.s32 %s11, 2
        // Predicated region
        $region82: #{atrou_mmu_forward.2} parent=80 // pred_check
          %p5795 = pneg %p129
        $region83: #{atrou_mmu_forward.2} parent=80 // pred_check_branch
          %5797 = sbr.rel (%p5795) target = $region85
        $region84: #{atrou_mmu_forward.2} parent=80 // pred_region
          %s5798 = sand.u32 %s114, 1
          %s5799 = sand.u32 %s114, 1
          %s5800 = smul.addr %s5799, 64
          %s5801 = scalar_lea.vmem [#allocation2], %s5800
        $region85: #{atrou_mmu_forward.2} parent=80 // pred_fallthru
          _
        // Predicated region
        $region86: #{atrou_mmu_forward.2} parent=80 // pred_check
          %p5802 = pneg %p157
        $region87: #{atrou_mmu_forward.2} parent=80 // pred_check_branch
          %5804 = sbr.rel (%p5802) target = $region89
        $region88: #{atrou_mmu_forward.2} parent=80 // pred_region
          %p5805 = scmp.lt.s32.totalorder %s22, 1
          %s5806 = scalar_select %p5805, %s22, 1
          %p5807 = scmp.lt.s32.totalorder %s23, 1
          %s5808 = scalar_select %p5807, %s23, 1
          %s5809 = smul.addr %s5806, 2
          %s5810 = sadd.s32 %s5808, %s5809
          %s5811 = smul.addr %s5810, 8
          %s5812 = scalar_lea.vmem %s4, %s5811
        $region89: #{atrou_mmu_forward.2} parent=80 // pred_fallthru
          _
      $region81: #{atrou_mmu_forward.2} parent=5 // pred_fallthru
        _
    $region6: #{atrou_mmu_forward.2} parent=1 // loop_footer
      %s15 = sadd.s32 1, %s11
    $region7: #{atrou_mmu_forward.2} parent=1 // loop_footer_branch
      %10 = sbr.rel target = $region3
    $region8: #{atrou_mmu_forward.2} parent=1 // loop_exit
      _

</llo_original>
